<compile_context>
chip_gen: v7x
topology: tpu7x:2x2x1
jax: 0.10.0
libtpu: 0.0.40
codegen_flags: <defaults>
</compile_context>

<pallas_src>
import functools

import jax
import jax.numpy as jnp
from jax.experimental import pallas as pl
from jax.experimental.pallas import tpu as pltpu

GN_EPS = 1e-5


# ----------------------------------------------------------------------------
# Pallas kernels (one fused kernel == one network layer)
# ----------------------------------------------------------------------------

def _matmul_relu_gn_kernel(x_ref, w_ref, b_ref, g_ref, bb_ref, o_ref, *, eps):
    """Fused conv layer (per sample): GroupNorm(1, C)(relu(X @ W + b)).

    x_ref : (1, M, K)  one sample's im2col patches
    w_ref : (K, N)     weight
    b_ref / g_ref / bb_ref : (1, N)  conv bias / GN gamma / GN beta
    o_ref : (1, M, N)
    GroupNorm(1, C) normalizes over all of C*H*W == the whole (M, N) tile.
    """
    y = jnp.dot(x_ref[0], w_ref[...], preferred_element_type=jnp.float32)
    y = jnp.maximum(y + b_ref[...], 0.0)
    mean = jnp.mean(y)
    var = jnp.mean(jnp.square(y - mean))          # biased variance (PyTorch GN)
    y = (y - mean) * jax.lax.rsqrt(var + eps)
    o_ref[0] = y * g_ref[...] + bb_ref[...]


def _matmul_act_kernel(x_ref, w_ref, b_ref, o_ref, *, act):
    """Fused conv layer without GroupNorm: act(X @ W + b)."""
    y = jnp.dot(x_ref[0], w_ref[...], preferred_element_type=jnp.float32)
    y = y + b_ref[...]
    if act == "relu":
        y = jnp.maximum(y, 0.0)
    elif act == "sigmoid":
        y = jax.nn.sigmoid(y)
    o_ref[0] = y


def _mu_logvar_sample_kernel(x_ref, wmu_ref, wlv_ref, bmu_ref, blv_ref, eps_ref,
                             mu_ref, lv_ref, s_ref):
    """mu / log_var convolutions share one patch tile; the reparameterization
    sample = mu + eps * exp(0.5 * log_var) is fused into the epilogue."""
    x = x_ref[0]
    mu = jnp.dot(x, wmu_ref[...], preferred_element_type=jnp.float32) + bmu_ref[...]
    lv = jnp.dot(x, wlv_ref[...], preferred_element_type=jnp.float32) + blv_ref[...]
    mu_ref[0] = mu
    lv_ref[0] = lv
    s_ref[0] = mu + eps_ref[0] * jnp.exp(0.5 * lv)


# ----------------------------------------------------------------------------
# pallas_call wrappers (per-sample blocks, grid over batch)
# ----------------------------------------------------------------------------

def _matmul_relu_gn(Xm, Wm, b, gamma, beta):
    """Xm: [B, M, K], Wm: [K, N] -> GroupNorm(relu(Xm @ Wm + b)): [B, M, N]."""
    B, M, K = Xm.shape
    N = Wm.shape[1]
    return pl.pallas_call(
        functools.partial(_matmul_relu_gn_kernel, eps=GN_EPS),
        grid=(B,),
        in_specs=[
            pl.BlockSpec((1, M, K), lambda bi: (bi, 0, 0)),
            pl.BlockSpec((K, N), lambda bi: (0, 0)),
            pl.BlockSpec((1, N), lambda bi: (0, 0)),
            pl.BlockSpec((1, N), lambda bi: (0, 0)),
            pl.BlockSpec((1, N), lambda bi: (0, 0)),
        ],
        out_specs=pl.BlockSpec((1, M, N), lambda bi: (bi, 0, 0)),
        out_shape=jax.ShapeDtypeStruct((B, M, N), jnp.float32),
        compiler_params=pltpu.CompilerParams(dimension_semantics=("parallel",)),
    )(Xm, Wm, b.reshape(1, N), gamma.reshape(1, N), beta.reshape(1, N))


def _matmul_act(Xm, Wm, b, act):
    B, M, K = Xm.shape
    N = Wm.shape[1]
    return pl.pallas_call(
        functools.partial(_matmul_act_kernel, act=act),
        grid=(B,),
        in_specs=[
            pl.BlockSpec((1, M, K), lambda bi: (bi, 0, 0)),
            pl.BlockSpec((K, N), lambda bi: (0, 0)),
            pl.BlockSpec((1, N), lambda bi: (0, 0)),
        ],
        out_specs=pl.BlockSpec((1, M, N), lambda bi: (bi, 0, 0)),
        out_shape=jax.ShapeDtypeStruct((B, M, N), jnp.float32),
        compiler_params=pltpu.CompilerParams(dimension_semantics=("parallel",)),
    )(Xm, Wm, b.reshape(1, N))


# ----------------------------------------------------------------------------
# Conv lowerings (patch extraction / phase packing = plain-JAX data movement)
# ----------------------------------------------------------------------------

def _extract_patches(x, kh, kw, stride, padding):
    """x: [B,H,W,C] -> [B, OH, OW, kh*kw*C], feature order (ki, kj, c)."""
    B, H, W, C = x.shape
    xp = jnp.pad(x, ((0, 0), (padding, padding), (padding, padding), (0, 0)))
    OH = (H + 2 * padding - kh) // stride + 1
    OW = (W + 2 * padding - kw) // stride + 1
    cols = []
    for i in range(kh):
        for j in range(kw):
            cols.append(xp[:, i:i + stride * OH:stride, j:j + stride * OW:stride, :])
    return jnp.concatenate(cols, axis=-1), OH, OW


def conv2d_relu_gn(x, w, b, gamma, beta, stride, padding):
    """x: [B,H,W,Cin] NHWC, w: [KH,KW,Cin,Cout]. Fused conv+ReLU+GroupNorm(1,C)."""
    KH, KW, Cin, Cout = w.shape
    patches, OH, OW = _extract_patches(x, KH, KW, stride, padding)
    B = x.shape[0]
    Xm = patches.reshape(B, OH * OW, KH * KW * Cin)
    out = _matmul_relu_gn(Xm, w.reshape(KH * KW * Cin, Cout), b, gamma, beta)
    return out.reshape(B, OH, OW, Cout)


def _phase_weight(w_t):
    """ConvTranspose2d weight [Cin, Cout, 8, 8] (stride=2, padding=3)
    -> phase-packed stride-1 weight [5*5*Cin, 4*Cout].

    Output phase (r, c): y[2q+r, 2p+c] is a stride-1 4x4 conv of the input
    window x[q-2:q+3, p-2:p+3] with kernel taps k = r + 7 - 2*d (d = window
    offset); all four phases are embedded in one shared 5x5 window so a single
    patch tensor feeds one matmul with N = 4*Cout.
    """
    Cin, Cout, KH, KW = w_t.shape
    phases = []
    for r in range(2):
        for c in range(2):
            sub = w_t[:, :, (1 - r)::2, (1 - c)::2]        # taps in increasing k
            sub = jnp.flip(sub, axis=(2, 3))               # window order (decreasing k)
            sub = jnp.transpose(sub, (2, 3, 0, 1))         # [4, 4, Cin, Cout]
            sub = jnp.pad(sub, ((r, 1 - r), (c, 1 - c), (0, 0), (0, 0)))  # -> [5,5,..]
            phases.append(sub)
    w5 = jnp.stack(phases, axis=3)                         # [5, 5, Cin, 4, Cout]
    return w5.reshape(5 * 5 * Cin, 4 * Cout)


def _depth_to_space2(y, Cout):
    """[B, H, W, 4*Cout] (phase order r, c, oc) -> [B, 2H, 2W, Cout]."""
    B, H, W, _ = y.shape
    y = y.reshape(B, H, W, 2, 2, Cout)
    y = jnp.transpose(y, (0, 1, 3, 2, 4, 5))
    return y.reshape(B, 2 * H, 2 * W, Cout)


def conv_transpose_relu_gn(x, w_t, b, gamma, beta):
    """ConvTranspose2d(k=8, s=2, p=3) + ReLU + GroupNorm(1, Cout), all fused.

    GroupNorm(1, C) is computed directly in phase space: the (H*W, 4*Cout)
    tile contains exactly the same values as the (2H, 2W, Cout) output, and
    the per-channel affine tiles gamma/beta over the 4 phases.
    """
    B, H, W, Cin = x.shape
    Cout = w_t.shape[1]
    patches, OH, OW = _extract_patches(x, 5, 5, 1, 2)      # OH = H, OW = W
    Xm = patches.reshape(B, OH * OW, 25 * Cin)
    out = _matmul_relu_gn(Xm, _phase_weight(w_t),
                          jnp.tile(b, 4), jnp.tile(gamma, 4), jnp.tile(beta, 4))
    return _depth_to_space2(out.reshape(B, OH, OW, 4 * Cout), Cout)


def conv_transpose_act(x, w_t, b, act):
    """ConvTranspose2d(k=8, s=2, p=3) + activation (no GroupNorm), fused."""
    B, H, W, Cin = x.shape
    Cout = w_t.shape[1]
    patches, OH, OW = _extract_patches(x, 5, 5, 1, 2)
    Xm = patches.reshape(B, OH * OW, 25 * Cin)
    out = _matmul_act(Xm, _phase_weight(w_t), jnp.tile(b, 4), act)
    return _depth_to_space2(out.reshape(B, OH, OW, 4 * Cout), Cout)


def mu_logvar_sample(x, w_mu, b_mu, w_lv, b_lv, eps, stride=2, padding=1):
    """Fused encoder_mu + encoder_log_var + reparameterization sample."""
    KH, KW, Cin, C = w_mu.shape
    patches, OH, OW = _extract_patches(x, KH, KW, stride, padding)
    B = x.shape[0]
    M = OH * OW
    K = KH * KW * Cin
    Xm = patches.reshape(B, M, K)
    out_sd = jax.ShapeDtypeStruct((B, M, C), jnp.float32)
    blk_out = pl.BlockSpec((1, M, C), lambda bi: (bi, 0, 0))
    mu, lv, sample = pl.pallas_call(
        _mu_logvar_sample_kernel,
        grid=(B,),
        in_specs=[
            pl.BlockSpec((1, M, K), lambda bi: (bi, 0, 0)),
            pl.BlockSpec((K, C), lambda bi: (0, 0)),
            pl.BlockSpec((K, C), lambda bi: (0, 0)),
            pl.BlockSpec((1, C), lambda bi: (0, 0)),
            pl.BlockSpec((1, C), lambda bi: (0, 0)),
            pl.BlockSpec((1, M, C), lambda bi: (bi, 0, 0)),
        ],
        out_specs=(blk_out, blk_out, blk_out),
        out_shape=(out_sd, out_sd, out_sd),
        compiler_params=pltpu.CompilerParams(dimension_semantics=("parallel",)),
    )(Xm, w_mu.reshape(K, C), w_lv.reshape(K, C),
      b_mu.reshape(1, C), b_lv.reshape(1, C), eps.reshape(B, M, C))
    shape = (B, OH, OW, C)
    return mu.reshape(shape), lv.reshape(shape), sample.reshape(shape)


# ----------------------------------------------------------------------------
# Parameters (deterministic, mirroring the PyTorch __init__ constants;
# the torch.normal(0, tiny) perturbation is omitted -> deterministic init)
# ----------------------------------------------------------------------------

def init_params():
    f32 = jnp.float32
    p = {}
    # encoder convs: weights stored as [KH, KW, Cin, Cout]
    p["e1_w"] = jnp.full((4, 4, 1, 4), 1.0 / 0.32, f32)
    p["e1_b"] = jnp.zeros((4,), f32)
    p["gn1_g"], p["gn1_b"] = jnp.ones((4,), f32), jnp.zeros((4,), f32)
    p["e2_w"] = jnp.full((4, 4, 4, 16), 1.0 / 128.0, f32)
    p["e2_b"] = jnp.zeros((16,), f32)
    p["gn2_g"], p["gn2_b"] = jnp.ones((16,), f32), jnp.zeros((16,), f32)
    p["e3_w"] = jnp.full((4, 4, 16, 32), 1.0 / 128.0, f32)
    p["e3_b"] = jnp.zeros((32,), f32)
    p["gn3_g"], p["gn3_b"] = jnp.ones((32,), f32), jnp.zeros((32,), f32)
    p["mu_w"] = jnp.full((4, 4, 32, 16), 1.0 / 128.0, f32)
    p["mu_b"] = jnp.zeros((16,), f32)
    p["lv_w"] = jnp.zeros((4, 4, 32, 16), f32)
    p["lv_b"] = jnp.full((16,), -2.3, f32)
    # decoder transposed convs: weights stored as [Cin, Cout, KH, KW] (PyTorch layout)
    p["d1_w"] = jnp.full((16, 32, 8, 8), 1.0 / 512.0, f32)
    p["d1_b"] = jnp.zeros((32,), f32)
    p["dn1_g"], p["dn1_b"] = jnp.ones((32,), f32), jnp.zeros((32,), f32)
    p["d2_w"] = jnp.full((32, 64, 8, 8), 1.0 / 512.0, f32)
    p["d2_b"] = jnp.zeros((64,), f32)
    p["dn2_g"], p["dn2_b"] = jnp.ones((64,), f32), jnp.zeros((64,), f32)
    p["d3_w"] = jnp.full((64, 32, 8, 8), 1.0 / 256.0, f32)
    p["d3_b"] = jnp.zeros((32,), f32)
    p["dn3_g"], p["dn3_b"] = jnp.ones((32,), f32), jnp.zeros((32,), f32)
    p["d5_w"] = jnp.full((32, 1, 8, 8), 1.0 / (32 * 8 * 8 * 0.24), f32)
    p["d5_b"] = jnp.full((1,), -(0.5 / 0.24), f32)
    return p


# ----------------------------------------------------------------------------
# Forward pass (matches TextureFinder.forward)
# ----------------------------------------------------------------------------

def texture_finder_forward(params, x_nchw, eps_key):
    p = params
    x = jnp.transpose(x_nchw, (0, 2, 3, 1))                       # NCHW -> NHWC

    # encoder: each layer = ONE fused pallas_call (conv + bias + ReLU + GroupNorm)
    e0 = conv2d_relu_gn(x,  p["e1_w"], p["e1_b"], p["gn1_g"], p["gn1_b"], 2, 1)
    e1 = conv2d_relu_gn(e0, p["e2_w"], p["e2_b"], p["gn2_g"], p["gn2_b"], 2, 1)
    e2 = conv2d_relu_gn(e1, p["e3_w"], p["e3_b"], p["gn3_g"], p["gn3_b"], 2, 1)

    # mu + log_var + reparameterization sample, fused into one pallas_call
    B, He, We, _ = e2.shape
    Hl, Wl, Cl = He // 2, We // 2, 16
    eps = jax.random.normal(eps_key, (B, Hl * Wl, Cl), jnp.float32)
    mu, log_var, sample = mu_logvar_sample(e2, p["mu_w"], p["mu_b"],
                                           p["lv_w"], p["lv_b"], eps)

    # decoder: phase-decomposed transposed convs, ReLU + GroupNorm fused in-kernel
    d1 = conv_transpose_relu_gn(sample, p["d1_w"], p["d1_b"], p["dn1_g"], p["dn1_b"])
    d2 = conv_transpose_relu_gn(d1,     p["d2_w"], p["d2_b"], p["dn2_g"], p["dn2_b"])
    d3 = conv_transpose_relu_gn(d2,     p["d3_w"], p["d3_b"], p["dn3_g"], p["dn3_b"])
    recon = conv_transpose_act(d3, p["d5_w"], p["d5_b"], act="sigmoid")

    def to_nchw(t):
        return jnp.transpose(t, (0, 3, 1, 2))

    # same return tuple as the PyTorch module, NCHW layout
    return (to_nchw(recon), to_nchw(mu), to_nchw(log_var), to_nchw(sample),
            to_nchw(e1), to_nchw(d2))


# ----------------------------------------------------------------------------
# Main
# ----------------------------------------------------------------------------

if __name__ == "__main__":
    key = jax.random.PRNGKey(0)
    k_in, k_eps = jax.random.split(key)

    # input: batch=2, 1 channel, 32x32 spatial (divisible by 2^4 for the four
    # stride-2 encoder convs).  NCHW, like the PyTorch module.
    x = jax.random.uniform(k_in, (2, 1, 32, 32), jnp.float32)

    params = init_params()
    fwd = jax.jit(functools.partial(texture_finder_forward, params))
    outs = jax.block_until_ready(fwd(x, k_eps))

    recon, mu, log_var, sample, e1, d2 = outs
    assert recon.shape == (2, 1, 32, 32)
    assert mu.shape == (2, 16, 2, 2) and log_var.shape == (2, 16, 2, 2)
    assert sample.shape == (2, 16, 2, 2)
    assert e1.shape == (2, 16, 8, 8)
    assert d2.shape == (2, 64, 8, 8)

    print("KERNEL_OK")
</pallas_src>

<mosaic_0001>
module attributes {stable_mosaic.version = 11 : i64} {
  func.func @_matmul_relu_gn_kernel(%arg0: i32, %arg1: memref<1x256x16xf32, #tpu.memory_space<vmem>>, %arg2: memref<16x4xf32, #tpu.memory_space<vmem>>, %arg3: memref<1x4xf32, #tpu.memory_space<vmem>>, %arg4: memref<1x4xf32, #tpu.memory_space<vmem>>, %arg5: memref<1x4xf32, #tpu.memory_space<vmem>>, %arg6: memref<1x256x4xf32, #tpu.memory_space<vmem>>) attributes {dimension_semantics = [#tpu.dimension_semantics<parallel>], iteration_bounds = array<i64: 2>, scalar_prefetch = 0 : i64, scratch_operands = 0 : i64, tpu.core_type = #tpu.core_type<tc>, window_params = [{transform_indices = @transform_0, window_bounds = array<i64: 1, 256, 16>}, {pipeline_mode = #tpu.pipeline_mode<synchronous>, transform_indices = @transform_1, window_bounds = array<i64: 16, 4>}, {pipeline_mode = #tpu.pipeline_mode<synchronous>, transform_indices = @transform_2, window_bounds = array<i64: 1, 4>}, {pipeline_mode = #tpu.pipeline_mode<synchronous>, transform_indices = @transform_3, window_bounds = array<i64: 1, 4>}, {pipeline_mode = #tpu.pipeline_mode<synchronous>, transform_indices = @transform_4, window_bounds = array<i64: 1, 4>}, {transform_indices = @transform_5, window_bounds = array<i64: 1, 256, 4>}]} {
    %c0 = arith.constant 0 : index
    %c0_0 = arith.constant 0 : index
    %c0_1 = arith.constant 0 : index
    %0 = vector.load %arg1[%c0, %c0_0, %c0_1] : memref<1x256x16xf32, #tpu.memory_space<vmem>>, vector<1x256x16xf32>
    %1 = vector.shape_cast %0 : vector<1x256x16xf32> to vector<256x16xf32>
    %c0_2 = arith.constant 0 : index
    %c0_3 = arith.constant 0 : index
    %2 = vector.load %arg2[%c0_2, %c0_3] : memref<16x4xf32, #tpu.memory_space<vmem>>, vector<16x4xf32>
    %cst = arith.constant dense<0.000000e+00> : vector<256x4xf32>
    %3 = tpu.matmul %1, %2, %cst {dimension_numbers = #tpu.dot_dimension_numbers<[1], [0], [0], [1], [0, 0, 1, 1], [], []>} : vector<256x16xf32>, vector<16x4xf32>, vector<256x4xf32> -> vector<256x4xf32>
    %c0_4 = arith.constant 0 : index
    %c0_5 = arith.constant 0 : index
    %4 = vector.load %arg3[%c0_4, %c0_5] : memref<1x4xf32, #tpu.memory_space<vmem>>, vector<1x4xf32>
    %5 = vector.broadcast %4 : vector<1x4xf32> to vector<256x4xf32>
    %6 = arith.addf %3, %5 : vector<256x4xf32>
    %cst_6 = arith.constant 0.000000e+00 : f32
    %7 = vector.broadcast %cst_6 : f32 to vector<256x4xf32>
    %8 = arith.maximumf %6, %7 : vector<256x4xf32>
    %9 = vector.shape_cast %8 : vector<256x4xf32> to vector<1x256x4xf32>
    %cst_7 = arith.constant dense<0.000000e+00> : vector<1xf32>
    %10 = vector.multi_reduction <add>, %9, %cst_7 [1, 2] : vector<1x256x4xf32> to vector<1xf32>
    %11 = vector.shape_cast %10 : vector<1xf32> to vector<1x1x1xf32>
    %12 = vector.extract %11[0, 0, 0] : f32 from vector<1x1x1xf32>
    %cst_8 = arith.constant 1.024000e+03 : f32
    %13 = arith.divf %12, %cst_8 : f32
    %14 = vector.broadcast %13 : f32 to vector<256x4xf32>
    %15 = arith.subf %8, %14 : vector<256x4xf32>
    %16 = arith.mulf %15, %15 : vector<256x4xf32>
    %17 = vector.shape_cast %16 : vector<256x4xf32> to vector<1x256x4xf32>
    %cst_9 = arith.constant dense<0.000000e+00> : vector<1xf32>
    %18 = vector.multi_reduction <add>, %17, %cst_9 [1, 2] : vector<1x256x4xf32> to vector<1xf32>
    %19 = vector.shape_cast %18 : vector<1xf32> to vector<1x1x1xf32>
    %20 = vector.extract %19[0, 0, 0] : f32 from vector<1x1x1xf32>
    %cst_10 = arith.constant 1.024000e+03 : f32
    %21 = arith.divf %20, %cst_10 : f32
    %22 = vector.broadcast %13 : f32 to vector<256x4xf32>
    %23 = arith.subf %8, %22 : vector<256x4xf32>
    %cst_11 = arith.constant 9.99999974E-6 : f32
    %24 = arith.addf %21, %cst_11 : f32
    %25 = math.rsqrt %24 : f32
    %26 = vector.broadcast %25 : f32 to vector<256x4xf32>
    %27 = arith.mulf %23, %26 : vector<256x4xf32>
    %c0_12 = arith.constant 0 : index
    %c0_13 = arith.constant 0 : index
    %28 = vector.load %arg4[%c0_12, %c0_13] : memref<1x4xf32, #tpu.memory_space<vmem>>, vector<1x4xf32>
    %29 = vector.broadcast %28 : vector<1x4xf32> to vector<256x4xf32>
    %30 = arith.mulf %27, %29 : vector<256x4xf32>
    %c0_14 = arith.constant 0 : index
    %c0_15 = arith.constant 0 : index
    %31 = vector.load %arg5[%c0_14, %c0_15] : memref<1x4xf32, #tpu.memory_space<vmem>>, vector<1x4xf32>
    %32 = vector.broadcast %31 : vector<1x4xf32> to vector<256x4xf32>
    %33 = arith.addf %30, %32 : vector<256x4xf32>
    %c0_16 = arith.constant 0 : index
    %c0_17 = arith.constant 0 : index
    %c0_18 = arith.constant 0 : index
    %34 = vector.load %arg6[%c0_16, %c0_17, %c0_18] : memref<1x256x4xf32, #tpu.memory_space<vmem>>, vector<1x256x4xf32>
    %35 = vector.shape_cast %34 : vector<1x256x4xf32> to vector<256x4xf32>
    %36 = vector.shape_cast %33 : vector<256x4xf32> to vector<1x256x4xf32>
    tpu.vector_store %arg6[%c0_16, %c0_17, %c0_18], %36 {strides = array<i32>} : memref<1x256x4xf32, #tpu.memory_space<vmem>>, vector<1x256x4xf32>,
    return
  }
  func.func @transform_0(%arg0: i32) -> (i32, i32, i32) {
    %c0_i32 = arith.constant 0 : i32
    %c0_i32_0 = arith.constant 0 : i32
    %c0_i32_1 = arith.constant 0 : i32
    return %arg0, %c0_i32, %c0_i32_0 : i32, i32, i32
  }
  func.func @transform_1(%arg0: i32) -> (i32, i32) {
    %c0_i32 = arith.constant 0 : i32
    %c0_i32_0 = arith.constant 0 : i32
    %c0_i32_1 = arith.constant 0 : i32
    return %c0_i32, %c0_i32_0 : i32, i32
  }
  func.func @transform_2(%arg0: i32) -> (i32, i32) {
    %c0_i32 = arith.constant 0 : i32
    %c0_i32_0 = arith.constant 0 : i32
    %c0_i32_1 = arith.constant 0 : i32
    return %c0_i32, %c0_i32_0 : i32, i32
  }
  func.func @transform_3(%arg0: i32) -> (i32, i32) {
    %c0_i32 = arith.constant 0 : i32
    %c0_i32_0 = arith.constant 0 : i32
    %c0_i32_1 = arith.constant 0 : i32
    return %c0_i32, %c0_i32_0 : i32, i32
  }
  func.func @transform_4(%arg0: i32) -> (i32, i32) {
    %c0_i32 = arith.constant 0 : i32
    %c0_i32_0 = arith.constant 0 : i32
    %c0_i32_1 = arith.constant 0 : i32
    return %c0_i32, %c0_i32_0 : i32, i32
  }
  func.func @transform_5(%arg0: i32) -> (i32, i32, i32) {
    %c0_i32 = arith.constant 0 : i32
    %c0_i32_0 = arith.constant 0 : i32
    %c0_i32_1 = arith.constant 0 : i32
    return %arg0, %c0_i32, %c0_i32_0 : i32, i32, i32
  }
}

module attributes {stable_mosaic.version = 11 : i64} {
  func.func @_matmul_relu_gn_kernel(%arg0: i32, %arg1: memref<1x64x64xf32, #tpu.memory_space<vmem>>, %arg2: memref<64x16xf32, #tpu.memory_space<vmem>>, %arg3: memref<1x16xf32, #tpu.memory_space<vmem>>, %arg4: memref<1x16xf32, #tpu.memory_space<vmem>>, %arg5: memref<1x16xf32, #tpu.memory_space<vmem>>, %arg6: memref<1x64x16xf32, #tpu.memory_space<vmem>>) attributes {dimension_semantics = [#tpu.dimension_semantics<parallel>], iteration_bounds = array<i64: 2>, scalar_prefetch = 0 : i64, scratch_operands = 0 : i64, tpu.core_type = #tpu.core_type<tc>, window_params = [{transform_indices = @transform_0, window_bounds = array<i64: 1, 64, 64>}, {pipeline_mode = #tpu.pipeline_mode<synchronous>, transform_indices = @transform_1, window_bounds = array<i64: 64, 16>}, {pipeline_mode = #tpu.pipeline_mode<synchronous>, transform_indices = @transform_2, window_bounds = array<i64: 1, 16>}, {pipeline_mode = #tpu.pipeline_mode<synchronous>, transform_indices = @transform_3, window_bounds = array<i64: 1, 16>}, {pipeline_mode = #tpu.pipeline_mode<synchronous>, transform_indices = @transform_4, window_bounds = array<i64: 1, 16>}, {transform_indices = @transform_5, window_bounds = array<i64: 1, 64, 16>}]} {
    %c0 = arith.constant 0 : index
    %c0_0 = arith.constant 0 : index
    %c0_1 = arith.constant 0 : index
    %0 = vector.load %arg1[%c0, %c0_0, %c0_1] : memref<1x64x64xf32, #tpu.memory_space<vmem>>, vector<1x64x64xf32>
    %1 = vector.shape_cast %0 : vector<1x64x64xf32> to vector<64x64xf32>
    %c0_2 = arith.constant 0 : index
    %c0_3 = arith.constant 0 : index
    %2 = vector.load %arg2[%c0_2, %c0_3] : memref<64x16xf32, #tpu.memory_space<vmem>>, vector<64x16xf32>
    %cst = arith.constant dense<0.000000e+00> : vector<64x16xf32>
    %3 = tpu.matmul %1, %2, %cst {dimension_numbers = #tpu.dot_dimension_numbers<[1], [0], [0], [1], [0, 0, 1, 1], [], []>} : vector<64x64xf32>, vector<64x16xf32>, vector<64x16xf32> -> vector<64x16xf32>
    %c0_4 = arith.constant 0 : index
    %c0_5 = arith.constant 0 : index
    %4 = vector.load %arg3[%c0_4, %c0_5] : memref<1x16xf32, #tpu.memory_space<vmem>>, vector<1x16xf32>
    %5 = vector.broadcast %4 : vector<1x16xf32> to vector<64x16xf32>
    %6 = arith.addf %3, %5 : vector<64x16xf32>
    %cst_6 = arith.constant 0.000000e+00 : f32
    %7 = vector.broadcast %cst_6 : f32 to vector<64x16xf32>
    %8 = arith.maximumf %6, %7 : vector<64x16xf32>
    %9 = vector.shape_cast %8 : vector<64x16xf32> to vector<1x64x16xf32>
    %cst_7 = arith.constant dense<0.000000e+00> : vector<1xf32>
    %10 = vector.multi_reduction <add>, %9, %cst_7 [1, 2] : vector<1x64x16xf32> to vector<1xf32>
    %11 = vector.shape_cast %10 : vector<1xf32> to vector<1x1x1xf32>
    %12 = vector.extract %11[0, 0, 0] : f32 from vector<1x1x1xf32>
    %cst_8 = arith.constant 1.024000e+03 : f32
    %13 = arith.divf %12, %cst_8 : f32
    %14 = vector.broadcast %13 : f32 to vector<64x16xf32>
    %15 = arith.subf %8, %14 : vector<64x16xf32>
    %16 = arith.mulf %15, %15 : vector<64x16xf32>
    %17 = vector.shape_cast %16 : vector<64x16xf32> to vector<1x64x16xf32>
    %cst_9 = arith.constant dense<0.000000e+00> : vector<1xf32>
    %18 = vector.multi_reduction <add>, %17, %cst_9 [1, 2] : vector<1x64x16xf32> to vector<1xf32>
    %19 = vector.shape_cast %18 : vector<1xf32> to vector<1x1x1xf32>
    %20 = vector.extract %19[0, 0, 0] : f32 from vector<1x1x1xf32>
    %cst_10 = arith.constant 1.024000e+03 : f32
    %21 = arith.divf %20, %cst_10 : f32
    %22 = vector.broadcast %13 : f32 to vector<64x16xf32>
    %23 = arith.subf %8, %22 : vector<64x16xf32>
    %cst_11 = arith.constant 9.99999974E-6 : f32
    %24 = arith.addf %21, %cst_11 : f32
    %25 = math.rsqrt %24 : f32
    %26 = vector.broadcast %25 : f32 to vector<64x16xf32>
    %27 = arith.mulf %23, %26 : vector<64x16xf32>
    %c0_12 = arith.constant 0 : index
    %c0_13 = arith.constant 0 : index
    %28 = vector.load %arg4[%c0_12, %c0_13] : memref<1x16xf32, #tpu.memory_space<vmem>>, vector<1x16xf32>
    %29 = vector.broadcast %28 : vector<1x16xf32> to vector<64x16xf32>
    %30 = arith.mulf %27, %29 : vector<64x16xf32>
    %c0_14 = arith.constant 0 : index
    %c0_15 = arith.constant 0 : index
    %31 = vector.load %arg5[%c0_14, %c0_15] : memref<1x16xf32, #tpu.memory_space<vmem>>, vector<1x16xf32>
    %32 = vector.broadcast %31 : vector<1x16xf32> to vector<64x16xf32>
    %33 = arith.addf %30, %32 : vector<64x16xf32>
    %c0_16 = arith.constant 0 : index
    %c0_17 = arith.constant 0 : index
    %c0_18 = arith.constant 0 : index
    %34 = vector.load %arg6[%c0_16, %c0_17, %c0_18] : memref<1x64x16xf32, #tpu.memory_space<vmem>>, vector<1x64x16xf32>
    %35 = vector.shape_cast %34 : vector<1x64x16xf32> to vector<64x16xf32>
    %36 = vector.shape_cast %33 : vector<64x16xf32> to vector<1x64x16xf32>
    tpu.vector_store %arg6[%c0_16, %c0_17, %c0_18], %36 {strides = array<i32>} : memref<1x64x16xf32, #tpu.memory_space<vmem>>, vector<1x64x16xf32>,
    return
  }
  func.func @transform_0(%arg0: i32) -> (i32, i32, i32) {
    %c0_i32 = arith.constant 0 : i32
    %c0_i32_0 = arith.constant 0 : i32
    %c0_i32_1 = arith.constant 0 : i32
    return %arg0, %c0_i32, %c0_i32_0 : i32, i32, i32
  }
  func.func @transform_1(%arg0: i32) -> (i32, i32) {
    %c0_i32 = arith.constant 0 : i32
    %c0_i32_0 = arith.constant 0 : i32
    %c0_i32_1 = arith.constant 0 : i32
    return %c0_i32, %c0_i32_0 : i32, i32
  }
  func.func @transform_2(%arg0: i32) -> (i32, i32) {
    %c0_i32 = arith.constant 0 : i32
    %c0_i32_0 = arith.constant 0 : i32
    %c0_i32_1 = arith.constant 0 : i32
    return %c0_i32, %c0_i32_0 : i32, i32
  }
  func.func @transform_3(%arg0: i32) -> (i32, i32) {
    %c0_i32 = arith.constant 0 : i32
    %c0_i32_0 = arith.constant 0 : i32
    %c0_i32_1 = arith.constant 0 : i32
    return %c0_i32, %c0_i32_0 : i32, i32
  }
  func.func @transform_4(%arg0: i32) -> (i32, i32) {
    %c0_i32 = arith.constant 0 : i32
    %c0_i32_0 = arith.constant 0 : i32
    %c0_i32_1 = arith.constant 0 : i32
    return %c0_i32, %c0_i32_0 : i32, i32
  }
  func.func @transform_5(%arg0: i32) -> (i32, i32, i32) {
    %c0_i32 = arith.constant 0 : i32
    %c0_i32_0 = arith.constant 0 : i32
    %c0_i32_1 = arith.constant 0 : i32
    return %arg0, %c0_i32, %c0_i32_0 : i32, i32, i32
  }
}

module attributes {stable_mosaic.version = 11 : i64} {
  func.func @_matmul_relu_gn_kernel(%arg0: i32, %arg1: memref<1x16x256xf32, #tpu.memory_space<vmem>>, %arg2: memref<256x32xf32, #tpu.memory_space<vmem>>, %arg3: memref<1x32xf32, #tpu.memory_space<vmem>>, %arg4: memref<1x32xf32, #tpu.memory_space<vmem>>, %arg5: memref<1x32xf32, #tpu.memory_space<vmem>>, %arg6: memref<1x16x32xf32, #tpu.memory_space<vmem>>) attributes {dimension_semantics = [#tpu.dimension_semantics<parallel>], iteration_bounds = array<i64: 2>, scalar_prefetch = 0 : i64, scratch_operands = 0 : i64, tpu.core_type = #tpu.core_type<tc>, window_params = [{transform_indices = @transform_0, window_bounds = array<i64: 1, 16, 256>}, {pipeline_mode = #tpu.pipeline_mode<synchronous>, transform_indices = @transform_1, window_bounds = array<i64: 256, 32>}, {pipeline_mode = #tpu.pipeline_mode<synchronous>, transform_indices = @transform_2, window_bounds = array<i64: 1, 32>}, {pipeline_mode = #tpu.pipeline_mode<synchronous>, transform_indices = @transform_3, window_bounds = array<i64: 1, 32>}, {pipeline_mode = #tpu.pipeline_mode<synchronous>, transform_indices = @transform_4, window_bounds = array<i64: 1, 32>}, {transform_indices = @transform_5, window_bounds = array<i64: 1, 16, 32>}]} {
    %c0 = arith.constant 0 : index
    %c0_0 = arith.constant 0 : index
    %c0_1 = arith.constant 0 : index
    %0 = vector.load %arg1[%c0, %c0_0, %c0_1] : memref<1x16x256xf32, #tpu.memory_space<vmem>>, vector<1x16x256xf32>
    %1 = vector.shape_cast %0 : vector<1x16x256xf32> to vector<16x256xf32>
    %c0_2 = arith.constant 0 : index
    %c0_3 = arith.constant 0 : index
    %2 = vector.load %arg2[%c0_2, %c0_3] : memref<256x32xf32, #tpu.memory_space<vmem>>, vector<256x32xf32>
    %cst = arith.constant dense<0.000000e+00> : vector<16x32xf32>
    %3 = tpu.matmul %1, %2, %cst {dimension_numbers = #tpu.dot_dimension_numbers<[1], [0], [0], [1], [0, 0, 1, 1], [], []>} : vector<16x256xf32>, vector<256x32xf32>, vector<16x32xf32> -> vector<16x32xf32>
    %c0_4 = arith.constant 0 : index
    %c0_5 = arith.constant 0 : index
    %4 = vector.load %arg3[%c0_4, %c0_5] : memref<1x32xf32, #tpu.memory_space<vmem>>, vector<1x32xf32>
    %5 = vector.broadcast %4 : vector<1x32xf32> to vector<16x32xf32>
    %6 = arith.addf %3, %5 : vector<16x32xf32>
    %cst_6 = arith.constant 0.000000e+00 : f32
    %7 = vector.broadcast %cst_6 : f32 to vector<16x32xf32>
    %8 = arith.maximumf %6, %7 : vector<16x32xf32>
    %9 = vector.shape_cast %8 : vector<16x32xf32> to vector<1x16x32xf32>
    %cst_7 = arith.constant dense<0.000000e+00> : vector<1xf32>
    %10 = vector.multi_reduction <add>, %9, %cst_7 [1, 2] : vector<1x16x32xf32> to vector<1xf32>
    %11 = vector.shape_cast %10 : vector<1xf32> to vector<1x1x1xf32>
    %12 = vector.extract %11[0, 0, 0] : f32 from vector<1x1x1xf32>
    %cst_8 = arith.constant 5.120000e+02 : f32
    %13 = arith.divf %12, %cst_8 : f32
    %14 = vector.broadcast %13 : f32 to vector<16x32xf32>
    %15 = arith.subf %8, %14 : vector<16x32xf32>
    %16 = arith.mulf %15, %15 : vector<16x32xf32>
    %17 = vector.shape_cast %16 : vector<16x32xf32> to vector<1x16x32xf32>
    %cst_9 = arith.constant dense<0.000000e+00> : vector<1xf32>
    %18 = vector.multi_reduction <add>, %17, %cst_9 [1, 2] : vector<1x16x32xf32> to vector<1xf32>
    %19 = vector.shape_cast %18 : vector<1xf32> to vector<1x1x1xf32>
    %20 = vector.extract %19[0, 0, 0] : f32 from vector<1x1x1xf32>
    %cst_10 = arith.constant 5.120000e+02 : f32
    %21 = arith.divf %20, %cst_10 : f32
    %22 = vector.broadcast %13 : f32 to vector<16x32xf32>
    %23 = arith.subf %8, %22 : vector<16x32xf32>
    %cst_11 = arith.constant 9.99999974E-6 : f32
    %24 = arith.addf %21, %cst_11 : f32
    %25 = math.rsqrt %24 : f32
    %26 = vector.broadcast %25 : f32 to vector<16x32xf32>
    %27 = arith.mulf %23, %26 : vector<16x32xf32>
    %c0_12 = arith.constant 0 : index
    %c0_13 = arith.constant 0 : index
    %28 = vector.load %arg4[%c0_12, %c0_13] : memref<1x32xf32, #tpu.memory_space<vmem>>, vector<1x32xf32>
    %29 = vector.broadcast %28 : vector<1x32xf32> to vector<16x32xf32>
    %30 = arith.mulf %27, %29 : vector<16x32xf32>
    %c0_14 = arith.constant 0 : index
    %c0_15 = arith.constant 0 : index
    %31 = vector.load %arg5[%c0_14, %c0_15] : memref<1x32xf32, #tpu.memory_space<vmem>>, vector<1x32xf32>
    %32 = vector.broadcast %31 : vector<1x32xf32> to vector<16x32xf32>
    %33 = arith.addf %30, %32 : vector<16x32xf32>
    %c0_16 = arith.constant 0 : index
    %c0_17 = arith.constant 0 : index
    %c0_18 = arith.constant 0 : index
    %34 = vector.load %arg6[%c0_16, %c0_17, %c0_18] : memref<1x16x32xf32, #tpu.memory_space<vmem>>, vector<1x16x32xf32>
    %35 = vector.shape_cast %34 : vector<1x16x32xf32> to vector<16x32xf32>
    %36 = vector.shape_cast %33 : vector<16x32xf32> to vector<1x16x32xf32>
    tpu.vector_store %arg6[%c0_16, %c0_17, %c0_18], %36 {strides = array<i32>} : memref<1x16x32xf32, #tpu.memory_space<vmem>>, vector<1x16x32xf32>,
    return
  }
  func.func @transform_0(%arg0: i32) -> (i32, i32, i32) {
    %c0_i32 = arith.constant 0 : i32
    %c0_i32_0 = arith.constant 0 : i32
    %c0_i32_1 = arith.constant 0 : i32
    return %arg0, %c0_i32, %c0_i32_0 : i32, i32, i32
  }
  func.func @transform_1(%arg0: i32) -> (i32, i32) {
    %c0_i32 = arith.constant 0 : i32
    %c0_i32_0 = arith.constant 0 : i32
    %c0_i32_1 = arith.constant 0 : i32
    return %c0_i32, %c0_i32_0 : i32, i32
  }
  func.func @transform_2(%arg0: i32) -> (i32, i32) {
    %c0_i32 = arith.constant 0 : i32
    %c0_i32_0 = arith.constant 0 : i32
    %c0_i32_1 = arith.constant 0 : i32
    return %c0_i32, %c0_i32_0 : i32, i32
  }
  func.func @transform_3(%arg0: i32) -> (i32, i32) {
    %c0_i32 = arith.constant 0 : i32
    %c0_i32_0 = arith.constant 0 : i32
    %c0_i32_1 = arith.constant 0 : i32
    return %c0_i32, %c0_i32_0 : i32, i32
  }
  func.func @transform_4(%arg0: i32) -> (i32, i32) {
    %c0_i32 = arith.constant 0 : i32
    %c0_i32_0 = arith.constant 0 : i32
    %c0_i32_1 = arith.constant 0 : i32
    return %c0_i32, %c0_i32_0 : i32, i32
  }
  func.func @transform_5(%arg0: i32) -> (i32, i32, i32) {
    %c0_i32 = arith.constant 0 : i32
    %c0_i32_0 = arith.constant 0 : i32
    %c0_i32_1 = arith.constant 0 : i32
    return %arg0, %c0_i32, %c0_i32_0 : i32, i32, i32
  }
}

module attributes {stable_mosaic.version = 11 : i64} {
  func.func @_mu_logvar_sample_kernel(%arg0: i32, %arg1: memref<1x4x512xf32, #tpu.memory_space<vmem>>, %arg2: memref<512x16xf32, #tpu.memory_space<vmem>>, %arg3: memref<512x16xf32, #tpu.memory_space<vmem>>, %arg4: memref<1x16xf32, #tpu.memory_space<vmem>>, %arg5: memref<1x16xf32, #tpu.memory_space<vmem>>, %arg6: memref<1x4x16xf32, #tpu.memory_space<vmem>>, %arg7: memref<1x4x16xf32, #tpu.memory_space<vmem>>, %arg8: memref<1x4x16xf32, #tpu.memory_space<vmem>>, %arg9: memref<1x4x16xf32, #tpu.memory_space<vmem>>) attributes {dimension_semantics = [#tpu.dimension_semantics<parallel>], iteration_bounds = array<i64: 2>, scalar_prefetch = 0 : i64, scratch_operands = 0 : i64, tpu.core_type = #tpu.core_type<tc>, window_params = [{transform_indices = @transform_0, window_bounds = array<i64: 1, 4, 512>}, {pipeline_mode = #tpu.pipeline_mode<synchronous>, transform_indices = @transform_1, window_bounds = array<i64: 512, 16>}, {pipeline_mode = #tpu.pipeline_mode<synchronous>, transform_indices = @transform_2, window_bounds = array<i64: 512, 16>}, {pipeline_mode = #tpu.pipeline_mode<synchronous>, transform_indices = @transform_3, window_bounds = array<i64: 1, 16>}, {pipeline_mode = #tpu.pipeline_mode<synchronous>, transform_indices = @transform_4, window_bounds = array<i64: 1, 16>}, {transform_indices = @transform_5, window_bounds = array<i64: 1, 4, 16>}, {transform_indices = @transform_6, window_bounds = array<i64: 1, 4, 16>}, {transform_indices = @transform_7, window_bounds = array<i64: 1, 4, 16>}, {transform_indices = @transform_8, window_bounds = array<i64: 1, 4, 16>}]} {
    %c0 = arith.constant 0 : index
    %c0_0 = arith.constant 0 : index
    %c0_1 = arith.constant 0 : index
    %0 = vector.load %arg1[%c0, %c0_0, %c0_1] : memref<1x4x512xf32, #tpu.memory_space<vmem>>, vector<1x4x512xf32>
    %1 = vector.shape_cast %0 : vector<1x4x512xf32> to vector<4x512xf32>
    %c0_2 = arith.constant 0 : index
    %c0_3 = arith.constant 0 : index
    %2 = vector.load %arg2[%c0_2, %c0_3] : memref<512x16xf32, #tpu.memory_space<vmem>>, vector<512x16xf32>
    %cst = arith.constant dense<0.000000e+00> : vector<4x16xf32>
    %3 = tpu.matmul %1, %2, %cst {dimension_numbers = #tpu.dot_dimension_numbers<[1], [0], [0], [1], [0, 0, 1, 1], [], []>} : vector<4x512xf32>, vector<512x16xf32>, vector<4x16xf32> -> vector<4x16xf32>
    %c0_4 = arith.constant 0 : index
    %c0_5 = arith.constant 0 : index
    %4 = vector.load %arg4[%c0_4, %c0_5] : memref<1x16xf32, #tpu.memory_space<vmem>>, vector<1x16xf32>
    %5 = vector.broadcast %4 : vector<1x16xf32> to vector<4x16xf32>
    %6 = arith.addf %3, %5 : vector<4x16xf32>
    %c0_6 = arith.constant 0 : index
    %c0_7 = arith.constant 0 : index
    %7 = vector.load %arg3[%c0_6, %c0_7] : memref<512x16xf32, #tpu.memory_space<vmem>>, vector<512x16xf32>
    %cst_8 = arith.constant dense<0.000000e+00> : vector<4x16xf32>
    %8 = tpu.matmul %1, %7, %cst_8 {dimension_numbers = #tpu.dot_dimension_numbers<[1], [0], [0], [1], [0, 0, 1, 1], [], []>} : vector<4x512xf32>, vector<512x16xf32>, vector<4x16xf32> -> vector<4x16xf32>
    %c0_9 = arith.constant 0 : index
    %c0_10 = arith.constant 0 : index
    %9 = vector.load %arg5[%c0_9, %c0_10] : memref<1x16xf32, #tpu.memory_space<vmem>>, vector<1x16xf32>
    %10 = vector.broadcast %9 : vector<1x16xf32> to vector<4x16xf32>
    %11 = arith.addf %8, %10 : vector<4x16xf32>
    %c0_11 = arith.constant 0 : index
    %c0_12 = arith.constant 0 : index
    %c0_13 = arith.constant 0 : index
    %12 = vector.load %arg7[%c0_11, %c0_12, %c0_13] : memref<1x4x16xf32, #tpu.memory_space<vmem>>, vector<1x4x16xf32>
    %13 = vector.shape_cast %12 : vector<1x4x16xf32> to vector<4x16xf32>
    %14 = vector.shape_cast %6 : vector<4x16xf32> to vector<1x4x16xf32>
    tpu.vector_store %arg7[%c0_11, %c0_12, %c0_13], %14 {strides = array<i32>} : memref<1x4x16xf32, #tpu.memory_space<vmem>>, vector<1x4x16xf32>,
    %c0_14 = arith.constant 0 : index
    %c0_15 = arith.constant 0 : index
    %c0_16 = arith.constant 0 : index
    %15 = vector.load %arg8[%c0_14, %c0_15, %c0_16] : memref<1x4x16xf32, #tpu.memory_space<vmem>>, vector<1x4x16xf32>
    %16 = vector.shape_cast %15 : vector<1x4x16xf32> to vector<4x16xf32>
    %17 = vector.shape_cast %11 : vector<4x16xf32> to vector<1x4x16xf32>
    tpu.vector_store %arg8[%c0_14, %c0_15, %c0_16], %17 {strides = array<i32>} : memref<1x4x16xf32, #tpu.memory_space<vmem>>, vector<1x4x16xf32>,
    %c0_17 = arith.constant 0 : index
    %c0_18 = arith.constant 0 : index
    %c0_19 = arith.constant 0 : index
    %18 = vector.load %arg6[%c0_17, %c0_18, %c0_19] : memref<1x4x16xf32, #tpu.memory_space<vmem>>, vector<1x4x16xf32>
    %19 = vector.shape_cast %18 : vector<1x4x16xf32> to vector<4x16xf32>
    %cst_20 = arith.constant 5.000000e-01 : f32
    %20 = vector.broadcast %cst_20 : f32 to vector<4x16xf32>
    %21 = arith.mulf %20, %11 : vector<4x16xf32>
    %22 = math.exp %21 : vector<4x16xf32>
    %23 = arith.mulf %19, %22 : vector<4x16xf32>
    %24 = arith.addf %6, %23 : vector<4x16xf32>
    %c0_21 = arith.constant 0 : index
    %c0_22 = arith.constant 0 : index
    %c0_23 = arith.constant 0 : index
    %25 = vector.load %arg9[%c0_21, %c0_22, %c0_23] : memref<1x4x16xf32, #tpu.memory_space<vmem>>, vector<1x4x16xf32>
    %26 = vector.shape_cast %25 : vector<1x4x16xf32> to vector<4x16xf32>
    %27 = vector.shape_cast %24 : vector<4x16xf32> to vector<1x4x16xf32>
    tpu.vector_store %arg9[%c0_21, %c0_22, %c0_23], %27 {strides = array<i32>} : memref<1x4x16xf32, #tpu.memory_space<vmem>>, vector<1x4x16xf32>,
    return
  }
  func.func @transform_0(%arg0: i32) -> (i32, i32, i32) {
    %c0_i32 = arith.constant 0 : i32
    %c0_i32_0 = arith.constant 0 : i32
    %c0_i32_1 = arith.constant 0 : i32
    return %arg0, %c0_i32, %c0_i32_0 : i32, i32, i32
  }
  func.func @transform_1(%arg0: i32) -> (i32, i32) {
    %c0_i32 = arith.constant 0 : i32
    %c0_i32_0 = arith.constant 0 : i32
    %c0_i32_1 = arith.constant 0 : i32
    return %c0_i32, %c0_i32_0 : i32, i32
  }
  func.func @transform_2(%arg0: i32) -> (i32, i32) {
    %c0_i32 = arith.constant 0 : i32
    %c0_i32_0 = arith.constant 0 : i32
    %c0_i32_1 = arith.constant 0 : i32
    return %c0_i32, %c0_i32_0 : i32, i32
  }
  func.func @transform_3(%arg0: i32) -> (i32, i32) {
    %c0_i32 = arith.constant 0 : i32
    %c0_i32_0 = arith.constant 0 : i32
    %c0_i32_1 = arith.constant 0 : i32
    return %c0_i32, %c0_i32_0 : i32, i32
  }
  func.func @transform_4(%arg0: i32) -> (i32, i32) {
    %c0_i32 = arith.constant 0 : i32
    %c0_i32_0 = arith.constant 0 : i32
    %c0_i32_1 = arith.constant 0 : i32
    return %c0_i32, %c0_i32_0 : i32, i32
  }
  func.func @transform_5(%arg0: i32) -> (i32, i32, i32) {
    %c0_i32 = arith.constant 0 : i32
    %c0_i32_0 = arith.constant 0 : i32
    %c0_i32_1 = arith.constant 0 : i32
    return %arg0, %c0_i32, %c0_i32_0 : i32, i32, i32
  }
  func.func @transform_6(%arg0: i32) -> (i32, i32, i32) {
    %c0_i32 = arith.constant 0 : i32
    %c0_i32_0 = arith.constant 0 : i32
    %c0_i32_1 = arith.constant 0 : i32
    return %arg0, %c0_i32, %c0_i32_0 : i32, i32, i32
  }
  func.func @transform_7(%arg0: i32) -> (i32, i32, i32) {
    %c0_i32 = arith.constant 0 : i32
    %c0_i32_0 = arith.constant 0 : i32
    %c0_i32_1 = arith.constant 0 : i32
    return %arg0, %c0_i32, %c0_i32_0 : i32, i32, i32
  }
  func.func @transform_8(%arg0: i32) -> (i32, i32, i32) {
    %c0_i32 = arith.constant 0 : i32
    %c0_i32_0 = arith.constant 0 : i32
    %c0_i32_1 = arith.constant 0 : i32
    return %arg0, %c0_i32, %c0_i32_0 : i32, i32, i32
  }
}

module attributes {stable_mosaic.version = 11 : i64} {
  func.func @_matmul_relu_gn_kernel(%arg0: i32, %arg1: memref<1x4x400xf32, #tpu.memory_space<vmem>>, %arg2: memref<400x128xf32, #tpu.memory_space<vmem>>, %arg3: memref<1x128xf32, #tpu.memory_space<vmem>>, %arg4: memref<1x128xf32, #tpu.memory_space<vmem>>, %arg5: memref<1x128xf32, #tpu.memory_space<vmem>>, %arg6: memref<1x4x128xf32, #tpu.memory_space<vmem>>) attributes {dimension_semantics = [#tpu.dimension_semantics<parallel>], iteration_bounds = array<i64: 2>, scalar_prefetch = 0 : i64, scratch_operands = 0 : i64, tpu.core_type = #tpu.core_type<tc>, window_params = [{transform_indices = @transform_0, window_bounds = array<i64: 1, 4, 400>}, {pipeline_mode = #tpu.pipeline_mode<synchronous>, transform_indices = @transform_1, window_bounds = array<i64: 400, 128>}, {pipeline_mode = #tpu.pipeline_mode<synchronous>, transform_indices = @transform_2, window_bounds = array<i64: 1, 128>}, {pipeline_mode = #tpu.pipeline_mode<synchronous>, transform_indices = @transform_3, window_bounds = array<i64: 1, 128>}, {pipeline_mode = #tpu.pipeline_mode<synchronous>, transform_indices = @transform_4, window_bounds = array<i64: 1, 128>}, {transform_indices = @transform_5, window_bounds = array<i64: 1, 4, 128>}]} {
    %c0 = arith.constant 0 : index
    %c0_0 = arith.constant 0 : index
    %c0_1 = arith.constant 0 : index
    %0 = vector.load %arg1[%c0, %c0_0, %c0_1] : memref<1x4x400xf32, #tpu.memory_space<vmem>>, vector<1x4x400xf32>
    %1 = vector.shape_cast %0 : vector<1x4x400xf32> to vector<4x400xf32>
    %c0_2 = arith.constant 0 : index
    %c0_3 = arith.constant 0 : index
    %2 = vector.load %arg2[%c0_2, %c0_3] : memref<400x128xf32, #tpu.memory_space<vmem>>, vector<400x128xf32>
    %cst = arith.constant dense<0.000000e+00> : vector<4x128xf32>
    %3 = tpu.matmul %1, %2, %cst {dimension_numbers = #tpu.dot_dimension_numbers<[1], [0], [0], [1], [0, 0, 1, 1], [], []>} : vector<4x400xf32>, vector<400x128xf32>, vector<4x128xf32> -> vector<4x128xf32>
    %c0_4 = arith.constant 0 : index
    %c0_5 = arith.constant 0 : index
    %4 = vector.load %arg3[%c0_4, %c0_5] : memref<1x128xf32, #tpu.memory_space<vmem>>, vector<1x128xf32>
    %5 = vector.broadcast %4 : vector<1x128xf32> to vector<4x128xf32>
    %6 = arith.addf %3, %5 : vector<4x128xf32>
    %cst_6 = arith.constant 0.000000e+00 : f32
    %7 = vector.broadcast %cst_6 : f32 to vector<4x128xf32>
    %8 = arith.maximumf %6, %7 : vector<4x128xf32>
    %9 = vector.shape_cast %8 : vector<4x128xf32> to vector<1x4x128xf32>
    %cst_7 = arith.constant dense<0.000000e+00> : vector<1xf32>
    %10 = vector.multi_reduction <add>, %9, %cst_7 [1, 2] : vector<1x4x128xf32> to vector<1xf32>
    %11 = vector.shape_cast %10 : vector<1xf32> to vector<1x1x1xf32>
    %12 = vector.extract %11[0, 0, 0] : f32 from vector<1x1x1xf32>
    %cst_8 = arith.constant 5.120000e+02 : f32
    %13 = arith.divf %12, %cst_8 : f32
    %14 = vector.broadcast %13 : f32 to vector<4x128xf32>
    %15 = arith.subf %8, %14 : vector<4x128xf32>
    %16 = arith.mulf %15, %15 : vector<4x128xf32>
    %17 = vector.shape_cast %16 : vector<4x128xf32> to vector<1x4x128xf32>
    %cst_9 = arith.constant dense<0.000000e+00> : vector<1xf32>
    %18 = vector.multi_reduction <add>, %17, %cst_9 [1, 2] : vector<1x4x128xf32> to vector<1xf32>
    %19 = vector.shape_cast %18 : vector<1xf32> to vector<1x1x1xf32>
    %20 = vector.extract %19[0, 0, 0] : f32 from vector<1x1x1xf32>
    %cst_10 = arith.constant 5.120000e+02 : f32
    %21 = arith.divf %20, %cst_10 : f32
    %22 = vector.broadcast %13 : f32 to vector<4x128xf32>
    %23 = arith.subf %8, %22 : vector<4x128xf32>
    %cst_11 = arith.constant 9.99999974E-6 : f32
    %24 = arith.addf %21, %cst_11 : f32
    %25 = math.rsqrt %24 : f32
    %26 = vector.broadcast %25 : f32 to vector<4x128xf32>
    %27 = arith.mulf %23, %26 : vector<4x128xf32>
    %c0_12 = arith.constant 0 : index
    %c0_13 = arith.constant 0 : index
    %28 = vector.load %arg4[%c0_12, %c0_13] : memref<1x128xf32, #tpu.memory_space<vmem>>, vector<1x128xf32>
    %29 = vector.broadcast %28 : vector<1x128xf32> to vector<4x128xf32>
    %30 = arith.mulf %27, %29 : vector<4x128xf32>
    %c0_14 = arith.constant 0 : index
    %c0_15 = arith.constant 0 : index
    %31 = vector.load %arg5[%c0_14, %c0_15] : memref<1x128xf32, #tpu.memory_space<vmem>>, vector<1x128xf32>
    %32 = vector.broadcast %31 : vector<1x128xf32> to vector<4x128xf32>
    %33 = arith.addf %30, %32 : vector<4x128xf32>
    %c0_16 = arith.constant 0 : index
    %c0_17 = arith.constant 0 : index
    %c0_18 = arith.constant 0 : index
    %34 = vector.load %arg6[%c0_16, %c0_17, %c0_18] : memref<1x4x128xf32, #tpu.memory_space<vmem>>, vector<1x4x128xf32>
    %35 = vector.shape_cast %34 : vector<1x4x128xf32> to vector<4x128xf32>
    %36 = vector.shape_cast %33 : vector<4x128xf32> to vector<1x4x128xf32>
    tpu.vector_store %arg6[%c0_16, %c0_17, %c0_18], %36 {strides = array<i32>} : memref<1x4x128xf32, #tpu.memory_space<vmem>>, vector<1x4x128xf32>,
    return
  }
  func.func @transform_0(%arg0: i32) -> (i32, i32, i32) {
    %c0_i32 = arith.constant 0 : i32
    %c0_i32_0 = arith.constant 0 : i32
    %c0_i32_1 = arith.constant 0 : i32
    return %arg0, %c0_i32, %c0_i32_0 : i32, i32, i32
  }
  func.func @transform_1(%arg0: i32) -> (i32, i32) {
    %c0_i32 = arith.constant 0 : i32
    %c0_i32_0 = arith.constant 0 : i32
    %c0_i32_1 = arith.constant 0 : i32
    return %c0_i32, %c0_i32_0 : i32, i32
  }
  func.func @transform_2(%arg0: i32) -> (i32, i32) {
    %c0_i32 = arith.constant 0 : i32
    %c0_i32_0 = arith.constant 0 : i32
    %c0_i32_1 = arith.constant 0 : i32
    return %c0_i32, %c0_i32_0 : i32, i32
  }
  func.func @transform_3(%arg0: i32) -> (i32, i32) {
    %c0_i32 = arith.constant 0 : i32
    %c0_i32_0 = arith.constant 0 : i32
    %c0_i32_1 = arith.constant 0 : i32
    return %c0_i32, %c0_i32_0 : i32, i32
  }
  func.func @transform_4(%arg0: i32) -> (i32, i32) {
    %c0_i32 = arith.constant 0 : i32
    %c0_i32_0 = arith.constant 0 : i32
    %c0_i32_1 = arith.constant 0 : i32
    return %c0_i32, %c0_i32_0 : i32, i32
  }
  func.func @transform_5(%arg0: i32) -> (i32, i32, i32) {
    %c0_i32 = arith.constant 0 : i32
    %c0_i32_0 = arith.constant 0 : i32
    %c0_i32_1 = arith.constant 0 : i32
    return %arg0, %c0_i32, %c0_i32_0 : i32, i32, i32
  }
}

module attributes {stable_mosaic.version = 11 : i64} {
  func.func @_matmul_relu_gn_kernel(%arg0: i32, %arg1: memref<1x16x800xf32, #tpu.memory_space<vmem>>, %arg2: memref<800x256xf32, #tpu.memory_space<vmem>>, %arg3: memref<1x256xf32, #tpu.memory_space<vmem>>, %arg4: memref<1x256xf32, #tpu.memory_space<vmem>>, %arg5: memref<1x256xf32, #tpu.memory_space<vmem>>, %arg6: memref<1x16x256xf32, #tpu.memory_space<vmem>>) attributes {dimension_semantics = [#tpu.dimension_semantics<parallel>], iteration_bounds = array<i64: 2>, scalar_prefetch = 0 : i64, scratch_operands = 0 : i64, tpu.core_type = #tpu.core_type<tc>, window_params = [{transform_indices = @transform_0, window_bounds = array<i64: 1, 16, 800>}, {pipeline_mode = #tpu.pipeline_mode<synchronous>, transform_indices = @transform_1, window_bounds = array<i64: 800, 256>}, {pipeline_mode = #tpu.pipeline_mode<synchronous>, transform_indices = @transform_2, window_bounds = array<i64: 1, 256>}, {pipeline_mode = #tpu.pipeline_mode<synchronous>, transform_indices = @transform_3, window_bounds = array<i64: 1, 256>}, {pipeline_mode = #tpu.pipeline_mode<synchronous>, transform_indices = @transform_4, window_bounds = array<i64: 1, 256>}, {transform_indices = @transform_5, window_bounds = array<i64: 1, 16, 256>}]} {
    %c0 = arith.constant 0 : index
    %c0_0 = arith.constant 0 : index
    %c0_1 = arith.constant 0 : index
    %0 = vector.load %arg1[%c0, %c0_0, %c0_1] : memref<1x16x800xf32, #tpu.memory_space<vmem>>, vector<1x16x800xf32>
    %1 = vector.shape_cast %0 : vector<1x16x800xf32> to vector<16x800xf32>
    %c0_2 = arith.constant 0 : index
    %c0_3 = arith.constant 0 : index
    %2 = vector.load %arg2[%c0_2, %c0_3] : memref<800x256xf32, #tpu.memory_space<vmem>>, vector<800x256xf32>
    %cst = arith.constant dense<0.000000e+00> : vector<16x256xf32>
    %3 = tpu.matmul %1, %2, %cst {dimension_numbers = #tpu.dot_dimension_numbers<[1], [0], [0], [1], [0, 0, 1, 1], [], []>} : vector<16x800xf32>, vector<800x256xf32>, vector<16x256xf32> -> vector<16x256xf32>
    %c0_4 = arith.constant 0 : index
    %c0_5 = arith.constant 0 : index
    %4 = vector.load %arg3[%c0_4, %c0_5] : memref<1x256xf32, #tpu.memory_space<vmem>>, vector<1x256xf32>
    %5 = vector.broadcast %4 : vector<1x256xf32> to vector<16x256xf32>
    %6 = arith.addf %3, %5 : vector<16x256xf32>
    %cst_6 = arith.constant 0.000000e+00 : f32
    %7 = vector.broadcast %cst_6 : f32 to vector<16x256xf32>
    %8 = arith.maximumf %6, %7 : vector<16x256xf32>
    %9 = vector.shape_cast %8 : vector<16x256xf32> to vector<1x16x256xf32>
    %cst_7 = arith.constant dense<0.000000e+00> : vector<1xf32>
    %10 = vector.multi_reduction <add>, %9, %cst_7 [1, 2] : vector<1x16x256xf32> to vector<1xf32>
    %11 = vector.shape_cast %10 : vector<1xf32> to vector<1x1x1xf32>
    %12 = vector.extract %11[0, 0, 0] : f32 from vector<1x1x1xf32>
    %cst_8 = arith.constant 4.096000e+03 : f32
    %13 = arith.divf %12, %cst_8 : f32
    %14 = vector.broadcast %13 : f32 to vector<16x256xf32>
    %15 = arith.subf %8, %14 : vector<16x256xf32>
    %16 = arith.mulf %15, %15 : vector<16x256xf32>
    %17 = vector.shape_cast %16 : vector<16x256xf32> to vector<1x16x256xf32>
    %cst_9 = arith.constant dense<0.000000e+00> : vector<1xf32>
    %18 = vector.multi_reduction <add>, %17, %cst_9 [1, 2] : vector<1x16x256xf32> to vector<1xf32>
    %19 = vector.shape_cast %18 : vector<1xf32> to vector<1x1x1xf32>
    %20 = vector.extract %19[0, 0, 0] : f32 from vector<1x1x1xf32>
    %cst_10 = arith.constant 4.096000e+03 : f32
    %21 = arith.divf %20, %cst_10 : f32
    %22 = vector.broadcast %13 : f32 to vector<16x256xf32>
    %23 = arith.subf %8, %22 : vector<16x256xf32>
    %cst_11 = arith.constant 9.99999974E-6 : f32
    %24 = arith.addf %21, %cst_11 : f32
    %25 = math.rsqrt %24 : f32
    %26 = vector.broadcast %25 : f32 to vector<16x256xf32>
    %27 = arith.mulf %23, %26 : vector<16x256xf32>
    %c0_12 = arith.constant 0 : index
    %c0_13 = arith.constant 0 : index
    %28 = vector.load %arg4[%c0_12, %c0_13] : memref<1x256xf32, #tpu.memory_space<vmem>>, vector<1x256xf32>
    %29 = vector.broadcast %28 : vector<1x256xf32> to vector<16x256xf32>
    %30 = arith.mulf %27, %29 : vector<16x256xf32>
    %c0_14 = arith.constant 0 : index
    %c0_15 = arith.constant 0 : index
    %31 = vector.load %arg5[%c0_14, %c0_15] : memref<1x256xf32, #tpu.memory_space<vmem>>, vector<1x256xf32>
    %32 = vector.broadcast %31 : vector<1x256xf32> to vector<16x256xf32>
    %33 = arith.addf %30, %32 : vector<16x256xf32>
    %c0_16 = arith.constant 0 : index
    %c0_17 = arith.constant 0 : index
    %c0_18 = arith.constant 0 : index
    %34 = vector.load %arg6[%c0_16, %c0_17, %c0_18] : memref<1x16x256xf32, #tpu.memory_space<vmem>>, vector<1x16x256xf32>
    %35 = vector.shape_cast %34 : vector<1x16x256xf32> to vector<16x256xf32>
    %36 = vector.shape_cast %33 : vector<16x256xf32> to vector<1x16x256xf32>
    tpu.vector_store %arg6[%c0_16, %c0_17, %c0_18], %36 {strides = array<i32>} : memref<1x16x256xf32, #tpu.memory_space<vmem>>, vector<1x16x256xf32>,
    return
  }
  func.func @transform_0(%arg0: i32) -> (i32, i32, i32) {
    %c0_i32 = arith.constant 0 : i32
    %c0_i32_0 = arith.constant 0 : i32
    %c0_i32_1 = arith.constant 0 : i32
    return %arg0, %c0_i32, %c0_i32_0 : i32, i32, i32
  }
  func.func @transform_1(%arg0: i32) -> (i32, i32) {
    %c0_i32 = arith.constant 0 : i32
    %c0_i32_0 = arith.constant 0 : i32
    %c0_i32_1 = arith.constant 0 : i32
    return %c0_i32, %c0_i32_0 : i32, i32
  }
  func.func @transform_2(%arg0: i32) -> (i32, i32) {
    %c0_i32 = arith.constant 0 : i32
    %c0_i32_0 = arith.constant 0 : i32
    %c0_i32_1 = arith.constant 0 : i32
    return %c0_i32, %c0_i32_0 : i32, i32
  }
  func.func @transform_3(%arg0: i32) -> (i32, i32) {
    %c0_i32 = arith.constant 0 : i32
    %c0_i32_0 = arith.constant 0 : i32
    %c0_i32_1 = arith.constant 0 : i32
    return %c0_i32, %c0_i32_0 : i32, i32
  }
  func.func @transform_4(%arg0: i32) -> (i32, i32) {
    %c0_i32 = arith.constant 0 : i32
    %c0_i32_0 = arith.constant 0 : i32
    %c0_i32_1 = arith.constant 0 : i32
    return %c0_i32, %c0_i32_0 : i32, i32
  }
  func.func @transform_5(%arg0: i32) -> (i32, i32, i32) {
    %c0_i32 = arith.constant 0 : i32
    %c0_i32_0 = arith.constant 0 : i32
    %c0_i32_1 = arith.constant 0 : i32
    return %arg0, %c0_i32, %c0_i32_0 : i32, i32, i32
  }
}

module attributes {stable_mosaic.version = 11 : i64} {
  func.func @_matmul_relu_gn_kernel(%arg0: i32, %arg1: memref<1x64x1600xf32, #tpu.memory_space<vmem>>, %arg2: memref<1600x128xf32, #tpu.memory_space<vmem>>, %arg3: memref<1x128xf32, #tpu.memory_space<vmem>>, %arg4: memref<1x128xf32, #tpu.memory_space<vmem>>, %arg5: memref<1x128xf32, #tpu.memory_space<vmem>>, %arg6: memref<1x64x128xf32, #tpu.memory_space<vmem>>) attributes {dimension_semantics = [#tpu.dimension_semantics<parallel>], iteration_bounds = array<i64: 2>, scalar_prefetch = 0 : i64, scratch_operands = 0 : i64, tpu.core_type = #tpu.core_type<tc>, window_params = [{transform_indices = @transform_0, window_bounds = array<i64: 1, 64, 1600>}, {pipeline_mode = #tpu.pipeline_mode<synchronous>, transform_indices = @transform_1, window_bounds = array<i64: 1600, 128>}, {pipeline_mode = #tpu.pipeline_mode<synchronous>, transform_indices = @transform_2, window_bounds = array<i64: 1, 128>}, {pipeline_mode = #tpu.pipeline_mode<synchronous>, transform_indices = @transform_3, window_bounds = array<i64: 1, 128>}, {pipeline_mode = #tpu.pipeline_mode<synchronous>, transform_indices = @transform_4, window_bounds = array<i64: 1, 128>}, {transform_indices = @transform_5, window_bounds = array<i64: 1, 64, 128>}]} {
    %c0 = arith.constant 0 : index
    %c0_0 = arith.constant 0 : index
    %c0_1 = arith.constant 0 : index
    %0 = vector.load %arg1[%c0, %c0_0, %c0_1] : memref<1x64x1600xf32, #tpu.memory_space<vmem>>, vector<1x64x1600xf32>
    %1 = vector.shape_cast %0 : vector<1x64x1600xf32> to vector<64x1600xf32>
    %c0_2 = arith.constant 0 : index
    %c0_3 = arith.constant 0 : index
    %2 = vector.load %arg2[%c0_2, %c0_3] : memref<1600x128xf32, #tpu.memory_space<vmem>>, vector<1600x128xf32>
    %cst = arith.constant dense<0.000000e+00> : vector<64x128xf32>
    %3 = tpu.matmul %1, %2, %cst {dimension_numbers = #tpu.dot_dimension_numbers<[1], [0], [0], [1], [0, 0, 1, 1], [], []>} : vector<64x1600xf32>, vector<1600x128xf32>, vector<64x128xf32> -> vector<64x128xf32>
    %c0_4 = arith.constant 0 : index
    %c0_5 = arith.constant 0 : index
    %4 = vector.load %arg3[%c0_4, %c0_5] : memref<1x128xf32, #tpu.memory_space<vmem>>, vector<1x128xf32>
    %5 = vector.broadcast %4 : vector<1x128xf32> to vector<64x128xf32>
    %6 = arith.addf %3, %5 : vector<64x128xf32>
    %cst_6 = arith.constant 0.000000e+00 : f32
    %7 = vector.broadcast %cst_6 : f32 to vector<64x128xf32>
    %8 = arith.maximumf %6, %7 : vector<64x128xf32>
    %9 = vector.shape_cast %8 : vector<64x128xf32> to vector<1x64x128xf32>
    %cst_7 = arith.constant dense<0.000000e+00> : vector<1xf32>
    %10 = vector.multi_reduction <add>, %9, %cst_7 [1, 2] : vector<1x64x128xf32> to vector<1xf32>
    %11 = vector.shape_cast %10 : vector<1xf32> to vector<1x1x1xf32>
    %12 = vector.extract %11[0, 0, 0] : f32 from vector<1x1x1xf32>
    %cst_8 = arith.constant 8.192000e+03 : f32
    %13 = arith.divf %12, %cst_8 : f32
    %14 = vector.broadcast %13 : f32 to vector<64x128xf32>
    %15 = arith.subf %8, %14 : vector<64x128xf32>
    %16 = arith.mulf %15, %15 : vector<64x128xf32>
    %17 = vector.shape_cast %16 : vector<64x128xf32> to vector<1x64x128xf32>
    %cst_9 = arith.constant dense<0.000000e+00> : vector<1xf32>
    %18 = vector.multi_reduction <add>, %17, %cst_9 [1, 2] : vector<1x64x128xf32> to vector<1xf32>
    %19 = vector.shape_cast %18 : vector<1xf32> to vector<1x1x1xf32>
    %20 = vector.extract %19[0, 0, 0] : f32 from vector<1x1x1xf32>
    %cst_10 = arith.constant 8.192000e+03 : f32
    %21 = arith.divf %20, %cst_10 : f32
    %22 = vector.broadcast %13 : f32 to vector<64x128xf32>
    %23 = arith.subf %8, %22 : vector<64x128xf32>
    %cst_11 = arith.constant 9.99999974E-6 : f32
    %24 = arith.addf %21, %cst_11 : f32
    %25 = math.rsqrt %24 : f32
    %26 = vector.broadcast %25 : f32 to vector<64x128xf32>
    %27 = arith.mulf %23, %26 : vector<64x128xf32>
    %c0_12 = arith.constant 0 : index
    %c0_13 = arith.constant 0 : index
    %28 = vector.load %arg4[%c0_12, %c0_13] : memref<1x128xf32, #tpu.memory_space<vmem>>, vector<1x128xf32>
    %29 = vector.broadcast %28 : vector<1x128xf32> to vector<64x128xf32>
    %30 = arith.mulf %27, %29 : vector<64x128xf32>
    %c0_14 = arith.constant 0 : index
    %c0_15 = arith.constant 0 : index
    %31 = vector.load %arg5[%c0_14, %c0_15] : memref<1x128xf32, #tpu.memory_space<vmem>>, vector<1x128xf32>
    %32 = vector.broadcast %31 : vector<1x128xf32> to vector<64x128xf32>
    %33 = arith.addf %30, %32 : vector<64x128xf32>
    %c0_16 = arith.constant 0 : index
    %c0_17 = arith.constant 0 : index
    %c0_18 = arith.constant 0 : index
    %34 = vector.load %arg6[%c0_16, %c0_17, %c0_18] : memref<1x64x128xf32, #tpu.memory_space<vmem>>, vector<1x64x128xf32>
    %35 = vector.shape_cast %34 : vector<1x64x128xf32> to vector<64x128xf32>
    %36 = vector.shape_cast %33 : vector<64x128xf32> to vector<1x64x128xf32>
    tpu.vector_store %arg6[%c0_16, %c0_17, %c0_18], %36 {strides = array<i32>} : memref<1x64x128xf32, #tpu.memory_space<vmem>>, vector<1x64x128xf32>,
    return
  }
  func.func @transform_0(%arg0: i32) -> (i32, i32, i32) {
    %c0_i32 = arith.constant 0 : i32
    %c0_i32_0 = arith.constant 0 : i32
    %c0_i32_1 = arith.constant 0 : i32
    return %arg0, %c0_i32, %c0_i32_0 : i32, i32, i32
  }
  func.func @transform_1(%arg0: i32) -> (i32, i32) {
    %c0_i32 = arith.constant 0 : i32
    %c0_i32_0 = arith.constant 0 : i32
    %c0_i32_1 = arith.constant 0 : i32
    return %c0_i32, %c0_i32_0 : i32, i32
  }
  func.func @transform_2(%arg0: i32) -> (i32, i32) {
    %c0_i32 = arith.constant 0 : i32
    %c0_i32_0 = arith.constant 0 : i32
    %c0_i32_1 = arith.constant 0 : i32
    return %c0_i32, %c0_i32_0 : i32, i32
  }
  func.func @transform_3(%arg0: i32) -> (i32, i32) {
    %c0_i32 = arith.constant 0 : i32
    %c0_i32_0 = arith.constant 0 : i32
    %c0_i32_1 = arith.constant 0 : i32
    return %c0_i32, %c0_i32_0 : i32, i32
  }
  func.func @transform_4(%arg0: i32) -> (i32, i32) {
    %c0_i32 = arith.constant 0 : i32
    %c0_i32_0 = arith.constant 0 : i32
    %c0_i32_1 = arith.constant 0 : i32
    return %c0_i32, %c0_i32_0 : i32, i32
  }
  func.func @transform_5(%arg0: i32) -> (i32, i32, i32) {
    %c0_i32 = arith.constant 0 : i32
    %c0_i32_0 = arith.constant 0 : i32
    %c0_i32_1 = arith.constant 0 : i32
    return %arg0, %c0_i32, %c0_i32_0 : i32, i32, i32
  }
}

module attributes {stable_mosaic.version = 11 : i64} {
  func.func @_matmul_act_kernel(%arg0: i32, %arg1: memref<1x256x800xf32, #tpu.memory_space<vmem>>, %arg2: memref<800x4xf32, #tpu.memory_space<vmem>>, %arg3: memref<1x4xf32, #tpu.memory_space<vmem>>, %arg4: memref<1x256x4xf32, #tpu.memory_space<vmem>>) attributes {dimension_semantics = [#tpu.dimension_semantics<parallel>], iteration_bounds = array<i64: 2>, scalar_prefetch = 0 : i64, scratch_operands = 0 : i64, tpu.core_type = #tpu.core_type<tc>, window_params = [{transform_indices = @transform_0, window_bounds = array<i64: 1, 256, 800>}, {pipeline_mode = #tpu.pipeline_mode<synchronous>, transform_indices = @transform_1, window_bounds = array<i64: 800, 4>}, {pipeline_mode = #tpu.pipeline_mode<synchronous>, transform_indices = @transform_2, window_bounds = array<i64: 1, 4>}, {transform_indices = @transform_3, window_bounds = array<i64: 1, 256, 4>}]} {
    %c0 = arith.constant 0 : index
    %c0_0 = arith.constant 0 : index
    %c0_1 = arith.constant 0 : index
    %0 = vector.load %arg1[%c0, %c0_0, %c0_1] : memref<1x256x800xf32, #tpu.memory_space<vmem>>, vector<1x256x800xf32>
    %1 = vector.shape_cast %0 : vector<1x256x800xf32> to vector<256x800xf32>
    %c0_2 = arith.constant 0 : index
    %c0_3 = arith.constant 0 : index
    %2 = vector.load %arg2[%c0_2, %c0_3] : memref<800x4xf32, #tpu.memory_space<vmem>>, vector<800x4xf32>
    %cst = arith.constant dense<0.000000e+00> : vector<256x4xf32>
    %3 = tpu.matmul %1, %2, %cst {dimension_numbers = #tpu.dot_dimension_numbers<[1], [0], [0], [1], [0, 0, 1, 1], [], []>} : vector<256x800xf32>, vector<800x4xf32>, vector<256x4xf32> -> vector<256x4xf32>
    %c0_4 = arith.constant 0 : index
    %c0_5 = arith.constant 0 : index
    %4 = vector.load %arg3[%c0_4, %c0_5] : memref<1x4xf32, #tpu.memory_space<vmem>>, vector<1x4xf32>
    %5 = vector.broadcast %4 : vector<1x4xf32> to vector<256x4xf32>
    %6 = arith.addf %3, %5 : vector<256x4xf32>
    %7 = arith.negf %6 : vector<256x4xf32>
    %8 = math.exp %7 : vector<256x4xf32>
    %cst_6 = arith.constant 1.000000e+00 : f32
    %9 = vector.broadcast %cst_6 : f32 to vector<256x4xf32>
    %10 = arith.addf %9, %8 : vector<256x4xf32>
    %11 = arith.divf %9, %10 : vector<256x4xf32>
    %c0_7 = arith.constant 0 : index
    %c0_8 = arith.constant 0 : index
    %c0_9 = arith.constant 0 : index
    %12 = vector.load %arg4[%c0_7, %c0_8, %c0_9] : memref<1x256x4xf32, #tpu.memory_space<vmem>>, vector<1x256x4xf32>
    %13 = vector.shape_cast %12 : vector<1x256x4xf32> to vector<256x4xf32>
    %14 = vector.shape_cast %11 : vector<256x4xf32> to vector<1x256x4xf32>
    tpu.vector_store %arg4[%c0_7, %c0_8, %c0_9], %14 {strides = array<i32>} : memref<1x256x4xf32, #tpu.memory_space<vmem>>, vector<1x256x4xf32>,
    return
  }
  func.func @transform_0(%arg0: i32) -> (i32, i32, i32) {
    %c0_i32 = arith.constant 0 : i32
    %c0_i32_0 = arith.constant 0 : i32
    %c0_i32_1 = arith.constant 0 : i32
    return %arg0, %c0_i32, %c0_i32_0 : i32, i32, i32
  }
  func.func @transform_1(%arg0: i32) -> (i32, i32) {
    %c0_i32 = arith.constant 0 : i32
    %c0_i32_0 = arith.constant 0 : i32
    %c0_i32_1 = arith.constant 0 : i32
    return %c0_i32, %c0_i32_0 : i32, i32
  }
  func.func @transform_2(%arg0: i32) -> (i32, i32) {
    %c0_i32 = arith.constant 0 : i32
    %c0_i32_0 = arith.constant 0 : i32
    %c0_i32_1 = arith.constant 0 : i32
    return %c0_i32, %c0_i32_0 : i32, i32
  }
  func.func @transform_3(%arg0: i32) -> (i32, i32, i32) {
    %c0_i32 = arith.constant 0 : i32
    %c0_i32_0 = arith.constant 0 : i32
    %c0_i32_1 = arith.constant 0 : i32
    return %arg0, %c0_i32, %c0_i32_0 : i32, i32, i32
  }
}

</mosaic_0001>

<llo_original>
// kernel: texture_finder_forward.8
$region0: #{texture_finder_forward.8}
  #allocation0 [shape = 'u32[]', space=smem, size = 0x4, offset = 0x4, fixed_abs, tag = 'smem constant byte address 0x4 - core index']
  #allocation1 [shape = 'u32[144,128]{1,0:T(1,128)}', space=vmem, size = 0x12000, scoped, tag = 'internal scratch']
  %s0 = inlined_call_operand.vmem [shape: f32[2,256,16], index: 0, kind: input, shape index: {}]
  %s1 = inlined_call_operand.vmem [shape: f32[16,4], index: 1, kind: input, shape index: {}]
  %s2 = inlined_call_operand.vmem [shape: f32[1,4], index: 2, kind: input, shape index: {}, may-alias: {2,4}]
  %s3 = inlined_call_operand.vmem [shape: f32[1,4], index: 3, kind: input, shape index: {}]
  %s4 = inlined_call_operand.vmem [shape: f32[1,4], index: 4, kind: input, shape index: {}, may-alias: {2,4}]
  %s5 = inlined_call_operand.vmem [shape: f32[2,256,4], index: 5, kind: output, shape index: {}]
  %s6 = sld [smem:[#allocation0]]
  $region53: #{texture_finder_forward.8} parent=0
    _
  %s8 = ssub.s32 1, %s6
  %s9 = scalar_select 0, %s8, %s6
  loop: start=0, step=1, limit=4
  $region2: #{texture_finder_forward.8} parent=0 // loop_pre_header
    _
  $region3: #{texture_finder_forward.8} parent=0 // loop_header
    %s11 = sphi 0, %s15
    %p12 = scmp.ge.s32.totalorder %s11, 4
    %s21 = sphi 0, %s23
    %s24 = sphi 0, %s21
    %s25 = sphi 0, %s24
    %s41 = sphi 0, %s25
    %s45 = sphi 0, %s45
    %s47 = sphi 0, %s45
    %s48 = sphi 0, %s47
    %s62 = sphi 0, %s48
    %s66 = sphi 0, %s66
    %s68 = sphi 0, %s66
    %s69 = sphi 0, %s68
    %s83 = sphi 0, %s69
    %s87 = sphi 0, %s87
    %s89 = sphi 0, %s87
    %s90 = sphi 0, %s89
    %s104 = sphi 0, %s90
    %s108 = sphi 0, %s108
    %s110 = sphi 0, %s108
    %s111 = sphi 0, %s110
    %s125 = sphi 0, %s111
    %s131 = sphi 0, %s133
    %s134 = sphi 0, %s131
    %s135 = sphi 0, %s134
    %s151 = sphi 0, %s135
  $region4: #{texture_finder_forward.8} parent=0 // loop_header_branch
    %14 = sbr.rel (%p12) target = $region8
  $region5: #{texture_finder_forward.8} parent=0 // loop_body
    %s16 = ssub.s32 %s11, 1
    %s17 = ssub.s32 %s11, 2
    %s18 = sadd.s32 %s11, 1
    %s19 = ssub.s32 %s11, %s18
    %p20 = scmp.eq.s32.totalorder %s19, 0
    %s22 = sadd.s32 %s21, 1
    %s23 = scalar_select %p20, %s21, %s22
    %p26 = pneg %p20
    %p27 = scmp.eq.s32.totalorder %s11, 1
    %p28 = por %p26, %p27
    %p29 = scmp.ne.s32.totalorder %s21, %s24
    %p30 = scmp.eq.s32.totalorder %s11, 0
    %p31 = por %p29, %p30
    %p32 = scmp.ne.s32.totalorder %s21, %s24
    %p33 = scmp.eq.s32.totalorder %s16, 1
    %p34 = por %p32, %p33
    %p35 = scmp.ne.s32.totalorder %s24, %s25
    %p36 = scmp.eq.s32.totalorder %s16, 0
    %p37 = por %p35, %p36
    %p38 = scmp.ne.s32.totalorder %s24, %s25
    %p39 = scmp.eq.s32.totalorder %s17, 1
    %p40 = por %p38, %p39
    %p42 = scmp.ne.s32.totalorder %s25, %s41
    %p43 = scmp.eq.s32.totalorder %s17, 0
    %p44 = por %p42, %p43
    %s46 = sadd.s32 %s45, 1
    %p49 = scmp.eq.s32.totalorder %s11, 1
    %p50 = scmp.ne.s32.totalorder %s45, %s47
    %p51 = scmp.eq.s32.totalorder %s11, 0
    %p52 = por %p50, %p51
    %p53 = scmp.ne.s32.totalorder %s45, %s47
    %p54 = scmp.eq.s32.totalorder %s16, 1
    %p55 = por %p53, %p54
    %p56 = scmp.ne.s32.totalorder %s47, %s48
    %p57 = scmp.eq.s32.totalorder %s16, 0
    %p58 = por %p56, %p57
    %p59 = scmp.ne.s32.totalorder %s47, %s48
    %p60 = scmp.eq.s32.totalorder %s17, 1
    %p61 = por %p59, %p60
    %p63 = scmp.ne.s32.totalorder %s48, %s62
    %p64 = scmp.eq.s32.totalorder %s17, 0
    %p65 = por %p63, %p64
    %s67 = sadd.s32 %s66, 1
    %p70 = scmp.eq.s32.totalorder %s11, 1
    %p71 = scmp.ne.s32.totalorder %s66, %s68
    %p72 = scmp.eq.s32.totalorder %s11, 0
    %p73 = por %p71, %p72
    %p74 = scmp.ne.s32.totalorder %s66, %s68
    %p75 = scmp.eq.s32.totalorder %s16, 1
    %p76 = por %p74, %p75
    %p77 = scmp.ne.s32.totalorder %s68, %s69
    %p78 = scmp.eq.s32.totalorder %s16, 0
    %p79 = por %p77, %p78
    %p80 = scmp.ne.s32.totalorder %s68, %s69
    %p81 = scmp.eq.s32.totalorder %s17, 1
    %p82 = por %p80, %p81
    %p84 = scmp.ne.s32.totalorder %s69, %s83
    %p85 = scmp.eq.s32.totalorder %s17, 0
    %p86 = por %p84, %p85
    %s88 = sadd.s32 %s87, 1
    %p91 = scmp.eq.s32.totalorder %s11, 1
    %p92 = scmp.ne.s32.totalorder %s87, %s89
    %p93 = scmp.eq.s32.totalorder %s11, 0
    %p94 = por %p92, %p93
    %p95 = scmp.ne.s32.totalorder %s87, %s89
    %p96 = scmp.eq.s32.totalorder %s16, 1
    %p97 = por %p95, %p96
    %p98 = scmp.ne.s32.totalorder %s89, %s90
    %p99 = scmp.eq.s32.totalorder %s16, 0
    %p100 = por %p98, %p99
    %p101 = scmp.ne.s32.totalorder %s89, %s90
    %p102 = scmp.eq.s32.totalorder %s17, 1
    %p103 = por %p101, %p102
    %p105 = scmp.ne.s32.totalorder %s90, %s104
    %p106 = scmp.eq.s32.totalorder %s17, 0
    %p107 = por %p105, %p106
    %s109 = sadd.s32 %s108, 1
    %p112 = scmp.eq.s32.totalorder %s11, 1
    %p113 = scmp.ne.s32.totalorder %s108, %s110
    %p114 = scmp.eq.s32.totalorder %s11, 0
    %p115 = por %p113, %p114
    %p116 = scmp.ne.s32.totalorder %s108, %s110
    %p117 = scmp.eq.s32.totalorder %s16, 1
    %p118 = por %p116, %p117
    %p119 = scmp.ne.s32.totalorder %s110, %s111
    %p120 = scmp.eq.s32.totalorder %s16, 0
    %p121 = por %p119, %p120
    %p122 = scmp.ne.s32.totalorder %s110, %s111
    %p123 = scmp.eq.s32.totalorder %s17, 1
    %p124 = por %p122, %p123
    %p126 = scmp.ne.s32.totalorder %s111, %s125
    %p127 = scmp.eq.s32.totalorder %s17, 0
    %p128 = por %p126, %p127
    %s129 = ssub.s32 %s11, %s18
    %p130 = scmp.eq.s32.totalorder %s129, 0
    %s132 = sadd.s32 %s131, 1
    %s133 = scalar_select %p130, %s131, %s132
    %p136 = pneg %p130
    %p137 = scmp.eq.s32.totalorder %s11, 1
    %p138 = por %p136, %p137
    %p139 = scmp.ne.s32.totalorder %s131, %s134
    %p140 = scmp.eq.s32.totalorder %s11, 0
    %p141 = por %p139, %p140
    %p142 = scmp.ne.s32.totalorder %s131, %s134
    %p143 = scmp.eq.s32.totalorder %s16, 1
    %p144 = por %p142, %p143
    %p145 = scmp.ne.s32.totalorder %s134, %s135
    %p146 = scmp.eq.s32.totalorder %s16, 0
    %p147 = por %p145, %p146
    %p148 = scmp.ne.s32.totalorder %s134, %s135
    %p149 = scmp.eq.s32.totalorder %s17, 1
    %p150 = por %p148, %p149
    %p152 = scmp.ne.s32.totalorder %s135, %s151
    %p153 = scmp.eq.s32.totalorder %s17, 0
    %p154 = por %p152, %p153
    %p155 = scmp.le.s32.totalorder 1, %s11
    %p156 = scmp.lt.s32.totalorder %s11, 3
    %p157 = pnand %p155, %p156
    %p158 = pneg %p157
    // Predicated region
    $region9: #{texture_finder_forward.8} parent=5 // pred_check
      _
    $region10: #{texture_finder_forward.8} parent=5 // pred_check_branch
      %160 = sbr.rel (%p157) target = $region12
    $region11: #{texture_finder_forward.8} parent=5 // pred_region
      %s161 = ssub.s32 %s11, 1
      // Predicated region
      $region13: #{texture_finder_forward.8} parent=11 // pred_check
        %p162 = pneg %p58
      $region14: #{texture_finder_forward.8} parent=11 // pred_check_branch
        %164 = sbr.rel (%p162) target = $region16
      $region15: #{texture_finder_forward.8} parent=11 // pred_region
        _
      $region16: #{texture_finder_forward.8} parent=11 // pred_fallthru
        _
      // Predicated region
      $region17: #{texture_finder_forward.8} parent=11 // pred_check
        %p165 = pneg %p79
      $region18: #{texture_finder_forward.8} parent=11 // pred_check_branch
        %167 = sbr.rel (%p165) target = $region20
      $region19: #{texture_finder_forward.8} parent=11 // pred_region
        _
      $region20: #{texture_finder_forward.8} parent=11 // pred_fallthru
        _
      // Predicated region
      $region21: #{texture_finder_forward.8} parent=11 // pred_check
        %p168 = pneg %p100
      $region22: #{texture_finder_forward.8} parent=11 // pred_check_branch
        %170 = sbr.rel (%p168) target = $region24
      $region23: #{texture_finder_forward.8} parent=11 // pred_region
        _
      $region24: #{texture_finder_forward.8} parent=11 // pred_fallthru
        _
      // Predicated region
      $region25: #{texture_finder_forward.8} parent=11 // pred_check
        %p171 = pneg %p121
      $region26: #{texture_finder_forward.8} parent=11 // pred_check_branch
        %173 = sbr.rel (%p171) target = $region28
      $region27: #{texture_finder_forward.8} parent=11 // pred_region
        _
      $region28: #{texture_finder_forward.8} parent=11 // pred_fallthru
        _
    $region12: #{texture_finder_forward.8} parent=5 // pred_fallthru
      _
    %p174 = scmp.lt.s32.totalorder %s11, 2
    // Predicated region
    $region29: #{texture_finder_forward.8} parent=5 // pred_check
      %p175 = pneg %p174
    $region30: #{texture_finder_forward.8} parent=5 // pred_check_branch
      %177 = sbr.rel (%p175) target = $region32
    $region31: #{texture_finder_forward.8} parent=5 // pred_region
      // Predicated region
      $region33: #{texture_finder_forward.8} parent=31 // pred_check
        %p178 = pneg %p31
      $region34: #{texture_finder_forward.8} parent=31 // pred_check_branch
        %180 = sbr.rel (%p178) target = $region36
      $region35: #{texture_finder_forward.8} parent=31 // pred_region
        %p181 = scmp.lt.s32.totalorder %s11, 1
        %s182 = scalar_select %p181, %s11, 1
        %s183 = smul.addr %s182, 32
        %s184 = smul.addr %s183, 8
        %s185 = scalar_lea.vmem %s0, %s184
      $region36: #{texture_finder_forward.8} parent=31 // pred_fallthru
        _
    $region32: #{texture_finder_forward.8} parent=5 // pred_fallthru
      _
    %p186 = scmp.le.s32.totalorder 1, %s11
    %p187 = scmp.lt.s32.totalorder %s11, 3
    %p188 = pnand %p186, %p187
    %p189 = pneg %p188
    // Predicated region
    $region37: #{texture_finder_forward.8} parent=5 // pred_check
      _
    $region38: #{texture_finder_forward.8} parent=5 // pred_check_branch
      %191 = sbr.rel (%p188) target = $region40
    $region39: #{texture_finder_forward.8} parent=5 // pred_region
      %s192 = ssub.s32 %s11, 1
      %p193 = scmp.lt.s32.totalorder %s16, 1
      %s194 = scalar_select %p193, %s16, 1
      %s195 = smul.addr %s194, 32
      %s196 = smul.addr %s195, 8
      %s197 = scalar_lea.vmem %s0, %s196
      %p198 = pneg %p37
      %p199 = pneg %p34
      %p200 = pneg %p58
      %p201 = pneg %p55
      %p202 = pneg %p79
      %p203 = pneg %p76
      %p204 = pneg %p100
      %p205 = pneg %p97
      %p206 = pneg %p121
      %p207 = pneg %p118
      %p208 = pneg %p147
      %p209 = pneg %p144
      %p210 = scmp.lt.s32.totalorder %s16, 1
      %s211 = scalar_select %p210, %s16, 1
      %s212 = smul.addr %s211, 32
      %s213 = smul.addr %s212, 8
      %s214 = scalar_lea.vmem %s5, %s213
      %p215 = scmp.lt.s32.totalorder %s16, 1
      %s216 = scalar_select %p215, %s16, 1
      %s217 = smul.addr %s216, 32
      %s218 = smul.addr %s217, 8
      %s219 = scalar_lea.vmem %s0, %s218
      %p220 = scmp.lt.s32.totalorder %s16, 1
      %s221 = scalar_select %p220, %s16, 1
      %s222 = smul.addr %s221, 32
      %s223 = smul.addr %s222, 8
      %s224 = scalar_lea.vmem %s5, %s223
      %v225 = vld [vmem:[%s219] sm:$0xff]
      %v226 = vld [vmem:[%s219 + $0x8] sm:$0xff]
      %v227 = vld [vmem:[%s219 + $0x10] sm:$0xff]
      %v228 = vld [vmem:[%s219 + $0x18] sm:$0xff]
      %v229 = vld [vmem:[%s219 + $0x20] sm:$0xff]
      %v230 = vld [vmem:[%s219 + $0x28] sm:$0xff]
      %v231 = vld [vmem:[%s219 + $0x30] sm:$0xff]
      %v232 = vld [vmem:[%s219 + $0x38] sm:$0xff]
      %v233 = vld [vmem:[%s219 + $0x40] sm:$0xff]
      %v234 = vld [vmem:[%s219 + $0x48] sm:$0xff]
      %v235 = vld [vmem:[%s219 + $0x50] sm:$0xff]
      %v236 = vld [vmem:[%s219 + $0x58] sm:$0xff]
      %v237 = vld [vmem:[%s219 + $0x60] sm:$0xff]
      %v238 = vld [vmem:[%s219 + $0x68] sm:$0xff]
      %v239 = vld [vmem:[%s219 + $0x70] sm:$0xff]
      %v240 = vld [vmem:[%s219 + $0x78] sm:$0xff]
      %v241 = vld [vmem:[%s219 + $0x80] sm:$0xff]
      %v242 = vld [vmem:[%s219 + $0x88] sm:$0xff]
      %v243 = vld [vmem:[%s219 + $0x90] sm:$0xff]
      %v244 = vld [vmem:[%s219 + $0x98] sm:$0xff]
      %v245 = vld [vmem:[%s219 + $0xa0] sm:$0xff]
      %v246 = vld [vmem:[%s219 + $0xa8] sm:$0xff]
      %v247 = vld [vmem:[%s219 + $0xb0] sm:$0xff]
      %v248 = vld [vmem:[%s219 + $0xb8] sm:$0xff]
      %v249 = vld [vmem:[%s219 + $0xc0] sm:$0xff]
      %v250 = vld [vmem:[%s219 + $0xc8] sm:$0xff]
      %v251 = vld [vmem:[%s219 + $0xd0] sm:$0xff]
      %v252 = vld [vmem:[%s219 + $0xd8] sm:$0xff]
      %v253 = vld [vmem:[%s219 + $0xe0] sm:$0xff]
      %v254 = vld [vmem:[%s219 + $0xe8] sm:$0xff]
      %v255 = vld [vmem:[%s219 + $0xf0] sm:$0xff]
      %v256 = vld [vmem:[%s219 + $0xf8] sm:$0xff]
      %v257 = vld [vmem:[%s1] sm:$0xff]
      %v258 = vld [vmem:[%s1 + $0x8] sm:$0xff]
      %v259 = vld [vmem:[%s2] sm:$0x1]
      %v261 = vlaneseq
      %v262 = vshrl.u32 %v261, 7
      %v263 = vsub.s32 0, %v262
      %v264 = vrot.slane %v259, %v263
      %vm266 = vcmask 130048
      %v268 = vsel %vm266, %v225, 0
      %v271 = vsel %vm266, %v226, 0
      %v274 = vsel %vm266, %v227, 0
      %v277 = vsel %vm266, %v228, 0
      %v280 = vsel %vm266, %v229, 0
      %v283 = vsel %vm266, %v230, 0
      %v286 = vsel %vm266, %v231, 0
      %v289 = vsel %vm266, %v232, 0
      %v292 = vsel %vm266, %v233, 0
      %v295 = vsel %vm266, %v234, 0
      %v298 = vsel %vm266, %v235, 0
      %v301 = vsel %vm266, %v236, 0
      %v304 = vsel %vm266, %v237, 0
      %v307 = vsel %vm266, %v238, 0
      %v310 = vsel %vm266, %v239, 0
      %v313 = vsel %vm266, %v240, 0
      %v316 = vsel %vm266, %v241, 0
      %v319 = vsel %vm266, %v242, 0
      %v322 = vsel %vm266, %v243, 0
      %v325 = vsel %vm266, %v244, 0
      %v328 = vsel %vm266, %v245, 0
      %v331 = vsel %vm266, %v246, 0
      %v334 = vsel %vm266, %v247, 0
      %v337 = vsel %vm266, %v248, 0
      %v340 = vsel %vm266, %v249, 0
      %v343 = vsel %vm266, %v250, 0
      %v346 = vsel %vm266, %v251, 0
      %v349 = vsel %vm266, %v252, 0
      %v352 = vsel %vm266, %v253, 0
      %v355 = vsel %vm266, %v254, 0
      %v358 = vsel %vm266, %v255, 0
      %v361 = vsel %vm266, %v256, 0
      %363 = vmatprep.subr.mxu0 0.0
      %364 = vmatpush1.msra.mxu0 %v257
      %365 = vmatprep.subr.mxu0 0.0
      %366 = vmatpush1.msra.mxu0 %v258
      %367 = vmatprep.subr.mxu0 0.0
      %368 = vmatpush1.msra.mxu0 0.0
      %369 = vmatprep.subr.mxu0 0.0
      %370 = vmatpush1.msra.mxu0 0.0
      %371 = vmatprep.subr.mxu0 0.0
      %372 = vmatpush1.msra.mxu0 0.0
      %373 = vmatprep.subr.mxu0 0.0
      %374 = vmatpush1.msra.mxu0 0.0
      %375 = vmatprep.subr.mxu0 0.0
      %376 = vmatpush1.msra.mxu0 0.0
      %377 = vmatprep.subr.mxu0 0.0
      %378 = vmatpush1.msra.mxu0 0.0
      %379 = vmatprep.subr.mxu0 0.0
      %380 = vmatpush1.msra.mxu0 0.0
      %381 = vmatprep.subr.mxu0 0.0
      %382 = vmatpush1.msra.mxu0 0.0
      %383 = vmatprep.subr.mxu0 0.0
      %384 = vmatpush1.msra.mxu0 0.0
      %385 = vmatprep.subr.mxu0 0.0
      %386 = vmatpush1.msra.mxu0 0.0
      %387 = vmatprep.subr.mxu0 0.0
      %388 = vmatpush1.msra.mxu0 0.0
      %389 = vmatprep.subr.mxu0 0.0
      %390 = vmatpush1.msra.mxu0 0.0
      %391 = vmatprep.subr.mxu0 0.0
      %392 = vmatpush1.msra.mxu0 0.0
      %393 = vmatprep.subr.mxu0 0.0
      %394 = vmatpush1.msra.mxu0 0.0
      %395 = vmatprep.subr.mxu0 0.0
      %396 = vmatpush1.msra.mxu0 0.0
      %397 = vmatprep.subr.mxu0 0.0
      %398 = vmatpush1.msra.mxu0 0.0
      %399 = vmatprep.subr.mxu0 0.0
      %400 = vmatpush1.msra.mxu0 0.0
      %401 = vmatprep.subr.mxu0 0.0
      %402 = vmatpush1.msra.mxu0 0.0
      %403 = vmatprep.subr.mxu0 0.0
      %404 = vmatpush1.msra.mxu0 0.0
      %405 = vmatprep.subr.mxu0 0.0
      %406 = vmatpush1.msra.mxu0 0.0
      %407 = vmatprep.subr.mxu0 0.0
      %408 = vmatpush1.msra.mxu0 0.0
      %409 = vmatprep.subr.mxu0 0.0
      %410 = vmatpush1.msra.mxu0 0.0
      %411 = vmatprep.subr.mxu0 0.0
      %412 = vmatpush1.msra.mxu0 0.0
      %413 = vmatprep.subr.mxu0 0.0
      %414 = vmatpush1.msra.mxu0 0.0
      %415 = vmatprep.subr.mxu0 0.0
      %416 = vmatpush1.msra.mxu0 0.0
      %417 = vmatprep.subr.mxu0 0.0
      %418 = vmatpush1.msra.mxu0 0.0
      %419 = vmatprep.subr.mxu0 0.0
      %420 = vmatpush1.msra.mxu0 0.0
      %421 = vmatprep.subr.mxu0 0.0
      %422 = vmatpush1.msra.mxu0 0.0
      %423 = vmatprep.subr.mxu0 0.0
      %424 = vmatpush1.msra.mxu0 0.0
      %425 = vmatprep.subr.mxu0 0.0
      %426 = vmatpush1.msra.mxu0 0.0
      %427 = vmatprep.mubr.f32.mxu0 0.0
      %428 = vmatmul.mubr.f32.gmra.mrb[0].mxu0 %v268
      %v429 = vpop.f32.mrb[0].mxu0
      %v430 = vadd.f32 %v264, %v429
      %v431 = vpop.f32.mrb[0].mxu0
      %432 = vmatprep.mubr.f32.mxu0 0.0
      %433 = vmatmul.mubr.f32.gmra.mrb[0].mxu0 %v271
      %v434 = vpop.f32.mrb[0].mxu0
      %v435 = vadd.f32 %v264, %v434
      %v436 = vpop.f32.mrb[0].mxu0
      %437 = vmatprep.mubr.f32.mxu0 0.0
      %438 = vmatmul.mubr.f32.gmra.mrb[0].mxu0 %v274
      %v439 = vpop.f32.mrb[0].mxu0
      %v440 = vadd.f32 %v264, %v439
      %v441 = vpop.f32.mrb[0].mxu0
      %442 = vmatprep.mubr.f32.mxu0 0.0
      %443 = vmatmul.mubr.f32.gmra.mrb[0].mxu0 %v277
      %v444 = vpop.f32.mrb[0].mxu0
      %v445 = vadd.f32 %v264, %v444
      %v446 = vpop.f32.mrb[0].mxu0
      %447 = vmatprep.mubr.f32.mxu0 0.0
      %448 = vmatmul.mubr.f32.gmra.mrb[0].mxu0 %v280
      %v449 = vpop.f32.mrb[0].mxu0
      %v450 = vadd.f32 %v264, %v449
      %v451 = vpop.f32.mrb[0].mxu0
      %452 = vmatprep.mubr.f32.mxu0 0.0
      %453 = vmatmul.mubr.f32.gmra.mrb[0].mxu0 %v283
      %v454 = vpop.f32.mrb[0].mxu0
      %v455 = vadd.f32 %v264, %v454
      %v456 = vpop.f32.mrb[0].mxu0
      %457 = vmatprep.mubr.f32.mxu0 0.0
      %458 = vmatmul.mubr.f32.gmra.mrb[0].mxu0 %v286
      %v459 = vpop.f32.mrb[0].mxu0
      %v460 = vadd.f32 %v264, %v459
      %v461 = vpop.f32.mrb[0].mxu0
      %462 = vmatprep.mubr.f32.mxu0 0.0
      %463 = vmatmul.mubr.f32.gmra.mrb[0].mxu0 %v289
      %v464 = vpop.f32.mrb[0].mxu0
      %v465 = vadd.f32 %v264, %v464
      %v466 = vpop.f32.mrb[0].mxu0
      %467 = vmatprep.mubr.f32.mxu0 0.0
      %468 = vmatmul.mubr.f32.gmra.mrb[0].mxu0 %v292
      %v469 = vpop.f32.mrb[0].mxu0
      %v470 = vadd.f32 %v264, %v469
      %v471 = vpop.f32.mrb[0].mxu0
      %472 = vmatprep.mubr.f32.mxu0 0.0
      %473 = vmatmul.mubr.f32.gmra.mrb[0].mxu0 %v295
      %v474 = vpop.f32.mrb[0].mxu0
      %v475 = vadd.f32 %v264, %v474
      %v476 = vpop.f32.mrb[0].mxu0
      %477 = vmatprep.mubr.f32.mxu0 0.0
      %478 = vmatmul.mubr.f32.gmra.mrb[0].mxu0 %v298
      %v479 = vpop.f32.mrb[0].mxu0
      %v480 = vadd.f32 %v264, %v479
      %v481 = vpop.f32.mrb[0].mxu0
      %482 = vmatprep.mubr.f32.mxu0 0.0
      %483 = vmatmul.mubr.f32.gmra.mrb[0].mxu0 %v301
      %v484 = vpop.f32.mrb[0].mxu0
      %v485 = vadd.f32 %v264, %v484
      %v486 = vpop.f32.mrb[0].mxu0
      %487 = vmatprep.mubr.f32.mxu0 0.0
      %488 = vmatmul.mubr.f32.gmra.mrb[0].mxu0 %v304
      %v489 = vpop.f32.mrb[0].mxu0
      %v490 = vadd.f32 %v264, %v489
      %v491 = vpop.f32.mrb[0].mxu0
      %492 = vmatprep.mubr.f32.mxu0 0.0
      %493 = vmatmul.mubr.f32.gmra.mrb[0].mxu0 %v307
      %v494 = vpop.f32.mrb[0].mxu0
      %v495 = vadd.f32 %v264, %v494
      %v496 = vpop.f32.mrb[0].mxu0
      %497 = vmatprep.mubr.f32.mxu0 0.0
      %498 = vmatmul.mubr.f32.gmra.mrb[0].mxu0 %v310
      %v499 = vpop.f32.mrb[0].mxu0
      %v500 = vadd.f32 %v264, %v499
      %v501 = vpop.f32.mrb[0].mxu0
      %502 = vmatprep.mubr.f32.mxu0 0.0
      %503 = vmatmul.mubr.f32.gmra.mrb[0].mxu0 %v313
      %v504 = vpop.f32.mrb[0].mxu0
      %v505 = vadd.f32 %v264, %v504
      %v506 = vpop.f32.mrb[0].mxu0
      %507 = vmatprep.mubr.f32.mxu0 0.0
      %508 = vmatmul.mubr.f32.gmra.mrb[0].mxu0 %v316
      %v509 = vpop.f32.mrb[0].mxu0
      %v510 = vadd.f32 %v264, %v509
      %v511 = vpop.f32.mrb[0].mxu0
      %512 = vmatprep.mubr.f32.mxu0 0.0
      %513 = vmatmul.mubr.f32.gmra.mrb[0].mxu0 %v319
      %v514 = vpop.f32.mrb[0].mxu0
      %v515 = vadd.f32 %v264, %v514
      %v516 = vpop.f32.mrb[0].mxu0
      %517 = vmatprep.mubr.f32.mxu0 0.0
      %518 = vmatmul.mubr.f32.gmra.mrb[0].mxu0 %v322
      %v519 = vpop.f32.mrb[0].mxu0
      %v520 = vadd.f32 %v264, %v519
      %v521 = vpop.f32.mrb[0].mxu0
      %522 = vmatprep.mubr.f32.mxu0 0.0
      %523 = vmatmul.mubr.f32.gmra.mrb[0].mxu0 %v325
      %v524 = vpop.f32.mrb[0].mxu0
      %v525 = vadd.f32 %v264, %v524
      %v526 = vpop.f32.mrb[0].mxu0
      %527 = vmatprep.mubr.f32.mxu0 0.0
      %528 = vmatmul.mubr.f32.gmra.mrb[0].mxu0 %v328
      %v529 = vpop.f32.mrb[0].mxu0
      %v530 = vadd.f32 %v264, %v529
      %v531 = vpop.f32.mrb[0].mxu0
      %532 = vmatprep.mubr.f32.mxu0 0.0
      %533 = vmatmul.mubr.f32.gmra.mrb[0].mxu0 %v331
      %v534 = vpop.f32.mrb[0].mxu0
      %v535 = vadd.f32 %v264, %v534
      %v536 = vpop.f32.mrb[0].mxu0
      %537 = vmatprep.mubr.f32.mxu0 0.0
      %538 = vmatmul.mubr.f32.gmra.mrb[0].mxu0 %v334
      %v539 = vpop.f32.mrb[0].mxu0
      %v540 = vadd.f32 %v264, %v539
      %v541 = vpop.f32.mrb[0].mxu0
      %542 = vmatprep.mubr.f32.mxu0 0.0
      %543 = vmatmul.mubr.f32.gmra.mrb[0].mxu0 %v337
      %v544 = vpop.f32.mrb[0].mxu0
      %v545 = vadd.f32 %v264, %v544
      %v546 = vpop.f32.mrb[0].mxu0
      %547 = vmatprep.mubr.f32.mxu0 0.0
      %548 = vmatmul.mubr.f32.gmra.mrb[0].mxu0 %v340
      %v549 = vpop.f32.mrb[0].mxu0
      %v550 = vadd.f32 %v264, %v549
      %v551 = vpop.f32.mrb[0].mxu0
      %552 = vmatprep.mubr.f32.mxu0 0.0
      %553 = vmatmul.mubr.f32.gmra.mrb[0].mxu0 %v343
      %v554 = vpop.f32.mrb[0].mxu0
      %v555 = vadd.f32 %v264, %v554
      %v556 = vpop.f32.mrb[0].mxu0
      %557 = vmatprep.mubr.f32.mxu0 0.0
      %558 = vmatmul.mubr.f32.gmra.mrb[0].mxu0 %v346
      %v559 = vpop.f32.mrb[0].mxu0
      %v560 = vadd.f32 %v264, %v559
      %v561 = vpop.f32.mrb[0].mxu0
      %562 = vmatprep.mubr.f32.mxu0 0.0
      %563 = vmatmul.mubr.f32.gmra.mrb[0].mxu0 %v349
      %v564 = vpop.f32.mrb[0].mxu0
      %v565 = vadd.f32 %v264, %v564
      %v566 = vpop.f32.mrb[0].mxu0
      %567 = vmatprep.mubr.f32.mxu0 0.0
      %568 = vmatmul.mubr.f32.gmra.mrb[0].mxu0 %v352
      %v569 = vpop.f32.mrb[0].mxu0
      %v570 = vadd.f32 %v264, %v569
      %v571 = vpop.f32.mrb[0].mxu0
      %572 = vmatprep.mubr.f32.mxu0 0.0
      %573 = vmatmul.mubr.f32.gmra.mrb[0].mxu0 %v355
      %v574 = vpop.f32.mrb[0].mxu0
      %v575 = vadd.f32 %v264, %v574
      %v576 = vpop.f32.mrb[0].mxu0
      %577 = vmatprep.mubr.f32.mxu0 0.0
      %578 = vmatmul.mubr.f32.gmra.mrb[0].mxu0 %v358
      %v579 = vpop.f32.mrb[0].mxu0
      %v580 = vadd.f32 %v264, %v579
      %v581 = vpop.f32.mrb[0].mxu0
      %582 = vmatprep.mubr.f32.mxu0 0.0
      %583 = vmatmul.mubr.f32.gmra.mrb[0].mxu0 %v361
      %v584 = vpop.f32.mrb[0].mxu0
      %v585 = vadd.f32 %v264, %v584
      %v586 = vpop.f32.mrb[0].mxu0
      %587 = vdwg.mxu0
      %v588 = vmax.f32 %v430, 0.0
      %v589 = vmax.f32 %v435, 0.0
      %v590 = vmax.f32 %v440, 0.0
      %v591 = vmax.f32 %v445, 0.0
      %v592 = vmax.f32 %v450, 0.0
      %v593 = vmax.f32 %v455, 0.0
      %v594 = vmax.f32 %v460, 0.0
      %v595 = vmax.f32 %v465, 0.0
      %v596 = vmax.f32 %v470, 0.0
      %v597 = vmax.f32 %v475, 0.0
      %v598 = vmax.f32 %v480, 0.0
      %v599 = vmax.f32 %v485, 0.0
      %v600 = vmax.f32 %v490, 0.0
      %v601 = vmax.f32 %v495, 0.0
      %v602 = vmax.f32 %v500, 0.0
      %v603 = vmax.f32 %v505, 0.0
      %v604 = vmax.f32 %v510, 0.0
      %v605 = vmax.f32 %v515, 0.0
      %v606 = vmax.f32 %v520, 0.0
      %v607 = vmax.f32 %v525, 0.0
      %v608 = vmax.f32 %v530, 0.0
      %v609 = vmax.f32 %v535, 0.0
      %v610 = vmax.f32 %v540, 0.0
      %v611 = vmax.f32 %v545, 0.0
      %v612 = vmax.f32 %v550, 0.0
      %v613 = vmax.f32 %v555, 0.0
      %v614 = vmax.f32 %v560, 0.0
      %v615 = vmax.f32 %v565, 0.0
      %v616 = vmax.f32 %v570, 0.0
      %v617 = vmax.f32 %v575, 0.0
      %v618 = vmax.f32 %v580, 0.0
      %v619 = vmax.f32 %v585, 0.0
      %vm620 = vcmask 31744
      %v621 = vsel %vm620, %v588, 0.0
      %v622 = vsel %vm620, %v589, 0.0
      %v623 = vadd.f32 %v621, %v622
      %v624 = vsel %vm620, %v590, 0.0
      %v625 = vadd.f32 %v623, %v624
      %v626 = vsel %vm620, %v591, 0.0
      %v627 = vadd.f32 %v625, %v626
      %v628 = vsel %vm620, %v592, 0.0
      %v629 = vadd.f32 %v627, %v628
      %v630 = vsel %vm620, %v593, 0.0
      %v631 = vadd.f32 %v629, %v630
      %v632 = vsel %vm620, %v594, 0.0
      %v633 = vadd.f32 %v631, %v632
      %v634 = vsel %vm620, %v595, 0.0
      %v635 = vadd.f32 %v633, %v634
      %v636 = vsel %vm620, %v596, 0.0
      %v637 = vadd.f32 %v635, %v636
      %v638 = vsel %vm620, %v597, 0.0
      %v639 = vadd.f32 %v637, %v638
      %v640 = vsel %vm620, %v598, 0.0
      %v641 = vadd.f32 %v639, %v640
      %v642 = vsel %vm620, %v599, 0.0
      %v643 = vadd.f32 %v641, %v642
      %v644 = vsel %vm620, %v600, 0.0
      %v645 = vadd.f32 %v643, %v644
      %v646 = vsel %vm620, %v601, 0.0
      %v647 = vadd.f32 %v645, %v646
      %v648 = vsel %vm620, %v602, 0.0
      %v649 = vadd.f32 %v647, %v648
      %v650 = vsel %vm620, %v603, 0.0
      %v651 = vadd.f32 %v649, %v650
      %v652 = vsel %vm620, %v604, 0.0
      %v653 = vadd.f32 %v651, %v652
      %v654 = vsel %vm620, %v605, 0.0
      %v655 = vadd.f32 %v653, %v654
      %v656 = vsel %vm620, %v606, 0.0
      %v657 = vadd.f32 %v655, %v656
      %v658 = vsel %vm620, %v607, 0.0
      %v659 = vadd.f32 %v657, %v658
      %v660 = vsel %vm620, %v608, 0.0
      %v661 = vadd.f32 %v659, %v660
      %v662 = vsel %vm620, %v609, 0.0
      %v663 = vadd.f32 %v661, %v662
      %v664 = vsel %vm620, %v610, 0.0
      %v665 = vadd.f32 %v663, %v664
      %v666 = vsel %vm620, %v611, 0.0
      %v667 = vadd.f32 %v665, %v666
      %v668 = vsel %vm620, %v612, 0.0
      %v669 = vadd.f32 %v667, %v668
      %v670 = vsel %vm620, %v613, 0.0
      %v671 = vadd.f32 %v669, %v670
      %v672 = vsel %vm620, %v614, 0.0
      %v673 = vadd.f32 %v671, %v672
      %v674 = vsel %vm620, %v615, 0.0
      %v675 = vadd.f32 %v673, %v674
      %v676 = vsel %vm620, %v616, 0.0
      %v677 = vadd.f32 %v675, %v676
      %v678 = vsel %vm620, %v617, 0.0
      %v679 = vadd.f32 %v677, %v678
      %v680 = vsel %vm620, %v618, 0.0
      %v681 = vadd.f32 %v679, %v680
      %v682 = vsel %vm620, %v619, 0.0
      %v683 = vadd.f32 %v681, %v682
      %684 = vadd.xlane.f32.xlu0 %v683
      %v685 = vpop.xlane.xlu0 %684
      %v686 = vrot.slane %v685, 4
      %v687 = vadd.f32 %v685, %v686
      %v688 = vrot.slane %v687, 2
      %v689 = vadd.f32 %v687, %v688
      %v690 = vrot.slane %v689, 1
      %v691 = vadd.f32 %v689, %v690
      %s692 = vtos %v691
      %v693 = vrcp.pop 1024.0
      %s694 = vtos %v693
      %s695 = smul.f32 %s692, %s694
      %v696 = vstv %s695
      %v697 = vsub.f32 %v588, %v696
      %v698 = vsub.f32 %v589, %v696
      %v699 = vsub.f32 %v590, %v696
      %v700 = vsub.f32 %v591, %v696
      %v701 = vsub.f32 %v592, %v696
      %v702 = vsub.f32 %v593, %v696
      %v703 = vsub.f32 %v594, %v696
      %v704 = vsub.f32 %v595, %v696
      %v705 = vsub.f32 %v596, %v696
      %v706 = vsub.f32 %v597, %v696
      %v707 = vsub.f32 %v598, %v696
      %v708 = vsub.f32 %v599, %v696
      %v709 = vsub.f32 %v600, %v696
      %v710 = vsub.f32 %v601, %v696
      %v711 = vsub.f32 %v602, %v696
      %v712 = vsub.f32 %v603, %v696
      %v713 = vsub.f32 %v604, %v696
      %v714 = vsub.f32 %v605, %v696
      %v715 = vsub.f32 %v606, %v696
      %v716 = vsub.f32 %v607, %v696
      %v717 = vsub.f32 %v608, %v696
      %v718 = vsub.f32 %v609, %v696
      %v719 = vsub.f32 %v610, %v696
      %v720 = vsub.f32 %v611, %v696
      %v721 = vsub.f32 %v612, %v696
      %v722 = vsub.f32 %v613, %v696
      %v723 = vsub.f32 %v614, %v696
      %v724 = vsub.f32 %v615, %v696
      %v725 = vsub.f32 %v616, %v696
      %v726 = vsub.f32 %v617, %v696
      %v727 = vsub.f32 %v618, %v696
      %v728 = vsub.f32 %v619, %v696
      %v729 = vmul.f32 %v697, %v697
      %v730 = vmul.f32 %v698, %v698
      %v731 = vmul.f32 %v699, %v699
      %v732 = vmul.f32 %v700, %v700
      %v733 = vmul.f32 %v701, %v701
      %v734 = vmul.f32 %v702, %v702
      %v735 = vmul.f32 %v703, %v703
      %v736 = vmul.f32 %v704, %v704
      %v737 = vmul.f32 %v705, %v705
      %v738 = vmul.f32 %v706, %v706
      %v739 = vmul.f32 %v707, %v707
      %v740 = vmul.f32 %v708, %v708
      %v741 = vmul.f32 %v709, %v709
      %v742 = vmul.f32 %v710, %v710
      %v743 = vmul.f32 %v711, %v711
      %v744 = vmul.f32 %v712, %v712
      %v745 = vmul.f32 %v713, %v713
      %v746 = vmul.f32 %v714, %v714
      %v747 = vmul.f32 %v715, %v715
      %v748 = vmul.f32 %v716, %v716
      %v749 = vmul.f32 %v717, %v717
      %v750 = vmul.f32 %v718, %v718
      %v751 = vmul.f32 %v719, %v719
      %v752 = vmul.f32 %v720, %v720
      %v753 = vmul.f32 %v721, %v721
      %v754 = vmul.f32 %v722, %v722
      %v755 = vmul.f32 %v723, %v723
      %v756 = vmul.f32 %v724, %v724
      %v757 = vmul.f32 %v725, %v725
      %v758 = vmul.f32 %v726, %v726
      %v759 = vmul.f32 %v727, %v727
      %v760 = vmul.f32 %v728, %v728
      %v761 = vsel %vm620, %v729, 0.0
      %v762 = vsel %vm620, %v730, 0.0
      %v763 = vadd.f32 %v761, %v762
      %v764 = vsel %vm620, %v731, 0.0
      %v765 = vadd.f32 %v763, %v764
      %v766 = vsel %vm620, %v732, 0.0
      %v767 = vadd.f32 %v765, %v766
      %v768 = vsel %vm620, %v733, 0.0
      %v769 = vadd.f32 %v767, %v768
      %v770 = vsel %vm620, %v734, 0.0
      %v771 = vadd.f32 %v769, %v770
      %v772 = vsel %vm620, %v735, 0.0
      %v773 = vadd.f32 %v771, %v772
      %v774 = vsel %vm620, %v736, 0.0
      %v775 = vadd.f32 %v773, %v774
      %v776 = vsel %vm620, %v737, 0.0
      %v777 = vadd.f32 %v775, %v776
      %v778 = vsel %vm620, %v738, 0.0
      %v779 = vadd.f32 %v777, %v778
      %v780 = vsel %vm620, %v739, 0.0
      %v781 = vadd.f32 %v779, %v780
      %v782 = vsel %vm620, %v740, 0.0
      %v783 = vadd.f32 %v781, %v782
      %v784 = vsel %vm620, %v741, 0.0
      %v785 = vadd.f32 %v783, %v784
      %v786 = vsel %vm620, %v742, 0.0
      %v787 = vadd.f32 %v785, %v786
      %v788 = vsel %vm620, %v743, 0.0
      %v789 = vadd.f32 %v787, %v788
      %v790 = vsel %vm620, %v744, 0.0
      %v791 = vadd.f32 %v789, %v790
      %v792 = vsel %vm620, %v745, 0.0
      %v793 = vadd.f32 %v791, %v792
      %v794 = vsel %vm620, %v746, 0.0
      %v795 = vadd.f32 %v793, %v794
      %v796 = vsel %vm620, %v747, 0.0
      %v797 = vadd.f32 %v795, %v796
      %v798 = vsel %vm620, %v748, 0.0
      %v799 = vadd.f32 %v797, %v798
      %v800 = vsel %vm620, %v749, 0.0
      %v801 = vadd.f32 %v799, %v800
      %v802 = vsel %vm620, %v750, 0.0
      %v803 = vadd.f32 %v801, %v802
      %v804 = vsel %vm620, %v751, 0.0
      %v805 = vadd.f32 %v803, %v804
      %v806 = vsel %vm620, %v752, 0.0
      %v807 = vadd.f32 %v805, %v806
      %v808 = vsel %vm620, %v753, 0.0
      %v809 = vadd.f32 %v807, %v808
      %v810 = vsel %vm620, %v754, 0.0
      %v811 = vadd.f32 %v809, %v810
      %v812 = vsel %vm620, %v755, 0.0
      %v813 = vadd.f32 %v811, %v812
      %v814 = vsel %vm620, %v756, 0.0
      %v815 = vadd.f32 %v813, %v814
      %v816 = vsel %vm620, %v757, 0.0
      %v817 = vadd.f32 %v815, %v816
      %v818 = vsel %vm620, %v758, 0.0
      %v819 = vadd.f32 %v817, %v818
      %v820 = vsel %vm620, %v759, 0.0
      %v821 = vadd.f32 %v819, %v820
      %v822 = vsel %vm620, %v760, 0.0
      %v823 = vadd.f32 %v821, %v822
      %824 = vadd.xlane.f32.xlu0 %v823
      %v825 = vpop.xlane.xlu0 %824
      %v826 = vrot.slane %v825, 4
      %v827 = vadd.f32 %v825, %v826
      %v828 = vrot.slane %v827, 2
      %v829 = vadd.f32 %v827, %v828
      %v830 = vrot.slane %v829, 1
      %v831 = vadd.f32 %v829, %v830
      %s832 = vtos %v831
      %v833 = vrcp.pop 1024.0
      %s834 = vtos %v833
      %s835 = smul.f32 %s832, %s834
      %s836 = sadd.f32 %s835, 1e-05
      %v837 = vstv %s836
      %v838 = vrsqrt.pop %v837
      %s839 = vtos %v838
      %v840 = vstv %s839
      %v841 = vmul.f32 %v697, %v840
      %v842 = vmul.f32 %v698, %v840
      %v843 = vmul.f32 %v699, %v840
      %v844 = vmul.f32 %v700, %v840
      %v845 = vmul.f32 %v701, %v840
      %v846 = vmul.f32 %v702, %v840
      %v847 = vmul.f32 %v703, %v840
      %v848 = vmul.f32 %v704, %v840
      %v849 = vmul.f32 %v705, %v840
      %v850 = vmul.f32 %v706, %v840
      %v851 = vmul.f32 %v707, %v840
      %v852 = vmul.f32 %v708, %v840
      %v853 = vmul.f32 %v709, %v840
      %v854 = vmul.f32 %v710, %v840
      %v855 = vmul.f32 %v711, %v840
      %v856 = vmul.f32 %v712, %v840
      %v857 = vmul.f32 %v713, %v840
      %v858 = vmul.f32 %v714, %v840
      %v859 = vmul.f32 %v715, %v840
      %v860 = vmul.f32 %v716, %v840
      %v861 = vmul.f32 %v717, %v840
      %v862 = vmul.f32 %v718, %v840
      %v863 = vmul.f32 %v719, %v840
      %v864 = vmul.f32 %v720, %v840
      %v865 = vmul.f32 %v721, %v840
      %v866 = vmul.f32 %v722, %v840
      %v867 = vmul.f32 %v723, %v840
      %v868 = vmul.f32 %v724, %v840
      %v869 = vmul.f32 %v725, %v840
      %v870 = vmul.f32 %v726, %v840
      %v871 = vmul.f32 %v727, %v840
      %v872 = vmul.f32 %v728, %v840
      %v873 = vld [vmem:[%s3] sm:$0x1]
      %v875 = vlaneseq
      %v876 = vshrl.u32 %v875, 7
      %v877 = vsub.s32 0, %v876
      %v878 = vrot.slane %v873, %v877
      %v880 = vmul.f32 %v841, %v878
      %v881 = vmul.f32 %v842, %v878
      %v882 = vmul.f32 %v843, %v878
      %v883 = vmul.f32 %v844, %v878
      %v884 = vmul.f32 %v845, %v878
      %v885 = vmul.f32 %v846, %v878
      %v886 = vmul.f32 %v847, %v878
      %v887 = vmul.f32 %v848, %v878
      %v888 = vmul.f32 %v849, %v878
      %v889 = vmul.f32 %v850, %v878
      %v890 = vmul.f32 %v851, %v878
      %v891 = vmul.f32 %v852, %v878
      %v892 = vmul.f32 %v853, %v878
      %v893 = vmul.f32 %v854, %v878
      %v894 = vmul.f32 %v855, %v878
      %v895 = vmul.f32 %v856, %v878
      %v896 = vmul.f32 %v857, %v878
      %v897 = vmul.f32 %v858, %v878
      %v898 = vmul.f32 %v859, %v878
      %v899 = vmul.f32 %v860, %v878
      %v900 = vmul.f32 %v861, %v878
      %v901 = vmul.f32 %v862, %v878
      %v902 = vmul.f32 %v863, %v878
      %v903 = vmul.f32 %v864, %v878
      %v904 = vmul.f32 %v865, %v878
      %v905 = vmul.f32 %v866, %v878
      %v906 = vmul.f32 %v867, %v878
      %v907 = vmul.f32 %v868, %v878
      %v908 = vmul.f32 %v869, %v878
      %v909 = vmul.f32 %v870, %v878
      %v910 = vmul.f32 %v871, %v878
      %v911 = vmul.f32 %v872, %v878
      %v912 = vld [vmem:[%s4] sm:$0x1]
      %v914 = vlaneseq
      %v915 = vshrl.u32 %v914, 7
      %v916 = vsub.s32 0, %v915
      %v917 = vrot.slane %v912, %v916
      %v919 = vadd.f32 %v880, %v917
      %v920 = vadd.f32 %v881, %v917
      %v921 = vadd.f32 %v882, %v917
      %v922 = vadd.f32 %v883, %v917
      %v923 = vadd.f32 %v884, %v917
      %v924 = vadd.f32 %v885, %v917
      %v925 = vadd.f32 %v886, %v917
      %v926 = vadd.f32 %v887, %v917
      %v927 = vadd.f32 %v888, %v917
      %v928 = vadd.f32 %v889, %v917
      %v929 = vadd.f32 %v890, %v917
      %v930 = vadd.f32 %v891, %v917
      %v931 = vadd.f32 %v892, %v917
      %v932 = vadd.f32 %v893, %v917
      %v933 = vadd.f32 %v894, %v917
      %v934 = vadd.f32 %v895, %v917
      %v935 = vadd.f32 %v896, %v917
      %v936 = vadd.f32 %v897, %v917
      %v937 = vadd.f32 %v898, %v917
      %v938 = vadd.f32 %v899, %v917
      %v939 = vadd.f32 %v900, %v917
      %v940 = vadd.f32 %v901, %v917
      %v941 = vadd.f32 %v902, %v917
      %v942 = vadd.f32 %v903, %v917
      %v943 = vadd.f32 %v904, %v917
      %v944 = vadd.f32 %v905, %v917
      %v945 = vadd.f32 %v906, %v917
      %v946 = vadd.f32 %v907, %v917
      %v947 = vadd.f32 %v908, %v917
      %v948 = vadd.f32 %v909, %v917
      %v949 = vadd.f32 %v910, %v917
      %v950 = vadd.f32 %v911, %v917
      %951 = vst.msk [vmem:[%s224] sm:$0xff] %vm620, %v919
      %952 = vst.msk [vmem:[%s224 + $0x8] sm:$0xff] %vm620, %v920
      %953 = vst.msk [vmem:[%s224 + $0x10] sm:$0xff] %vm620, %v921
      %954 = vst.msk [vmem:[%s224 + $0x18] sm:$0xff] %vm620, %v922
      %955 = vst.msk [vmem:[%s224 + $0x20] sm:$0xff] %vm620, %v923
      %956 = vst.msk [vmem:[%s224 + $0x28] sm:$0xff] %vm620, %v924
      %957 = vst.msk [vmem:[%s224 + $0x30] sm:$0xff] %vm620, %v925
      %958 = vst.msk [vmem:[%s224 + $0x38] sm:$0xff] %vm620, %v926
      %959 = vst.msk [vmem:[%s224 + $0x40] sm:$0xff] %vm620, %v927
      %960 = vst.msk [vmem:[%s224 + $0x48] sm:$0xff] %vm620, %v928
      %961 = vst.msk [vmem:[%s224 + $0x50] sm:$0xff] %vm620, %v929
      %962 = vst.msk [vmem:[%s224 + $0x58] sm:$0xff] %vm620, %v930
      %963 = vst.msk [vmem:[%s224 + $0x60] sm:$0xff] %vm620, %v931
      %964 = vst.msk [vmem:[%s224 + $0x68] sm:$0xff] %vm620, %v932
      %965 = vst.msk [vmem:[%s224 + $0x70] sm:$0xff] %vm620, %v933
      %966 = vst.msk [vmem:[%s224 + $0x78] sm:$0xff] %vm620, %v934
      %967 = vst.msk [vmem:[%s224 + $0x80] sm:$0xff] %vm620, %v935
      %968 = vst.msk [vmem:[%s224 + $0x88] sm:$0xff] %vm620, %v936
      %969 = vst.msk [vmem:[%s224 + $0x90] sm:$0xff] %vm620, %v937
      %970 = vst.msk [vmem:[%s224 + $0x98] sm:$0xff] %vm620, %v938
      %971 = vst.msk [vmem:[%s224 + $0xa0] sm:$0xff] %vm620, %v939
      %972 = vst.msk [vmem:[%s224 + $0xa8] sm:$0xff] %vm620, %v940
      %973 = vst.msk [vmem:[%s224 + $0xb0] sm:$0xff] %vm620, %v941
      %974 = vst.msk [vmem:[%s224 + $0xb8] sm:$0xff] %vm620, %v942
      %975 = vst.msk [vmem:[%s224 + $0xc0] sm:$0xff] %vm620, %v943
      %976 = vst.msk [vmem:[%s224 + $0xc8] sm:$0xff] %vm620, %v944
      %977 = vst.msk [vmem:[%s224 + $0xd0] sm:$0xff] %vm620, %v945
      %978 = vst.msk [vmem:[%s224 + $0xd8] sm:$0xff] %vm620, %v946
      %979 = vst.msk [vmem:[%s224 + $0xe0] sm:$0xff] %vm620, %v947
      %980 = vst.msk [vmem:[%s224 + $0xe8] sm:$0xff] %vm620, %v948
      %981 = vst.msk [vmem:[%s224 + $0xf0] sm:$0xff] %vm620, %v949
      %982 = vst.msk [vmem:[%s224 + $0xf8] sm:$0xff] %vm620, %v950
      %p983 = scmp.lt.s32.totalorder %s16, 1
      %s984 = scalar_select %p983, %s16, 1
      %s985 = smul.addr %s984, 32
      %s986 = smul.addr %s985, 8
      %s987 = scalar_lea.vmem %s5, %s986
      // Predicated region
      $region41: #{texture_finder_forward.8} parent=39 // pred_check
        %p988 = pneg %p144
      $region42: #{texture_finder_forward.8} parent=39 // pred_check_branch
        %990 = sbr.rel (%p988) target = $region44
      $region43: #{texture_finder_forward.8} parent=39 // pred_region
        _
      $region44: #{texture_finder_forward.8} parent=39 // pred_fallthru
        _
    $region40: #{texture_finder_forward.8} parent=5 // pred_fallthru
      _
    %p991 = scmp.le.s32.totalorder 2, %s11
    // Predicated region
    $region45: #{texture_finder_forward.8} parent=5 // pred_check
      %p992 = pneg %p991
    $region46: #{texture_finder_forward.8} parent=5 // pred_check_branch
      %994 = sbr.rel (%p992) target = $region48
    $region47: #{texture_finder_forward.8} parent=5 // pred_region
      %s995 = ssub.s32 %s11, 2
      // Predicated region
      $region49: #{texture_finder_forward.8} parent=47 // pred_check
        %p996 = pneg %p150
      $region50: #{texture_finder_forward.8} parent=47 // pred_check_branch
        %998 = sbr.rel (%p996) target = $region52
      $region51: #{texture_finder_forward.8} parent=47 // pred_region
        %p999 = scmp.lt.s32.totalorder %s17, 1
        %s1000 = scalar_select %p999, %s17, 1
        %s1001 = smul.addr %s1000, 32
        %s1002 = smul.addr %s1001, 8
        %s1003 = scalar_lea.vmem %s5, %s1002
      $region52: #{texture_finder_forward.8} parent=47 // pred_fallthru
        _
    $region48: #{texture_finder_forward.8} parent=5 // pred_fallthru
      _
  $region6: #{texture_finder_forward.8} parent=0 // loop_footer
    %s15 = sadd.s32 1, %s11
  $region7: #{texture_finder_forward.8} parent=0 // loop_footer_branch
    %10 = sbr.rel target = $region3
  $region8: #{texture_finder_forward.8} parent=0 // loop_exit
    _

// kernel: texture_finder_forward.9
$region0: #{texture_finder_forward.9}
  #allocation0 [shape = 'u32[]', space=smem, size = 0x4, offset = 0x4, fixed_abs, tag = 'smem constant byte address 0x4 - core index']
  #allocation1 [shape = 'u32[144,128]{1,0:T(1,128)}', space=vmem, size = 0x12000, scoped, tag = 'internal scratch']
  %s0 = inlined_call_operand.vmem [shape: f32[2,64,64], index: 0, kind: input, shape index: {}]
  %s1 = inlined_call_operand.vmem [shape: f32[64,16], index: 1, kind: input, shape index: {}]
  %s2 = inlined_call_operand.vmem [shape: f32[1,16], index: 2, kind: input, shape index: {}, may-alias: {2,4}]
  %s3 = inlined_call_operand.vmem [shape: f32[1,16], index: 3, kind: input, shape index: {}]
  %s4 = inlined_call_operand.vmem [shape: f32[1,16], index: 4, kind: input, shape index: {}, may-alias: {2,4}]
  %s5 = inlined_call_operand.vmem [shape: f32[2,64,16], index: 5, kind: output, shape index: {}]
  %s6 = sld [smem:[#allocation0]]
  $region53: #{texture_finder_forward.9} parent=0
    _
  %s8 = ssub.s32 1, %s6
  %s9 = scalar_select 0, %s8, %s6
  loop: start=0, step=1, limit=4
  $region2: #{texture_finder_forward.9} parent=0 // loop_pre_header
    _
  $region3: #{texture_finder_forward.9} parent=0 // loop_header
    %s11 = sphi 0, %s15
    %p12 = scmp.ge.s32.totalorder %s11, 4
    %s21 = sphi 0, %s23
    %s24 = sphi 0, %s21
    %s25 = sphi 0, %s24
    %s41 = sphi 0, %s25
    %s45 = sphi 0, %s45
    %s47 = sphi 0, %s45
    %s48 = sphi 0, %s47
    %s62 = sphi 0, %s48
    %s66 = sphi 0, %s66
    %s68 = sphi 0, %s66
    %s69 = sphi 0, %s68
    %s83 = sphi 0, %s69
    %s87 = sphi 0, %s87
    %s89 = sphi 0, %s87
    %s90 = sphi 0, %s89
    %s104 = sphi 0, %s90
    %s108 = sphi 0, %s108
    %s110 = sphi 0, %s108
    %s111 = sphi 0, %s110
    %s125 = sphi 0, %s111
    %s131 = sphi 0, %s133
    %s134 = sphi 0, %s131
    %s135 = sphi 0, %s134
    %s151 = sphi 0, %s135
  $region4: #{texture_finder_forward.9} parent=0 // loop_header_branch
    %14 = sbr.rel (%p12) target = $region8
  $region5: #{texture_finder_forward.9} parent=0 // loop_body
    %s16 = ssub.s32 %s11, 1
    %s17 = ssub.s32 %s11, 2
    %s18 = sadd.s32 %s11, 1
    %s19 = ssub.s32 %s11, %s18
    %p20 = scmp.eq.s32.totalorder %s19, 0
    %s22 = sadd.s32 %s21, 1
    %s23 = scalar_select %p20, %s21, %s22
    %p26 = pneg %p20
    %p27 = scmp.eq.s32.totalorder %s11, 1
    %p28 = por %p26, %p27
    %p29 = scmp.ne.s32.totalorder %s21, %s24
    %p30 = scmp.eq.s32.totalorder %s11, 0
    %p31 = por %p29, %p30
    %p32 = scmp.ne.s32.totalorder %s21, %s24
    %p33 = scmp.eq.s32.totalorder %s16, 1
    %p34 = por %p32, %p33
    %p35 = scmp.ne.s32.totalorder %s24, %s25
    %p36 = scmp.eq.s32.totalorder %s16, 0
    %p37 = por %p35, %p36
    %p38 = scmp.ne.s32.totalorder %s24, %s25
    %p39 = scmp.eq.s32.totalorder %s17, 1
    %p40 = por %p38, %p39
    %p42 = scmp.ne.s32.totalorder %s25, %s41
    %p43 = scmp.eq.s32.totalorder %s17, 0
    %p44 = por %p42, %p43
    %s46 = sadd.s32 %s45, 1
    %p49 = scmp.eq.s32.totalorder %s11, 1
    %p50 = scmp.ne.s32.totalorder %s45, %s47
    %p51 = scmp.eq.s32.totalorder %s11, 0
    %p52 = por %p50, %p51
    %p53 = scmp.ne.s32.totalorder %s45, %s47
    %p54 = scmp.eq.s32.totalorder %s16, 1
    %p55 = por %p53, %p54
    %p56 = scmp.ne.s32.totalorder %s47, %s48
    %p57 = scmp.eq.s32.totalorder %s16, 0
    %p58 = por %p56, %p57
    %p59 = scmp.ne.s32.totalorder %s47, %s48
    %p60 = scmp.eq.s32.totalorder %s17, 1
    %p61 = por %p59, %p60
    %p63 = scmp.ne.s32.totalorder %s48, %s62
    %p64 = scmp.eq.s32.totalorder %s17, 0
    %p65 = por %p63, %p64
    %s67 = sadd.s32 %s66, 1
    %p70 = scmp.eq.s32.totalorder %s11, 1
    %p71 = scmp.ne.s32.totalorder %s66, %s68
    %p72 = scmp.eq.s32.totalorder %s11, 0
    %p73 = por %p71, %p72
    %p74 = scmp.ne.s32.totalorder %s66, %s68
    %p75 = scmp.eq.s32.totalorder %s16, 1
    %p76 = por %p74, %p75
    %p77 = scmp.ne.s32.totalorder %s68, %s69
    %p78 = scmp.eq.s32.totalorder %s16, 0
    %p79 = por %p77, %p78
    %p80 = scmp.ne.s32.totalorder %s68, %s69
    %p81 = scmp.eq.s32.totalorder %s17, 1
    %p82 = por %p80, %p81
    %p84 = scmp.ne.s32.totalorder %s69, %s83
    %p85 = scmp.eq.s32.totalorder %s17, 0
    %p86 = por %p84, %p85
    %s88 = sadd.s32 %s87, 1
    %p91 = scmp.eq.s32.totalorder %s11, 1
    %p92 = scmp.ne.s32.totalorder %s87, %s89
    %p93 = scmp.eq.s32.totalorder %s11, 0
    %p94 = por %p92, %p93
    %p95 = scmp.ne.s32.totalorder %s87, %s89
    %p96 = scmp.eq.s32.totalorder %s16, 1
    %p97 = por %p95, %p96
    %p98 = scmp.ne.s32.totalorder %s89, %s90
    %p99 = scmp.eq.s32.totalorder %s16, 0
    %p100 = por %p98, %p99
    %p101 = scmp.ne.s32.totalorder %s89, %s90
    %p102 = scmp.eq.s32.totalorder %s17, 1
    %p103 = por %p101, %p102
    %p105 = scmp.ne.s32.totalorder %s90, %s104
    %p106 = scmp.eq.s32.totalorder %s17, 0
    %p107 = por %p105, %p106
    %s109 = sadd.s32 %s108, 1
    %p112 = scmp.eq.s32.totalorder %s11, 1
    %p113 = scmp.ne.s32.totalorder %s108, %s110
    %p114 = scmp.eq.s32.totalorder %s11, 0
    %p115 = por %p113, %p114
    %p116 = scmp.ne.s32.totalorder %s108, %s110
    %p117 = scmp.eq.s32.totalorder %s16, 1
    %p118 = por %p116, %p117
    %p119 = scmp.ne.s32.totalorder %s110, %s111
    %p120 = scmp.eq.s32.totalorder %s16, 0
    %p121 = por %p119, %p120
    %p122 = scmp.ne.s32.totalorder %s110, %s111
    %p123 = scmp.eq.s32.totalorder %s17, 1
    %p124 = por %p122, %p123
    %p126 = scmp.ne.s32.totalorder %s111, %s125
    %p127 = scmp.eq.s32.totalorder %s17, 0
    %p128 = por %p126, %p127
    %s129 = ssub.s32 %s11, %s18
    %p130 = scmp.eq.s32.totalorder %s129, 0
    %s132 = sadd.s32 %s131, 1
    %s133 = scalar_select %p130, %s131, %s132
    %p136 = pneg %p130
    %p137 = scmp.eq.s32.totalorder %s11, 1
    %p138 = por %p136, %p137
    %p139 = scmp.ne.s32.totalorder %s131, %s134
    %p140 = scmp.eq.s32.totalorder %s11, 0
    %p141 = por %p139, %p140
    %p142 = scmp.ne.s32.totalorder %s131, %s134
    %p143 = scmp.eq.s32.totalorder %s16, 1
    %p144 = por %p142, %p143
    %p145 = scmp.ne.s32.totalorder %s134, %s135
    %p146 = scmp.eq.s32.totalorder %s16, 0
    %p147 = por %p145, %p146
    %p148 = scmp.ne.s32.totalorder %s134, %s135
    %p149 = scmp.eq.s32.totalorder %s17, 1
    %p150 = por %p148, %p149
    %p152 = scmp.ne.s32.totalorder %s135, %s151
    %p153 = scmp.eq.s32.totalorder %s17, 0
    %p154 = por %p152, %p153
    %p155 = scmp.le.s32.totalorder 1, %s11
    %p156 = scmp.lt.s32.totalorder %s11, 3
    %p157 = pnand %p155, %p156
    %p158 = pneg %p157
    // Predicated region
    $region9: #{texture_finder_forward.9} parent=5 // pred_check
      _
    $region10: #{texture_finder_forward.9} parent=5 // pred_check_branch
      %160 = sbr.rel (%p157) target = $region12
    $region11: #{texture_finder_forward.9} parent=5 // pred_region
      %s161 = ssub.s32 %s11, 1
      // Predicated region
      $region13: #{texture_finder_forward.9} parent=11 // pred_check
        %p162 = pneg %p58
      $region14: #{texture_finder_forward.9} parent=11 // pred_check_branch
        %164 = sbr.rel (%p162) target = $region16
      $region15: #{texture_finder_forward.9} parent=11 // pred_region
        _
      $region16: #{texture_finder_forward.9} parent=11 // pred_fallthru
        _
      // Predicated region
      $region17: #{texture_finder_forward.9} parent=11 // pred_check
        %p165 = pneg %p79
      $region18: #{texture_finder_forward.9} parent=11 // pred_check_branch
        %167 = sbr.rel (%p165) target = $region20
      $region19: #{texture_finder_forward.9} parent=11 // pred_region
        _
      $region20: #{texture_finder_forward.9} parent=11 // pred_fallthru
        _
      // Predicated region
      $region21: #{texture_finder_forward.9} parent=11 // pred_check
        %p168 = pneg %p100
      $region22: #{texture_finder_forward.9} parent=11 // pred_check_branch
        %170 = sbr.rel (%p168) target = $region24
      $region23: #{texture_finder_forward.9} parent=11 // pred_region
        _
      $region24: #{texture_finder_forward.9} parent=11 // pred_fallthru
        _
      // Predicated region
      $region25: #{texture_finder_forward.9} parent=11 // pred_check
        %p171 = pneg %p121
      $region26: #{texture_finder_forward.9} parent=11 // pred_check_branch
        %173 = sbr.rel (%p171) target = $region28
      $region27: #{texture_finder_forward.9} parent=11 // pred_region
        _
      $region28: #{texture_finder_forward.9} parent=11 // pred_fallthru
        _
    $region12: #{texture_finder_forward.9} parent=5 // pred_fallthru
      _
    %p174 = scmp.lt.s32.totalorder %s11, 2
    // Predicated region
    $region29: #{texture_finder_forward.9} parent=5 // pred_check
      %p175 = pneg %p174
    $region30: #{texture_finder_forward.9} parent=5 // pred_check_branch
      %177 = sbr.rel (%p175) target = $region32
    $region31: #{texture_finder_forward.9} parent=5 // pred_region
      // Predicated region
      $region33: #{texture_finder_forward.9} parent=31 // pred_check
        %p178 = pneg %p31
      $region34: #{texture_finder_forward.9} parent=31 // pred_check_branch
        %180 = sbr.rel (%p178) target = $region36
      $region35: #{texture_finder_forward.9} parent=31 // pred_region
        %p181 = scmp.lt.s32.totalorder %s11, 1
        %s182 = scalar_select %p181, %s11, 1
        %s183 = smul.addr %s182, 8
        %s184 = smul.addr %s183, 8
        %s185 = scalar_lea.vmem %s0, %s184
      $region36: #{texture_finder_forward.9} parent=31 // pred_fallthru
        _
    $region32: #{texture_finder_forward.9} parent=5 // pred_fallthru
      _
    %p186 = scmp.le.s32.totalorder 1, %s11
    %p187 = scmp.lt.s32.totalorder %s11, 3
    %p188 = pnand %p186, %p187
    %p189 = pneg %p188
    // Predicated region
    $region37: #{texture_finder_forward.9} parent=5 // pred_check
      _
    $region38: #{texture_finder_forward.9} parent=5 // pred_check_branch
      %191 = sbr.rel (%p188) target = $region40
    $region39: #{texture_finder_forward.9} parent=5 // pred_region
      %s192 = ssub.s32 %s11, 1
      %p193 = scmp.lt.s32.totalorder %s16, 1
      %s194 = scalar_select %p193, %s16, 1
      %s195 = smul.addr %s194, 8
      %s196 = smul.addr %s195, 8
      %s197 = scalar_lea.vmem %s0, %s196
      %p198 = pneg %p37
      %p199 = pneg %p34
      %p200 = pneg %p58
      %p201 = pneg %p55
      %p202 = pneg %p79
      %p203 = pneg %p76
      %p204 = pneg %p100
      %p205 = pneg %p97
      %p206 = pneg %p121
      %p207 = pneg %p118
      %p208 = pneg %p147
      %p209 = pneg %p144
      %p210 = scmp.lt.s32.totalorder %s16, 1
      %s211 = scalar_select %p210, %s16, 1
      %s212 = smul.addr %s211, 8
      %s213 = smul.addr %s212, 8
      %s214 = scalar_lea.vmem %s5, %s213
      %p215 = scmp.lt.s32.totalorder %s16, 1
      %s216 = scalar_select %p215, %s16, 1
      %s217 = smul.addr %s216, 8
      %s218 = smul.addr %s217, 8
      %s219 = scalar_lea.vmem %s0, %s218
      %p220 = scmp.lt.s32.totalorder %s16, 1
      %s221 = scalar_select %p220, %s16, 1
      %s222 = smul.addr %s221, 8
      %s223 = smul.addr %s222, 8
      %s224 = scalar_lea.vmem %s5, %s223
      %v225 = vld [vmem:[%s219] sm:$0xff]
      %v226 = vld [vmem:[%s219 + $0x8] sm:$0xff]
      %v227 = vld [vmem:[%s219 + $0x10] sm:$0xff]
      %v228 = vld [vmem:[%s219 + $0x18] sm:$0xff]
      %v229 = vld [vmem:[%s219 + $0x20] sm:$0xff]
      %v230 = vld [vmem:[%s219 + $0x28] sm:$0xff]
      %v231 = vld [vmem:[%s219 + $0x30] sm:$0xff]
      %v232 = vld [vmem:[%s219 + $0x38] sm:$0xff]
      %v233 = vld [vmem:[%s1] sm:$0xff]
      %v234 = vld [vmem:[%s1 + $0x8] sm:$0xff]
      %v235 = vld [vmem:[%s1 + $0x10] sm:$0xff]
      %v236 = vld [vmem:[%s1 + $0x18] sm:$0xff]
      %v237 = vld [vmem:[%s1 + $0x20] sm:$0xff]
      %v238 = vld [vmem:[%s1 + $0x28] sm:$0xff]
      %v239 = vld [vmem:[%s1 + $0x30] sm:$0xff]
      %v240 = vld [vmem:[%s1 + $0x38] sm:$0xff]
      %v241 = vld [vmem:[%s2] sm:$0x1]
      %v243 = vlaneseq
      %v244 = vshrl.u32 %v243, 7
      %v245 = vsub.s32 0, %v244
      %v246 = vrot.slane %v241, %v245
      %vm248 = vcmask 523264
      %v250 = vsel %vm248, %v225, 0
      %v253 = vsel %vm248, %v226, 0
      %v256 = vsel %vm248, %v227, 0
      %v259 = vsel %vm248, %v228, 0
      %v262 = vsel %vm248, %v229, 0
      %v265 = vsel %vm248, %v230, 0
      %v268 = vsel %vm248, %v231, 0
      %v271 = vsel %vm248, %v232, 0
      %273 = vmatprep.subr.mxu0 0.0
      %274 = vmatpush1.msra.mxu0 %v233
      %275 = vmatprep.subr.mxu0 0.0
      %276 = vmatpush1.msra.mxu0 %v234
      %277 = vmatprep.subr.mxu0 0.0
      %278 = vmatpush1.msra.mxu0 %v235
      %279 = vmatprep.subr.mxu0 0.0
      %280 = vmatpush1.msra.mxu0 %v236
      %281 = vmatprep.subr.mxu0 0.0
      %282 = vmatpush1.msra.mxu0 %v237
      %283 = vmatprep.subr.mxu0 0.0
      %284 = vmatpush1.msra.mxu0 %v238
      %285 = vmatprep.subr.mxu0 0.0
      %286 = vmatpush1.msra.mxu0 %v239
      %287 = vmatprep.subr.mxu0 0.0
      %288 = vmatpush1.msra.mxu0 %v240
      %289 = vmatprep.subr.mxu0 0.0
      %290 = vmatpush1.msra.mxu0 0.0
      %291 = vmatprep.subr.mxu0 0.0
      %292 = vmatpush1.msra.mxu0 0.0
      %293 = vmatprep.subr.mxu0 0.0
      %294 = vmatpush1.msra.mxu0 0.0
      %295 = vmatprep.subr.mxu0 0.0
      %296 = vmatpush1.msra.mxu0 0.0
      %297 = vmatprep.subr.mxu0 0.0
      %298 = vmatpush1.msra.mxu0 0.0
      %299 = vmatprep.subr.mxu0 0.0
      %300 = vmatpush1.msra.mxu0 0.0
      %301 = vmatprep.subr.mxu0 0.0
      %302 = vmatpush1.msra.mxu0 0.0
      %303 = vmatprep.subr.mxu0 0.0
      %304 = vmatpush1.msra.mxu0 0.0
      %305 = vmatprep.subr.mxu0 0.0
      %306 = vmatpush1.msra.mxu0 0.0
      %307 = vmatprep.subr.mxu0 0.0
      %308 = vmatpush1.msra.mxu0 0.0
      %309 = vmatprep.subr.mxu0 0.0
      %310 = vmatpush1.msra.mxu0 0.0
      %311 = vmatprep.subr.mxu0 0.0
      %312 = vmatpush1.msra.mxu0 0.0
      %313 = vmatprep.subr.mxu0 0.0
      %314 = vmatpush1.msra.mxu0 0.0
      %315 = vmatprep.subr.mxu0 0.0
      %316 = vmatpush1.msra.mxu0 0.0
      %317 = vmatprep.subr.mxu0 0.0
      %318 = vmatpush1.msra.mxu0 0.0
      %319 = vmatprep.subr.mxu0 0.0
      %320 = vmatpush1.msra.mxu0 0.0
      %321 = vmatprep.subr.mxu0 0.0
      %322 = vmatpush1.msra.mxu0 0.0
      %323 = vmatprep.subr.mxu0 0.0
      %324 = vmatpush1.msra.mxu0 0.0
      %325 = vmatprep.subr.mxu0 0.0
      %326 = vmatpush1.msra.mxu0 0.0
      %327 = vmatprep.subr.mxu0 0.0
      %328 = vmatpush1.msra.mxu0 0.0
      %329 = vmatprep.subr.mxu0 0.0
      %330 = vmatpush1.msra.mxu0 0.0
      %331 = vmatprep.subr.mxu0 0.0
      %332 = vmatpush1.msra.mxu0 0.0
      %333 = vmatprep.subr.mxu0 0.0
      %334 = vmatpush1.msra.mxu0 0.0
      %335 = vmatprep.subr.mxu0 0.0
      %336 = vmatpush1.msra.mxu0 0.0
      %337 = vmatprep.mubr.f32.mxu0 0.0
      %338 = vmatmul.mubr.f32.gmra.mrb[0].mxu0 %v250
      %v339 = vpop.f32.mrb[0].mxu0
      %v340 = vadd.f32 %v246, %v339
      %v341 = vpop.f32.mrb[0].mxu0
      %342 = vmatprep.mubr.f32.mxu0 0.0
      %343 = vmatmul.mubr.f32.gmra.mrb[0].mxu0 %v253
      %v344 = vpop.f32.mrb[0].mxu0
      %v345 = vadd.f32 %v246, %v344
      %v346 = vpop.f32.mrb[0].mxu0
      %347 = vmatprep.mubr.f32.mxu0 0.0
      %348 = vmatmul.mubr.f32.gmra.mrb[0].mxu0 %v256
      %v349 = vpop.f32.mrb[0].mxu0
      %v350 = vadd.f32 %v246, %v349
      %v351 = vpop.f32.mrb[0].mxu0
      %352 = vmatprep.mubr.f32.mxu0 0.0
      %353 = vmatmul.mubr.f32.gmra.mrb[0].mxu0 %v259
      %v354 = vpop.f32.mrb[0].mxu0
      %v355 = vadd.f32 %v246, %v354
      %v356 = vpop.f32.mrb[0].mxu0
      %357 = vmatprep.mubr.f32.mxu0 0.0
      %358 = vmatmul.mubr.f32.gmra.mrb[0].mxu0 %v262
      %v359 = vpop.f32.mrb[0].mxu0
      %v360 = vadd.f32 %v246, %v359
      %v361 = vpop.f32.mrb[0].mxu0
      %362 = vmatprep.mubr.f32.mxu0 0.0
      %363 = vmatmul.mubr.f32.gmra.mrb[0].mxu0 %v265
      %v364 = vpop.f32.mrb[0].mxu0
      %v365 = vadd.f32 %v246, %v364
      %v366 = vpop.f32.mrb[0].mxu0
      %367 = vmatprep.mubr.f32.mxu0 0.0
      %368 = vmatmul.mubr.f32.gmra.mrb[0].mxu0 %v268
      %v369 = vpop.f32.mrb[0].mxu0
      %v370 = vadd.f32 %v246, %v369
      %v371 = vpop.f32.mrb[0].mxu0
      %372 = vmatprep.mubr.f32.mxu0 0.0
      %373 = vmatmul.mubr.f32.gmra.mrb[0].mxu0 %v271
      %v374 = vpop.f32.mrb[0].mxu0
      %v375 = vadd.f32 %v246, %v374
      %v376 = vpop.f32.mrb[0].mxu0
      %377 = vdwg.mxu0
      %v378 = vmax.f32 %v340, 0.0
      %v379 = vmax.f32 %v345, 0.0
      %v380 = vmax.f32 %v350, 0.0
      %v381 = vmax.f32 %v355, 0.0
      %v382 = vmax.f32 %v360, 0.0
      %v383 = vmax.f32 %v365, 0.0
      %v384 = vmax.f32 %v370, 0.0
      %v385 = vmax.f32 %v375, 0.0
      %vm386 = vcmask 130048
      %v387 = vsel %vm386, %v378, 0.0
      %v388 = vsel %vm386, %v379, 0.0
      %v389 = vadd.f32 %v387, %v388
      %v390 = vsel %vm386, %v380, 0.0
      %v391 = vadd.f32 %v389, %v390
      %v392 = vsel %vm386, %v381, 0.0
      %v393 = vadd.f32 %v391, %v392
      %v394 = vsel %vm386, %v382, 0.0
      %v395 = vadd.f32 %v393, %v394
      %v396 = vsel %vm386, %v383, 0.0
      %v397 = vadd.f32 %v395, %v396
      %v398 = vsel %vm386, %v384, 0.0
      %v399 = vadd.f32 %v397, %v398
      %v400 = vsel %vm386, %v385, 0.0
      %v401 = vadd.f32 %v399, %v400
      %402 = vadd.xlane.f32.xlu0 %v401
      %v403 = vpop.xlane.xlu0 %402
      %v404 = vrot.slane %v403, 4
      %v405 = vadd.f32 %v403, %v404
      %v406 = vrot.slane %v405, 2
      %v407 = vadd.f32 %v405, %v406
      %v408 = vrot.slane %v407, 1
      %v409 = vadd.f32 %v407, %v408
      %s410 = vtos %v409
      %v411 = vrcp.pop 1024.0
      %s412 = vtos %v411
      %s413 = smul.f32 %s410, %s412
      %v414 = vstv %s413
      %v415 = vsub.f32 %v378, %v414
      %v416 = vsub.f32 %v379, %v414
      %v417 = vsub.f32 %v380, %v414
      %v418 = vsub.f32 %v381, %v414
      %v419 = vsub.f32 %v382, %v414
      %v420 = vsub.f32 %v383, %v414
      %v421 = vsub.f32 %v384, %v414
      %v422 = vsub.f32 %v385, %v414
      %v423 = vmul.f32 %v415, %v415
      %v424 = vmul.f32 %v416, %v416
      %v425 = vmul.f32 %v417, %v417
      %v426 = vmul.f32 %v418, %v418
      %v427 = vmul.f32 %v419, %v419
      %v428 = vmul.f32 %v420, %v420
      %v429 = vmul.f32 %v421, %v421
      %v430 = vmul.f32 %v422, %v422
      %v431 = vsel %vm386, %v423, 0.0
      %v432 = vsel %vm386, %v424, 0.0
      %v433 = vadd.f32 %v431, %v432
      %v434 = vsel %vm386, %v425, 0.0
      %v435 = vadd.f32 %v433, %v434
      %v436 = vsel %vm386, %v426, 0.0
      %v437 = vadd.f32 %v435, %v436
      %v438 = vsel %vm386, %v427, 0.0
      %v439 = vadd.f32 %v437, %v438
      %v440 = vsel %vm386, %v428, 0.0
      %v441 = vadd.f32 %v439, %v440
      %v442 = vsel %vm386, %v429, 0.0
      %v443 = vadd.f32 %v441, %v442
      %v444 = vsel %vm386, %v430, 0.0
      %v445 = vadd.f32 %v443, %v444
      %446 = vadd.xlane.f32.xlu0 %v445
      %v447 = vpop.xlane.xlu0 %446
      %v448 = vrot.slane %v447, 4
      %v449 = vadd.f32 %v447, %v448
      %v450 = vrot.slane %v449, 2
      %v451 = vadd.f32 %v449, %v450
      %v452 = vrot.slane %v451, 1
      %v453 = vadd.f32 %v451, %v452
      %s454 = vtos %v453
      %v455 = vrcp.pop 1024.0
      %s456 = vtos %v455
      %s457 = smul.f32 %s454, %s456
      %s458 = sadd.f32 %s457, 1e-05
      %v459 = vstv %s458
      %v460 = vrsqrt.pop %v459
      %s461 = vtos %v460
      %v462 = vstv %s461
      %v463 = vmul.f32 %v415, %v462
      %v464 = vmul.f32 %v416, %v462
      %v465 = vmul.f32 %v417, %v462
      %v466 = vmul.f32 %v418, %v462
      %v467 = vmul.f32 %v419, %v462
      %v468 = vmul.f32 %v420, %v462
      %v469 = vmul.f32 %v421, %v462
      %v470 = vmul.f32 %v422, %v462
      %v471 = vld [vmem:[%s3] sm:$0x1]
      %v473 = vlaneseq
      %v474 = vshrl.u32 %v473, 7
      %v475 = vsub.s32 0, %v474
      %v476 = vrot.slane %v471, %v475
      %v478 = vmul.f32 %v463, %v476
      %v479 = vmul.f32 %v464, %v476
      %v480 = vmul.f32 %v465, %v476
      %v481 = vmul.f32 %v466, %v476
      %v482 = vmul.f32 %v467, %v476
      %v483 = vmul.f32 %v468, %v476
      %v484 = vmul.f32 %v469, %v476
      %v485 = vmul.f32 %v470, %v476
      %v486 = vld [vmem:[%s4] sm:$0x1]
      %v488 = vlaneseq
      %v489 = vshrl.u32 %v488, 7
      %v490 = vsub.s32 0, %v489
      %v491 = vrot.slane %v486, %v490
      %v493 = vadd.f32 %v478, %v491
      %v494 = vadd.f32 %v479, %v491
      %v495 = vadd.f32 %v480, %v491
      %v496 = vadd.f32 %v481, %v491
      %v497 = vadd.f32 %v482, %v491
      %v498 = vadd.f32 %v483, %v491
      %v499 = vadd.f32 %v484, %v491
      %v500 = vadd.f32 %v485, %v491
      %501 = vst.msk [vmem:[%s224] sm:$0xff] %vm386, %v493
      %502 = vst.msk [vmem:[%s224 + $0x8] sm:$0xff] %vm386, %v494
      %503 = vst.msk [vmem:[%s224 + $0x10] sm:$0xff] %vm386, %v495
      %504 = vst.msk [vmem:[%s224 + $0x18] sm:$0xff] %vm386, %v496
      %505 = vst.msk [vmem:[%s224 + $0x20] sm:$0xff] %vm386, %v497
      %506 = vst.msk [vmem:[%s224 + $0x28] sm:$0xff] %vm386, %v498
      %507 = vst.msk [vmem:[%s224 + $0x30] sm:$0xff] %vm386, %v499
      %508 = vst.msk [vmem:[%s224 + $0x38] sm:$0xff] %vm386, %v500
      %p509 = scmp.lt.s32.totalorder %s16, 1
      %s510 = scalar_select %p509, %s16, 1
      %s511 = smul.addr %s510, 8
      %s512 = smul.addr %s511, 8
      %s513 = scalar_lea.vmem %s5, %s512
      // Predicated region
      $region41: #{texture_finder_forward.9} parent=39 // pred_check
        %p514 = pneg %p144
      $region42: #{texture_finder_forward.9} parent=39 // pred_check_branch
        %516 = sbr.rel (%p514) target = $region44
      $region43: #{texture_finder_forward.9} parent=39 // pred_region
        _
      $region44: #{texture_finder_forward.9} parent=39 // pred_fallthru
        _
    $region40: #{texture_finder_forward.9} parent=5 // pred_fallthru
      _
    %p517 = scmp.le.s32.totalorder 2, %s11
    // Predicated region
    $region45: #{texture_finder_forward.9} parent=5 // pred_check
      %p518 = pneg %p517
    $region46: #{texture_finder_forward.9} parent=5 // pred_check_branch
      %520 = sbr.rel (%p518) target = $region48
    $region47: #{texture_finder_forward.9} parent=5 // pred_region
      %s521 = ssub.s32 %s11, 2
      // Predicated region
      $region49: #{texture_finder_forward.9} parent=47 // pred_check
        %p522 = pneg %p150
      $region50: #{texture_finder_forward.9} parent=47 // pred_check_branch
        %524 = sbr.rel (%p522) target = $region52
      $region51: #{texture_finder_forward.9} parent=47 // pred_region
        %p525 = scmp.lt.s32.totalorder %s17, 1
        %s526 = scalar_select %p525, %s17, 1
        %s527 = smul.addr %s526, 8
        %s528 = smul.addr %s527, 8
        %s529 = scalar_lea.vmem %s5, %s528
      $region52: #{texture_finder_forward.9} parent=47 // pred_fallthru
        _
    $region48: #{texture_finder_forward.9} parent=5 // pred_fallthru
      _
  $region6: #{texture_finder_forward.9} parent=0 // loop_footer
    %s15 = sadd.s32 1, %s11
  $region7: #{texture_finder_forward.9} parent=0 // loop_footer_branch
    %10 = sbr.rel target = $region3
  $region8: #{texture_finder_forward.9} parent=0 // loop_exit
    _

// kernel: texture_finder_forward.10
$region0: #{texture_finder_forward.10}
  #allocation0 [shape = 'u32[]', space=smem, size = 0x4, offset = 0x4, fixed_abs, tag = 'smem constant byte address 0x4 - core index']
  #allocation1 [shape = 'u32[144,128]{1,0:T(1,128)}', space=vmem, size = 0x12000, scoped, tag = 'internal scratch']
  %s0 = inlined_call_operand.vmem [shape: f32[2,16,256], index: 0, kind: input, shape index: {}]
  %s1 = inlined_call_operand.vmem [shape: f32[256,32], index: 1, kind: input, shape index: {}]
  %s2 = inlined_call_operand.vmem [shape: f32[1,32], index: 2, kind: input, shape index: {}, may-alias: {2,4}]
  %s3 = inlined_call_operand.vmem [shape: f32[1,32], index: 3, kind: input, shape index: {}]
  %s4 = inlined_call_operand.vmem [shape: f32[1,32], index: 4, kind: input, shape index: {}, may-alias: {2,4}]
  %s5 = inlined_call_operand.vmem [shape: f32[2,16,32], index: 5, kind: output, shape index: {}]
  %s6 = sld [smem:[#allocation0]]
  $region53: #{texture_finder_forward.10} parent=0
    _
  %s8 = ssub.s32 1, %s6
  %s9 = scalar_select 0, %s8, %s6
  loop: start=0, step=1, limit=4
  $region2: #{texture_finder_forward.10} parent=0 // loop_pre_header
    _
  $region3: #{texture_finder_forward.10} parent=0 // loop_header
    %s11 = sphi 0, %s15
    %p12 = scmp.ge.s32.totalorder %s11, 4
    %s21 = sphi 0, %s23
    %s24 = sphi 0, %s21
    %s25 = sphi 0, %s24
    %s41 = sphi 0, %s25
    %s45 = sphi 0, %s45
    %s47 = sphi 0, %s45
    %s48 = sphi 0, %s47
    %s62 = sphi 0, %s48
    %s66 = sphi 0, %s66
    %s68 = sphi 0, %s66
    %s69 = sphi 0, %s68
    %s83 = sphi 0, %s69
    %s87 = sphi 0, %s87
    %s89 = sphi 0, %s87
    %s90 = sphi 0, %s89
    %s104 = sphi 0, %s90
    %s108 = sphi 0, %s108
    %s110 = sphi 0, %s108
    %s111 = sphi 0, %s110
    %s125 = sphi 0, %s111
    %s131 = sphi 0, %s133
    %s134 = sphi 0, %s131
    %s135 = sphi 0, %s134
    %s151 = sphi 0, %s135
  $region4: #{texture_finder_forward.10} parent=0 // loop_header_branch
    %14 = sbr.rel (%p12) target = $region8
  $region5: #{texture_finder_forward.10} parent=0 // loop_body
    %s16 = ssub.s32 %s11, 1
    %s17 = ssub.s32 %s11, 2
    %s18 = sadd.s32 %s11, 1
    %s19 = ssub.s32 %s11, %s18
    %p20 = scmp.eq.s32.totalorder %s19, 0
    %s22 = sadd.s32 %s21, 1
    %s23 = scalar_select %p20, %s21, %s22
    %p26 = pneg %p20
    %p27 = scmp.eq.s32.totalorder %s11, 1
    %p28 = por %p26, %p27
    %p29 = scmp.ne.s32.totalorder %s21, %s24
    %p30 = scmp.eq.s32.totalorder %s11, 0
    %p31 = por %p29, %p30
    %p32 = scmp.ne.s32.totalorder %s21, %s24
    %p33 = scmp.eq.s32.totalorder %s16, 1
    %p34 = por %p32, %p33
    %p35 = scmp.ne.s32.totalorder %s24, %s25
    %p36 = scmp.eq.s32.totalorder %s16, 0
    %p37 = por %p35, %p36
    %p38 = scmp.ne.s32.totalorder %s24, %s25
    %p39 = scmp.eq.s32.totalorder %s17, 1
    %p40 = por %p38, %p39
    %p42 = scmp.ne.s32.totalorder %s25, %s41
    %p43 = scmp.eq.s32.totalorder %s17, 0
    %p44 = por %p42, %p43
    %s46 = sadd.s32 %s45, 1
    %p49 = scmp.eq.s32.totalorder %s11, 1
    %p50 = scmp.ne.s32.totalorder %s45, %s47
    %p51 = scmp.eq.s32.totalorder %s11, 0
    %p52 = por %p50, %p51
    %p53 = scmp.ne.s32.totalorder %s45, %s47
    %p54 = scmp.eq.s32.totalorder %s16, 1
    %p55 = por %p53, %p54
    %p56 = scmp.ne.s32.totalorder %s47, %s48
    %p57 = scmp.eq.s32.totalorder %s16, 0
    %p58 = por %p56, %p57
    %p59 = scmp.ne.s32.totalorder %s47, %s48
    %p60 = scmp.eq.s32.totalorder %s17, 1
    %p61 = por %p59, %p60
    %p63 = scmp.ne.s32.totalorder %s48, %s62
    %p64 = scmp.eq.s32.totalorder %s17, 0
    %p65 = por %p63, %p64
    %s67 = sadd.s32 %s66, 1
    %p70 = scmp.eq.s32.totalorder %s11, 1
    %p71 = scmp.ne.s32.totalorder %s66, %s68
    %p72 = scmp.eq.s32.totalorder %s11, 0
    %p73 = por %p71, %p72
    %p74 = scmp.ne.s32.totalorder %s66, %s68
    %p75 = scmp.eq.s32.totalorder %s16, 1
    %p76 = por %p74, %p75
    %p77 = scmp.ne.s32.totalorder %s68, %s69
    %p78 = scmp.eq.s32.totalorder %s16, 0
    %p79 = por %p77, %p78
    %p80 = scmp.ne.s32.totalorder %s68, %s69
    %p81 = scmp.eq.s32.totalorder %s17, 1
    %p82 = por %p80, %p81
    %p84 = scmp.ne.s32.totalorder %s69, %s83
    %p85 = scmp.eq.s32.totalorder %s17, 0
    %p86 = por %p84, %p85
    %s88 = sadd.s32 %s87, 1
    %p91 = scmp.eq.s32.totalorder %s11, 1
    %p92 = scmp.ne.s32.totalorder %s87, %s89
    %p93 = scmp.eq.s32.totalorder %s11, 0
    %p94 = por %p92, %p93
    %p95 = scmp.ne.s32.totalorder %s87, %s89
    %p96 = scmp.eq.s32.totalorder %s16, 1
    %p97 = por %p95, %p96
    %p98 = scmp.ne.s32.totalorder %s89, %s90
    %p99 = scmp.eq.s32.totalorder %s16, 0
    %p100 = por %p98, %p99
    %p101 = scmp.ne.s32.totalorder %s89, %s90
    %p102 = scmp.eq.s32.totalorder %s17, 1
    %p103 = por %p101, %p102
    %p105 = scmp.ne.s32.totalorder %s90, %s104
    %p106 = scmp.eq.s32.totalorder %s17, 0
    %p107 = por %p105, %p106
    %s109 = sadd.s32 %s108, 1
    %p112 = scmp.eq.s32.totalorder %s11, 1
    %p113 = scmp.ne.s32.totalorder %s108, %s110
    %p114 = scmp.eq.s32.totalorder %s11, 0
    %p115 = por %p113, %p114
    %p116 = scmp.ne.s32.totalorder %s108, %s110
    %p117 = scmp.eq.s32.totalorder %s16, 1
    %p118 = por %p116, %p117
    %p119 = scmp.ne.s32.totalorder %s110, %s111
    %p120 = scmp.eq.s32.totalorder %s16, 0
    %p121 = por %p119, %p120
    %p122 = scmp.ne.s32.totalorder %s110, %s111
    %p123 = scmp.eq.s32.totalorder %s17, 1
    %p124 = por %p122, %p123
    %p126 = scmp.ne.s32.totalorder %s111, %s125
    %p127 = scmp.eq.s32.totalorder %s17, 0
    %p128 = por %p126, %p127
    %s129 = ssub.s32 %s11, %s18
    %p130 = scmp.eq.s32.totalorder %s129, 0
    %s132 = sadd.s32 %s131, 1
    %s133 = scalar_select %p130, %s131, %s132
    %p136 = pneg %p130
    %p137 = scmp.eq.s32.totalorder %s11, 1
    %p138 = por %p136, %p137
    %p139 = scmp.ne.s32.totalorder %s131, %s134
    %p140 = scmp.eq.s32.totalorder %s11, 0
    %p141 = por %p139, %p140
    %p142 = scmp.ne.s32.totalorder %s131, %s134
    %p143 = scmp.eq.s32.totalorder %s16, 1
    %p144 = por %p142, %p143
    %p145 = scmp.ne.s32.totalorder %s134, %s135
    %p146 = scmp.eq.s32.totalorder %s16, 0
    %p147 = por %p145, %p146
    %p148 = scmp.ne.s32.totalorder %s134, %s135
    %p149 = scmp.eq.s32.totalorder %s17, 1
    %p150 = por %p148, %p149
    %p152 = scmp.ne.s32.totalorder %s135, %s151
    %p153 = scmp.eq.s32.totalorder %s17, 0
    %p154 = por %p152, %p153
    %p155 = scmp.le.s32.totalorder 1, %s11
    %p156 = scmp.lt.s32.totalorder %s11, 3
    %p157 = pnand %p155, %p156
    %p158 = pneg %p157
    // Predicated region
    $region9: #{texture_finder_forward.10} parent=5 // pred_check
      _
    $region10: #{texture_finder_forward.10} parent=5 // pred_check_branch
      %160 = sbr.rel (%p157) target = $region12
    $region11: #{texture_finder_forward.10} parent=5 // pred_region
      %s161 = ssub.s32 %s11, 1
      // Predicated region
      $region13: #{texture_finder_forward.10} parent=11 // pred_check
        %p162 = pneg %p58
      $region14: #{texture_finder_forward.10} parent=11 // pred_check_branch
        %164 = sbr.rel (%p162) target = $region16
      $region15: #{texture_finder_forward.10} parent=11 // pred_region
        _
      $region16: #{texture_finder_forward.10} parent=11 // pred_fallthru
        _
      // Predicated region
      $region17: #{texture_finder_forward.10} parent=11 // pred_check
        %p165 = pneg %p79
      $region18: #{texture_finder_forward.10} parent=11 // pred_check_branch
        %167 = sbr.rel (%p165) target = $region20
      $region19: #{texture_finder_forward.10} parent=11 // pred_region
        _
      $region20: #{texture_finder_forward.10} parent=11 // pred_fallthru
        _
      // Predicated region
      $region21: #{texture_finder_forward.10} parent=11 // pred_check
        %p168 = pneg %p100
      $region22: #{texture_finder_forward.10} parent=11 // pred_check_branch
        %170 = sbr.rel (%p168) target = $region24
      $region23: #{texture_finder_forward.10} parent=11 // pred_region
        _
      $region24: #{texture_finder_forward.10} parent=11 // pred_fallthru
        _
      // Predicated region
      $region25: #{texture_finder_forward.10} parent=11 // pred_check
        %p171 = pneg %p121
      $region26: #{texture_finder_forward.10} parent=11 // pred_check_branch
        %173 = sbr.rel (%p171) target = $region28
      $region27: #{texture_finder_forward.10} parent=11 // pred_region
        _
      $region28: #{texture_finder_forward.10} parent=11 // pred_fallthru
        _
    $region12: #{texture_finder_forward.10} parent=5 // pred_fallthru
      _
    %p174 = scmp.lt.s32.totalorder %s11, 2
    // Predicated region
    $region29: #{texture_finder_forward.10} parent=5 // pred_check
      %p175 = pneg %p174
    $region30: #{texture_finder_forward.10} parent=5 // pred_check_branch
      %177 = sbr.rel (%p175) target = $region32
    $region31: #{texture_finder_forward.10} parent=5 // pred_region
      // Predicated region
      $region33: #{texture_finder_forward.10} parent=31 // pred_check
        %p178 = pneg %p31
      $region34: #{texture_finder_forward.10} parent=31 // pred_check_branch
        %180 = sbr.rel (%p178) target = $region36
      $region35: #{texture_finder_forward.10} parent=31 // pred_region
        %p181 = scmp.lt.s32.totalorder %s11, 1
        %s182 = scalar_select %p181, %s11, 1
        %s183 = smul.addr %s182, 4
        %s184 = smul.addr %s183, 8
        %s185 = scalar_lea.vmem %s0, %s184
      $region36: #{texture_finder_forward.10} parent=31 // pred_fallthru
        _
    $region32: #{texture_finder_forward.10} parent=5 // pred_fallthru
      _
    %p186 = scmp.le.s32.totalorder 1, %s11
    %p187 = scmp.lt.s32.totalorder %s11, 3
    %p188 = pnand %p186, %p187
    %p189 = pneg %p188
    // Predicated region
    $region37: #{texture_finder_forward.10} parent=5 // pred_check
      _
    $region38: #{texture_finder_forward.10} parent=5 // pred_check_branch
      %191 = sbr.rel (%p188) target = $region40
    $region39: #{texture_finder_forward.10} parent=5 // pred_region
      %s192 = ssub.s32 %s11, 1
      %p193 = scmp.lt.s32.totalorder %s16, 1
      %s194 = scalar_select %p193, %s16, 1
      %s195 = smul.addr %s194, 4
      %s196 = smul.addr %s195, 8
      %s197 = scalar_lea.vmem %s0, %s196
      %p198 = pneg %p37
      %p199 = pneg %p34
      %p200 = pneg %p58
      %p201 = pneg %p55
      %p202 = pneg %p79
      %p203 = pneg %p76
      %p204 = pneg %p100
      %p205 = pneg %p97
      %p206 = pneg %p121
      %p207 = pneg %p118
      %p208 = pneg %p147
      %p209 = pneg %p144
      %p210 = scmp.lt.s32.totalorder %s16, 1
      %s211 = scalar_select %p210, %s16, 1
      %s212 = smul.addr %s211, 2
      %s213 = smul.addr %s212, 8
      %s214 = scalar_lea.vmem %s5, %s213
      %p215 = scmp.lt.s32.totalorder %s16, 1
      %s216 = scalar_select %p215, %s16, 1
      %s217 = smul.addr %s216, 4
      %s218 = smul.addr %s217, 8
      %s219 = scalar_lea.vmem %s0, %s218
      %p220 = scmp.lt.s32.totalorder %s16, 1
      %s221 = scalar_select %p220, %s16, 1
      %s222 = smul.addr %s221, 2
      %s223 = smul.addr %s222, 8
      %s224 = scalar_lea.vmem %s5, %s223
      %v225 = vld [vmem:[%s219] sm:$0xff]
      %v226 = vld [vmem:[%s219 + $0x8] sm:$0xff]
      %v227 = vld [vmem:[%s219 + $0x10] sm:$0xff]
      %v228 = vld [vmem:[%s219 + $0x18] sm:$0xff]
      %v229 = vld [vmem:[%s1] sm:$0xff]
      %v230 = vld [vmem:[%s1 + $0x8] sm:$0xff]
      %v231 = vld [vmem:[%s1 + $0x10] sm:$0xff]
      %v232 = vld [vmem:[%s1 + $0x18] sm:$0xff]
      %v233 = vld [vmem:[%s1 + $0x20] sm:$0xff]
      %v234 = vld [vmem:[%s1 + $0x28] sm:$0xff]
      %v235 = vld [vmem:[%s1 + $0x30] sm:$0xff]
      %v236 = vld [vmem:[%s1 + $0x38] sm:$0xff]
      %v237 = vld [vmem:[%s1 + $0x40] sm:$0xff]
      %v238 = vld [vmem:[%s1 + $0x48] sm:$0xff]
      %v239 = vld [vmem:[%s1 + $0x50] sm:$0xff]
      %v240 = vld [vmem:[%s1 + $0x58] sm:$0xff]
      %v241 = vld [vmem:[%s1 + $0x60] sm:$0xff]
      %v242 = vld [vmem:[%s1 + $0x68] sm:$0xff]
      %v243 = vld [vmem:[%s1 + $0x70] sm:$0xff]
      %v244 = vld [vmem:[%s1 + $0x78] sm:$0xff]
      %v245 = vld [vmem:[%s1 + $0x80] sm:$0xff]
      %v246 = vld [vmem:[%s1 + $0x88] sm:$0xff]
      %v247 = vld [vmem:[%s1 + $0x90] sm:$0xff]
      %v248 = vld [vmem:[%s1 + $0x98] sm:$0xff]
      %v249 = vld [vmem:[%s1 + $0xa0] sm:$0xff]
      %v250 = vld [vmem:[%s1 + $0xa8] sm:$0xff]
      %v251 = vld [vmem:[%s1 + $0xb0] sm:$0xff]
      %v252 = vld [vmem:[%s1 + $0xb8] sm:$0xff]
      %v253 = vld [vmem:[%s1 + $0xc0] sm:$0xff]
      %v254 = vld [vmem:[%s1 + $0xc8] sm:$0xff]
      %v255 = vld [vmem:[%s1 + $0xd0] sm:$0xff]
      %v256 = vld [vmem:[%s1 + $0xd8] sm:$0xff]
      %v257 = vld [vmem:[%s1 + $0xe0] sm:$0xff]
      %v258 = vld [vmem:[%s1 + $0xe8] sm:$0xff]
      %v259 = vld [vmem:[%s1 + $0xf0] sm:$0xff]
      %v260 = vld [vmem:[%s1 + $0xf8] sm:$0xff]
      %v261 = vld [vmem:[%s2] sm:$0x1]
      %v263 = vlaneseq
      %v264 = vshrl.u32 %v263, 7
      %v265 = vsub.s32 0, %v264
      %v266 = vrot.slane %v261, %v265
      %268 = vmatprep.subr.mxu0 0.0
      %269 = vmatpush1.msra.mxu0 %v229
      %270 = vmatprep.subr.mxu0 0.0
      %271 = vmatpush1.msra.mxu0 %v230
      %272 = vmatprep.subr.mxu0 0.0
      %273 = vmatpush1.msra.mxu0 %v231
      %274 = vmatprep.subr.mxu0 0.0
      %275 = vmatpush1.msra.mxu0 %v232
      %276 = vmatprep.subr.mxu0 0.0
      %277 = vmatpush1.msra.mxu0 %v233
      %278 = vmatprep.subr.mxu0 0.0
      %279 = vmatpush1.msra.mxu0 %v234
      %280 = vmatprep.subr.mxu0 0.0
      %281 = vmatpush1.msra.mxu0 %v235
      %282 = vmatprep.subr.mxu0 0.0
      %283 = vmatpush1.msra.mxu0 %v236
      %284 = vmatprep.subr.mxu0 0.0
      %285 = vmatpush1.msra.mxu0 %v237
      %286 = vmatprep.subr.mxu0 0.0
      %287 = vmatpush1.msra.mxu0 %v238
      %288 = vmatprep.subr.mxu0 0.0
      %289 = vmatpush1.msra.mxu0 %v239
      %290 = vmatprep.subr.mxu0 0.0
      %291 = vmatpush1.msra.mxu0 %v240
      %292 = vmatprep.subr.mxu0 0.0
      %293 = vmatpush1.msra.mxu0 %v241
      %294 = vmatprep.subr.mxu0 0.0
      %295 = vmatpush1.msra.mxu0 %v242
      %296 = vmatprep.subr.mxu0 0.0
      %297 = vmatpush1.msra.mxu0 %v243
      %298 = vmatprep.subr.mxu0 0.0
      %299 = vmatpush1.msra.mxu0 %v244
      %300 = vmatprep.subr.mxu0 0.0
      %301 = vmatpush1.msra.mxu0 %v245
      %302 = vmatprep.subr.mxu0 0.0
      %303 = vmatpush1.msra.mxu0 %v246
      %304 = vmatprep.subr.mxu0 0.0
      %305 = vmatpush1.msra.mxu0 %v247
      %306 = vmatprep.subr.mxu0 0.0
      %307 = vmatpush1.msra.mxu0 %v248
      %308 = vmatprep.subr.mxu0 0.0
      %309 = vmatpush1.msra.mxu0 %v249
      %310 = vmatprep.subr.mxu0 0.0
      %311 = vmatpush1.msra.mxu0 %v250
      %312 = vmatprep.subr.mxu0 0.0
      %313 = vmatpush1.msra.mxu0 %v251
      %314 = vmatprep.subr.mxu0 0.0
      %315 = vmatpush1.msra.mxu0 %v252
      %316 = vmatprep.subr.mxu0 0.0
      %317 = vmatpush1.msra.mxu0 %v253
      %318 = vmatprep.subr.mxu0 0.0
      %319 = vmatpush1.msra.mxu0 %v254
      %320 = vmatprep.subr.mxu0 0.0
      %321 = vmatpush1.msra.mxu0 %v255
      %322 = vmatprep.subr.mxu0 0.0
      %323 = vmatpush1.msra.mxu0 %v256
      %324 = vmatprep.subr.mxu0 0.0
      %325 = vmatpush1.msra.mxu0 %v257
      %326 = vmatprep.subr.mxu0 0.0
      %327 = vmatpush1.msra.mxu0 %v258
      %328 = vmatprep.subr.mxu0 0.0
      %329 = vmatpush1.msra.mxu0 %v259
      %330 = vmatprep.subr.mxu0 0.0
      %331 = vmatpush1.msra.mxu0 %v260
      %332 = vmatprep.mubr.f32.mxu0 %v226
      %333 = vmatmul.mubr.f32.gmra.mrb[0].mxu0 %v225
      %v334 = vpop.f32.mrb[0].mxu0
      %v335 = vadd.f32 %v266, %v334
      %v336 = vpop.f32.mrb[0].mxu0
      %337 = vmatprep.mubr.f32.mxu0 %v228
      %338 = vmatmul.mubr.f32.gmra.mrb[0].mxu0 %v227
      %v339 = vpop.f32.mrb[0].mxu0
      %v340 = vadd.f32 %v266, %v339
      %v341 = vpop.f32.mrb[0].mxu0
      %342 = vdwg.mxu0
      %v343 = vmax.f32 %v335, 0.0
      %v344 = vmax.f32 %v340, 0.0
      %vm345 = vcmask 261120
      %v346 = vsel %vm345, %v343, 0.0
      %v347 = vsel %vm345, %v344, 0.0
      %v348 = vadd.f32 %v346, %v347
      %349 = vadd.xlane.f32.xlu0 %v348
      %v350 = vpop.xlane.xlu0 %349
      %v351 = vrot.slane %v350, 4
      %v352 = vadd.f32 %v350, %v351
      %v353 = vrot.slane %v352, 2
      %v354 = vadd.f32 %v352, %v353
      %v355 = vrot.slane %v354, 1
      %v356 = vadd.f32 %v354, %v355
      %s357 = vtos %v356
      %v358 = vrcp.pop 512.0
      %s359 = vtos %v358
      %s360 = smul.f32 %s357, %s359
      %v361 = vstv %s360
      %v362 = vsub.f32 %v343, %v361
      %v363 = vsub.f32 %v344, %v361
      %v364 = vmul.f32 %v362, %v362
      %v365 = vmul.f32 %v363, %v363
      %v366 = vsel %vm345, %v364, 0.0
      %v367 = vsel %vm345, %v365, 0.0
      %v368 = vadd.f32 %v366, %v367
      %369 = vadd.xlane.f32.xlu0 %v368
      %v370 = vpop.xlane.xlu0 %369
      %v371 = vrot.slane %v370, 4
      %v372 = vadd.f32 %v370, %v371
      %v373 = vrot.slane %v372, 2
      %v374 = vadd.f32 %v372, %v373
      %v375 = vrot.slane %v374, 1
      %v376 = vadd.f32 %v374, %v375
      %s377 = vtos %v376
      %v378 = vrcp.pop 512.0
      %s379 = vtos %v378
      %s380 = smul.f32 %s377, %s379
      %s381 = sadd.f32 %s380, 1e-05
      %v382 = vstv %s381
      %v383 = vrsqrt.pop %v382
      %s384 = vtos %v383
      %v385 = vstv %s384
      %v386 = vmul.f32 %v362, %v385
      %v387 = vmul.f32 %v363, %v385
      %v388 = vld [vmem:[%s3] sm:$0x1]
      %v390 = vlaneseq
      %v391 = vshrl.u32 %v390, 7
      %v392 = vsub.s32 0, %v391
      %v393 = vrot.slane %v388, %v392
      %v395 = vmul.f32 %v386, %v393
      %v396 = vmul.f32 %v387, %v393
      %v397 = vld [vmem:[%s4] sm:$0x1]
      %v399 = vlaneseq
      %v400 = vshrl.u32 %v399, 7
      %v401 = vsub.s32 0, %v400
      %v402 = vrot.slane %v397, %v401
      %v404 = vadd.f32 %v395, %v402
      %v405 = vadd.f32 %v396, %v402
      %406 = vst.msk [vmem:[%s224] sm:$0xff] %vm345, %v404
      %407 = vst.msk [vmem:[%s224 + $0x8] sm:$0xff] %vm345, %v405
      %p408 = scmp.lt.s32.totalorder %s16, 1
      %s409 = scalar_select %p408, %s16, 1
      %s410 = smul.addr %s409, 2
      %s411 = smul.addr %s410, 8
      %s412 = scalar_lea.vmem %s5, %s411
      // Predicated region
      $region41: #{texture_finder_forward.10} parent=39 // pred_check
        %p413 = pneg %p144
      $region42: #{texture_finder_forward.10} parent=39 // pred_check_branch
        %415 = sbr.rel (%p413) target = $region44
      $region43: #{texture_finder_forward.10} parent=39 // pred_region
        _
      $region44: #{texture_finder_forward.10} parent=39 // pred_fallthru
        _
    $region40: #{texture_finder_forward.10} parent=5 // pred_fallthru
      _
    %p416 = scmp.le.s32.totalorder 2, %s11
    // Predicated region
    $region45: #{texture_finder_forward.10} parent=5 // pred_check
      %p417 = pneg %p416
    $region46: #{texture_finder_forward.10} parent=5 // pred_check_branch
      %419 = sbr.rel (%p417) target = $region48
    $region47: #{texture_finder_forward.10} parent=5 // pred_region
      %s420 = ssub.s32 %s11, 2
      // Predicated region
      $region49: #{texture_finder_forward.10} parent=47 // pred_check
        %p421 = pneg %p150
      $region50: #{texture_finder_forward.10} parent=47 // pred_check_branch
        %423 = sbr.rel (%p421) target = $region52
      $region51: #{texture_finder_forward.10} parent=47 // pred_region
        %p424 = scmp.lt.s32.totalorder %s17, 1
        %s425 = scalar_select %p424, %s17, 1
        %s426 = smul.addr %s425, 2
        %s427 = smul.addr %s426, 8
        %s428 = scalar_lea.vmem %s5, %s427
      $region52: #{texture_finder_forward.10} parent=47 // pred_fallthru
        _
    $region48: #{texture_finder_forward.10} parent=5 // pred_fallthru
      _
  $region6: #{texture_finder_forward.10} parent=0 // loop_footer
    %s15 = sadd.s32 1, %s11
  $region7: #{texture_finder_forward.10} parent=0 // loop_footer_branch
    %10 = sbr.rel target = $region3
  $region8: #{texture_finder_forward.10} parent=0 // loop_exit
    _

// kernel: texture_finder_forward.11
$region0: #{texture_finder_forward.11}
  #allocation0 [shape = 'u32[]', space=smem, size = 0x4, offset = 0x4, fixed_abs, tag = 'smem constant byte address 0x4 - core index']
  #allocation1 [shape = 'u32[144,128]{1,0:T(1,128)}', space=vmem, size = 0x12000, scoped, tag = 'internal scratch']
  %s0 = inlined_call_operand.vmem [shape: f32[2,4,512], index: 0, kind: input, shape index: {}]
  %s1 = inlined_call_operand.vmem [shape: f32[512,16], index: 1, kind: input, shape index: {}]
  %s2 = inlined_call_operand.vmem [shape: f32[512,16], index: 2, kind: input, shape index: {}]
  %s3 = inlined_call_operand.vmem [shape: f32[1,16], index: 3, kind: input, shape index: {}]
  %s4 = inlined_call_operand.vmem [shape: f32[1,16], index: 4, kind: input, shape index: {}]
  %s5 = inlined_call_operand.vmem [shape: f32[2,4,16], index: 5, kind: input, shape index: {}]
  %s6 = inlined_call_operand.hbm [shape: f32[2,4,16], index: 6, kind: output, shape index: {0}]
  %s7 = inlined_call_operand.hbm [shape: f32[2,4,16], index: 7, kind: output, shape index: {1}]
  %s8 = inlined_call_operand.vmem [shape: f32[2,4,16], index: 8, kind: output, shape index: {2}]
  %9 = xla_tuple %s6, %s7, %s8
  %s10 = sld [smem:[#allocation0]]
  $region73: #{texture_finder_forward.11} parent=0
    _
  %s12 = ssub.s32 1, %s10
  %s13 = scalar_select 0, %s12, %s10
  $region1: #{texture_finder_forward.11} parent=0
    #allocation2 [shape = 'u8[4096]{0}', space=vmem, size = 0x1000, scoped, tag = 'output window, operand 0']
    #allocation3 [shape = 's32[2]{0}', space=sflag, size = 0x8, scoped, tag = 'scoped memory for texture_finder_forward.11']
    #allocation4 [shape = 'u8[4096]{0}', space=vmem, size = 0x1000, scoped, tag = 'output window, operand 1']
    #allocation5 [shape = 's32[2]{0}', space=sflag, size = 0x8, scoped, tag = 'scoped memory for texture_finder_forward.11']
    %14 = vsyncpa [#allocation3], 0
    %s15 = scalar_lea.sflag [#allocation3], 1
    %16 = vsyncpa %s15, 0
    %17 = vsyncpa [#allocation5], 0
    %s18 = scalar_lea.sflag [#allocation5], 1
    %19 = vsyncpa %s18, 0
    loop: start=0, step=1, limit=4
    $region2: #{texture_finder_forward.11} parent=1 // loop_pre_header
      _
    $region3: #{texture_finder_forward.11} parent=1 // loop_header
      %s21 = sphi 0, %s25
      %p22 = scmp.ge.s32.totalorder %s21, 4
      %s31 = sphi 0, %s33
      %s34 = sphi 0, %s31
      %s35 = sphi 0, %s34
      %s51 = sphi 0, %s35
      %s55 = sphi 0, %s55
      %s57 = sphi 0, %s55
      %s58 = sphi 0, %s57
      %s72 = sphi 0, %s58
      %s76 = sphi 0, %s76
      %s78 = sphi 0, %s76
      %s79 = sphi 0, %s78
      %s93 = sphi 0, %s79
      %s97 = sphi 0, %s97
      %s99 = sphi 0, %s97
      %s100 = sphi 0, %s99
      %s114 = sphi 0, %s100
      %s118 = sphi 0, %s118
      %s120 = sphi 0, %s118
      %s121 = sphi 0, %s120
      %s135 = sphi 0, %s121
      %s141 = sphi 0, %s143
      %s144 = sphi 0, %s141
      %s145 = sphi 0, %s144
      %s161 = sphi 0, %s145
      %s167 = sphi 0, %s169
      %s170 = sphi 0, %s167
      %s171 = sphi 0, %s170
      %s187 = sphi 0, %s171
      %s193 = sphi 0, %s195
      %s196 = sphi 0, %s193
      %s197 = sphi 0, %s196
      %s213 = sphi 0, %s197
      %s219 = sphi 0, %s221
      %s222 = sphi 0, %s219
      %s223 = sphi 0, %s222
      %s239 = sphi 0, %s223
    $region4: #{texture_finder_forward.11} parent=1 // loop_header_branch
      %24 = sbr.rel (%p22) target = $region8
    $region5: #{texture_finder_forward.11} parent=1 // loop_body
      %s26 = ssub.s32 %s21, 1
      %s27 = ssub.s32 %s21, 2
      %s28 = sadd.s32 %s21, 1
      %s29 = ssub.s32 %s21, %s28
      %p30 = scmp.eq.s32.totalorder %s29, 0
      %s32 = sadd.s32 %s31, 1
      %s33 = scalar_select %p30, %s31, %s32
      %p36 = pneg %p30
      %p37 = scmp.eq.s32.totalorder %s21, 1
      %p38 = por %p36, %p37
      %p39 = scmp.ne.s32.totalorder %s31, %s34
      %p40 = scmp.eq.s32.totalorder %s21, 0
      %p41 = por %p39, %p40
      %p42 = scmp.ne.s32.totalorder %s31, %s34
      %p43 = scmp.eq.s32.totalorder %s26, 1
      %p44 = por %p42, %p43
      %p45 = scmp.ne.s32.totalorder %s34, %s35
      %p46 = scmp.eq.s32.totalorder %s26, 0
      %p47 = por %p45, %p46
      %p48 = scmp.ne.s32.totalorder %s34, %s35
      %p49 = scmp.eq.s32.totalorder %s27, 1
      %p50 = por %p48, %p49
      %p52 = scmp.ne.s32.totalorder %s35, %s51
      %p53 = scmp.eq.s32.totalorder %s27, 0
      %p54 = por %p52, %p53
      %s56 = sadd.s32 %s55, 1
      %p59 = scmp.eq.s32.totalorder %s21, 1
      %p60 = scmp.ne.s32.totalorder %s55, %s57
      %p61 = scmp.eq.s32.totalorder %s21, 0
      %p62 = por %p60, %p61
      %p63 = scmp.ne.s32.totalorder %s55, %s57
      %p64 = scmp.eq.s32.totalorder %s26, 1
      %p65 = por %p63, %p64
      %p66 = scmp.ne.s32.totalorder %s57, %s58
      %p67 = scmp.eq.s32.totalorder %s26, 0
      %p68 = por %p66, %p67
      %p69 = scmp.ne.s32.totalorder %s57, %s58
      %p70 = scmp.eq.s32.totalorder %s27, 1
      %p71 = por %p69, %p70
      %p73 = scmp.ne.s32.totalorder %s58, %s72
      %p74 = scmp.eq.s32.totalorder %s27, 0
      %p75 = por %p73, %p74
      %s77 = sadd.s32 %s76, 1
      %p80 = scmp.eq.s32.totalorder %s21, 1
      %p81 = scmp.ne.s32.totalorder %s76, %s78
      %p82 = scmp.eq.s32.totalorder %s21, 0
      %p83 = por %p81, %p82
      %p84 = scmp.ne.s32.totalorder %s76, %s78
      %p85 = scmp.eq.s32.totalorder %s26, 1
      %p86 = por %p84, %p85
      %p87 = scmp.ne.s32.totalorder %s78, %s79
      %p88 = scmp.eq.s32.totalorder %s26, 0
      %p89 = por %p87, %p88
      %p90 = scmp.ne.s32.totalorder %s78, %s79
      %p91 = scmp.eq.s32.totalorder %s27, 1
      %p92 = por %p90, %p91
      %p94 = scmp.ne.s32.totalorder %s79, %s93
      %p95 = scmp.eq.s32.totalorder %s27, 0
      %p96 = por %p94, %p95
      %s98 = sadd.s32 %s97, 1
      %p101 = scmp.eq.s32.totalorder %s21, 1
      %p102 = scmp.ne.s32.totalorder %s97, %s99
      %p103 = scmp.eq.s32.totalorder %s21, 0
      %p104 = por %p102, %p103
      %p105 = scmp.ne.s32.totalorder %s97, %s99
      %p106 = scmp.eq.s32.totalorder %s26, 1
      %p107 = por %p105, %p106
      %p108 = scmp.ne.s32.totalorder %s99, %s100
      %p109 = scmp.eq.s32.totalorder %s26, 0
      %p110 = por %p108, %p109
      %p111 = scmp.ne.s32.totalorder %s99, %s100
      %p112 = scmp.eq.s32.totalorder %s27, 1
      %p113 = por %p111, %p112
      %p115 = scmp.ne.s32.totalorder %s100, %s114
      %p116 = scmp.eq.s32.totalorder %s27, 0
      %p117 = por %p115, %p116
      %s119 = sadd.s32 %s118, 1
      %p122 = scmp.eq.s32.totalorder %s21, 1
      %p123 = scmp.ne.s32.totalorder %s118, %s120
      %p124 = scmp.eq.s32.totalorder %s21, 0
      %p125 = por %p123, %p124
      %p126 = scmp.ne.s32.totalorder %s118, %s120
      %p127 = scmp.eq.s32.totalorder %s26, 1
      %p128 = por %p126, %p127
      %p129 = scmp.ne.s32.totalorder %s120, %s121
      %p130 = scmp.eq.s32.totalorder %s26, 0
      %p131 = por %p129, %p130
      %p132 = scmp.ne.s32.totalorder %s120, %s121
      %p133 = scmp.eq.s32.totalorder %s27, 1
      %p134 = por %p132, %p133
      %p136 = scmp.ne.s32.totalorder %s121, %s135
      %p137 = scmp.eq.s32.totalorder %s27, 0
      %p138 = por %p136, %p137
      %s139 = ssub.s32 %s21, %s28
      %p140 = scmp.eq.s32.totalorder %s139, 0
      %s142 = sadd.s32 %s141, 1
      %s143 = scalar_select %p140, %s141, %s142
      %p146 = pneg %p140
      %p147 = scmp.eq.s32.totalorder %s21, 1
      %p148 = por %p146, %p147
      %p149 = scmp.ne.s32.totalorder %s141, %s144
      %p150 = scmp.eq.s32.totalorder %s21, 0
      %p151 = por %p149, %p150
      %p152 = scmp.ne.s32.totalorder %s141, %s144
      %p153 = scmp.eq.s32.totalorder %s26, 1
      %p154 = por %p152, %p153
      %p155 = scmp.ne.s32.totalorder %s144, %s145
      %p156 = scmp.eq.s32.totalorder %s26, 0
      %p157 = por %p155, %p156
      %p158 = scmp.ne.s32.totalorder %s144, %s145
      %p159 = scmp.eq.s32.totalorder %s27, 1
      %p160 = por %p158, %p159
      %p162 = scmp.ne.s32.totalorder %s145, %s161
      %p163 = scmp.eq.s32.totalorder %s27, 0
      %p164 = por %p162, %p163
      %s165 = ssub.s32 %s21, %s28
      %p166 = scmp.eq.s32.totalorder %s165, 0
      %s168 = sadd.s32 %s167, 1
      %s169 = scalar_select %p166, %s167, %s168
      %p172 = pneg %p166
      %p173 = scmp.eq.s32.totalorder %s21, 1
      %p174 = por %p172, %p173
      %p175 = scmp.ne.s32.totalorder %s167, %s170
      %p176 = scmp.eq.s32.totalorder %s21, 0
      %p177 = por %p175, %p176
      %p178 = scmp.ne.s32.totalorder %s167, %s170
      %p179 = scmp.eq.s32.totalorder %s26, 1
      %p180 = por %p178, %p179
      %p181 = scmp.ne.s32.totalorder %s170, %s171
      %p182 = scmp.eq.s32.totalorder %s26, 0
      %p183 = por %p181, %p182
      %p184 = scmp.ne.s32.totalorder %s170, %s171
      %p185 = scmp.eq.s32.totalorder %s27, 1
      %p186 = por %p184, %p185
      %p188 = scmp.ne.s32.totalorder %s171, %s187
      %p189 = scmp.eq.s32.totalorder %s27, 0
      %p190 = por %p188, %p189
      %s191 = ssub.s32 %s21, %s28
      %p192 = scmp.eq.s32.totalorder %s191, 0
      %s194 = sadd.s32 %s193, 1
      %s195 = scalar_select %p192, %s193, %s194
      %p198 = pneg %p192
      %p199 = scmp.eq.s32.totalorder %s21, 1
      %p200 = por %p198, %p199
      %p201 = scmp.ne.s32.totalorder %s193, %s196
      %p202 = scmp.eq.s32.totalorder %s21, 0
      %p203 = por %p201, %p202
      %p204 = scmp.ne.s32.totalorder %s193, %s196
      %p205 = scmp.eq.s32.totalorder %s26, 1
      %p206 = por %p204, %p205
      %p207 = scmp.ne.s32.totalorder %s196, %s197
      %p208 = scmp.eq.s32.totalorder %s26, 0
      %p209 = por %p207, %p208
      %p210 = scmp.ne.s32.totalorder %s196, %s197
      %p211 = scmp.eq.s32.totalorder %s27, 1
      %p212 = por %p210, %p211
      %p214 = scmp.ne.s32.totalorder %s197, %s213
      %p215 = scmp.eq.s32.totalorder %s27, 0
      %p216 = por %p214, %p215
      %s217 = ssub.s32 %s21, %s28
      %p218 = scmp.eq.s32.totalorder %s217, 0
      %s220 = sadd.s32 %s219, 1
      %s221 = scalar_select %p218, %s219, %s220
      %p224 = pneg %p218
      %p225 = scmp.eq.s32.totalorder %s21, 1
      %p226 = por %p224, %p225
      %p227 = scmp.ne.s32.totalorder %s219, %s222
      %p228 = scmp.eq.s32.totalorder %s21, 0
      %p229 = por %p227, %p228
      %p230 = scmp.ne.s32.totalorder %s219, %s222
      %p231 = scmp.eq.s32.totalorder %s26, 1
      %p232 = por %p230, %p231
      %p233 = scmp.ne.s32.totalorder %s222, %s223
      %p234 = scmp.eq.s32.totalorder %s26, 0
      %p235 = por %p233, %p234
      %p236 = scmp.ne.s32.totalorder %s222, %s223
      %p237 = scmp.eq.s32.totalorder %s27, 1
      %p238 = por %p236, %p237
      %p240 = scmp.ne.s32.totalorder %s223, %s239
      %p241 = scmp.eq.s32.totalorder %s27, 0
      %p242 = por %p240, %p241
      %p243 = scmp.le.s32.totalorder 1, %s21
      %p244 = scmp.lt.s32.totalorder %s21, 3
      %p245 = pnand %p243, %p244
      %p246 = pneg %p245
      // Predicated region
      $region9: #{texture_finder_forward.11} parent=5 // pred_check
        _
      $region10: #{texture_finder_forward.11} parent=5 // pred_check_branch
        %248 = sbr.rel (%p245) target = $region12
      $region11: #{texture_finder_forward.11} parent=5 // pred_region
        %s249 = ssub.s32 %s21, 1
        // Predicated region
        $region13: #{texture_finder_forward.11} parent=11 // pred_check
          %p250 = pneg %p68
        $region14: #{texture_finder_forward.11} parent=11 // pred_check_branch
          %252 = sbr.rel (%p250) target = $region16
        $region15: #{texture_finder_forward.11} parent=11 // pred_region
          _
        $region16: #{texture_finder_forward.11} parent=11 // pred_fallthru
          _
        // Predicated region
        $region17: #{texture_finder_forward.11} parent=11 // pred_check
          %p253 = pneg %p89
        $region18: #{texture_finder_forward.11} parent=11 // pred_check_branch
          %255 = sbr.rel (%p253) target = $region20
        $region19: #{texture_finder_forward.11} parent=11 // pred_region
          _
        $region20: #{texture_finder_forward.11} parent=11 // pred_fallthru
          _
        // Predicated region
        $region21: #{texture_finder_forward.11} parent=11 // pred_check
          %p256 = pneg %p110
        $region22: #{texture_finder_forward.11} parent=11 // pred_check_branch
          %258 = sbr.rel (%p256) target = $region24
        $region23: #{texture_finder_forward.11} parent=11 // pred_region
          _
        $region24: #{texture_finder_forward.11} parent=11 // pred_fallthru
          _
        // Predicated region
        $region25: #{texture_finder_forward.11} parent=11 // pred_check
          %p259 = pneg %p131
        $region26: #{texture_finder_forward.11} parent=11 // pred_check_branch
          %261 = sbr.rel (%p259) target = $region28
        $region27: #{texture_finder_forward.11} parent=11 // pred_region
          _
        $region28: #{texture_finder_forward.11} parent=11 // pred_fallthru
          _
      $region12: #{texture_finder_forward.11} parent=5 // pred_fallthru
        _
      %p262 = scmp.lt.s32.totalorder %s21, 2
      // Predicated region
      $region29: #{texture_finder_forward.11} parent=5 // pred_check
        %p263 = pneg %p262
      $region30: #{texture_finder_forward.11} parent=5 // pred_check_branch
        %265 = sbr.rel (%p263) target = $region32
      $region31: #{texture_finder_forward.11} parent=5 // pred_region
        // Predicated region
        $region33: #{texture_finder_forward.11} parent=31 // pred_check
          %p266 = pneg %p41
        $region34: #{texture_finder_forward.11} parent=31 // pred_check_branch
          %268 = sbr.rel (%p266) target = $region36
        $region35: #{texture_finder_forward.11} parent=31 // pred_region
          %p269 = scmp.lt.s32.totalorder %s21, 1
          %s270 = scalar_select %p269, %s21, 1
          %s271 = smul.addr %s270, 4
          %s272 = smul.addr %s271, 4
          %s273 = scalar_lea.vmem %s0, %s272
        $region36: #{texture_finder_forward.11} parent=31 // pred_fallthru
          _
        // Predicated region
        $region37: #{texture_finder_forward.11} parent=31 // pred_check
          %p274 = pneg %p151
        $region38: #{texture_finder_forward.11} parent=31 // pred_check_branch
          %276 = sbr.rel (%p274) target = $region40
        $region39: #{texture_finder_forward.11} parent=31 // pred_region
          %p277 = scmp.lt.s32.totalorder %s21, 1
          %s278 = scalar_select %p277, %s21, 1
          %s279 = smul.addr %s278, 4
          %s280 = scalar_lea.vmem %s5, %s279
        $region40: #{texture_finder_forward.11} parent=31 // pred_fallthru
          _
      $region32: #{texture_finder_forward.11} parent=5 // pred_fallthru
        _
      %p281 = scmp.le.s32.totalorder 1, %s21
      %p282 = scmp.lt.s32.totalorder %s21, 3
      %p283 = pnand %p281, %p282
      %p284 = pneg %p283
      // Predicated region
      $region41: #{texture_finder_forward.11} parent=5 // pred_check
        _
      $region42: #{texture_finder_forward.11} parent=5 // pred_check_branch
        %286 = sbr.rel (%p283) target = $region44
      $region43: #{texture_finder_forward.11} parent=5 // pred_region
        %s287 = ssub.s32 %s21, 1
        %p288 = scmp.lt.s32.totalorder %s26, 1
        %s289 = scalar_select %p288, %s26, 1
        %s290 = smul.addr %s289, 4
        %s291 = smul.addr %s290, 4
        %s292 = scalar_lea.vmem %s0, %s291
        %p293 = pneg %p47
        %p294 = pneg %p44
        %p295 = pneg %p68
        %p296 = pneg %p65
        %p297 = pneg %p89
        %p298 = pneg %p86
        %p299 = pneg %p110
        %p300 = pneg %p107
        %p301 = pneg %p131
        %p302 = pneg %p128
        %p303 = scmp.lt.s32.totalorder %s26, 1
        %s304 = scalar_select %p303, %s26, 1
        %s305 = smul.addr %s304, 4
        %s306 = scalar_lea.vmem %s5, %s305
        %p307 = pneg %p157
        %p308 = pneg %p154
        %p309 = pneg %p183
        %p310 = pneg %p180
        %s311 = sand.u32 %s170, 1
        %s312 = scalar_lea.sflag [#allocation3], %s311
        %s313 = sand.u32 %s170, 1
        %s314 = smul.addr %s313, 4
        %s315 = scalar_lea.vmem [#allocation2], %s314
        %p316 = pneg %p209
        %p317 = pneg %p206
        %s318 = sand.u32 %s196, 1
        %s319 = scalar_lea.sflag [#allocation5], %s318
        %s320 = sand.u32 %s196, 1
        %s321 = smul.addr %s320, 4
        %s322 = scalar_lea.vmem [#allocation4], %s321
        %p323 = pneg %p235
        %p324 = pneg %p232
        %p325 = scmp.lt.s32.totalorder %s26, 1
        %s326 = scalar_select %p325, %s26, 1
        %s327 = smul.addr %s326, 4
        %s328 = scalar_lea.vmem %s8, %s327
        %p329 = scmp.lt.s32.totalorder %s26, 1
        %s330 = scalar_select %p329, %s26, 1
        %s331 = smul.addr %s330, 4
        %s332 = smul.addr %s331, 4
        %s333 = scalar_lea.vmem %s0, %s332
        %p334 = scmp.lt.s32.totalorder %s26, 1
        %s335 = scalar_select %p334, %s26, 1
        %s336 = smul.addr %s335, 4
        %s337 = scalar_lea.vmem %s5, %s336
        %p338 = scmp.lt.s32.totalorder %s26, 1
        %s339 = scalar_select %p338, %s26, 1
        %s340 = smul.addr %s339, 4
        %s341 = scalar_lea.vmem %s8, %s340
        %v342 = vld [vmem:[%s333] sm:$0xff]
        %v343 = vld [vmem:[%s333 + $0x8] sm:$0xff]
        %v344 = vld [vmem:[%s1] sm:$0xff]
        %v345 = vld [vmem:[%s1 + $0x8] sm:$0xff]
        %v346 = vld [vmem:[%s1 + $0x10] sm:$0xff]
        %v347 = vld [vmem:[%s1 + $0x18] sm:$0xff]
        %v348 = vld [vmem:[%s1 + $0x20] sm:$0xff]
        %v349 = vld [vmem:[%s1 + $0x28] sm:$0xff]
        %v350 = vld [vmem:[%s1 + $0x30] sm:$0xff]
        %v351 = vld [vmem:[%s1 + $0x38] sm:$0xff]
        %v352 = vld [vmem:[%s1 + $0x40] sm:$0xff]
        %v353 = vld [vmem:[%s1 + $0x48] sm:$0xff]
        %v354 = vld [vmem:[%s1 + $0x50] sm:$0xff]
        %v355 = vld [vmem:[%s1 + $0x58] sm:$0xff]
        %v356 = vld [vmem:[%s1 + $0x60] sm:$0xff]
        %v357 = vld [vmem:[%s1 + $0x68] sm:$0xff]
        %v358 = vld [vmem:[%s1 + $0x70] sm:$0xff]
        %v359 = vld [vmem:[%s1 + $0x78] sm:$0xff]
        %v360 = vld [vmem:[%s1 + $0x80] sm:$0xff]
        %v361 = vld [vmem:[%s1 + $0x88] sm:$0xff]
        %v362 = vld [vmem:[%s1 + $0x90] sm:$0xff]
        %v363 = vld [vmem:[%s1 + $0x98] sm:$0xff]
        %v364 = vld [vmem:[%s1 + $0xa0] sm:$0xff]
        %v365 = vld [vmem:[%s1 + $0xa8] sm:$0xff]
        %v366 = vld [vmem:[%s1 + $0xb0] sm:$0xff]
        %v367 = vld [vmem:[%s1 + $0xb8] sm:$0xff]
        %v368 = vld [vmem:[%s1 + $0xc0] sm:$0xff]
        %v369 = vld [vmem:[%s1 + $0xc8] sm:$0xff]
        %v370 = vld [vmem:[%s1 + $0xd0] sm:$0xff]
        %v371 = vld [vmem:[%s1 + $0xd8] sm:$0xff]
        %v372 = vld [vmem:[%s1 + $0xe0] sm:$0xff]
        %v373 = vld [vmem:[%s1 + $0xe8] sm:$0xff]
        %v374 = vld [vmem:[%s1 + $0xf0] sm:$0xff]
        %v375 = vld [vmem:[%s1 + $0xf8] sm:$0xff]
        %v376 = vld [vmem:[%s1 + $0x100] sm:$0xff]
        %v377 = vld [vmem:[%s1 + $0x108] sm:$0xff]
        %v378 = vld [vmem:[%s1 + $0x110] sm:$0xff]
        %v379 = vld [vmem:[%s1 + $0x118] sm:$0xff]
        %v380 = vld [vmem:[%s1 + $0x120] sm:$0xff]
        %v381 = vld [vmem:[%s1 + $0x128] sm:$0xff]
        %v382 = vld [vmem:[%s1 + $0x130] sm:$0xff]
        %v383 = vld [vmem:[%s1 + $0x138] sm:$0xff]
        %v384 = vld [vmem:[%s1 + $0x140] sm:$0xff]
        %v385 = vld [vmem:[%s1 + $0x148] sm:$0xff]
        %v386 = vld [vmem:[%s1 + $0x150] sm:$0xff]
        %v387 = vld [vmem:[%s1 + $0x158] sm:$0xff]
        %v388 = vld [vmem:[%s1 + $0x160] sm:$0xff]
        %v389 = vld [vmem:[%s1 + $0x168] sm:$0xff]
        %v390 = vld [vmem:[%s1 + $0x170] sm:$0xff]
        %v391 = vld [vmem:[%s1 + $0x178] sm:$0xff]
        %v392 = vld [vmem:[%s1 + $0x180] sm:$0xff]
        %v393 = vld [vmem:[%s1 + $0x188] sm:$0xff]
        %v394 = vld [vmem:[%s1 + $0x190] sm:$0xff]
        %v395 = vld [vmem:[%s1 + $0x198] sm:$0xff]
        %v396 = vld [vmem:[%s1 + $0x1a0] sm:$0xff]
        %v397 = vld [vmem:[%s1 + $0x1a8] sm:$0xff]
        %v398 = vld [vmem:[%s1 + $0x1b0] sm:$0xff]
        %v399 = vld [vmem:[%s1 + $0x1b8] sm:$0xff]
        %v400 = vld [vmem:[%s1 + $0x1c0] sm:$0xff]
        %v401 = vld [vmem:[%s1 + $0x1c8] sm:$0xff]
        %v402 = vld [vmem:[%s1 + $0x1d0] sm:$0xff]
        %v403 = vld [vmem:[%s1 + $0x1d8] sm:$0xff]
        %v404 = vld [vmem:[%s1 + $0x1e0] sm:$0xff]
        %v405 = vld [vmem:[%s1 + $0x1e8] sm:$0xff]
        %v406 = vld [vmem:[%s1 + $0x1f0] sm:$0xff]
        %v407 = vld [vmem:[%s1 + $0x1f8] sm:$0xff]
        %v408 = vld [vmem:[%s3] sm:$0x1]
        %v410 = vlaneseq
        %v411 = vshrl.u32 %v410, 7
        %v412 = vsub.s32 0, %v411
        %v413 = vrot.slane %v408, %v412
        %v417 = vcombine.high %v342, %v342
        %v418 = vcombine.high %v343, %v343
        %421 = vmatprep.subr.mxu0 0.0
        %422 = vmatpush1.msra.mxu0 %v344
        %423 = vmatprep.subr.mxu0 0.0
        %424 = vmatpush1.msra.mxu0 %v345
        %425 = vmatprep.subr.mxu0 0.0
        %426 = vmatpush1.msra.mxu0 %v346
        %427 = vmatprep.subr.mxu0 0.0
        %428 = vmatpush1.msra.mxu0 %v347
        %429 = vmatprep.subr.mxu0 0.0
        %430 = vmatpush1.msra.mxu0 %v348
        %431 = vmatprep.subr.mxu0 0.0
        %432 = vmatpush1.msra.mxu0 %v349
        %433 = vmatprep.subr.mxu0 0.0
        %434 = vmatpush1.msra.mxu0 %v350
        %435 = vmatprep.subr.mxu0 0.0
        %436 = vmatpush1.msra.mxu0 %v351
        %437 = vmatprep.subr.mxu0 0.0
        %438 = vmatpush1.msra.mxu0 %v352
        %439 = vmatprep.subr.mxu0 0.0
        %440 = vmatpush1.msra.mxu0 %v353
        %441 = vmatprep.subr.mxu0 0.0
        %442 = vmatpush1.msra.mxu0 %v354
        %443 = vmatprep.subr.mxu0 0.0
        %444 = vmatpush1.msra.mxu0 %v355
        %445 = vmatprep.subr.mxu0 0.0
        %446 = vmatpush1.msra.mxu0 %v356
        %447 = vmatprep.subr.mxu0 0.0
        %448 = vmatpush1.msra.mxu0 %v357
        %449 = vmatprep.subr.mxu0 0.0
        %450 = vmatpush1.msra.mxu0 %v358
        %451 = vmatprep.subr.mxu0 0.0
        %452 = vmatpush1.msra.mxu0 %v359
        %453 = vmatprep.subr.mxu0 0.0
        %454 = vmatpush1.msra.mxu0 %v360
        %455 = vmatprep.subr.mxu0 0.0
        %456 = vmatpush1.msra.mxu0 %v361
        %457 = vmatprep.subr.mxu0 0.0
        %458 = vmatpush1.msra.mxu0 %v362
        %459 = vmatprep.subr.mxu0 0.0
        %460 = vmatpush1.msra.mxu0 %v363
        %461 = vmatprep.subr.mxu0 0.0
        %462 = vmatpush1.msra.mxu0 %v364
        %463 = vmatprep.subr.mxu0 0.0
        %464 = vmatpush1.msra.mxu0 %v365
        %465 = vmatprep.subr.mxu0 0.0
        %466 = vmatpush1.msra.mxu0 %v366
        %467 = vmatprep.subr.mxu0 0.0
        %468 = vmatpush1.msra.mxu0 %v367
        %469 = vmatprep.subr.mxu0 0.0
        %470 = vmatpush1.msra.mxu0 %v368
        %471 = vmatprep.subr.mxu0 0.0
        %472 = vmatpush1.msra.mxu0 %v369
        %473 = vmatprep.subr.mxu0 0.0
        %474 = vmatpush1.msra.mxu0 %v370
        %475 = vmatprep.subr.mxu0 0.0
        %476 = vmatpush1.msra.mxu0 %v371
        %477 = vmatprep.subr.mxu0 0.0
        %478 = vmatpush1.msra.mxu0 %v372
        %479 = vmatprep.subr.mxu0 0.0
        %480 = vmatpush1.msra.mxu0 %v373
        %481 = vmatprep.subr.mxu0 0.0
        %482 = vmatpush1.msra.mxu0 %v374
        %483 = vmatprep.subr.mxu0 0.0
        %484 = vmatpush1.msra.mxu0 %v375
        %485 = vmatprep.mubr.f32.mxu0 %v417
        %486 = vmatmul.mubr.f32.gmra.mrb[0].mxu0 %v342
        %v487 = vpop.f32.mrb[0].mxu0
        %v488 = vadd.f32 %v413, %v487
        %v489 = vpop.f32.mrb[0].mxu0
        %490 = vdwg.mxu0
        %491 = vmatprep.subr.mxu0 0.0
        %492 = vmatpush1.msra.mxu0 %v376
        %493 = vmatprep.subr.mxu0 0.0
        %494 = vmatpush1.msra.mxu0 %v377
        %495 = vmatprep.subr.mxu0 0.0
        %496 = vmatpush1.msra.mxu0 %v378
        %497 = vmatprep.subr.mxu0 0.0
        %498 = vmatpush1.msra.mxu0 %v379
        %499 = vmatprep.subr.mxu0 0.0
        %500 = vmatpush1.msra.mxu0 %v380
        %501 = vmatprep.subr.mxu0 0.0
        %502 = vmatpush1.msra.mxu0 %v381
        %503 = vmatprep.subr.mxu0 0.0
        %504 = vmatpush1.msra.mxu0 %v382
        %505 = vmatprep.subr.mxu0 0.0
        %506 = vmatpush1.msra.mxu0 %v383
        %507 = vmatprep.subr.mxu0 0.0
        %508 = vmatpush1.msra.mxu0 %v384
        %509 = vmatprep.subr.mxu0 0.0
        %510 = vmatpush1.msra.mxu0 %v385
        %511 = vmatprep.subr.mxu0 0.0
        %512 = vmatpush1.msra.mxu0 %v386
        %513 = vmatprep.subr.mxu0 0.0
        %514 = vmatpush1.msra.mxu0 %v387
        %515 = vmatprep.subr.mxu0 0.0
        %516 = vmatpush1.msra.mxu0 %v388
        %517 = vmatprep.subr.mxu0 0.0
        %518 = vmatpush1.msra.mxu0 %v389
        %519 = vmatprep.subr.mxu0 0.0
        %520 = vmatpush1.msra.mxu0 %v390
        %521 = vmatprep.subr.mxu0 0.0
        %522 = vmatpush1.msra.mxu0 %v391
        %523 = vmatprep.subr.mxu0 0.0
        %524 = vmatpush1.msra.mxu0 %v392
        %525 = vmatprep.subr.mxu0 0.0
        %526 = vmatpush1.msra.mxu0 %v393
        %527 = vmatprep.subr.mxu0 0.0
        %528 = vmatpush1.msra.mxu0 %v394
        %529 = vmatprep.subr.mxu0 0.0
        %530 = vmatpush1.msra.mxu0 %v395
        %531 = vmatprep.subr.mxu0 0.0
        %532 = vmatpush1.msra.mxu0 %v396
        %533 = vmatprep.subr.mxu0 0.0
        %534 = vmatpush1.msra.mxu0 %v397
        %535 = vmatprep.subr.mxu0 0.0
        %536 = vmatpush1.msra.mxu0 %v398
        %537 = vmatprep.subr.mxu0 0.0
        %538 = vmatpush1.msra.mxu0 %v399
        %539 = vmatprep.subr.mxu0 0.0
        %540 = vmatpush1.msra.mxu0 %v400
        %541 = vmatprep.subr.mxu0 0.0
        %542 = vmatpush1.msra.mxu0 %v401
        %543 = vmatprep.subr.mxu0 0.0
        %544 = vmatpush1.msra.mxu0 %v402
        %545 = vmatprep.subr.mxu0 0.0
        %546 = vmatpush1.msra.mxu0 %v403
        %547 = vmatprep.subr.mxu0 0.0
        %548 = vmatpush1.msra.mxu0 %v404
        %549 = vmatprep.subr.mxu0 0.0
        %550 = vmatpush1.msra.mxu0 %v405
        %551 = vmatprep.subr.mxu0 0.0
        %552 = vmatpush1.msra.mxu0 %v406
        %553 = vmatprep.subr.mxu0 0.0
        %554 = vmatpush1.msra.mxu0 %v407
        %555 = vmatprep.mubr.f32.mxu0 %v418
        %556 = vmatmul.mubr.f32.gmra.mrb[0].mxu0 %v343
        %v557 = vpop.f32.mrb[0].mxu0
        %v558 = vadd.f32 %v488, %v557
        %v559 = vpop.f32.mrb[0].mxu0
        %560 = vdwg.mxu0
        %v561 = vld [vmem:[%s2] sm:$0xff]
        %v562 = vld [vmem:[%s2 + $0x8] sm:$0xff]
        %v563 = vld [vmem:[%s2 + $0x10] sm:$0xff]
        %v564 = vld [vmem:[%s2 + $0x18] sm:$0xff]
        %v565 = vld [vmem:[%s2 + $0x20] sm:$0xff]
        %v566 = vld [vmem:[%s2 + $0x28] sm:$0xff]
        %v567 = vld [vmem:[%s2 + $0x30] sm:$0xff]
        %v568 = vld [vmem:[%s2 + $0x38] sm:$0xff]
        %v569 = vld [vmem:[%s2 + $0x40] sm:$0xff]
        %v570 = vld [vmem:[%s2 + $0x48] sm:$0xff]
        %v571 = vld [vmem:[%s2 + $0x50] sm:$0xff]
        %v572 = vld [vmem:[%s2 + $0x58] sm:$0xff]
        %v573 = vld [vmem:[%s2 + $0x60] sm:$0xff]
        %v574 = vld [vmem:[%s2 + $0x68] sm:$0xff]
        %v575 = vld [vmem:[%s2 + $0x70] sm:$0xff]
        %v576 = vld [vmem:[%s2 + $0x78] sm:$0xff]
        %v577 = vld [vmem:[%s2 + $0x80] sm:$0xff]
        %v578 = vld [vmem:[%s2 + $0x88] sm:$0xff]
        %v579 = vld [vmem:[%s2 + $0x90] sm:$0xff]
        %v580 = vld [vmem:[%s2 + $0x98] sm:$0xff]
        %v581 = vld [vmem:[%s2 + $0xa0] sm:$0xff]
        %v582 = vld [vmem:[%s2 + $0xa8] sm:$0xff]
        %v583 = vld [vmem:[%s2 + $0xb0] sm:$0xff]
        %v584 = vld [vmem:[%s2 + $0xb8] sm:$0xff]
        %v585 = vld [vmem:[%s2 + $0xc0] sm:$0xff]
        %v586 = vld [vmem:[%s2 + $0xc8] sm:$0xff]
        %v587 = vld [vmem:[%s2 + $0xd0] sm:$0xff]
        %v588 = vld [vmem:[%s2 + $0xd8] sm:$0xff]
        %v589 = vld [vmem:[%s2 + $0xe0] sm:$0xff]
        %v590 = vld [vmem:[%s2 + $0xe8] sm:$0xff]
        %v591 = vld [vmem:[%s2 + $0xf0] sm:$0xff]
        %v592 = vld [vmem:[%s2 + $0xf8] sm:$0xff]
        %v593 = vld [vmem:[%s2 + $0x100] sm:$0xff]
        %v594 = vld [vmem:[%s2 + $0x108] sm:$0xff]
        %v595 = vld [vmem:[%s2 + $0x110] sm:$0xff]
        %v596 = vld [vmem:[%s2 + $0x118] sm:$0xff]
        %v597 = vld [vmem:[%s2 + $0x120] sm:$0xff]
        %v598 = vld [vmem:[%s2 + $0x128] sm:$0xff]
        %v599 = vld [vmem:[%s2 + $0x130] sm:$0xff]
        %v600 = vld [vmem:[%s2 + $0x138] sm:$0xff]
        %v601 = vld [vmem:[%s2 + $0x140] sm:$0xff]
        %v602 = vld [vmem:[%s2 + $0x148] sm:$0xff]
        %v603 = vld [vmem:[%s2 + $0x150] sm:$0xff]
        %v604 = vld [vmem:[%s2 + $0x158] sm:$0xff]
        %v605 = vld [vmem:[%s2 + $0x160] sm:$0xff]
        %v606 = vld [vmem:[%s2 + $0x168] sm:$0xff]
        %v607 = vld [vmem:[%s2 + $0x170] sm:$0xff]
        %v608 = vld [vmem:[%s2 + $0x178] sm:$0xff]
        %v609 = vld [vmem:[%s2 + $0x180] sm:$0xff]
        %v610 = vld [vmem:[%s2 + $0x188] sm:$0xff]
        %v611 = vld [vmem:[%s2 + $0x190] sm:$0xff]
        %v612 = vld [vmem:[%s2 + $0x198] sm:$0xff]
        %v613 = vld [vmem:[%s2 + $0x1a0] sm:$0xff]
        %v614 = vld [vmem:[%s2 + $0x1a8] sm:$0xff]
        %v615 = vld [vmem:[%s2 + $0x1b0] sm:$0xff]
        %v616 = vld [vmem:[%s2 + $0x1b8] sm:$0xff]
        %v617 = vld [vmem:[%s2 + $0x1c0] sm:$0xff]
        %v618 = vld [vmem:[%s2 + $0x1c8] sm:$0xff]
        %v619 = vld [vmem:[%s2 + $0x1d0] sm:$0xff]
        %v620 = vld [vmem:[%s2 + $0x1d8] sm:$0xff]
        %v621 = vld [vmem:[%s2 + $0x1e0] sm:$0xff]
        %v622 = vld [vmem:[%s2 + $0x1e8] sm:$0xff]
        %v623 = vld [vmem:[%s2 + $0x1f0] sm:$0xff]
        %v624 = vld [vmem:[%s2 + $0x1f8] sm:$0xff]
        %v625 = vld [vmem:[%s4] sm:$0x1]
        %v627 = vlaneseq
        %v628 = vshrl.u32 %v627, 7
        %v629 = vsub.s32 0, %v628
        %v630 = vrot.slane %v625, %v629
        %632 = vmatprep.subr.mxu0 0.0
        %633 = vmatpush1.msra.mxu0 %v561
        %634 = vmatprep.subr.mxu0 0.0
        %635 = vmatpush1.msra.mxu0 %v562
        %636 = vmatprep.subr.mxu0 0.0
        %637 = vmatpush1.msra.mxu0 %v563
        %638 = vmatprep.subr.mxu0 0.0
        %639 = vmatpush1.msra.mxu0 %v564
        %640 = vmatprep.subr.mxu0 0.0
        %641 = vmatpush1.msra.mxu0 %v565
        %642 = vmatprep.subr.mxu0 0.0
        %643 = vmatpush1.msra.mxu0 %v566
        %644 = vmatprep.subr.mxu0 0.0
        %645 = vmatpush1.msra.mxu0 %v567
        %646 = vmatprep.subr.mxu0 0.0
        %647 = vmatpush1.msra.mxu0 %v568
        %648 = vmatprep.subr.mxu0 0.0
        %649 = vmatpush1.msra.mxu0 %v569
        %650 = vmatprep.subr.mxu0 0.0
        %651 = vmatpush1.msra.mxu0 %v570
        %652 = vmatprep.subr.mxu0 0.0
        %653 = vmatpush1.msra.mxu0 %v571
        %654 = vmatprep.subr.mxu0 0.0
        %655 = vmatpush1.msra.mxu0 %v572
        %656 = vmatprep.subr.mxu0 0.0
        %657 = vmatpush1.msra.mxu0 %v573
        %658 = vmatprep.subr.mxu0 0.0
        %659 = vmatpush1.msra.mxu0 %v574
        %660 = vmatprep.subr.mxu0 0.0
        %661 = vmatpush1.msra.mxu0 %v575
        %662 = vmatprep.subr.mxu0 0.0
        %663 = vmatpush1.msra.mxu0 %v576
        %664 = vmatprep.subr.mxu0 0.0
        %665 = vmatpush1.msra.mxu0 %v577
        %666 = vmatprep.subr.mxu0 0.0
        %667 = vmatpush1.msra.mxu0 %v578
        %668 = vmatprep.subr.mxu0 0.0
        %669 = vmatpush1.msra.mxu0 %v579
        %670 = vmatprep.subr.mxu0 0.0
        %671 = vmatpush1.msra.mxu0 %v580
        %672 = vmatprep.subr.mxu0 0.0
        %673 = vmatpush1.msra.mxu0 %v581
        %674 = vmatprep.subr.mxu0 0.0
        %675 = vmatpush1.msra.mxu0 %v582
        %676 = vmatprep.subr.mxu0 0.0
        %677 = vmatpush1.msra.mxu0 %v583
        %678 = vmatprep.subr.mxu0 0.0
        %679 = vmatpush1.msra.mxu0 %v584
        %680 = vmatprep.subr.mxu0 0.0
        %681 = vmatpush1.msra.mxu0 %v585
        %682 = vmatprep.subr.mxu0 0.0
        %683 = vmatpush1.msra.mxu0 %v586
        %684 = vmatprep.subr.mxu0 0.0
        %685 = vmatpush1.msra.mxu0 %v587
        %686 = vmatprep.subr.mxu0 0.0
        %687 = vmatpush1.msra.mxu0 %v588
        %688 = vmatprep.subr.mxu0 0.0
        %689 = vmatpush1.msra.mxu0 %v589
        %690 = vmatprep.subr.mxu0 0.0
        %691 = vmatpush1.msra.mxu0 %v590
        %692 = vmatprep.subr.mxu0 0.0
        %693 = vmatpush1.msra.mxu0 %v591
        %694 = vmatprep.subr.mxu0 0.0
        %695 = vmatpush1.msra.mxu0 %v592
        %696 = vmatprep.mubr.f32.mxu0 %v417
        %697 = vmatmul.mubr.f32.gmra.mrb[0].mxu0 %v342
        %v698 = vpop.f32.mrb[0].mxu0
        %v699 = vadd.f32 %v630, %v698
        %v700 = vpop.f32.mrb[0].mxu0
        %701 = vdwg.mxu0
        %702 = vmatprep.subr.mxu0 0.0
        %703 = vmatpush1.msra.mxu0 %v593
        %704 = vmatprep.subr.mxu0 0.0
        %705 = vmatpush1.msra.mxu0 %v594
        %706 = vmatprep.subr.mxu0 0.0
        %707 = vmatpush1.msra.mxu0 %v595
        %708 = vmatprep.subr.mxu0 0.0
        %709 = vmatpush1.msra.mxu0 %v596
        %710 = vmatprep.subr.mxu0 0.0
        %711 = vmatpush1.msra.mxu0 %v597
        %712 = vmatprep.subr.mxu0 0.0
        %713 = vmatpush1.msra.mxu0 %v598
        %714 = vmatprep.subr.mxu0 0.0
        %715 = vmatpush1.msra.mxu0 %v599
        %716 = vmatprep.subr.mxu0 0.0
        %717 = vmatpush1.msra.mxu0 %v600
        %718 = vmatprep.subr.mxu0 0.0
        %719 = vmatpush1.msra.mxu0 %v601
        %720 = vmatprep.subr.mxu0 0.0
        %721 = vmatpush1.msra.mxu0 %v602
        %722 = vmatprep.subr.mxu0 0.0
        %723 = vmatpush1.msra.mxu0 %v603
        %724 = vmatprep.subr.mxu0 0.0
        %725 = vmatpush1.msra.mxu0 %v604
        %726 = vmatprep.subr.mxu0 0.0
        %727 = vmatpush1.msra.mxu0 %v605
        %728 = vmatprep.subr.mxu0 0.0
        %729 = vmatpush1.msra.mxu0 %v606
        %730 = vmatprep.subr.mxu0 0.0
        %731 = vmatpush1.msra.mxu0 %v607
        %732 = vmatprep.subr.mxu0 0.0
        %733 = vmatpush1.msra.mxu0 %v608
        %734 = vmatprep.subr.mxu0 0.0
        %735 = vmatpush1.msra.mxu0 %v609
        %736 = vmatprep.subr.mxu0 0.0
        %737 = vmatpush1.msra.mxu0 %v610
        %738 = vmatprep.subr.mxu0 0.0
        %739 = vmatpush1.msra.mxu0 %v611
        %740 = vmatprep.subr.mxu0 0.0
        %741 = vmatpush1.msra.mxu0 %v612
        %742 = vmatprep.subr.mxu0 0.0
        %743 = vmatpush1.msra.mxu0 %v613
        %744 = vmatprep.subr.mxu0 0.0
        %745 = vmatpush1.msra.mxu0 %v614
        %746 = vmatprep.subr.mxu0 0.0
        %747 = vmatpush1.msra.mxu0 %v615
        %748 = vmatprep.subr.mxu0 0.0
        %749 = vmatpush1.msra.mxu0 %v616
        %750 = vmatprep.subr.mxu0 0.0
        %751 = vmatpush1.msra.mxu0 %v617
        %752 = vmatprep.subr.mxu0 0.0
        %753 = vmatpush1.msra.mxu0 %v618
        %754 = vmatprep.subr.mxu0 0.0
        %755 = vmatpush1.msra.mxu0 %v619
        %756 = vmatprep.subr.mxu0 0.0
        %757 = vmatpush1.msra.mxu0 %v620
        %758 = vmatprep.subr.mxu0 0.0
        %759 = vmatpush1.msra.mxu0 %v621
        %760 = vmatprep.subr.mxu0 0.0
        %761 = vmatpush1.msra.mxu0 %v622
        %762 = vmatprep.subr.mxu0 0.0
        %763 = vmatpush1.msra.mxu0 %v623
        %764 = vmatprep.subr.mxu0 0.0
        %765 = vmatpush1.msra.mxu0 %v624
        %766 = vmatprep.mubr.f32.mxu0 %v418
        %767 = vmatmul.mubr.f32.gmra.mrb[0].mxu0 %v343
        %v768 = vpop.f32.mrb[0].mxu0
        %v769 = vadd.f32 %v699, %v768
        %v770 = vpop.f32.mrb[0].mxu0
        %771 = vdwg.mxu0
        %vm772 = vcmask 125952
        %773 = vst.msk [vmem:[%s315] sm:$0xf] %vm772, %v558
        %774 = vst.msk [vmem:[%s322] sm:$0xf] %vm772, %v769
        %v775 = vld [vmem:[%s337] sm:$0xf]
        %v776 = vmul.f32 %v769, 0.5
        %v777 = vmul.f32 %v776, 1.442695
        %v778 = vpow.pop %v777
        %v779 = vmul.f32 %v775, %v778
        %v780 = vadd.f32 %v558, %v779
        %781 = vst.msk [vmem:[%s341] sm:$0xf] %vm772, %v780
        %s782 = sand.u32 %s170, 1
        %s783 = scalar_lea.sflag [#allocation3], %s782
        %s784 = sand.u32 %s170, 1
        %s785 = smul.addr %s784, 4
        %s786 = scalar_lea.vmem [#allocation2], %s785
        %s787 = sand.u32 %s196, 1
        %s788 = scalar_lea.sflag [#allocation5], %s787
        %s789 = sand.u32 %s196, 1
        %s790 = smul.addr %s789, 4
        %s791 = scalar_lea.vmem [#allocation4], %s790
        %p792 = scmp.lt.s32.totalorder %s26, 1
        %s793 = scalar_select %p792, %s26, 1
        %s794 = smul.addr %s793, 4
        %s795 = scalar_lea.vmem %s8, %s794
        // Predicated region
        $region45: #{texture_finder_forward.11} parent=43 // pred_check
          %p796 = pneg %p180
        $region46: #{texture_finder_forward.11} parent=43 // pred_check_branch
          %798 = sbr.rel (%p796) target = $region48
        $region47: #{texture_finder_forward.11} parent=43 // pred_region
          %s800 = ssub.s32 64, 64
          %801 = vsyncadd %s783, %s800
          %s802 = smul.addr %s26, 64
          %s803 = scalar_lea.hbm %s6, %s802
          %s805 = sshll.u32 %s786, 4
          %s806 = int_to_ptr.vmem [resolvable:$true] %s805
          %808 = dma.vmem_to_hbm [thread:$0]  %s806, 64, %s803, %s783
        $region48: #{texture_finder_forward.11} parent=43 // pred_fallthru
          _
        // Predicated region
        $region49: #{texture_finder_forward.11} parent=43 // pred_check
          %p809 = pneg %p206
        $region50: #{texture_finder_forward.11} parent=43 // pred_check_branch
          %811 = sbr.rel (%p809) target = $region52
        $region51: #{texture_finder_forward.11} parent=43 // pred_region
          %s813 = ssub.s32 64, 64
          %814 = vsyncadd %s788, %s813
          %s815 = smul.addr %s26, 64
          %s816 = scalar_lea.hbm %s7, %s815
          %s818 = sshll.u32 %s791, 4
          %s819 = int_to_ptr.vmem [resolvable:$true] %s818
          %821 = dma.vmem_to_hbm [thread:$0]  %s819, 64, %s816, %s788
        $region52: #{texture_finder_forward.11} parent=43 // pred_fallthru
          _
        // Predicated region
        $region53: #{texture_finder_forward.11} parent=43 // pred_check
          %p822 = pneg %p232
        $region54: #{texture_finder_forward.11} parent=43 // pred_check_branch
          %824 = sbr.rel (%p822) target = $region56
        $region55: #{texture_finder_forward.11} parent=43 // pred_region
          _
        $region56: #{texture_finder_forward.11} parent=43 // pred_fallthru
          _
      $region44: #{texture_finder_forward.11} parent=5 // pred_fallthru
        _
      %p825 = scmp.le.s32.totalorder 2, %s21
      // Predicated region
      $region57: #{texture_finder_forward.11} parent=5 // pred_check
        %p826 = pneg %p825
      $region58: #{texture_finder_forward.11} parent=5 // pred_check_branch
        %828 = sbr.rel (%p826) target = $region60
      $region59: #{texture_finder_forward.11} parent=5 // pred_region
        %s829 = ssub.s32 %s21, 2
        // Predicated region
        $region61: #{texture_finder_forward.11} parent=59 // pred_check
          %p830 = pneg %p186
        $region62: #{texture_finder_forward.11} parent=59 // pred_check_branch
          %832 = sbr.rel (%p830) target = $region64
        $region63: #{texture_finder_forward.11} parent=59 // pred_region
          %s833 = sand.u32 %s171, 1
          %s834 = scalar_lea.sflag [#allocation3], %s833
          %s835 = sand.u32 %s171, 1
          %s836 = smul.addr %s835, 4
          %s837 = scalar_lea.vmem [#allocation2], %s836
          %838 = dma.done %s834, 64
        $region64: #{texture_finder_forward.11} parent=59 // pred_fallthru
          _
        // Predicated region
        $region65: #{texture_finder_forward.11} parent=59 // pred_check
          %p839 = pneg %p212
        $region66: #{texture_finder_forward.11} parent=59 // pred_check_branch
          %841 = sbr.rel (%p839) target = $region68
        $region67: #{texture_finder_forward.11} parent=59 // pred_region
          %s842 = sand.u32 %s197, 1
          %s843 = scalar_lea.sflag [#allocation5], %s842
          %s844 = sand.u32 %s197, 1
          %s845 = smul.addr %s844, 4
          %s846 = scalar_lea.vmem [#allocation4], %s845
          %847 = dma.done %s843, 64
        $region68: #{texture_finder_forward.11} parent=59 // pred_fallthru
          _
        // Predicated region
        $region69: #{texture_finder_forward.11} parent=59 // pred_check
          %p848 = pneg %p238
        $region70: #{texture_finder_forward.11} parent=59 // pred_check_branch
          %850 = sbr.rel (%p848) target = $region72
        $region71: #{texture_finder_forward.11} parent=59 // pred_region
          %p851 = scmp.lt.s32.totalorder %s27, 1
          %s852 = scalar_select %p851, %s27, 1
          %s853 = smul.addr %s852, 4
          %s854 = scalar_lea.vmem %s8, %s853
        $region72: #{texture_finder_forward.11} parent=59 // pred_fallthru
          _
      $region60: #{texture_finder_forward.11} parent=5 // pred_fallthru
        _
    $region6: #{texture_finder_forward.11} parent=1 // loop_footer
      %s25 = sadd.s32 1, %s21
    $region7: #{texture_finder_forward.11} parent=1 // loop_footer_branch
      %20 = sbr.rel target = $region3
    $region8: #{texture_finder_forward.11} parent=1 // loop_exit
      _
    %855 = vsyncpa [#allocation3], 1
    %s856 = scalar_lea.sflag [#allocation3], 1
    %857 = vsyncpa %s856, 1
    %858 = vsyncpa [#allocation5], 1
    %s859 = scalar_lea.sflag [#allocation5], 1
    %860 = vsyncpa %s859, 1

// kernel: texture_finder_forward.12
$region0: #{texture_finder_forward.12}
  #allocation0 [shape = 'u32[]', space=smem, size = 0x4, offset = 0x4, fixed_abs, tag = 'smem constant byte address 0x4 - core index']
  #allocation1 [shape = 'u32[144,128]{1,0:T(1,128)}', space=vmem, size = 0x12000, scoped, tag = 'internal scratch']
  %s0 = inlined_call_operand.vmem [shape: f32[2,4,400], index: 0, kind: input, shape index: {}]
  %s1 = inlined_call_operand.vmem [shape: f32[400,128], index: 1, kind: input, shape index: {}]
  %s2 = inlined_call_operand.vmem [shape: f32[1,128], index: 2, kind: input, shape index: {}, may-alias: {2,4}]
  %s3 = inlined_call_operand.vmem [shape: f32[1,128], index: 3, kind: input, shape index: {}]
  %s4 = inlined_call_operand.vmem [shape: f32[1,128], index: 4, kind: input, shape index: {}, may-alias: {2,4}]
  %s5 = inlined_call_operand.vmem [shape: f32[2,4,128], index: 5, kind: output, shape index: {}]
  %s6 = sld [smem:[#allocation0]]
  $region53: #{texture_finder_forward.12} parent=0
    _
  %s8 = ssub.s32 1, %s6
  %s9 = scalar_select 0, %s8, %s6
  loop: start=0, step=1, limit=4
  $region2: #{texture_finder_forward.12} parent=0 // loop_pre_header
    _
  $region3: #{texture_finder_forward.12} parent=0 // loop_header
    %s11 = sphi 0, %s15
    %p12 = scmp.ge.s32.totalorder %s11, 4
    %s21 = sphi 0, %s23
    %s24 = sphi 0, %s21
    %s25 = sphi 0, %s24
    %s41 = sphi 0, %s25
    %s45 = sphi 0, %s45
    %s47 = sphi 0, %s45
    %s48 = sphi 0, %s47
    %s62 = sphi 0, %s48
    %s66 = sphi 0, %s66
    %s68 = sphi 0, %s66
    %s69 = sphi 0, %s68
    %s83 = sphi 0, %s69
    %s87 = sphi 0, %s87
    %s89 = sphi 0, %s87
    %s90 = sphi 0, %s89
    %s104 = sphi 0, %s90
    %s108 = sphi 0, %s108
    %s110 = sphi 0, %s108
    %s111 = sphi 0, %s110
    %s125 = sphi 0, %s111
    %s131 = sphi 0, %s133
    %s134 = sphi 0, %s131
    %s135 = sphi 0, %s134
    %s151 = sphi 0, %s135
  $region4: #{texture_finder_forward.12} parent=0 // loop_header_branch
    %14 = sbr.rel (%p12) target = $region8
  $region5: #{texture_finder_forward.12} parent=0 // loop_body
    %s16 = ssub.s32 %s11, 1
    %s17 = ssub.s32 %s11, 2
    %s18 = sadd.s32 %s11, 1
    %s19 = ssub.s32 %s11, %s18
    %p20 = scmp.eq.s32.totalorder %s19, 0
    %s22 = sadd.s32 %s21, 1
    %s23 = scalar_select %p20, %s21, %s22
    %p26 = pneg %p20
    %p27 = scmp.eq.s32.totalorder %s11, 1
    %p28 = por %p26, %p27
    %p29 = scmp.ne.s32.totalorder %s21, %s24
    %p30 = scmp.eq.s32.totalorder %s11, 0
    %p31 = por %p29, %p30
    %p32 = scmp.ne.s32.totalorder %s21, %s24
    %p33 = scmp.eq.s32.totalorder %s16, 1
    %p34 = por %p32, %p33
    %p35 = scmp.ne.s32.totalorder %s24, %s25
    %p36 = scmp.eq.s32.totalorder %s16, 0
    %p37 = por %p35, %p36
    %p38 = scmp.ne.s32.totalorder %s24, %s25
    %p39 = scmp.eq.s32.totalorder %s17, 1
    %p40 = por %p38, %p39
    %p42 = scmp.ne.s32.totalorder %s25, %s41
    %p43 = scmp.eq.s32.totalorder %s17, 0
    %p44 = por %p42, %p43
    %s46 = sadd.s32 %s45, 1
    %p49 = scmp.eq.s32.totalorder %s11, 1
    %p50 = scmp.ne.s32.totalorder %s45, %s47
    %p51 = scmp.eq.s32.totalorder %s11, 0
    %p52 = por %p50, %p51
    %p53 = scmp.ne.s32.totalorder %s45, %s47
    %p54 = scmp.eq.s32.totalorder %s16, 1
    %p55 = por %p53, %p54
    %p56 = scmp.ne.s32.totalorder %s47, %s48
    %p57 = scmp.eq.s32.totalorder %s16, 0
    %p58 = por %p56, %p57
    %p59 = scmp.ne.s32.totalorder %s47, %s48
    %p60 = scmp.eq.s32.totalorder %s17, 1
    %p61 = por %p59, %p60
    %p63 = scmp.ne.s32.totalorder %s48, %s62
    %p64 = scmp.eq.s32.totalorder %s17, 0
    %p65 = por %p63, %p64
    %s67 = sadd.s32 %s66, 1
    %p70 = scmp.eq.s32.totalorder %s11, 1
    %p71 = scmp.ne.s32.totalorder %s66, %s68
    %p72 = scmp.eq.s32.totalorder %s11, 0
    %p73 = por %p71, %p72
    %p74 = scmp.ne.s32.totalorder %s66, %s68
    %p75 = scmp.eq.s32.totalorder %s16, 1
    %p76 = por %p74, %p75
    %p77 = scmp.ne.s32.totalorder %s68, %s69
    %p78 = scmp.eq.s32.totalorder %s16, 0
    %p79 = por %p77, %p78
    %p80 = scmp.ne.s32.totalorder %s68, %s69
    %p81 = scmp.eq.s32.totalorder %s17, 1
    %p82 = por %p80, %p81
    %p84 = scmp.ne.s32.totalorder %s69, %s83
    %p85 = scmp.eq.s32.totalorder %s17, 0
    %p86 = por %p84, %p85
    %s88 = sadd.s32 %s87, 1
    %p91 = scmp.eq.s32.totalorder %s11, 1
    %p92 = scmp.ne.s32.totalorder %s87, %s89
    %p93 = scmp.eq.s32.totalorder %s11, 0
    %p94 = por %p92, %p93
    %p95 = scmp.ne.s32.totalorder %s87, %s89
    %p96 = scmp.eq.s32.totalorder %s16, 1
    %p97 = por %p95, %p96
    %p98 = scmp.ne.s32.totalorder %s89, %s90
    %p99 = scmp.eq.s32.totalorder %s16, 0
    %p100 = por %p98, %p99
    %p101 = scmp.ne.s32.totalorder %s89, %s90
    %p102 = scmp.eq.s32.totalorder %s17, 1
    %p103 = por %p101, %p102
    %p105 = scmp.ne.s32.totalorder %s90, %s104
    %p106 = scmp.eq.s32.totalorder %s17, 0
    %p107 = por %p105, %p106
    %s109 = sadd.s32 %s108, 1
    %p112 = scmp.eq.s32.totalorder %s11, 1
    %p113 = scmp.ne.s32.totalorder %s108, %s110
    %p114 = scmp.eq.s32.totalorder %s11, 0
    %p115 = por %p113, %p114
    %p116 = scmp.ne.s32.totalorder %s108, %s110
    %p117 = scmp.eq.s32.totalorder %s16, 1
    %p118 = por %p116, %p117
    %p119 = scmp.ne.s32.totalorder %s110, %s111
    %p120 = scmp.eq.s32.totalorder %s16, 0
    %p121 = por %p119, %p120
    %p122 = scmp.ne.s32.totalorder %s110, %s111
    %p123 = scmp.eq.s32.totalorder %s17, 1
    %p124 = por %p122, %p123
    %p126 = scmp.ne.s32.totalorder %s111, %s125
    %p127 = scmp.eq.s32.totalorder %s17, 0
    %p128 = por %p126, %p127
    %s129 = ssub.s32 %s11, %s18
    %p130 = scmp.eq.s32.totalorder %s129, 0
    %s132 = sadd.s32 %s131, 1
    %s133 = scalar_select %p130, %s131, %s132
    %p136 = pneg %p130
    %p137 = scmp.eq.s32.totalorder %s11, 1
    %p138 = por %p136, %p137
    %p139 = scmp.ne.s32.totalorder %s131, %s134
    %p140 = scmp.eq.s32.totalorder %s11, 0
    %p141 = por %p139, %p140
    %p142 = scmp.ne.s32.totalorder %s131, %s134
    %p143 = scmp.eq.s32.totalorder %s16, 1
    %p144 = por %p142, %p143
    %p145 = scmp.ne.s32.totalorder %s134, %s135
    %p146 = scmp.eq.s32.totalorder %s16, 0
    %p147 = por %p145, %p146
    %p148 = scmp.ne.s32.totalorder %s134, %s135
    %p149 = scmp.eq.s32.totalorder %s17, 1
    %p150 = por %p148, %p149
    %p152 = scmp.ne.s32.totalorder %s135, %s151
    %p153 = scmp.eq.s32.totalorder %s17, 0
    %p154 = por %p152, %p153
    %p155 = scmp.le.s32.totalorder 1, %s11
    %p156 = scmp.lt.s32.totalorder %s11, 3
    %p157 = pnand %p155, %p156
    %p158 = pneg %p157
    // Predicated region
    $region9: #{texture_finder_forward.12} parent=5 // pred_check
      _
    $region10: #{texture_finder_forward.12} parent=5 // pred_check_branch
      %160 = sbr.rel (%p157) target = $region12
    $region11: #{texture_finder_forward.12} parent=5 // pred_region
      %s161 = ssub.s32 %s11, 1
      // Predicated region
      $region13: #{texture_finder_forward.12} parent=11 // pred_check
        %p162 = pneg %p58
      $region14: #{texture_finder_forward.12} parent=11 // pred_check_branch
        %164 = sbr.rel (%p162) target = $region16
      $region15: #{texture_finder_forward.12} parent=11 // pred_region
        _
      $region16: #{texture_finder_forward.12} parent=11 // pred_fallthru
        _
      // Predicated region
      $region17: #{texture_finder_forward.12} parent=11 // pred_check
        %p165 = pneg %p79
      $region18: #{texture_finder_forward.12} parent=11 // pred_check_branch
        %167 = sbr.rel (%p165) target = $region20
      $region19: #{texture_finder_forward.12} parent=11 // pred_region
        _
      $region20: #{texture_finder_forward.12} parent=11 // pred_fallthru
        _
      // Predicated region
      $region21: #{texture_finder_forward.12} parent=11 // pred_check
        %p168 = pneg %p100
      $region22: #{texture_finder_forward.12} parent=11 // pred_check_branch
        %170 = sbr.rel (%p168) target = $region24
      $region23: #{texture_finder_forward.12} parent=11 // pred_region
        _
      $region24: #{texture_finder_forward.12} parent=11 // pred_fallthru
        _
      // Predicated region
      $region25: #{texture_finder_forward.12} parent=11 // pred_check
        %p171 = pneg %p121
      $region26: #{texture_finder_forward.12} parent=11 // pred_check_branch
        %173 = sbr.rel (%p171) target = $region28
      $region27: #{texture_finder_forward.12} parent=11 // pred_region
        _
      $region28: #{texture_finder_forward.12} parent=11 // pred_fallthru
        _
    $region12: #{texture_finder_forward.12} parent=5 // pred_fallthru
      _
    %p174 = scmp.lt.s32.totalorder %s11, 2
    // Predicated region
    $region29: #{texture_finder_forward.12} parent=5 // pred_check
      %p175 = pneg %p174
    $region30: #{texture_finder_forward.12} parent=5 // pred_check_branch
      %177 = sbr.rel (%p175) target = $region32
    $region31: #{texture_finder_forward.12} parent=5 // pred_region
      // Predicated region
      $region33: #{texture_finder_forward.12} parent=31 // pred_check
        %p178 = pneg %p31
      $region34: #{texture_finder_forward.12} parent=31 // pred_check_branch
        %180 = sbr.rel (%p178) target = $region36
      $region35: #{texture_finder_forward.12} parent=31 // pred_region
        %p181 = scmp.lt.s32.totalorder %s11, 1
        %s182 = scalar_select %p181, %s11, 1
        %s183 = smul.addr %s182, 4
        %s184 = smul.addr %s183, 4
        %s185 = scalar_lea.vmem %s0, %s184
      $region36: #{texture_finder_forward.12} parent=31 // pred_fallthru
        _
    $region32: #{texture_finder_forward.12} parent=5 // pred_fallthru
      _
    %p186 = scmp.le.s32.totalorder 1, %s11
    %p187 = scmp.lt.s32.totalorder %s11, 3
    %p188 = pnand %p186, %p187
    %p189 = pneg %p188
    // Predicated region
    $region37: #{texture_finder_forward.12} parent=5 // pred_check
      _
    $region38: #{texture_finder_forward.12} parent=5 // pred_check_branch
      %191 = sbr.rel (%p188) target = $region40
    $region39: #{texture_finder_forward.12} parent=5 // pred_region
      %s192 = ssub.s32 %s11, 1
      %p193 = scmp.lt.s32.totalorder %s16, 1
      %s194 = scalar_select %p193, %s16, 1
      %s195 = smul.addr %s194, 4
      %s196 = smul.addr %s195, 4
      %s197 = scalar_lea.vmem %s0, %s196
      %p198 = pneg %p37
      %p199 = pneg %p34
      %p200 = pneg %p58
      %p201 = pneg %p55
      %p202 = pneg %p79
      %p203 = pneg %p76
      %p204 = pneg %p100
      %p205 = pneg %p97
      %p206 = pneg %p121
      %p207 = pneg %p118
      %p208 = pneg %p147
      %p209 = pneg %p144
      %p210 = scmp.lt.s32.totalorder %s16, 1
      %s211 = scalar_select %p210, %s16, 1
      %s212 = smul.addr %s211, 4
      %s213 = scalar_lea.vmem %s5, %s212
      %p214 = scmp.lt.s32.totalorder %s16, 1
      %s215 = scalar_select %p214, %s16, 1
      %s216 = smul.addr %s215, 4
      %s217 = smul.addr %s216, 4
      %s218 = scalar_lea.vmem %s0, %s217
      %p219 = scmp.lt.s32.totalorder %s16, 1
      %s220 = scalar_select %p219, %s16, 1
      %s221 = smul.addr %s220, 4
      %s222 = scalar_lea.vmem %s5, %s221
      %v223 = vld [vmem:[%s218] sm:$0xff]
      %v224 = vld [vmem:[%s218 + $0x8] sm:$0xff]
      %v225 = vld [vmem:[%s1] sm:$0xff]
      %v226 = vld [vmem:[%s1 + $0x8] sm:$0xff]
      %v227 = vld [vmem:[%s1 + $0x10] sm:$0xff]
      %v228 = vld [vmem:[%s1 + $0x18] sm:$0xff]
      %v229 = vld [vmem:[%s1 + $0x20] sm:$0xff]
      %v230 = vld [vmem:[%s1 + $0x28] sm:$0xff]
      %v231 = vld [vmem:[%s1 + $0x30] sm:$0xff]
      %v232 = vld [vmem:[%s1 + $0x38] sm:$0xff]
      %v233 = vld [vmem:[%s1 + $0x40] sm:$0xff]
      %v234 = vld [vmem:[%s1 + $0x48] sm:$0xff]
      %v235 = vld [vmem:[%s1 + $0x50] sm:$0xff]
      %v236 = vld [vmem:[%s1 + $0x58] sm:$0xff]
      %v237 = vld [vmem:[%s1 + $0x60] sm:$0xff]
      %v238 = vld [vmem:[%s1 + $0x68] sm:$0xff]
      %v239 = vld [vmem:[%s1 + $0x70] sm:$0xff]
      %v240 = vld [vmem:[%s1 + $0x78] sm:$0xff]
      %v241 = vld [vmem:[%s1 + $0x80] sm:$0xff]
      %v242 = vld [vmem:[%s1 + $0x88] sm:$0xff]
      %v243 = vld [vmem:[%s1 + $0x90] sm:$0xff]
      %v244 = vld [vmem:[%s1 + $0x98] sm:$0xff]
      %v245 = vld [vmem:[%s1 + $0xa0] sm:$0xff]
      %v246 = vld [vmem:[%s1 + $0xa8] sm:$0xff]
      %v247 = vld [vmem:[%s1 + $0xb0] sm:$0xff]
      %v248 = vld [vmem:[%s1 + $0xb8] sm:$0xff]
      %v249 = vld [vmem:[%s1 + $0xc0] sm:$0xff]
      %v250 = vld [vmem:[%s1 + $0xc8] sm:$0xff]
      %v251 = vld [vmem:[%s1 + $0xd0] sm:$0xff]
      %v252 = vld [vmem:[%s1 + $0xd8] sm:$0xff]
      %v253 = vld [vmem:[%s1 + $0xe0] sm:$0xff]
      %v254 = vld [vmem:[%s1 + $0xe8] sm:$0xff]
      %v255 = vld [vmem:[%s1 + $0xf0] sm:$0xff]
      %v256 = vld [vmem:[%s1 + $0xf8] sm:$0xff]
      %v257 = vld [vmem:[%s1 + $0x100] sm:$0xff]
      %v258 = vld [vmem:[%s1 + $0x108] sm:$0xff]
      %v259 = vld [vmem:[%s1 + $0x110] sm:$0xff]
      %v260 = vld [vmem:[%s1 + $0x118] sm:$0xff]
      %v261 = vld [vmem:[%s1 + $0x120] sm:$0xff]
      %v262 = vld [vmem:[%s1 + $0x128] sm:$0xff]
      %v263 = vld [vmem:[%s1 + $0x130] sm:$0xff]
      %v264 = vld [vmem:[%s1 + $0x138] sm:$0xff]
      %v265 = vld [vmem:[%s1 + $0x140] sm:$0xff]
      %v266 = vld [vmem:[%s1 + $0x148] sm:$0xff]
      %v267 = vld [vmem:[%s1 + $0x150] sm:$0xff]
      %v268 = vld [vmem:[%s1 + $0x158] sm:$0xff]
      %v269 = vld [vmem:[%s1 + $0x160] sm:$0xff]
      %v270 = vld [vmem:[%s1 + $0x168] sm:$0xff]
      %v271 = vld [vmem:[%s1 + $0x170] sm:$0xff]
      %v272 = vld [vmem:[%s1 + $0x178] sm:$0xff]
      %v273 = vld [vmem:[%s1 + $0x180] sm:$0xff]
      %v274 = vld [vmem:[%s1 + $0x188] sm:$0xff]
      %v275 = vld [vmem:[%s2] sm:$0x1]
      %v277 = vlaneseq
      %v278 = vshrl.u32 %v277, 7
      %v279 = vsub.s32 0, %v278
      %v280 = vrot.slane %v275, %v279
      %v284 = vcombine.high %v223, %v223
      %v285 = vcombine.high %v224, %v224
      %vm287 = vcmask 130048
      %v288 = vsel %vm287, %v285, 0
      %290 = vmatprep.subr.mxu0 0.0
      %291 = vmatpush1.msra.mxu0 %v225
      %292 = vmatprep.subr.mxu0 0.0
      %293 = vmatpush1.msra.mxu0 %v226
      %294 = vmatprep.subr.mxu0 0.0
      %295 = vmatpush1.msra.mxu0 %v227
      %296 = vmatprep.subr.mxu0 0.0
      %297 = vmatpush1.msra.mxu0 %v228
      %298 = vmatprep.subr.mxu0 0.0
      %299 = vmatpush1.msra.mxu0 %v229
      %300 = vmatprep.subr.mxu0 0.0
      %301 = vmatpush1.msra.mxu0 %v230
      %302 = vmatprep.subr.mxu0 0.0
      %303 = vmatpush1.msra.mxu0 %v231
      %304 = vmatprep.subr.mxu0 0.0
      %305 = vmatpush1.msra.mxu0 %v232
      %306 = vmatprep.subr.mxu0 0.0
      %307 = vmatpush1.msra.mxu0 %v233
      %308 = vmatprep.subr.mxu0 0.0
      %309 = vmatpush1.msra.mxu0 %v234
      %310 = vmatprep.subr.mxu0 0.0
      %311 = vmatpush1.msra.mxu0 %v235
      %312 = vmatprep.subr.mxu0 0.0
      %313 = vmatpush1.msra.mxu0 %v236
      %314 = vmatprep.subr.mxu0 0.0
      %315 = vmatpush1.msra.mxu0 %v237
      %316 = vmatprep.subr.mxu0 0.0
      %317 = vmatpush1.msra.mxu0 %v238
      %318 = vmatprep.subr.mxu0 0.0
      %319 = vmatpush1.msra.mxu0 %v239
      %320 = vmatprep.subr.mxu0 0.0
      %321 = vmatpush1.msra.mxu0 %v240
      %322 = vmatprep.subr.mxu0 0.0
      %323 = vmatpush1.msra.mxu0 %v241
      %324 = vmatprep.subr.mxu0 0.0
      %325 = vmatpush1.msra.mxu0 %v242
      %326 = vmatprep.subr.mxu0 0.0
      %327 = vmatpush1.msra.mxu0 %v243
      %328 = vmatprep.subr.mxu0 0.0
      %329 = vmatpush1.msra.mxu0 %v244
      %330 = vmatprep.subr.mxu0 0.0
      %331 = vmatpush1.msra.mxu0 %v245
      %332 = vmatprep.subr.mxu0 0.0
      %333 = vmatpush1.msra.mxu0 %v246
      %334 = vmatprep.subr.mxu0 0.0
      %335 = vmatpush1.msra.mxu0 %v247
      %336 = vmatprep.subr.mxu0 0.0
      %337 = vmatpush1.msra.mxu0 %v248
      %338 = vmatprep.subr.mxu0 0.0
      %339 = vmatpush1.msra.mxu0 %v249
      %340 = vmatprep.subr.mxu0 0.0
      %341 = vmatpush1.msra.mxu0 %v250
      %342 = vmatprep.subr.mxu0 0.0
      %343 = vmatpush1.msra.mxu0 %v251
      %344 = vmatprep.subr.mxu0 0.0
      %345 = vmatpush1.msra.mxu0 %v252
      %346 = vmatprep.subr.mxu0 0.0
      %347 = vmatpush1.msra.mxu0 %v253
      %348 = vmatprep.subr.mxu0 0.0
      %349 = vmatpush1.msra.mxu0 %v254
      %350 = vmatprep.subr.mxu0 0.0
      %351 = vmatpush1.msra.mxu0 %v255
      %352 = vmatprep.subr.mxu0 0.0
      %353 = vmatpush1.msra.mxu0 %v256
      %354 = vmatprep.mubr.f32.mxu0 %v284
      %355 = vmatmul.mubr.f32.gmra.mrb[0].mxu0 %v223
      %v356 = vpop.f32.mrb[0].mxu0
      %v357 = vadd.f32 %v280, %v356
      %v358 = vpop.f32.mrb[0].mxu0
      %359 = vdwg.mxu0
      %360 = vmatprep.subr.mxu0 0.0
      %361 = vmatpush1.msra.mxu0 %v257
      %362 = vmatprep.subr.mxu0 0.0
      %363 = vmatpush1.msra.mxu0 %v258
      %364 = vmatprep.subr.mxu0 0.0
      %365 = vmatpush1.msra.mxu0 %v259
      %366 = vmatprep.subr.mxu0 0.0
      %367 = vmatpush1.msra.mxu0 %v260
      %368 = vmatprep.subr.mxu0 0.0
      %369 = vmatpush1.msra.mxu0 %v261
      %370 = vmatprep.subr.mxu0 0.0
      %371 = vmatpush1.msra.mxu0 %v262
      %372 = vmatprep.subr.mxu0 0.0
      %373 = vmatpush1.msra.mxu0 %v263
      %374 = vmatprep.subr.mxu0 0.0
      %375 = vmatpush1.msra.mxu0 %v264
      %376 = vmatprep.subr.mxu0 0.0
      %377 = vmatpush1.msra.mxu0 %v265
      %378 = vmatprep.subr.mxu0 0.0
      %379 = vmatpush1.msra.mxu0 %v266
      %380 = vmatprep.subr.mxu0 0.0
      %381 = vmatpush1.msra.mxu0 %v267
      %382 = vmatprep.subr.mxu0 0.0
      %383 = vmatpush1.msra.mxu0 %v268
      %384 = vmatprep.subr.mxu0 0.0
      %385 = vmatpush1.msra.mxu0 %v269
      %386 = vmatprep.subr.mxu0 0.0
      %387 = vmatpush1.msra.mxu0 %v270
      %388 = vmatprep.subr.mxu0 0.0
      %389 = vmatpush1.msra.mxu0 %v271
      %390 = vmatprep.subr.mxu0 0.0
      %391 = vmatpush1.msra.mxu0 %v272
      %392 = vmatprep.subr.mxu0 0.0
      %393 = vmatpush1.msra.mxu0 %v273
      %394 = vmatprep.subr.mxu0 0.0
      %395 = vmatpush1.msra.mxu0 %v274
      %396 = vmatprep.subr.mxu0 0.0
      %397 = vmatpush1.msra.mxu0 0.0
      %398 = vmatprep.subr.mxu0 0.0
      %399 = vmatpush1.msra.mxu0 0.0
      %400 = vmatprep.subr.mxu0 0.0
      %401 = vmatpush1.msra.mxu0 0.0
      %402 = vmatprep.subr.mxu0 0.0
      %403 = vmatpush1.msra.mxu0 0.0
      %404 = vmatprep.subr.mxu0 0.0
      %405 = vmatpush1.msra.mxu0 0.0
      %406 = vmatprep.subr.mxu0 0.0
      %407 = vmatpush1.msra.mxu0 0.0
      %408 = vmatprep.subr.mxu0 0.0
      %409 = vmatpush1.msra.mxu0 0.0
      %410 = vmatprep.subr.mxu0 0.0
      %411 = vmatpush1.msra.mxu0 0.0
      %412 = vmatprep.subr.mxu0 0.0
      %413 = vmatpush1.msra.mxu0 0.0
      %414 = vmatprep.subr.mxu0 0.0
      %415 = vmatpush1.msra.mxu0 0.0
      %416 = vmatprep.subr.mxu0 0.0
      %417 = vmatpush1.msra.mxu0 0.0
      %418 = vmatprep.subr.mxu0 0.0
      %419 = vmatpush1.msra.mxu0 0.0
      %420 = vmatprep.subr.mxu0 0.0
      %421 = vmatpush1.msra.mxu0 0.0
      %422 = vmatprep.subr.mxu0 0.0
      %423 = vmatpush1.msra.mxu0 0.0
      %424 = vmatprep.mubr.f32.mxu0 %v288
      %425 = vmatmul.mubr.f32.gmra.mrb[0].mxu0 %v224
      %v426 = vpop.f32.mrb[0].mxu0
      %v427 = vadd.f32 %v357, %v426
      %v428 = vpop.f32.mrb[0].mxu0
      %429 = vdwg.mxu0
      %v430 = vmax.f32 %v427, 0.0
      %vm431 = vcmask 1043456
      %v432 = vsel %vm431, %v430, 0.0
      %433 = vadd.xlane.f32.xlu0 %v432
      %v434 = vpop.xlane.xlu0 %433
      %v435 = vrot.slane %v434, 4
      %v436 = vadd.f32 %v434, %v435
      %v437 = vrot.slane %v436, 2
      %v438 = vadd.f32 %v436, %v437
      %v439 = vrot.slane %v438, 1
      %v440 = vadd.f32 %v438, %v439
      %s441 = vtos %v440
      %v442 = vrcp.pop 512.0
      %s443 = vtos %v442
      %s444 = smul.f32 %s441, %s443
      %v445 = vstv %s444
      %v446 = vsub.f32 %v430, %v445
      %v447 = vmul.f32 %v446, %v446
      %v448 = vsel %vm431, %v447, 0.0
      %449 = vadd.xlane.f32.xlu0 %v448
      %v450 = vpop.xlane.xlu0 %449
      %v451 = vrot.slane %v450, 4
      %v452 = vadd.f32 %v450, %v451
      %v453 = vrot.slane %v452, 2
      %v454 = vadd.f32 %v452, %v453
      %v455 = vrot.slane %v454, 1
      %v456 = vadd.f32 %v454, %v455
      %s457 = vtos %v456
      %v458 = vrcp.pop 512.0
      %s459 = vtos %v458
      %s460 = smul.f32 %s457, %s459
      %s461 = sadd.f32 %s460, 1e-05
      %v462 = vstv %s461
      %v463 = vrsqrt.pop %v462
      %s464 = vtos %v463
      %v465 = vstv %s464
      %v466 = vmul.f32 %v446, %v465
      %v467 = vld [vmem:[%s3] sm:$0x1]
      %v469 = vlaneseq
      %v470 = vshrl.u32 %v469, 7
      %v471 = vsub.s32 0, %v470
      %v472 = vrot.slane %v467, %v471
      %v474 = vmul.f32 %v466, %v472
      %v475 = vld [vmem:[%s4] sm:$0x1]
      %v477 = vlaneseq
      %v478 = vshrl.u32 %v477, 7
      %v479 = vsub.s32 0, %v478
      %v480 = vrot.slane %v475, %v479
      %v482 = vadd.f32 %v474, %v480
      %483 = vst [vmem:[%s222] sm:$0xf] %v482
      %p484 = scmp.lt.s32.totalorder %s16, 1
      %s485 = scalar_select %p484, %s16, 1
      %s486 = smul.addr %s485, 4
      %s487 = scalar_lea.vmem %s5, %s486
      // Predicated region
      $region41: #{texture_finder_forward.12} parent=39 // pred_check
        %p488 = pneg %p144
      $region42: #{texture_finder_forward.12} parent=39 // pred_check_branch
        %490 = sbr.rel (%p488) target = $region44
      $region43: #{texture_finder_forward.12} parent=39 // pred_region
        _
      $region44: #{texture_finder_forward.12} parent=39 // pred_fallthru
        _
    $region40: #{texture_finder_forward.12} parent=5 // pred_fallthru
      _
    %p491 = scmp.le.s32.totalorder 2, %s11
    // Predicated region
    $region45: #{texture_finder_forward.12} parent=5 // pred_check
      %p492 = pneg %p491
    $region46: #{texture_finder_forward.12} parent=5 // pred_check_branch
      %494 = sbr.rel (%p492) target = $region48
    $region47: #{texture_finder_forward.12} parent=5 // pred_region
      %s495 = ssub.s32 %s11, 2
      // Predicated region
      $region49: #{texture_finder_forward.12} parent=47 // pred_check
        %p496 = pneg %p150
      $region50: #{texture_finder_forward.12} parent=47 // pred_check_branch
        %498 = sbr.rel (%p496) target = $region52
      $region51: #{texture_finder_forward.12} parent=47 // pred_region
        %p499 = scmp.lt.s32.totalorder %s17, 1
        %s500 = scalar_select %p499, %s17, 1
        %s501 = smul.addr %s500, 4
        %s502 = scalar_lea.vmem %s5, %s501
      $region52: #{texture_finder_forward.12} parent=47 // pred_fallthru
        _
    $region48: #{texture_finder_forward.12} parent=5 // pred_fallthru
      _
  $region6: #{texture_finder_forward.12} parent=0 // loop_footer
    %s15 = sadd.s32 1, %s11
  $region7: #{texture_finder_forward.12} parent=0 // loop_footer_branch
    %10 = sbr.rel target = $region3
  $region8: #{texture_finder_forward.12} parent=0 // loop_exit
    _

// kernel: texture_finder_forward.13
$region0: #{texture_finder_forward.13}
  #allocation0 [shape = 'u32[]', space=smem, size = 0x4, offset = 0x4, fixed_abs, tag = 'smem constant byte address 0x4 - core index']
  #allocation1 [shape = 'u32[144,128]{1,0:T(1,128)}', space=vmem, size = 0x12000, scoped, tag = 'internal scratch']
  %s0 = inlined_call_operand.vmem [shape: f32[2,16,800], index: 0, kind: input, shape index: {}]
  %s1 = inlined_call_operand.vmem [shape: f32[800,256], index: 1, kind: input, shape index: {}]
  %s2 = inlined_call_operand.vmem [shape: f32[1,256], index: 2, kind: input, shape index: {}, may-alias: {2,4}]
  %s3 = inlined_call_operand.vmem [shape: f32[1,256], index: 3, kind: input, shape index: {}]
  %s4 = inlined_call_operand.vmem [shape: f32[1,256], index: 4, kind: input, shape index: {}, may-alias: {2,4}]
  %s5 = inlined_call_operand.vmem [shape: f32[2,16,256], index: 5, kind: output, shape index: {}]
  %s6 = sld [smem:[#allocation0]]
  $region53: #{texture_finder_forward.13} parent=0
    _
  %s8 = ssub.s32 1, %s6
  %s9 = scalar_select 0, %s8, %s6
  loop: start=0, step=1, limit=4
  $region2: #{texture_finder_forward.13} parent=0 // loop_pre_header
    _
  $region3: #{texture_finder_forward.13} parent=0 // loop_header
    %s11 = sphi 0, %s15
    %p12 = scmp.ge.s32.totalorder %s11, 4
    %s21 = sphi 0, %s23
    %s24 = sphi 0, %s21
    %s25 = sphi 0, %s24
    %s41 = sphi 0, %s25
    %s45 = sphi 0, %s45
    %s47 = sphi 0, %s45
    %s48 = sphi 0, %s47
    %s62 = sphi 0, %s48
    %s66 = sphi 0, %s66
    %s68 = sphi 0, %s66
    %s69 = sphi 0, %s68
    %s83 = sphi 0, %s69
    %s87 = sphi 0, %s87
    %s89 = sphi 0, %s87
    %s90 = sphi 0, %s89
    %s104 = sphi 0, %s90
    %s108 = sphi 0, %s108
    %s110 = sphi 0, %s108
    %s111 = sphi 0, %s110
    %s125 = sphi 0, %s111
    %s131 = sphi 0, %s133
    %s134 = sphi 0, %s131
    %s135 = sphi 0, %s134
    %s151 = sphi 0, %s135
  $region4: #{texture_finder_forward.13} parent=0 // loop_header_branch
    %14 = sbr.rel (%p12) target = $region8
  $region5: #{texture_finder_forward.13} parent=0 // loop_body
    %s16 = ssub.s32 %s11, 1
    %s17 = ssub.s32 %s11, 2
    %s18 = sadd.s32 %s11, 1
    %s19 = ssub.s32 %s11, %s18
    %p20 = scmp.eq.s32.totalorder %s19, 0
    %s22 = sadd.s32 %s21, 1
    %s23 = scalar_select %p20, %s21, %s22
    %p26 = pneg %p20
    %p27 = scmp.eq.s32.totalorder %s11, 1
    %p28 = por %p26, %p27
    %p29 = scmp.ne.s32.totalorder %s21, %s24
    %p30 = scmp.eq.s32.totalorder %s11, 0
    %p31 = por %p29, %p30
    %p32 = scmp.ne.s32.totalorder %s21, %s24
    %p33 = scmp.eq.s32.totalorder %s16, 1
    %p34 = por %p32, %p33
    %p35 = scmp.ne.s32.totalorder %s24, %s25
    %p36 = scmp.eq.s32.totalorder %s16, 0
    %p37 = por %p35, %p36
    %p38 = scmp.ne.s32.totalorder %s24, %s25
    %p39 = scmp.eq.s32.totalorder %s17, 1
    %p40 = por %p38, %p39
    %p42 = scmp.ne.s32.totalorder %s25, %s41
    %p43 = scmp.eq.s32.totalorder %s17, 0
    %p44 = por %p42, %p43
    %s46 = sadd.s32 %s45, 1
    %p49 = scmp.eq.s32.totalorder %s11, 1
    %p50 = scmp.ne.s32.totalorder %s45, %s47
    %p51 = scmp.eq.s32.totalorder %s11, 0
    %p52 = por %p50, %p51
    %p53 = scmp.ne.s32.totalorder %s45, %s47
    %p54 = scmp.eq.s32.totalorder %s16, 1
    %p55 = por %p53, %p54
    %p56 = scmp.ne.s32.totalorder %s47, %s48
    %p57 = scmp.eq.s32.totalorder %s16, 0
    %p58 = por %p56, %p57
    %p59 = scmp.ne.s32.totalorder %s47, %s48
    %p60 = scmp.eq.s32.totalorder %s17, 1
    %p61 = por %p59, %p60
    %p63 = scmp.ne.s32.totalorder %s48, %s62
    %p64 = scmp.eq.s32.totalorder %s17, 0
    %p65 = por %p63, %p64
    %s67 = sadd.s32 %s66, 1
    %p70 = scmp.eq.s32.totalorder %s11, 1
    %p71 = scmp.ne.s32.totalorder %s66, %s68
    %p72 = scmp.eq.s32.totalorder %s11, 0
    %p73 = por %p71, %p72
    %p74 = scmp.ne.s32.totalorder %s66, %s68
    %p75 = scmp.eq.s32.totalorder %s16, 1
    %p76 = por %p74, %p75
    %p77 = scmp.ne.s32.totalorder %s68, %s69
    %p78 = scmp.eq.s32.totalorder %s16, 0
    %p79 = por %p77, %p78
    %p80 = scmp.ne.s32.totalorder %s68, %s69
    %p81 = scmp.eq.s32.totalorder %s17, 1
    %p82 = por %p80, %p81
    %p84 = scmp.ne.s32.totalorder %s69, %s83
    %p85 = scmp.eq.s32.totalorder %s17, 0
    %p86 = por %p84, %p85
    %s88 = sadd.s32 %s87, 1
    %p91 = scmp.eq.s32.totalorder %s11, 1
    %p92 = scmp.ne.s32.totalorder %s87, %s89
    %p93 = scmp.eq.s32.totalorder %s11, 0
    %p94 = por %p92, %p93
    %p95 = scmp.ne.s32.totalorder %s87, %s89
    %p96 = scmp.eq.s32.totalorder %s16, 1
    %p97 = por %p95, %p96
    %p98 = scmp.ne.s32.totalorder %s89, %s90
    %p99 = scmp.eq.s32.totalorder %s16, 0
    %p100 = por %p98, %p99
    %p101 = scmp.ne.s32.totalorder %s89, %s90
    %p102 = scmp.eq.s32.totalorder %s17, 1
    %p103 = por %p101, %p102
    %p105 = scmp.ne.s32.totalorder %s90, %s104
    %p106 = scmp.eq.s32.totalorder %s17, 0
    %p107 = por %p105, %p106
    %s109 = sadd.s32 %s108, 1
    %p112 = scmp.eq.s32.totalorder %s11, 1
    %p113 = scmp.ne.s32.totalorder %s108, %s110
    %p114 = scmp.eq.s32.totalorder %s11, 0
    %p115 = por %p113, %p114
    %p116 = scmp.ne.s32.totalorder %s108, %s110
    %p117 = scmp.eq.s32.totalorder %s16, 1
    %p118 = por %p116, %p117
    %p119 = scmp.ne.s32.totalorder %s110, %s111
    %p120 = scmp.eq.s32.totalorder %s16, 0
    %p121 = por %p119, %p120
    %p122 = scmp.ne.s32.totalorder %s110, %s111
    %p123 = scmp.eq.s32.totalorder %s17, 1
    %p124 = por %p122, %p123
    %p126 = scmp.ne.s32.totalorder %s111, %s125
    %p127 = scmp.eq.s32.totalorder %s17, 0
    %p128 = por %p126, %p127
    %s129 = ssub.s32 %s11, %s18
    %p130 = scmp.eq.s32.totalorder %s129, 0
    %s132 = sadd.s32 %s131, 1
    %s133 = scalar_select %p130, %s131, %s132
    %p136 = pneg %p130
    %p137 = scmp.eq.s32.totalorder %s11, 1
    %p138 = por %p136, %p137
    %p139 = scmp.ne.s32.totalorder %s131, %s134
    %p140 = scmp.eq.s32.totalorder %s11, 0
    %p141 = por %p139, %p140
    %p142 = scmp.ne.s32.totalorder %s131, %s134
    %p143 = scmp.eq.s32.totalorder %s16, 1
    %p144 = por %p142, %p143
    %p145 = scmp.ne.s32.totalorder %s134, %s135
    %p146 = scmp.eq.s32.totalorder %s16, 0
    %p147 = por %p145, %p146
    %p148 = scmp.ne.s32.totalorder %s134, %s135
    %p149 = scmp.eq.s32.totalorder %s17, 1
    %p150 = por %p148, %p149
    %p152 = scmp.ne.s32.totalorder %s135, %s151
    %p153 = scmp.eq.s32.totalorder %s17, 0
    %p154 = por %p152, %p153
    %p155 = scmp.le.s32.totalorder 1, %s11
    %p156 = scmp.lt.s32.totalorder %s11, 3
    %p157 = pnand %p155, %p156
    %p158 = pneg %p157
    // Predicated region
    $region9: #{texture_finder_forward.13} parent=5 // pred_check
      _
    $region10: #{texture_finder_forward.13} parent=5 // pred_check_branch
      %160 = sbr.rel (%p157) target = $region12
    $region11: #{texture_finder_forward.13} parent=5 // pred_region
      %s161 = ssub.s32 %s11, 1
      // Predicated region
      $region13: #{texture_finder_forward.13} parent=11 // pred_check
        %p162 = pneg %p58
      $region14: #{texture_finder_forward.13} parent=11 // pred_check_branch
        %164 = sbr.rel (%p162) target = $region16
      $region15: #{texture_finder_forward.13} parent=11 // pred_region
        _
      $region16: #{texture_finder_forward.13} parent=11 // pred_fallthru
        _
      // Predicated region
      $region17: #{texture_finder_forward.13} parent=11 // pred_check
        %p165 = pneg %p79
      $region18: #{texture_finder_forward.13} parent=11 // pred_check_branch
        %167 = sbr.rel (%p165) target = $region20
      $region19: #{texture_finder_forward.13} parent=11 // pred_region
        _
      $region20: #{texture_finder_forward.13} parent=11 // pred_fallthru
        _
      // Predicated region
      $region21: #{texture_finder_forward.13} parent=11 // pred_check
        %p168 = pneg %p100
      $region22: #{texture_finder_forward.13} parent=11 // pred_check_branch
        %170 = sbr.rel (%p168) target = $region24
      $region23: #{texture_finder_forward.13} parent=11 // pred_region
        _
      $region24: #{texture_finder_forward.13} parent=11 // pred_fallthru
        _
      // Predicated region
      $region25: #{texture_finder_forward.13} parent=11 // pred_check
        %p171 = pneg %p121
      $region26: #{texture_finder_forward.13} parent=11 // pred_check_branch
        %173 = sbr.rel (%p171) target = $region28
      $region27: #{texture_finder_forward.13} parent=11 // pred_region
        _
      $region28: #{texture_finder_forward.13} parent=11 // pred_fallthru
        _
    $region12: #{texture_finder_forward.13} parent=5 // pred_fallthru
      _
    %p174 = scmp.lt.s32.totalorder %s11, 2
    // Predicated region
    $region29: #{texture_finder_forward.13} parent=5 // pred_check
      %p175 = pneg %p174
    $region30: #{texture_finder_forward.13} parent=5 // pred_check_branch
      %177 = sbr.rel (%p175) target = $region32
    $region31: #{texture_finder_forward.13} parent=5 // pred_region
      // Predicated region
      $region33: #{texture_finder_forward.13} parent=31 // pred_check
        %p178 = pneg %p31
      $region34: #{texture_finder_forward.13} parent=31 // pred_check_branch
        %180 = sbr.rel (%p178) target = $region36
      $region35: #{texture_finder_forward.13} parent=31 // pred_region
        %p181 = scmp.lt.s32.totalorder %s11, 1
        %s182 = scalar_select %p181, %s11, 1
        %s183 = smul.addr %s182, 14
        %s184 = smul.addr %s183, 8
        %s185 = scalar_lea.vmem %s0, %s184
      $region36: #{texture_finder_forward.13} parent=31 // pred_fallthru
        _
    $region32: #{texture_finder_forward.13} parent=5 // pred_fallthru
      _
    %p186 = scmp.le.s32.totalorder 1, %s11
    %p187 = scmp.lt.s32.totalorder %s11, 3
    %p188 = pnand %p186, %p187
    %p189 = pneg %p188
    // Predicated region
    $region37: #{texture_finder_forward.13} parent=5 // pred_check
      _
    $region38: #{texture_finder_forward.13} parent=5 // pred_check_branch
      %191 = sbr.rel (%p188) target = $region40
    $region39: #{texture_finder_forward.13} parent=5 // pred_region
      %s192 = ssub.s32 %s11, 1
      %p193 = scmp.lt.s32.totalorder %s16, 1
      %s194 = scalar_select %p193, %s16, 1
      %s195 = smul.addr %s194, 14
      %s196 = smul.addr %s195, 8
      %s197 = scalar_lea.vmem %s0, %s196
      %p198 = pneg %p37
      %p199 = pneg %p34
      %p200 = pneg %p58
      %p201 = pneg %p55
      %p202 = pneg %p79
      %p203 = pneg %p76
      %p204 = pneg %p100
      %p205 = pneg %p97
      %p206 = pneg %p121
      %p207 = pneg %p118
      %p208 = pneg %p147
      %p209 = pneg %p144
      %p210 = scmp.lt.s32.totalorder %s16, 1
      %s211 = scalar_select %p210, %s16, 1
      %s212 = smul.addr %s211, 4
      %s213 = smul.addr %s212, 8
      %s214 = scalar_lea.vmem %s5, %s213
      %p215 = scmp.lt.s32.totalorder %s16, 1
      %s216 = scalar_select %p215, %s16, 1
      %s217 = smul.addr %s216, 14
      %s218 = smul.addr %s217, 8
      %s219 = scalar_lea.vmem %s0, %s218
      %p220 = scmp.lt.s32.totalorder %s16, 1
      %s221 = scalar_select %p220, %s16, 1
      %s222 = smul.addr %s221, 4
      %s223 = smul.addr %s222, 8
      %s224 = scalar_lea.vmem %s5, %s223
      %v225 = vld [vmem:[%s219] sm:$0xff]
      %v226 = vld [vmem:[%s219 + $0x8] sm:$0xff]
      %v227 = vld [vmem:[%s219 + $0x10] sm:$0xff]
      %v228 = vld [vmem:[%s219 + $0x18] sm:$0xff]
      %v229 = vld [vmem:[%s219 + $0x20] sm:$0xff]
      %v230 = vld [vmem:[%s219 + $0x28] sm:$0xff]
      %v231 = vld [vmem:[%s219 + $0x30] sm:$0xff]
      %v232 = vld [vmem:[%s219 + $0x38] sm:$0xff]
      %v233 = vld [vmem:[%s219 + $0x40] sm:$0xff]
      %v234 = vld [vmem:[%s219 + $0x48] sm:$0xff]
      %v235 = vld [vmem:[%s219 + $0x50] sm:$0xff]
      %v236 = vld [vmem:[%s219 + $0x58] sm:$0xff]
      %v237 = vld [vmem:[%s219 + $0x60] sm:$0xff]
      %v238 = vld [vmem:[%s219 + $0x68] sm:$0xff]
      %v239 = vld [vmem:[%s1] sm:$0xff]
      %v240 = vld [vmem:[%s1 + $0x8] sm:$0xff]
      %v241 = vld [vmem:[%s1 + $0x10] sm:$0xff]
      %v242 = vld [vmem:[%s1 + $0x18] sm:$0xff]
      %v243 = vld [vmem:[%s1 + $0x20] sm:$0xff]
      %v244 = vld [vmem:[%s1 + $0x28] sm:$0xff]
      %v245 = vld [vmem:[%s1 + $0x30] sm:$0xff]
      %v246 = vld [vmem:[%s1 + $0x38] sm:$0xff]
      %v247 = vld [vmem:[%s1 + $0x40] sm:$0xff]
      %v248 = vld [vmem:[%s1 + $0x48] sm:$0xff]
      %v249 = vld [vmem:[%s1 + $0x50] sm:$0xff]
      %v250 = vld [vmem:[%s1 + $0x58] sm:$0xff]
      %v251 = vld [vmem:[%s1 + $0x60] sm:$0xff]
      %v252 = vld [vmem:[%s1 + $0x68] sm:$0xff]
      %v253 = vld [vmem:[%s1 + $0x70] sm:$0xff]
      %v254 = vld [vmem:[%s1 + $0x78] sm:$0xff]
      %v255 = vld [vmem:[%s1 + $0x80] sm:$0xff]
      %v256 = vld [vmem:[%s1 + $0x88] sm:$0xff]
      %v257 = vld [vmem:[%s1 + $0x90] sm:$0xff]
      %v258 = vld [vmem:[%s1 + $0x98] sm:$0xff]
      %v259 = vld [vmem:[%s1 + $0xa0] sm:$0xff]
      %v260 = vld [vmem:[%s1 + $0xa8] sm:$0xff]
      %v261 = vld [vmem:[%s1 + $0xb0] sm:$0xff]
      %v262 = vld [vmem:[%s1 + $0xb8] sm:$0xff]
      %v263 = vld [vmem:[%s1 + $0xc0] sm:$0xff]
      %v264 = vld [vmem:[%s1 + $0xc8] sm:$0xff]
      %v265 = vld [vmem:[%s1 + $0xd0] sm:$0xff]
      %v266 = vld [vmem:[%s1 + $0xd8] sm:$0xff]
      %v267 = vld [vmem:[%s1 + $0xe0] sm:$0xff]
      %v268 = vld [vmem:[%s1 + $0xe8] sm:$0xff]
      %v269 = vld [vmem:[%s1 + $0xf0] sm:$0xff]
      %v270 = vld [vmem:[%s1 + $0xf8] sm:$0xff]
      %v271 = vld [vmem:[%s1 + $0x100] sm:$0xff]
      %v272 = vld [vmem:[%s1 + $0x108] sm:$0xff]
      %v273 = vld [vmem:[%s1 + $0x110] sm:$0xff]
      %v274 = vld [vmem:[%s1 + $0x118] sm:$0xff]
      %v275 = vld [vmem:[%s1 + $0x120] sm:$0xff]
      %v276 = vld [vmem:[%s1 + $0x128] sm:$0xff]
      %v277 = vld [vmem:[%s1 + $0x130] sm:$0xff]
      %v278 = vld [vmem:[%s1 + $0x138] sm:$0xff]
      %v279 = vld [vmem:[%s1 + $0x140] sm:$0xff]
      %v280 = vld [vmem:[%s1 + $0x148] sm:$0xff]
      %v281 = vld [vmem:[%s1 + $0x150] sm:$0xff]
      %v282 = vld [vmem:[%s1 + $0x158] sm:$0xff]
      %v283 = vld [vmem:[%s1 + $0x160] sm:$0xff]
      %v284 = vld [vmem:[%s1 + $0x168] sm:$0xff]
      %v285 = vld [vmem:[%s1 + $0x170] sm:$0xff]
      %v286 = vld [vmem:[%s1 + $0x178] sm:$0xff]
      %v287 = vld [vmem:[%s1 + $0x180] sm:$0xff]
      %v288 = vld [vmem:[%s1 + $0x188] sm:$0xff]
      %v289 = vld [vmem:[%s1 + $0x190] sm:$0xff]
      %v290 = vld [vmem:[%s1 + $0x198] sm:$0xff]
      %v291 = vld [vmem:[%s1 + $0x1a0] sm:$0xff]
      %v292 = vld [vmem:[%s1 + $0x1a8] sm:$0xff]
      %v293 = vld [vmem:[%s1 + $0x1b0] sm:$0xff]
      %v294 = vld [vmem:[%s1 + $0x1b8] sm:$0xff]
      %v295 = vld [vmem:[%s1 + $0x1c0] sm:$0xff]
      %v296 = vld [vmem:[%s1 + $0x1c8] sm:$0xff]
      %v297 = vld [vmem:[%s1 + $0x1d0] sm:$0xff]
      %v298 = vld [vmem:[%s1 + $0x1d8] sm:$0xff]
      %v299 = vld [vmem:[%s1 + $0x1e0] sm:$0xff]
      %v300 = vld [vmem:[%s1 + $0x1e8] sm:$0xff]
      %v301 = vld [vmem:[%s1 + $0x1f0] sm:$0xff]
      %v302 = vld [vmem:[%s1 + $0x1f8] sm:$0xff]
      %v303 = vld [vmem:[%s1 + $0x200] sm:$0xff]
      %v304 = vld [vmem:[%s1 + $0x208] sm:$0xff]
      %v305 = vld [vmem:[%s1 + $0x210] sm:$0xff]
      %v306 = vld [vmem:[%s1 + $0x218] sm:$0xff]
      %v307 = vld [vmem:[%s1 + $0x220] sm:$0xff]
      %v308 = vld [vmem:[%s1 + $0x228] sm:$0xff]
      %v309 = vld [vmem:[%s1 + $0x230] sm:$0xff]
      %v310 = vld [vmem:[%s1 + $0x238] sm:$0xff]
      %v311 = vld [vmem:[%s1 + $0x240] sm:$0xff]
      %v312 = vld [vmem:[%s1 + $0x248] sm:$0xff]
      %v313 = vld [vmem:[%s1 + $0x250] sm:$0xff]
      %v314 = vld [vmem:[%s1 + $0x258] sm:$0xff]
      %v315 = vld [vmem:[%s1 + $0x260] sm:$0xff]
      %v316 = vld [vmem:[%s1 + $0x268] sm:$0xff]
      %v317 = vld [vmem:[%s1 + $0x270] sm:$0xff]
      %v318 = vld [vmem:[%s1 + $0x278] sm:$0xff]
      %v319 = vld [vmem:[%s1 + $0x280] sm:$0xff]
      %v320 = vld [vmem:[%s1 + $0x288] sm:$0xff]
      %v321 = vld [vmem:[%s1 + $0x290] sm:$0xff]
      %v322 = vld [vmem:[%s1 + $0x298] sm:$0xff]
      %v323 = vld [vmem:[%s1 + $0x2a0] sm:$0xff]
      %v324 = vld [vmem:[%s1 + $0x2a8] sm:$0xff]
      %v325 = vld [vmem:[%s1 + $0x2b0] sm:$0xff]
      %v326 = vld [vmem:[%s1 + $0x2b8] sm:$0xff]
      %v327 = vld [vmem:[%s1 + $0x2c0] sm:$0xff]
      %v328 = vld [vmem:[%s1 + $0x2c8] sm:$0xff]
      %v329 = vld [vmem:[%s1 + $0x2d0] sm:$0xff]
      %v330 = vld [vmem:[%s1 + $0x2d8] sm:$0xff]
      %v331 = vld [vmem:[%s1 + $0x2e0] sm:$0xff]
      %v332 = vld [vmem:[%s1 + $0x2e8] sm:$0xff]
      %v333 = vld [vmem:[%s1 + $0x2f0] sm:$0xff]
      %v334 = vld [vmem:[%s1 + $0x2f8] sm:$0xff]
      %v335 = vld [vmem:[%s1 + $0x300] sm:$0xff]
      %v336 = vld [vmem:[%s1 + $0x308] sm:$0xff]
      %v337 = vld [vmem:[%s1 + $0x310] sm:$0xff]
      %v338 = vld [vmem:[%s1 + $0x318] sm:$0xff]
      %v339 = vld [vmem:[%s1 + $0x320] sm:$0xff]
      %v340 = vld [vmem:[%s1 + $0x328] sm:$0xff]
      %v341 = vld [vmem:[%s1 + $0x330] sm:$0xff]
      %v342 = vld [vmem:[%s1 + $0x338] sm:$0xff]
      %v343 = vld [vmem:[%s1 + $0x340] sm:$0xff]
      %v344 = vld [vmem:[%s1 + $0x348] sm:$0xff]
      %v345 = vld [vmem:[%s1 + $0x350] sm:$0xff]
      %v346 = vld [vmem:[%s1 + $0x358] sm:$0xff]
      %v347 = vld [vmem:[%s1 + $0x360] sm:$0xff]
      %v348 = vld [vmem:[%s1 + $0x368] sm:$0xff]
      %v349 = vld [vmem:[%s1 + $0x370] sm:$0xff]
      %v350 = vld [vmem:[%s1 + $0x378] sm:$0xff]
      %v351 = vld [vmem:[%s1 + $0x380] sm:$0xff]
      %v352 = vld [vmem:[%s1 + $0x388] sm:$0xff]
      %v353 = vld [vmem:[%s1 + $0x390] sm:$0xff]
      %v354 = vld [vmem:[%s1 + $0x398] sm:$0xff]
      %v355 = vld [vmem:[%s1 + $0x3a0] sm:$0xff]
      %v356 = vld [vmem:[%s1 + $0x3a8] sm:$0xff]
      %v357 = vld [vmem:[%s1 + $0x3b0] sm:$0xff]
      %v358 = vld [vmem:[%s1 + $0x3b8] sm:$0xff]
      %v359 = vld [vmem:[%s1 + $0x3c0] sm:$0xff]
      %v360 = vld [vmem:[%s1 + $0x3c8] sm:$0xff]
      %v361 = vld [vmem:[%s1 + $0x3d0] sm:$0xff]
      %v362 = vld [vmem:[%s1 + $0x3d8] sm:$0xff]
      %v363 = vld [vmem:[%s1 + $0x3e0] sm:$0xff]
      %v364 = vld [vmem:[%s1 + $0x3e8] sm:$0xff]
      %v365 = vld [vmem:[%s1 + $0x3f0] sm:$0xff]
      %v366 = vld [vmem:[%s1 + $0x3f8] sm:$0xff]
      %v367 = vld [vmem:[%s1 + $0x400] sm:$0xff]
      %v368 = vld [vmem:[%s1 + $0x408] sm:$0xff]
      %v369 = vld [vmem:[%s1 + $0x410] sm:$0xff]
      %v370 = vld [vmem:[%s1 + $0x418] sm:$0xff]
      %v371 = vld [vmem:[%s1 + $0x420] sm:$0xff]
      %v372 = vld [vmem:[%s1 + $0x428] sm:$0xff]
      %v373 = vld [vmem:[%s1 + $0x430] sm:$0xff]
      %v374 = vld [vmem:[%s1 + $0x438] sm:$0xff]
      %v375 = vld [vmem:[%s1 + $0x440] sm:$0xff]
      %v376 = vld [vmem:[%s1 + $0x448] sm:$0xff]
      %v377 = vld [vmem:[%s1 + $0x450] sm:$0xff]
      %v378 = vld [vmem:[%s1 + $0x458] sm:$0xff]
      %v379 = vld [vmem:[%s1 + $0x460] sm:$0xff]
      %v380 = vld [vmem:[%s1 + $0x468] sm:$0xff]
      %v381 = vld [vmem:[%s1 + $0x470] sm:$0xff]
      %v382 = vld [vmem:[%s1 + $0x478] sm:$0xff]
      %v383 = vld [vmem:[%s1 + $0x480] sm:$0xff]
      %v384 = vld [vmem:[%s1 + $0x488] sm:$0xff]
      %v385 = vld [vmem:[%s1 + $0x490] sm:$0xff]
      %v386 = vld [vmem:[%s1 + $0x498] sm:$0xff]
      %v387 = vld [vmem:[%s1 + $0x4a0] sm:$0xff]
      %v388 = vld [vmem:[%s1 + $0x4a8] sm:$0xff]
      %v389 = vld [vmem:[%s1 + $0x4b0] sm:$0xff]
      %v390 = vld [vmem:[%s1 + $0x4b8] sm:$0xff]
      %v391 = vld [vmem:[%s1 + $0x4c0] sm:$0xff]
      %v392 = vld [vmem:[%s1 + $0x4c8] sm:$0xff]
      %v393 = vld [vmem:[%s1 + $0x4d0] sm:$0xff]
      %v394 = vld [vmem:[%s1 + $0x4d8] sm:$0xff]
      %v395 = vld [vmem:[%s1 + $0x4e0] sm:$0xff]
      %v396 = vld [vmem:[%s1 + $0x4e8] sm:$0xff]
      %v397 = vld [vmem:[%s1 + $0x4f0] sm:$0xff]
      %v398 = vld [vmem:[%s1 + $0x4f8] sm:$0xff]
      %v399 = vld [vmem:[%s1 + $0x500] sm:$0xff]
      %v400 = vld [vmem:[%s1 + $0x508] sm:$0xff]
      %v401 = vld [vmem:[%s1 + $0x510] sm:$0xff]
      %v402 = vld [vmem:[%s1 + $0x518] sm:$0xff]
      %v403 = vld [vmem:[%s1 + $0x520] sm:$0xff]
      %v404 = vld [vmem:[%s1 + $0x528] sm:$0xff]
      %v405 = vld [vmem:[%s1 + $0x530] sm:$0xff]
      %v406 = vld [vmem:[%s1 + $0x538] sm:$0xff]
      %v407 = vld [vmem:[%s1 + $0x540] sm:$0xff]
      %v408 = vld [vmem:[%s1 + $0x548] sm:$0xff]
      %v409 = vld [vmem:[%s1 + $0x550] sm:$0xff]
      %v410 = vld [vmem:[%s1 + $0x558] sm:$0xff]
      %v411 = vld [vmem:[%s1 + $0x560] sm:$0xff]
      %v412 = vld [vmem:[%s1 + $0x568] sm:$0xff]
      %v413 = vld [vmem:[%s1 + $0x570] sm:$0xff]
      %v414 = vld [vmem:[%s1 + $0x578] sm:$0xff]
      %v415 = vld [vmem:[%s1 + $0x580] sm:$0xff]
      %v416 = vld [vmem:[%s1 + $0x588] sm:$0xff]
      %v417 = vld [vmem:[%s1 + $0x590] sm:$0xff]
      %v418 = vld [vmem:[%s1 + $0x598] sm:$0xff]
      %v419 = vld [vmem:[%s1 + $0x5a0] sm:$0xff]
      %v420 = vld [vmem:[%s1 + $0x5a8] sm:$0xff]
      %v421 = vld [vmem:[%s1 + $0x5b0] sm:$0xff]
      %v422 = vld [vmem:[%s1 + $0x5b8] sm:$0xff]
      %v423 = vld [vmem:[%s1 + $0x5c0] sm:$0xff]
      %v424 = vld [vmem:[%s1 + $0x5c8] sm:$0xff]
      %v425 = vld [vmem:[%s1 + $0x5d0] sm:$0xff]
      %v426 = vld [vmem:[%s1 + $0x5d8] sm:$0xff]
      %v427 = vld [vmem:[%s1 + $0x5e0] sm:$0xff]
      %v428 = vld [vmem:[%s1 + $0x5e8] sm:$0xff]
      %v429 = vld [vmem:[%s1 + $0x5f0] sm:$0xff]
      %v430 = vld [vmem:[%s1 + $0x5f8] sm:$0xff]
      %v431 = vld [vmem:[%s1 + $0x600] sm:$0xff]
      %v432 = vld [vmem:[%s1 + $0x608] sm:$0xff]
      %v433 = vld [vmem:[%s1 + $0x610] sm:$0xff]
      %v434 = vld [vmem:[%s1 + $0x618] sm:$0xff]
      %v435 = vld [vmem:[%s1 + $0x620] sm:$0xff]
      %v436 = vld [vmem:[%s1 + $0x628] sm:$0xff]
      %v437 = vld [vmem:[%s1 + $0x630] sm:$0xff]
      %v438 = vld [vmem:[%s1 + $0x638] sm:$0xff]
      %v439 = vld [vmem:[%s2] sm:$0x3]
      %v441 = vlaneseq
      %v442 = vshrl.u32 %v441, 7
      %v443 = vsub.s32 0, %v442
      %v444 = vrot.slane %v439, %v443
      %v445 = vlaneseq
      %v446 = vshrl.u32 %v445, 7
      %v447 = vsub.s32 1, %v446
      %v448 = vrot.slane %v439, %v447
      %vm451 = vcmask 261120
      %v453 = vsel %vm451, %v231, 0
      %v456 = vsel %vm451, %v238, 0
      %458 = vmatprep.subr.mxu0 %v240
      %459 = vmatpush1.msra.mxu0 %v239
      %460 = vmatprep.subr.mxu0 %v242
      %461 = vmatpush1.msra.mxu0 %v241
      %462 = vmatprep.subr.mxu0 %v244
      %463 = vmatpush1.msra.mxu0 %v243
      %464 = vmatprep.subr.mxu0 %v246
      %465 = vmatpush1.msra.mxu0 %v245
      %466 = vmatprep.subr.mxu0 %v248
      %467 = vmatpush1.msra.mxu0 %v247
      %468 = vmatprep.subr.mxu0 %v250
      %469 = vmatpush1.msra.mxu0 %v249
      %470 = vmatprep.subr.mxu0 %v252
      %471 = vmatpush1.msra.mxu0 %v251
      %472 = vmatprep.subr.mxu0 %v254
      %473 = vmatpush1.msra.mxu0 %v253
      %474 = vmatprep.subr.mxu0 %v256
      %475 = vmatpush1.msra.mxu0 %v255
      %476 = vmatprep.subr.mxu0 %v258
      %477 = vmatpush1.msra.mxu0 %v257
      %478 = vmatprep.subr.mxu0 %v260
      %479 = vmatpush1.msra.mxu0 %v259
      %480 = vmatprep.subr.mxu0 %v262
      %481 = vmatpush1.msra.mxu0 %v261
      %482 = vmatprep.subr.mxu0 %v264
      %483 = vmatpush1.msra.mxu0 %v263
      %484 = vmatprep.subr.mxu0 %v266
      %485 = vmatpush1.msra.mxu0 %v265
      %486 = vmatprep.subr.mxu0 %v268
      %487 = vmatpush1.msra.mxu0 %v267
      %488 = vmatprep.subr.mxu0 %v270
      %489 = vmatpush1.msra.mxu0 %v269
      %490 = vmatprep.subr.mxu0 %v272
      %491 = vmatpush1.msra.mxu0 %v271
      %492 = vmatprep.subr.mxu0 %v274
      %493 = vmatpush1.msra.mxu0 %v273
      %494 = vmatprep.subr.mxu0 %v276
      %495 = vmatpush1.msra.mxu0 %v275
      %496 = vmatprep.subr.mxu0 %v278
      %497 = vmatpush1.msra.mxu0 %v277
      %498 = vmatprep.subr.mxu0 %v280
      %499 = vmatpush1.msra.mxu0 %v279
      %500 = vmatprep.subr.mxu0 %v282
      %501 = vmatpush1.msra.mxu0 %v281
      %502 = vmatprep.subr.mxu0 %v284
      %503 = vmatpush1.msra.mxu0 %v283
      %504 = vmatprep.subr.mxu0 %v286
      %505 = vmatpush1.msra.mxu0 %v285
      %506 = vmatprep.subr.mxu0 %v288
      %507 = vmatpush1.msra.mxu0 %v287
      %508 = vmatprep.subr.mxu0 %v290
      %509 = vmatpush1.msra.mxu0 %v289
      %510 = vmatprep.subr.mxu0 %v292
      %511 = vmatpush1.msra.mxu0 %v291
      %512 = vmatprep.subr.mxu0 %v294
      %513 = vmatpush1.msra.mxu0 %v293
      %514 = vmatprep.subr.mxu0 %v296
      %515 = vmatpush1.msra.mxu0 %v295
      %516 = vmatprep.subr.mxu0 %v298
      %517 = vmatpush1.msra.mxu0 %v297
      %518 = vmatprep.subr.mxu0 %v300
      %519 = vmatpush1.msra.mxu0 %v299
      %520 = vmatprep.subr.mxu0 %v302
      %521 = vmatpush1.msra.mxu0 %v301
      %522 = vmatprep.mubr.f32.mxu0 %v226
      %523 = vmatmul.mubr.f32.gmra.mrb[0].mxu0 %v225
      %v524 = vpop.f32.mrb[0].mxu0
      %v525 = vadd.f32 %v444, %v524
      %v526 = vpop.f32.mrb[0].mxu0
      %v527 = vadd.f32 %v448, %v526
      %528 = vmatprep.mubr.f32.mxu0 %v233
      %529 = vmatmul.mubr.f32.gmra.mrb[0].mxu0 %v232
      %v530 = vpop.f32.mrb[0].mxu0
      %v531 = vadd.f32 %v444, %v530
      %v532 = vpop.f32.mrb[0].mxu0
      %v533 = vadd.f32 %v448, %v532
      %534 = vdwg.mxu0
      %535 = vmatprep.subr.mxu0 %v304
      %536 = vmatpush1.msra.mxu0 %v303
      %537 = vmatprep.subr.mxu0 %v306
      %538 = vmatpush1.msra.mxu0 %v305
      %539 = vmatprep.subr.mxu0 %v308
      %540 = vmatpush1.msra.mxu0 %v307
      %541 = vmatprep.subr.mxu0 %v310
      %542 = vmatpush1.msra.mxu0 %v309
      %543 = vmatprep.subr.mxu0 %v312
      %544 = vmatpush1.msra.mxu0 %v311
      %545 = vmatprep.subr.mxu0 %v314
      %546 = vmatpush1.msra.mxu0 %v313
      %547 = vmatprep.subr.mxu0 %v316
      %548 = vmatpush1.msra.mxu0 %v315
      %549 = vmatprep.subr.mxu0 %v318
      %550 = vmatpush1.msra.mxu0 %v317
      %551 = vmatprep.subr.mxu0 %v320
      %552 = vmatpush1.msra.mxu0 %v319
      %553 = vmatprep.subr.mxu0 %v322
      %554 = vmatpush1.msra.mxu0 %v321
      %555 = vmatprep.subr.mxu0 %v324
      %556 = vmatpush1.msra.mxu0 %v323
      %557 = vmatprep.subr.mxu0 %v326
      %558 = vmatpush1.msra.mxu0 %v325
      %559 = vmatprep.subr.mxu0 %v328
      %560 = vmatpush1.msra.mxu0 %v327
      %561 = vmatprep.subr.mxu0 %v330
      %562 = vmatpush1.msra.mxu0 %v329
      %563 = vmatprep.subr.mxu0 %v332
      %564 = vmatpush1.msra.mxu0 %v331
      %565 = vmatprep.subr.mxu0 %v334
      %566 = vmatpush1.msra.mxu0 %v333
      %567 = vmatprep.subr.mxu0 %v336
      %568 = vmatpush1.msra.mxu0 %v335
      %569 = vmatprep.subr.mxu0 %v338
      %570 = vmatpush1.msra.mxu0 %v337
      %571 = vmatprep.subr.mxu0 %v340
      %572 = vmatpush1.msra.mxu0 %v339
      %573 = vmatprep.subr.mxu0 %v342
      %574 = vmatpush1.msra.mxu0 %v341
      %575 = vmatprep.subr.mxu0 %v344
      %576 = vmatpush1.msra.mxu0 %v343
      %577 = vmatprep.subr.mxu0 %v346
      %578 = vmatpush1.msra.mxu0 %v345
      %579 = vmatprep.subr.mxu0 %v348
      %580 = vmatpush1.msra.mxu0 %v347
      %581 = vmatprep.subr.mxu0 %v350
      %582 = vmatpush1.msra.mxu0 %v349
      %583 = vmatprep.subr.mxu0 %v352
      %584 = vmatpush1.msra.mxu0 %v351
      %585 = vmatprep.subr.mxu0 %v354
      %586 = vmatpush1.msra.mxu0 %v353
      %587 = vmatprep.subr.mxu0 %v356
      %588 = vmatpush1.msra.mxu0 %v355
      %589 = vmatprep.subr.mxu0 %v358
      %590 = vmatpush1.msra.mxu0 %v357
      %591 = vmatprep.subr.mxu0 %v360
      %592 = vmatpush1.msra.mxu0 %v359
      %593 = vmatprep.subr.mxu0 %v362
      %594 = vmatpush1.msra.mxu0 %v361
      %595 = vmatprep.subr.mxu0 %v364
      %596 = vmatpush1.msra.mxu0 %v363
      %597 = vmatprep.subr.mxu0 %v366
      %598 = vmatpush1.msra.mxu0 %v365
      %599 = vmatprep.mubr.f32.mxu0 %v228
      %600 = vmatmul.mubr.f32.gmra.mrb[0].mxu0 %v227
      %v601 = vpop.f32.mrb[0].mxu0
      %v602 = vadd.f32 %v525, %v601
      %v603 = vpop.f32.mrb[0].mxu0
      %v604 = vadd.f32 %v527, %v603
      %605 = vmatprep.mubr.f32.mxu0 %v235
      %606 = vmatmul.mubr.f32.gmra.mrb[0].mxu0 %v234
      %v607 = vpop.f32.mrb[0].mxu0
      %v608 = vadd.f32 %v531, %v607
      %v609 = vpop.f32.mrb[0].mxu0
      %v610 = vadd.f32 %v533, %v609
      %611 = vdwg.mxu0
      %612 = vmatprep.subr.mxu0 %v368
      %613 = vmatpush1.msra.mxu0 %v367
      %614 = vmatprep.subr.mxu0 %v370
      %615 = vmatpush1.msra.mxu0 %v369
      %616 = vmatprep.subr.mxu0 %v372
      %617 = vmatpush1.msra.mxu0 %v371
      %618 = vmatprep.subr.mxu0 %v374
      %619 = vmatpush1.msra.mxu0 %v373
      %620 = vmatprep.subr.mxu0 %v376
      %621 = vmatpush1.msra.mxu0 %v375
      %622 = vmatprep.subr.mxu0 %v378
      %623 = vmatpush1.msra.mxu0 %v377
      %624 = vmatprep.subr.mxu0 %v380
      %625 = vmatpush1.msra.mxu0 %v379
      %626 = vmatprep.subr.mxu0 %v382
      %627 = vmatpush1.msra.mxu0 %v381
      %628 = vmatprep.subr.mxu0 %v384
      %629 = vmatpush1.msra.mxu0 %v383
      %630 = vmatprep.subr.mxu0 %v386
      %631 = vmatpush1.msra.mxu0 %v385
      %632 = vmatprep.subr.mxu0 %v388
      %633 = vmatpush1.msra.mxu0 %v387
      %634 = vmatprep.subr.mxu0 %v390
      %635 = vmatpush1.msra.mxu0 %v389
      %636 = vmatprep.subr.mxu0 %v392
      %637 = vmatpush1.msra.mxu0 %v391
      %638 = vmatprep.subr.mxu0 %v394
      %639 = vmatpush1.msra.mxu0 %v393
      %640 = vmatprep.subr.mxu0 %v396
      %641 = vmatpush1.msra.mxu0 %v395
      %642 = vmatprep.subr.mxu0 %v398
      %643 = vmatpush1.msra.mxu0 %v397
      %644 = vmatprep.subr.mxu0 %v400
      %645 = vmatpush1.msra.mxu0 %v399
      %646 = vmatprep.subr.mxu0 %v402
      %647 = vmatpush1.msra.mxu0 %v401
      %648 = vmatprep.subr.mxu0 %v404
      %649 = vmatpush1.msra.mxu0 %v403
      %650 = vmatprep.subr.mxu0 %v406
      %651 = vmatpush1.msra.mxu0 %v405
      %652 = vmatprep.subr.mxu0 %v408
      %653 = vmatpush1.msra.mxu0 %v407
      %654 = vmatprep.subr.mxu0 %v410
      %655 = vmatpush1.msra.mxu0 %v409
      %656 = vmatprep.subr.mxu0 %v412
      %657 = vmatpush1.msra.mxu0 %v411
      %658 = vmatprep.subr.mxu0 %v414
      %659 = vmatpush1.msra.mxu0 %v413
      %660 = vmatprep.subr.mxu0 %v416
      %661 = vmatpush1.msra.mxu0 %v415
      %662 = vmatprep.subr.mxu0 %v418
      %663 = vmatpush1.msra.mxu0 %v417
      %664 = vmatprep.subr.mxu0 %v420
      %665 = vmatpush1.msra.mxu0 %v419
      %666 = vmatprep.subr.mxu0 %v422
      %667 = vmatpush1.msra.mxu0 %v421
      %668 = vmatprep.subr.mxu0 %v424
      %669 = vmatpush1.msra.mxu0 %v423
      %670 = vmatprep.subr.mxu0 %v426
      %671 = vmatpush1.msra.mxu0 %v425
      %672 = vmatprep.subr.mxu0 %v428
      %673 = vmatpush1.msra.mxu0 %v427
      %674 = vmatprep.subr.mxu0 %v430
      %675 = vmatpush1.msra.mxu0 %v429
      %676 = vmatprep.mubr.f32.mxu0 %v230
      %677 = vmatmul.mubr.f32.gmra.mrb[0].mxu0 %v229
      %v678 = vpop.f32.mrb[0].mxu0
      %v679 = vadd.f32 %v602, %v678
      %v680 = vpop.f32.mrb[0].mxu0
      %v681 = vadd.f32 %v604, %v680
      %682 = vmatprep.mubr.f32.mxu0 %v237
      %683 = vmatmul.mubr.f32.gmra.mrb[0].mxu0 %v236
      %v684 = vpop.f32.mrb[0].mxu0
      %v685 = vadd.f32 %v608, %v684
      %v686 = vpop.f32.mrb[0].mxu0
      %v687 = vadd.f32 %v610, %v686
      %688 = vdwg.mxu0
      %689 = vmatprep.subr.mxu0 %v432
      %690 = vmatpush1.msra.mxu0 %v431
      %691 = vmatprep.subr.mxu0 %v434
      %692 = vmatpush1.msra.mxu0 %v433
      %693 = vmatprep.subr.mxu0 %v436
      %694 = vmatpush1.msra.mxu0 %v435
      %695 = vmatprep.subr.mxu0 %v438
      %696 = vmatpush1.msra.mxu0 %v437
      %697 = vmatprep.subr.mxu0 0.0
      %698 = vmatpush1.msra.mxu0 0.0
      %699 = vmatprep.subr.mxu0 0.0
      %700 = vmatpush1.msra.mxu0 0.0
      %701 = vmatprep.subr.mxu0 0.0
      %702 = vmatpush1.msra.mxu0 0.0
      %703 = vmatprep.subr.mxu0 0.0
      %704 = vmatpush1.msra.mxu0 0.0
      %705 = vmatprep.subr.mxu0 0.0
      %706 = vmatpush1.msra.mxu0 0.0
      %707 = vmatprep.subr.mxu0 0.0
      %708 = vmatpush1.msra.mxu0 0.0
      %709 = vmatprep.subr.mxu0 0.0
      %710 = vmatpush1.msra.mxu0 0.0
      %711 = vmatprep.subr.mxu0 0.0
      %712 = vmatpush1.msra.mxu0 0.0
      %713 = vmatprep.subr.mxu0 0.0
      %714 = vmatpush1.msra.mxu0 0.0
      %715 = vmatprep.subr.mxu0 0.0
      %716 = vmatpush1.msra.mxu0 0.0
      %717 = vmatprep.subr.mxu0 0.0
      %718 = vmatpush1.msra.mxu0 0.0
      %719 = vmatprep.subr.mxu0 0.0
      %720 = vmatpush1.msra.mxu0 0.0
      %721 = vmatprep.subr.mxu0 0.0
      %722 = vmatpush1.msra.mxu0 0.0
      %723 = vmatprep.subr.mxu0 0.0
      %724 = vmatpush1.msra.mxu0 0.0
      %725 = vmatprep.subr.mxu0 0.0
      %726 = vmatpush1.msra.mxu0 0.0
      %727 = vmatprep.subr.mxu0 0.0
      %728 = vmatpush1.msra.mxu0 0.0
      %729 = vmatprep.subr.mxu0 0.0
      %730 = vmatpush1.msra.mxu0 0.0
      %731 = vmatprep.subr.mxu0 0.0
      %732 = vmatpush1.msra.mxu0 0.0
      %733 = vmatprep.subr.mxu0 0.0
      %734 = vmatpush1.msra.mxu0 0.0
      %735 = vmatprep.subr.mxu0 0.0
      %736 = vmatpush1.msra.mxu0 0.0
      %737 = vmatprep.subr.mxu0 0.0
      %738 = vmatpush1.msra.mxu0 0.0
      %739 = vmatprep.subr.mxu0 0.0
      %740 = vmatpush1.msra.mxu0 0.0
      %741 = vmatprep.subr.mxu0 0.0
      %742 = vmatpush1.msra.mxu0 0.0
      %743 = vmatprep.subr.mxu0 0.0
      %744 = vmatpush1.msra.mxu0 0.0
      %745 = vmatprep.subr.mxu0 0.0
      %746 = vmatpush1.msra.mxu0 0.0
      %747 = vmatprep.subr.mxu0 0.0
      %748 = vmatpush1.msra.mxu0 0.0
      %749 = vmatprep.subr.mxu0 0.0
      %750 = vmatpush1.msra.mxu0 0.0
      %751 = vmatprep.subr.mxu0 0.0
      %752 = vmatpush1.msra.mxu0 0.0
      %753 = vmatprep.mubr.f32.mxu0 0.0
      %754 = vmatmul.mubr.f32.gmra.mrb[0].mxu0 %v453
      %v755 = vpop.f32.mrb[0].mxu0
      %v756 = vadd.f32 %v679, %v755
      %v757 = vpop.f32.mrb[0].mxu0
      %v758 = vadd.f32 %v681, %v757
      %759 = vmatprep.mubr.f32.mxu0 0.0
      %760 = vmatmul.mubr.f32.gmra.mrb[0].mxu0 %v456
      %v761 = vpop.f32.mrb[0].mxu0
      %v762 = vadd.f32 %v685, %v761
      %v763 = vpop.f32.mrb[0].mxu0
      %v764 = vadd.f32 %v687, %v763
      %765 = vdwg.mxu0
      %v766 = vmax.f32 %v756, 0.0
      %v767 = vmax.f32 %v758, 0.0
      %v768 = vmax.f32 %v762, 0.0
      %v769 = vmax.f32 %v764, 0.0
      %v770 = vadd.f32 %v766, %v767
      %v771 = vadd.f32 %v770, %v768
      %v772 = vadd.f32 %v771, %v769
      %773 = vadd.xlane.f32.xlu0 %v772
      %v774 = vpop.xlane.xlu0 %773
      %v775 = vrot.slane %v774, 4
      %v776 = vadd.f32 %v774, %v775
      %v777 = vrot.slane %v776, 2
      %v778 = vadd.f32 %v776, %v777
      %v779 = vrot.slane %v778, 1
      %v780 = vadd.f32 %v778, %v779
      %s781 = vtos %v780
      %v782 = vrcp.pop 4096.0
      %s783 = vtos %v782
      %s784 = smul.f32 %s781, %s783
      %v785 = vstv %s784
      %v786 = vsub.f32 %v766, %v785
      %v787 = vsub.f32 %v767, %v785
      %v788 = vsub.f32 %v768, %v785
      %v789 = vsub.f32 %v769, %v785
      %v790 = vmul.f32 %v786, %v786
      %v791 = vmul.f32 %v787, %v787
      %v792 = vmul.f32 %v788, %v788
      %v793 = vmul.f32 %v789, %v789
      %v794 = vadd.f32 %v790, %v791
      %v795 = vadd.f32 %v794, %v792
      %v796 = vadd.f32 %v795, %v793
      %797 = vadd.xlane.f32.xlu0 %v796
      %v798 = vpop.xlane.xlu0 %797
      %v799 = vrot.slane %v798, 4
      %v800 = vadd.f32 %v798, %v799
      %v801 = vrot.slane %v800, 2
      %v802 = vadd.f32 %v800, %v801
      %v803 = vrot.slane %v802, 1
      %v804 = vadd.f32 %v802, %v803
      %s805 = vtos %v804
      %v806 = vrcp.pop 4096.0
      %s807 = vtos %v806
      %s808 = smul.f32 %s805, %s807
      %s809 = sadd.f32 %s808, 1e-05
      %v810 = vstv %s809
      %v811 = vrsqrt.pop %v810
      %s812 = vtos %v811
      %v813 = vstv %s812
      %v814 = vmul.f32 %v786, %v813
      %v815 = vmul.f32 %v787, %v813
      %v816 = vmul.f32 %v788, %v813
      %v817 = vmul.f32 %v789, %v813
      %v818 = vld [vmem:[%s3] sm:$0x3]
      %v820 = vlaneseq
      %v821 = vshrl.u32 %v820, 7
      %v822 = vsub.s32 0, %v821
      %v823 = vrot.slane %v818, %v822
      %v824 = vlaneseq
      %v825 = vshrl.u32 %v824, 7
      %v826 = vsub.s32 1, %v825
      %v827 = vrot.slane %v818, %v826
      %v830 = vmul.f32 %v814, %v823
      %v831 = vmul.f32 %v815, %v827
      %v832 = vmul.f32 %v816, %v823
      %v833 = vmul.f32 %v817, %v827
      %v834 = vld [vmem:[%s4] sm:$0x3]
      %v836 = vlaneseq
      %v837 = vshrl.u32 %v836, 7
      %v838 = vsub.s32 0, %v837
      %v839 = vrot.slane %v834, %v838
      %v840 = vlaneseq
      %v841 = vshrl.u32 %v840, 7
      %v842 = vsub.s32 1, %v841
      %v843 = vrot.slane %v834, %v842
      %v846 = vadd.f32 %v830, %v839
      %v847 = vadd.f32 %v831, %v843
      %v848 = vadd.f32 %v832, %v839
      %v849 = vadd.f32 %v833, %v843
      %850 = vst [vmem:[%s224] sm:$0xff] %v846
      %851 = vst [vmem:[%s224 + $0x8] sm:$0xff] %v847
      %852 = vst [vmem:[%s224 + $0x10] sm:$0xff] %v848
      %853 = vst [vmem:[%s224 + $0x18] sm:$0xff] %v849
      %p854 = scmp.lt.s32.totalorder %s16, 1
      %s855 = scalar_select %p854, %s16, 1
      %s856 = smul.addr %s855, 4
      %s857 = smul.addr %s856, 8
      %s858 = scalar_lea.vmem %s5, %s857
      // Predicated region
      $region41: #{texture_finder_forward.13} parent=39 // pred_check
        %p859 = pneg %p144
      $region42: #{texture_finder_forward.13} parent=39 // pred_check_branch
        %861 = sbr.rel (%p859) target = $region44
      $region43: #{texture_finder_forward.13} parent=39 // pred_region
        _
      $region44: #{texture_finder_forward.13} parent=39 // pred_fallthru
        _
    $region40: #{texture_finder_forward.13} parent=5 // pred_fallthru
      _
    %p862 = scmp.le.s32.totalorder 2, %s11
    // Predicated region
    $region45: #{texture_finder_forward.13} parent=5 // pred_check
      %p863 = pneg %p862
    $region46: #{texture_finder_forward.13} parent=5 // pred_check_branch
      %865 = sbr.rel (%p863) target = $region48
    $region47: #{texture_finder_forward.13} parent=5 // pred_region
      %s866 = ssub.s32 %s11, 2
      // Predicated region
      $region49: #{texture_finder_forward.13} parent=47 // pred_check
        %p867 = pneg %p150
      $region50: #{texture_finder_forward.13} parent=47 // pred_check_branch
        %869 = sbr.rel (%p867) target = $region52
      $region51: #{texture_finder_forward.13} parent=47 // pred_region
        %p870 = scmp.lt.s32.totalorder %s17, 1
        %s871 = scalar_select %p870, %s17, 1
        %s872 = smul.addr %s871, 4
        %s873 = smul.addr %s872, 8
        %s874 = scalar_lea.vmem %s5, %s873
      $region52: #{texture_finder_forward.13} parent=47 // pred_fallthru
        _
    $region48: #{texture_finder_forward.13} parent=5 // pred_fallthru
      _
  $region6: #{texture_finder_forward.13} parent=0 // loop_footer
    %s15 = sadd.s32 1, %s11
  $region7: #{texture_finder_forward.13} parent=0 // loop_footer_branch
    %10 = sbr.rel target = $region3
  $region8: #{texture_finder_forward.13} parent=0 // loop_exit
    _

// kernel: texture_finder_forward.14
$region0: #{texture_finder_forward.14}
  #allocation0 [shape = 'u32[]', space=smem, size = 0x4, offset = 0x4, fixed_abs, tag = 'smem constant byte address 0x4 - core index']
  #allocation1 [shape = 'u32[144,128]{1,0:T(1,128)}', space=vmem, size = 0x12000, scoped, tag = 'internal scratch']
  %s0 = inlined_call_operand.vmem [shape: f32[2,64,1600], index: 0, kind: input, shape index: {}]
  %s1 = inlined_call_operand.vmem [shape: f32[1600,128], index: 1, kind: input, shape index: {}]
  %s2 = inlined_call_operand.vmem [shape: f32[1,128], index: 2, kind: input, shape index: {}, may-alias: {2,4}]
  %s3 = inlined_call_operand.vmem [shape: f32[1,128], index: 3, kind: input, shape index: {}]
  %s4 = inlined_call_operand.vmem [shape: f32[1,128], index: 4, kind: input, shape index: {}, may-alias: {2,4}]
  %s5 = inlined_call_operand.vmem [shape: f32[2,64,128], index: 5, kind: output, shape index: {}]
  %s6 = sld [smem:[#allocation0]]
  $region53: #{texture_finder_forward.14} parent=0
    _
  %s8 = ssub.s32 1, %s6
  %s9 = scalar_select 0, %s8, %s6
  loop: start=0, step=1, limit=4
  $region2: #{texture_finder_forward.14} parent=0 // loop_pre_header
    _
  $region3: #{texture_finder_forward.14} parent=0 // loop_header
    %s11 = sphi 0, %s15
    %p12 = scmp.ge.s32.totalorder %s11, 4
    %s21 = sphi 0, %s23
    %s24 = sphi 0, %s21
    %s25 = sphi 0, %s24
    %s41 = sphi 0, %s25
    %s45 = sphi 0, %s45
    %s47 = sphi 0, %s45
    %s48 = sphi 0, %s47
    %s62 = sphi 0, %s48
    %s66 = sphi 0, %s66
    %s68 = sphi 0, %s66
    %s69 = sphi 0, %s68
    %s83 = sphi 0, %s69
    %s87 = sphi 0, %s87
    %s89 = sphi 0, %s87
    %s90 = sphi 0, %s89
    %s104 = sphi 0, %s90
    %s108 = sphi 0, %s108
    %s110 = sphi 0, %s108
    %s111 = sphi 0, %s110
    %s125 = sphi 0, %s111
    %s131 = sphi 0, %s133
    %s134 = sphi 0, %s131
    %s135 = sphi 0, %s134
    %s151 = sphi 0, %s135
  $region4: #{texture_finder_forward.14} parent=0 // loop_header_branch
    %14 = sbr.rel (%p12) target = $region8
  $region5: #{texture_finder_forward.14} parent=0 // loop_body
    %s16 = ssub.s32 %s11, 1
    %s17 = ssub.s32 %s11, 2
    %s18 = sadd.s32 %s11, 1
    %s19 = ssub.s32 %s11, %s18
    %p20 = scmp.eq.s32.totalorder %s19, 0
    %s22 = sadd.s32 %s21, 1
    %s23 = scalar_select %p20, %s21, %s22
    %p26 = pneg %p20
    %p27 = scmp.eq.s32.totalorder %s11, 1
    %p28 = por %p26, %p27
    %p29 = scmp.ne.s32.totalorder %s21, %s24
    %p30 = scmp.eq.s32.totalorder %s11, 0
    %p31 = por %p29, %p30
    %p32 = scmp.ne.s32.totalorder %s21, %s24
    %p33 = scmp.eq.s32.totalorder %s16, 1
    %p34 = por %p32, %p33
    %p35 = scmp.ne.s32.totalorder %s24, %s25
    %p36 = scmp.eq.s32.totalorder %s16, 0
    %p37 = por %p35, %p36
    %p38 = scmp.ne.s32.totalorder %s24, %s25
    %p39 = scmp.eq.s32.totalorder %s17, 1
    %p40 = por %p38, %p39
    %p42 = scmp.ne.s32.totalorder %s25, %s41
    %p43 = scmp.eq.s32.totalorder %s17, 0
    %p44 = por %p42, %p43
    %s46 = sadd.s32 %s45, 1
    %p49 = scmp.eq.s32.totalorder %s11, 1
    %p50 = scmp.ne.s32.totalorder %s45, %s47
    %p51 = scmp.eq.s32.totalorder %s11, 0
    %p52 = por %p50, %p51
    %p53 = scmp.ne.s32.totalorder %s45, %s47
    %p54 = scmp.eq.s32.totalorder %s16, 1
    %p55 = por %p53, %p54
    %p56 = scmp.ne.s32.totalorder %s47, %s48
    %p57 = scmp.eq.s32.totalorder %s16, 0
    %p58 = por %p56, %p57
    %p59 = scmp.ne.s32.totalorder %s47, %s48
    %p60 = scmp.eq.s32.totalorder %s17, 1
    %p61 = por %p59, %p60
    %p63 = scmp.ne.s32.totalorder %s48, %s62
    %p64 = scmp.eq.s32.totalorder %s17, 0
    %p65 = por %p63, %p64
    %s67 = sadd.s32 %s66, 1
    %p70 = scmp.eq.s32.totalorder %s11, 1
    %p71 = scmp.ne.s32.totalorder %s66, %s68
    %p72 = scmp.eq.s32.totalorder %s11, 0
    %p73 = por %p71, %p72
    %p74 = scmp.ne.s32.totalorder %s66, %s68
    %p75 = scmp.eq.s32.totalorder %s16, 1
    %p76 = por %p74, %p75
    %p77 = scmp.ne.s32.totalorder %s68, %s69
    %p78 = scmp.eq.s32.totalorder %s16, 0
    %p79 = por %p77, %p78
    %p80 = scmp.ne.s32.totalorder %s68, %s69
    %p81 = scmp.eq.s32.totalorder %s17, 1
    %p82 = por %p80, %p81
    %p84 = scmp.ne.s32.totalorder %s69, %s83
    %p85 = scmp.eq.s32.totalorder %s17, 0
    %p86 = por %p84, %p85
    %s88 = sadd.s32 %s87, 1
    %p91 = scmp.eq.s32.totalorder %s11, 1
    %p92 = scmp.ne.s32.totalorder %s87, %s89
    %p93 = scmp.eq.s32.totalorder %s11, 0
    %p94 = por %p92, %p93
    %p95 = scmp.ne.s32.totalorder %s87, %s89
    %p96 = scmp.eq.s32.totalorder %s16, 1
    %p97 = por %p95, %p96
    %p98 = scmp.ne.s32.totalorder %s89, %s90
    %p99 = scmp.eq.s32.totalorder %s16, 0
    %p100 = por %p98, %p99
    %p101 = scmp.ne.s32.totalorder %s89, %s90
    %p102 = scmp.eq.s32.totalorder %s17, 1
    %p103 = por %p101, %p102
    %p105 = scmp.ne.s32.totalorder %s90, %s104
    %p106 = scmp.eq.s32.totalorder %s17, 0
    %p107 = por %p105, %p106
    %s109 = sadd.s32 %s108, 1
    %p112 = scmp.eq.s32.totalorder %s11, 1
    %p113 = scmp.ne.s32.totalorder %s108, %s110
    %p114 = scmp.eq.s32.totalorder %s11, 0
    %p115 = por %p113, %p114
    %p116 = scmp.ne.s32.totalorder %s108, %s110
    %p117 = scmp.eq.s32.totalorder %s16, 1
    %p118 = por %p116, %p117
    %p119 = scmp.ne.s32.totalorder %s110, %s111
    %p120 = scmp.eq.s32.totalorder %s16, 0
    %p121 = por %p119, %p120
    %p122 = scmp.ne.s32.totalorder %s110, %s111
    %p123 = scmp.eq.s32.totalorder %s17, 1
    %p124 = por %p122, %p123
    %p126 = scmp.ne.s32.totalorder %s111, %s125
    %p127 = scmp.eq.s32.totalorder %s17, 0
    %p128 = por %p126, %p127
    %s129 = ssub.s32 %s11, %s18
    %p130 = scmp.eq.s32.totalorder %s129, 0
    %s132 = sadd.s32 %s131, 1
    %s133 = scalar_select %p130, %s131, %s132
    %p136 = pneg %p130
    %p137 = scmp.eq.s32.totalorder %s11, 1
    %p138 = por %p136, %p137
    %p139 = scmp.ne.s32.totalorder %s131, %s134
    %p140 = scmp.eq.s32.totalorder %s11, 0
    %p141 = por %p139, %p140
    %p142 = scmp.ne.s32.totalorder %s131, %s134
    %p143 = scmp.eq.s32.totalorder %s16, 1
    %p144 = por %p142, %p143
    %p145 = scmp.ne.s32.totalorder %s134, %s135
    %p146 = scmp.eq.s32.totalorder %s16, 0
    %p147 = por %p145, %p146
    %p148 = scmp.ne.s32.totalorder %s134, %s135
    %p149 = scmp.eq.s32.totalorder %s17, 1
    %p150 = por %p148, %p149
    %p152 = scmp.ne.s32.totalorder %s135, %s151
    %p153 = scmp.eq.s32.totalorder %s17, 0
    %p154 = por %p152, %p153
    %p155 = scmp.le.s32.totalorder 1, %s11
    %p156 = scmp.lt.s32.totalorder %s11, 3
    %p157 = pnand %p155, %p156
    %p158 = pneg %p157
    // Predicated region
    $region9: #{texture_finder_forward.14} parent=5 // pred_check
      _
    $region10: #{texture_finder_forward.14} parent=5 // pred_check_branch
      %160 = sbr.rel (%p157) target = $region12
    $region11: #{texture_finder_forward.14} parent=5 // pred_region
      %s161 = ssub.s32 %s11, 1
      // Predicated region
      $region13: #{texture_finder_forward.14} parent=11 // pred_check
        %p162 = pneg %p58
      $region14: #{texture_finder_forward.14} parent=11 // pred_check_branch
        %164 = sbr.rel (%p162) target = $region16
      $region15: #{texture_finder_forward.14} parent=11 // pred_region
        _
      $region16: #{texture_finder_forward.14} parent=11 // pred_fallthru
        _
      // Predicated region
      $region17: #{texture_finder_forward.14} parent=11 // pred_check
        %p165 = pneg %p79
      $region18: #{texture_finder_forward.14} parent=11 // pred_check_branch
        %167 = sbr.rel (%p165) target = $region20
      $region19: #{texture_finder_forward.14} parent=11 // pred_region
        _
      $region20: #{texture_finder_forward.14} parent=11 // pred_fallthru
        _
      // Predicated region
      $region21: #{texture_finder_forward.14} parent=11 // pred_check
        %p168 = pneg %p100
      $region22: #{texture_finder_forward.14} parent=11 // pred_check_branch
        %170 = sbr.rel (%p168) target = $region24
      $region23: #{texture_finder_forward.14} parent=11 // pred_region
        _
      $region24: #{texture_finder_forward.14} parent=11 // pred_fallthru
        _
      // Predicated region
      $region25: #{texture_finder_forward.14} parent=11 // pred_check
        %p171 = pneg %p121
      $region26: #{texture_finder_forward.14} parent=11 // pred_check_branch
        %173 = sbr.rel (%p171) target = $region28
      $region27: #{texture_finder_forward.14} parent=11 // pred_region
        _
      $region28: #{texture_finder_forward.14} parent=11 // pred_fallthru
        _
    $region12: #{texture_finder_forward.14} parent=5 // pred_fallthru
      _
    %p174 = scmp.lt.s32.totalorder %s11, 2
    // Predicated region
    $region29: #{texture_finder_forward.14} parent=5 // pred_check
      %p175 = pneg %p174
    $region30: #{texture_finder_forward.14} parent=5 // pred_check_branch
      %177 = sbr.rel (%p175) target = $region32
    $region31: #{texture_finder_forward.14} parent=5 // pred_region
      // Predicated region
      $region33: #{texture_finder_forward.14} parent=31 // pred_check
        %p178 = pneg %p31
      $region34: #{texture_finder_forward.14} parent=31 // pred_check_branch
        %180 = sbr.rel (%p178) target = $region36
      $region35: #{texture_finder_forward.14} parent=31 // pred_region
        %p181 = scmp.lt.s32.totalorder %s11, 1
        %s182 = scalar_select %p181, %s11, 1
        %s183 = smul.addr %s182, 104
        %s184 = smul.addr %s183, 8
        %s185 = scalar_lea.vmem %s0, %s184
      $region36: #{texture_finder_forward.14} parent=31 // pred_fallthru
        _
    $region32: #{texture_finder_forward.14} parent=5 // pred_fallthru
      _
    %p186 = scmp.le.s32.totalorder 1, %s11
    %p187 = scmp.lt.s32.totalorder %s11, 3
    %p188 = pnand %p186, %p187
    %p189 = pneg %p188
    // Predicated region
    $region37: #{texture_finder_forward.14} parent=5 // pred_check
      _
    $region38: #{texture_finder_forward.14} parent=5 // pred_check_branch
      %191 = sbr.rel (%p188) target = $region40
    $region39: #{texture_finder_forward.14} parent=5 // pred_region
      %s192 = ssub.s32 %s11, 1
      %p193 = scmp.lt.s32.totalorder %s16, 1
      %s194 = scalar_select %p193, %s16, 1
      %s195 = smul.addr %s194, 104
      %s196 = smul.addr %s195, 8
      %s197 = scalar_lea.vmem %s0, %s196
      %p198 = pneg %p37
      %p199 = pneg %p34
      %p200 = pneg %p58
      %p201 = pneg %p55
      %p202 = pneg %p79
      %p203 = pneg %p76
      %p204 = pneg %p100
      %p205 = pneg %p97
      %p206 = pneg %p121
      %p207 = pneg %p118
      %p208 = pneg %p147
      %p209 = pneg %p144
      %p210 = scmp.lt.s32.totalorder %s16, 1
      %s211 = scalar_select %p210, %s16, 1
      %s212 = smul.addr %s211, 8
      %s213 = smul.addr %s212, 8
      %s214 = scalar_lea.vmem %s5, %s213
      %p215 = scmp.lt.s32.totalorder %s16, 1
      %s216 = scalar_select %p215, %s16, 1
      %s217 = smul.addr %s216, 104
      %s218 = smul.addr %s217, 8
      %s219 = scalar_lea.vmem %s0, %s218
      %p220 = scmp.lt.s32.totalorder %s16, 1
      %s221 = scalar_select %p220, %s16, 1
      %s222 = smul.addr %s221, 8
      %s223 = smul.addr %s222, 8
      %s224 = scalar_lea.vmem %s5, %s223
      %v225 = vld [vmem:[%s219] sm:$0xff]
      %v226 = vld [vmem:[%s219 + $0x8] sm:$0xff]
      %v227 = vld [vmem:[%s219 + $0x10] sm:$0xff]
      %v228 = vld [vmem:[%s219 + $0x18] sm:$0xff]
      %v229 = vld [vmem:[%s219 + $0x20] sm:$0xff]
      %v230 = vld [vmem:[%s219 + $0x28] sm:$0xff]
      %v231 = vld [vmem:[%s219 + $0x30] sm:$0xff]
      %v232 = vld [vmem:[%s219 + $0x38] sm:$0xff]
      %v233 = vld [vmem:[%s219 + $0x40] sm:$0xff]
      %v234 = vld [vmem:[%s219 + $0x48] sm:$0xff]
      %v235 = vld [vmem:[%s219 + $0x50] sm:$0xff]
      %v236 = vld [vmem:[%s219 + $0x58] sm:$0xff]
      %v237 = vld [vmem:[%s219 + $0x60] sm:$0xff]
      %v238 = vld [vmem:[%s219 + $0x68] sm:$0xff]
      %v239 = vld [vmem:[%s219 + $0x70] sm:$0xff]
      %v240 = vld [vmem:[%s219 + $0x78] sm:$0xff]
      %v241 = vld [vmem:[%s219 + $0x80] sm:$0xff]
      %v242 = vld [vmem:[%s219 + $0x88] sm:$0xff]
      %v243 = vld [vmem:[%s219 + $0x90] sm:$0xff]
      %v244 = vld [vmem:[%s219 + $0x98] sm:$0xff]
      %v245 = vld [vmem:[%s219 + $0xa0] sm:$0xff]
      %v246 = vld [vmem:[%s219 + $0xa8] sm:$0xff]
      %v247 = vld [vmem:[%s219 + $0xb0] sm:$0xff]
      %v248 = vld [vmem:[%s219 + $0xb8] sm:$0xff]
      %v249 = vld [vmem:[%s219 + $0xc0] sm:$0xff]
      %v250 = vld [vmem:[%s219 + $0xc8] sm:$0xff]
      %v251 = vld [vmem:[%s219 + $0xd0] sm:$0xff]
      %v252 = vld [vmem:[%s219 + $0xd8] sm:$0xff]
      %v253 = vld [vmem:[%s219 + $0xe0] sm:$0xff]
      %v254 = vld [vmem:[%s219 + $0xe8] sm:$0xff]
      %v255 = vld [vmem:[%s219 + $0xf0] sm:$0xff]
      %v256 = vld [vmem:[%s219 + $0xf8] sm:$0xff]
      %v257 = vld [vmem:[%s219 + $0x100] sm:$0xff]
      %v258 = vld [vmem:[%s219 + $0x108] sm:$0xff]
      %v259 = vld [vmem:[%s219 + $0x110] sm:$0xff]
      %v260 = vld [vmem:[%s219 + $0x118] sm:$0xff]
      %v261 = vld [vmem:[%s219 + $0x120] sm:$0xff]
      %v262 = vld [vmem:[%s219 + $0x128] sm:$0xff]
      %v263 = vld [vmem:[%s219 + $0x130] sm:$0xff]
      %v264 = vld [vmem:[%s219 + $0x138] sm:$0xff]
      %v265 = vld [vmem:[%s219 + $0x140] sm:$0xff]
      %v266 = vld [vmem:[%s219 + $0x148] sm:$0xff]
      %v267 = vld [vmem:[%s219 + $0x150] sm:$0xff]
      %v268 = vld [vmem:[%s219 + $0x158] sm:$0xff]
      %v269 = vld [vmem:[%s219 + $0x160] sm:$0xff]
      %v270 = vld [vmem:[%s219 + $0x168] sm:$0xff]
      %v271 = vld [vmem:[%s219 + $0x170] sm:$0xff]
      %v272 = vld [vmem:[%s219 + $0x178] sm:$0xff]
      %v273 = vld [vmem:[%s219 + $0x180] sm:$0xff]
      %v274 = vld [vmem:[%s219 + $0x188] sm:$0xff]
      %v275 = vld [vmem:[%s219 + $0x190] sm:$0xff]
      %v276 = vld [vmem:[%s219 + $0x198] sm:$0xff]
      %v277 = vld [vmem:[%s219 + $0x1a0] sm:$0xff]
      %v278 = vld [vmem:[%s219 + $0x1a8] sm:$0xff]
      %v279 = vld [vmem:[%s219 + $0x1b0] sm:$0xff]
      %v280 = vld [vmem:[%s219 + $0x1b8] sm:$0xff]
      %v281 = vld [vmem:[%s219 + $0x1c0] sm:$0xff]
      %v282 = vld [vmem:[%s219 + $0x1c8] sm:$0xff]
      %v283 = vld [vmem:[%s219 + $0x1d0] sm:$0xff]
      %v284 = vld [vmem:[%s219 + $0x1d8] sm:$0xff]
      %v285 = vld [vmem:[%s219 + $0x1e0] sm:$0xff]
      %v286 = vld [vmem:[%s219 + $0x1e8] sm:$0xff]
      %v287 = vld [vmem:[%s219 + $0x1f0] sm:$0xff]
      %v288 = vld [vmem:[%s219 + $0x1f8] sm:$0xff]
      %v289 = vld [vmem:[%s219 + $0x200] sm:$0xff]
      %v290 = vld [vmem:[%s219 + $0x208] sm:$0xff]
      %v291 = vld [vmem:[%s219 + $0x210] sm:$0xff]
      %v292 = vld [vmem:[%s219 + $0x218] sm:$0xff]
      %v293 = vld [vmem:[%s219 + $0x220] sm:$0xff]
      %v294 = vld [vmem:[%s219 + $0x228] sm:$0xff]
      %v295 = vld [vmem:[%s219 + $0x230] sm:$0xff]
      %v296 = vld [vmem:[%s219 + $0x238] sm:$0xff]
      %v297 = vld [vmem:[%s219 + $0x240] sm:$0xff]
      %v298 = vld [vmem:[%s219 + $0x248] sm:$0xff]
      %v299 = vld [vmem:[%s219 + $0x250] sm:$0xff]
      %v300 = vld [vmem:[%s219 + $0x258] sm:$0xff]
      %v301 = vld [vmem:[%s219 + $0x260] sm:$0xff]
      %v302 = vld [vmem:[%s219 + $0x268] sm:$0xff]
      %v303 = vld [vmem:[%s219 + $0x270] sm:$0xff]
      %v304 = vld [vmem:[%s219 + $0x278] sm:$0xff]
      %v305 = vld [vmem:[%s219 + $0x280] sm:$0xff]
      %v306 = vld [vmem:[%s219 + $0x288] sm:$0xff]
      %v307 = vld [vmem:[%s219 + $0x290] sm:$0xff]
      %v308 = vld [vmem:[%s219 + $0x298] sm:$0xff]
      %v309 = vld [vmem:[%s219 + $0x2a0] sm:$0xff]
      %v310 = vld [vmem:[%s219 + $0x2a8] sm:$0xff]
      %v311 = vld [vmem:[%s219 + $0x2b0] sm:$0xff]
      %v312 = vld [vmem:[%s219 + $0x2b8] sm:$0xff]
      %v313 = vld [vmem:[%s219 + $0x2c0] sm:$0xff]
      %v314 = vld [vmem:[%s219 + $0x2c8] sm:$0xff]
      %v315 = vld [vmem:[%s219 + $0x2d0] sm:$0xff]
      %v316 = vld [vmem:[%s219 + $0x2d8] sm:$0xff]
      %v317 = vld [vmem:[%s219 + $0x2e0] sm:$0xff]
      %v318 = vld [vmem:[%s219 + $0x2e8] sm:$0xff]
      %v319 = vld [vmem:[%s219 + $0x2f0] sm:$0xff]
      %v320 = vld [vmem:[%s219 + $0x2f8] sm:$0xff]
      %v321 = vld [vmem:[%s219 + $0x300] sm:$0xff]
      %v322 = vld [vmem:[%s219 + $0x308] sm:$0xff]
      %v323 = vld [vmem:[%s219 + $0x310] sm:$0xff]
      %v324 = vld [vmem:[%s219 + $0x318] sm:$0xff]
      %v325 = vld [vmem:[%s219 + $0x320] sm:$0xff]
      %v326 = vld [vmem:[%s219 + $0x328] sm:$0xff]
      %v327 = vld [vmem:[%s219 + $0x330] sm:$0xff]
      %v328 = vld [vmem:[%s219 + $0x338] sm:$0xff]
      %v329 = vld [vmem:[%s1] sm:$0xff]
      %v330 = vld [vmem:[%s1 + $0x8] sm:$0xff]
      %v331 = vld [vmem:[%s1 + $0x10] sm:$0xff]
      %v332 = vld [vmem:[%s1 + $0x18] sm:$0xff]
      %v333 = vld [vmem:[%s1 + $0x20] sm:$0xff]
      %v334 = vld [vmem:[%s1 + $0x28] sm:$0xff]
      %v335 = vld [vmem:[%s1 + $0x30] sm:$0xff]
      %v336 = vld [vmem:[%s1 + $0x38] sm:$0xff]
      %v337 = vld [vmem:[%s1 + $0x40] sm:$0xff]
      %v338 = vld [vmem:[%s1 + $0x48] sm:$0xff]
      %v339 = vld [vmem:[%s1 + $0x50] sm:$0xff]
      %v340 = vld [vmem:[%s1 + $0x58] sm:$0xff]
      %v341 = vld [vmem:[%s1 + $0x60] sm:$0xff]
      %v342 = vld [vmem:[%s1 + $0x68] sm:$0xff]
      %v343 = vld [vmem:[%s1 + $0x70] sm:$0xff]
      %v344 = vld [vmem:[%s1 + $0x78] sm:$0xff]
      %v345 = vld [vmem:[%s1 + $0x80] sm:$0xff]
      %v346 = vld [vmem:[%s1 + $0x88] sm:$0xff]
      %v347 = vld [vmem:[%s1 + $0x90] sm:$0xff]
      %v348 = vld [vmem:[%s1 + $0x98] sm:$0xff]
      %v349 = vld [vmem:[%s1 + $0xa0] sm:$0xff]
      %v350 = vld [vmem:[%s1 + $0xa8] sm:$0xff]
      %v351 = vld [vmem:[%s1 + $0xb0] sm:$0xff]
      %v352 = vld [vmem:[%s1 + $0xb8] sm:$0xff]
      %v353 = vld [vmem:[%s1 + $0xc0] sm:$0xff]
      %v354 = vld [vmem:[%s1 + $0xc8] sm:$0xff]
      %v355 = vld [vmem:[%s1 + $0xd0] sm:$0xff]
      %v356 = vld [vmem:[%s1 + $0xd8] sm:$0xff]
      %v357 = vld [vmem:[%s1 + $0xe0] sm:$0xff]
      %v358 = vld [vmem:[%s1 + $0xe8] sm:$0xff]
      %v359 = vld [vmem:[%s1 + $0xf0] sm:$0xff]
      %v360 = vld [vmem:[%s1 + $0xf8] sm:$0xff]
      %v361 = vld [vmem:[%s1 + $0x100] sm:$0xff]
      %v362 = vld [vmem:[%s1 + $0x108] sm:$0xff]
      %v363 = vld [vmem:[%s1 + $0x110] sm:$0xff]
      %v364 = vld [vmem:[%s1 + $0x118] sm:$0xff]
      %v365 = vld [vmem:[%s1 + $0x120] sm:$0xff]
      %v366 = vld [vmem:[%s1 + $0x128] sm:$0xff]
      %v367 = vld [vmem:[%s1 + $0x130] sm:$0xff]
      %v368 = vld [vmem:[%s1 + $0x138] sm:$0xff]
      %v369 = vld [vmem:[%s1 + $0x140] sm:$0xff]
      %v370 = vld [vmem:[%s1 + $0x148] sm:$0xff]
      %v371 = vld [vmem:[%s1 + $0x150] sm:$0xff]
      %v372 = vld [vmem:[%s1 + $0x158] sm:$0xff]
      %v373 = vld [vmem:[%s1 + $0x160] sm:$0xff]
      %v374 = vld [vmem:[%s1 + $0x168] sm:$0xff]
      %v375 = vld [vmem:[%s1 + $0x170] sm:$0xff]
      %v376 = vld [vmem:[%s1 + $0x178] sm:$0xff]
      %v377 = vld [vmem:[%s1 + $0x180] sm:$0xff]
      %v378 = vld [vmem:[%s1 + $0x188] sm:$0xff]
      %v379 = vld [vmem:[%s1 + $0x190] sm:$0xff]
      %v380 = vld [vmem:[%s1 + $0x198] sm:$0xff]
      %v381 = vld [vmem:[%s1 + $0x1a0] sm:$0xff]
      %v382 = vld [vmem:[%s1 + $0x1a8] sm:$0xff]
      %v383 = vld [vmem:[%s1 + $0x1b0] sm:$0xff]
      %v384 = vld [vmem:[%s1 + $0x1b8] sm:$0xff]
      %v385 = vld [vmem:[%s1 + $0x1c0] sm:$0xff]
      %v386 = vld [vmem:[%s1 + $0x1c8] sm:$0xff]
      %v387 = vld [vmem:[%s1 + $0x1d0] sm:$0xff]
      %v388 = vld [vmem:[%s1 + $0x1d8] sm:$0xff]
      %v389 = vld [vmem:[%s1 + $0x1e0] sm:$0xff]
      %v390 = vld [vmem:[%s1 + $0x1e8] sm:$0xff]
      %v391 = vld [vmem:[%s1 + $0x1f0] sm:$0xff]
      %v392 = vld [vmem:[%s1 + $0x1f8] sm:$0xff]
      %v393 = vld [vmem:[%s1 + $0x200] sm:$0xff]
      %v394 = vld [vmem:[%s1 + $0x208] sm:$0xff]
      %v395 = vld [vmem:[%s1 + $0x210] sm:$0xff]
      %v396 = vld [vmem:[%s1 + $0x218] sm:$0xff]
      %v397 = vld [vmem:[%s1 + $0x220] sm:$0xff]
      %v398 = vld [vmem:[%s1 + $0x228] sm:$0xff]
      %v399 = vld [vmem:[%s1 + $0x230] sm:$0xff]
      %v400 = vld [vmem:[%s1 + $0x238] sm:$0xff]
      %v401 = vld [vmem:[%s1 + $0x240] sm:$0xff]
      %v402 = vld [vmem:[%s1 + $0x248] sm:$0xff]
      %v403 = vld [vmem:[%s1 + $0x250] sm:$0xff]
      %v404 = vld [vmem:[%s1 + $0x258] sm:$0xff]
      %v405 = vld [vmem:[%s1 + $0x260] sm:$0xff]
      %v406 = vld [vmem:[%s1 + $0x268] sm:$0xff]
      %v407 = vld [vmem:[%s1 + $0x270] sm:$0xff]
      %v408 = vld [vmem:[%s1 + $0x278] sm:$0xff]
      %v409 = vld [vmem:[%s1 + $0x280] sm:$0xff]
      %v410 = vld [vmem:[%s1 + $0x288] sm:$0xff]
      %v411 = vld [vmem:[%s1 + $0x290] sm:$0xff]
      %v412 = vld [vmem:[%s1 + $0x298] sm:$0xff]
      %v413 = vld [vmem:[%s1 + $0x2a0] sm:$0xff]
      %v414 = vld [vmem:[%s1 + $0x2a8] sm:$0xff]
      %v415 = vld [vmem:[%s1 + $0x2b0] sm:$0xff]
      %v416 = vld [vmem:[%s1 + $0x2b8] sm:$0xff]
      %v417 = vld [vmem:[%s1 + $0x2c0] sm:$0xff]
      %v418 = vld [vmem:[%s1 + $0x2c8] sm:$0xff]
      %v419 = vld [vmem:[%s1 + $0x2d0] sm:$0xff]
      %v420 = vld [vmem:[%s1 + $0x2d8] sm:$0xff]
      %v421 = vld [vmem:[%s1 + $0x2e0] sm:$0xff]
      %v422 = vld [vmem:[%s1 + $0x2e8] sm:$0xff]
      %v423 = vld [vmem:[%s1 + $0x2f0] sm:$0xff]
      %v424 = vld [vmem:[%s1 + $0x2f8] sm:$0xff]
      %v425 = vld [vmem:[%s1 + $0x300] sm:$0xff]
      %v426 = vld [vmem:[%s1 + $0x308] sm:$0xff]
      %v427 = vld [vmem:[%s1 + $0x310] sm:$0xff]
      %v428 = vld [vmem:[%s1 + $0x318] sm:$0xff]
      %v429 = vld [vmem:[%s1 + $0x320] sm:$0xff]
      %v430 = vld [vmem:[%s1 + $0x328] sm:$0xff]
      %v431 = vld [vmem:[%s1 + $0x330] sm:$0xff]
      %v432 = vld [vmem:[%s1 + $0x338] sm:$0xff]
      %v433 = vld [vmem:[%s1 + $0x340] sm:$0xff]
      %v434 = vld [vmem:[%s1 + $0x348] sm:$0xff]
      %v435 = vld [vmem:[%s1 + $0x350] sm:$0xff]
      %v436 = vld [vmem:[%s1 + $0x358] sm:$0xff]
      %v437 = vld [vmem:[%s1 + $0x360] sm:$0xff]
      %v438 = vld [vmem:[%s1 + $0x368] sm:$0xff]
      %v439 = vld [vmem:[%s1 + $0x370] sm:$0xff]
      %v440 = vld [vmem:[%s1 + $0x378] sm:$0xff]
      %v441 = vld [vmem:[%s1 + $0x380] sm:$0xff]
      %v442 = vld [vmem:[%s1 + $0x388] sm:$0xff]
      %v443 = vld [vmem:[%s1 + $0x390] sm:$0xff]
      %v444 = vld [vmem:[%s1 + $0x398] sm:$0xff]
      %v445 = vld [vmem:[%s1 + $0x3a0] sm:$0xff]
      %v446 = vld [vmem:[%s1 + $0x3a8] sm:$0xff]
      %v447 = vld [vmem:[%s1 + $0x3b0] sm:$0xff]
      %v448 = vld [vmem:[%s1 + $0x3b8] sm:$0xff]
      %v449 = vld [vmem:[%s1 + $0x3c0] sm:$0xff]
      %v450 = vld [vmem:[%s1 + $0x3c8] sm:$0xff]
      %v451 = vld [vmem:[%s1 + $0x3d0] sm:$0xff]
      %v452 = vld [vmem:[%s1 + $0x3d8] sm:$0xff]
      %v453 = vld [vmem:[%s1 + $0x3e0] sm:$0xff]
      %v454 = vld [vmem:[%s1 + $0x3e8] sm:$0xff]
      %v455 = vld [vmem:[%s1 + $0x3f0] sm:$0xff]
      %v456 = vld [vmem:[%s1 + $0x3f8] sm:$0xff]
      %v457 = vld [vmem:[%s1 + $0x400] sm:$0xff]
      %v458 = vld [vmem:[%s1 + $0x408] sm:$0xff]
      %v459 = vld [vmem:[%s1 + $0x410] sm:$0xff]
      %v460 = vld [vmem:[%s1 + $0x418] sm:$0xff]
      %v461 = vld [vmem:[%s1 + $0x420] sm:$0xff]
      %v462 = vld [vmem:[%s1 + $0x428] sm:$0xff]
      %v463 = vld [vmem:[%s1 + $0x430] sm:$0xff]
      %v464 = vld [vmem:[%s1 + $0x438] sm:$0xff]
      %v465 = vld [vmem:[%s1 + $0x440] sm:$0xff]
      %v466 = vld [vmem:[%s1 + $0x448] sm:$0xff]
      %v467 = vld [vmem:[%s1 + $0x450] sm:$0xff]
      %v468 = vld [vmem:[%s1 + $0x458] sm:$0xff]
      %v469 = vld [vmem:[%s1 + $0x460] sm:$0xff]
      %v470 = vld [vmem:[%s1 + $0x468] sm:$0xff]
      %v471 = vld [vmem:[%s1 + $0x470] sm:$0xff]
      %v472 = vld [vmem:[%s1 + $0x478] sm:$0xff]
      %v473 = vld [vmem:[%s1 + $0x480] sm:$0xff]
      %v474 = vld [vmem:[%s1 + $0x488] sm:$0xff]
      %v475 = vld [vmem:[%s1 + $0x490] sm:$0xff]
      %v476 = vld [vmem:[%s1 + $0x498] sm:$0xff]
      %v477 = vld [vmem:[%s1 + $0x4a0] sm:$0xff]
      %v478 = vld [vmem:[%s1 + $0x4a8] sm:$0xff]
      %v479 = vld [vmem:[%s1 + $0x4b0] sm:$0xff]
      %v480 = vld [vmem:[%s1 + $0x4b8] sm:$0xff]
      %v481 = vld [vmem:[%s1 + $0x4c0] sm:$0xff]
      %v482 = vld [vmem:[%s1 + $0x4c8] sm:$0xff]
      %v483 = vld [vmem:[%s1 + $0x4d0] sm:$0xff]
      %v484 = vld [vmem:[%s1 + $0x4d8] sm:$0xff]
      %v485 = vld [vmem:[%s1 + $0x4e0] sm:$0xff]
      %v486 = vld [vmem:[%s1 + $0x4e8] sm:$0xff]
      %v487 = vld [vmem:[%s1 + $0x4f0] sm:$0xff]
      %v488 = vld [vmem:[%s1 + $0x4f8] sm:$0xff]
      %v489 = vld [vmem:[%s1 + $0x500] sm:$0xff]
      %v490 = vld [vmem:[%s1 + $0x508] sm:$0xff]
      %v491 = vld [vmem:[%s1 + $0x510] sm:$0xff]
      %v492 = vld [vmem:[%s1 + $0x518] sm:$0xff]
      %v493 = vld [vmem:[%s1 + $0x520] sm:$0xff]
      %v494 = vld [vmem:[%s1 + $0x528] sm:$0xff]
      %v495 = vld [vmem:[%s1 + $0x530] sm:$0xff]
      %v496 = vld [vmem:[%s1 + $0x538] sm:$0xff]
      %v497 = vld [vmem:[%s1 + $0x540] sm:$0xff]
      %v498 = vld [vmem:[%s1 + $0x548] sm:$0xff]
      %v499 = vld [vmem:[%s1 + $0x550] sm:$0xff]
      %v500 = vld [vmem:[%s1 + $0x558] sm:$0xff]
      %v501 = vld [vmem:[%s1 + $0x560] sm:$0xff]
      %v502 = vld [vmem:[%s1 + $0x568] sm:$0xff]
      %v503 = vld [vmem:[%s1 + $0x570] sm:$0xff]
      %v504 = vld [vmem:[%s1 + $0x578] sm:$0xff]
      %v505 = vld [vmem:[%s1 + $0x580] sm:$0xff]
      %v506 = vld [vmem:[%s1 + $0x588] sm:$0xff]
      %v507 = vld [vmem:[%s1 + $0x590] sm:$0xff]
      %v508 = vld [vmem:[%s1 + $0x598] sm:$0xff]
      %v509 = vld [vmem:[%s1 + $0x5a0] sm:$0xff]
      %v510 = vld [vmem:[%s1 + $0x5a8] sm:$0xff]
      %v511 = vld [vmem:[%s1 + $0x5b0] sm:$0xff]
      %v512 = vld [vmem:[%s1 + $0x5b8] sm:$0xff]
      %v513 = vld [vmem:[%s1 + $0x5c0] sm:$0xff]
      %v514 = vld [vmem:[%s1 + $0x5c8] sm:$0xff]
      %v515 = vld [vmem:[%s1 + $0x5d0] sm:$0xff]
      %v516 = vld [vmem:[%s1 + $0x5d8] sm:$0xff]
      %v517 = vld [vmem:[%s1 + $0x5e0] sm:$0xff]
      %v518 = vld [vmem:[%s1 + $0x5e8] sm:$0xff]
      %v519 = vld [vmem:[%s1 + $0x5f0] sm:$0xff]
      %v520 = vld [vmem:[%s1 + $0x5f8] sm:$0xff]
      %v521 = vld [vmem:[%s1 + $0x600] sm:$0xff]
      %v522 = vld [vmem:[%s1 + $0x608] sm:$0xff]
      %v523 = vld [vmem:[%s1 + $0x610] sm:$0xff]
      %v524 = vld [vmem:[%s1 + $0x618] sm:$0xff]
      %v525 = vld [vmem:[%s1 + $0x620] sm:$0xff]
      %v526 = vld [vmem:[%s1 + $0x628] sm:$0xff]
      %v527 = vld [vmem:[%s1 + $0x630] sm:$0xff]
      %v528 = vld [vmem:[%s1 + $0x638] sm:$0xff]
      %v529 = vld [vmem:[%s2] sm:$0x1]
      %v531 = vlaneseq
      %v532 = vshrl.u32 %v531, 7
      %v533 = vsub.s32 0, %v532
      %v534 = vrot.slane %v529, %v533
      %vm536 = vcmask 523264
      %v538 = vsel %vm536, %v237, 0
      %v541 = vsel %vm536, %v250, 0
      %v544 = vsel %vm536, %v263, 0
      %v547 = vsel %vm536, %v276, 0
      %v550 = vsel %vm536, %v289, 0
      %v553 = vsel %vm536, %v302, 0
      %v556 = vsel %vm536, %v315, 0
      %v559 = vsel %vm536, %v328, 0
      %561 = vmatprep.subr.mxu0 0.0
      %562 = vmatpush1.msra.mxu0 %v329
      %563 = vmatprep.subr.mxu0 0.0
      %564 = vmatpush1.msra.mxu0 %v330
      %565 = vmatprep.subr.mxu0 0.0
      %566 = vmatpush1.msra.mxu0 %v331
      %567 = vmatprep.subr.mxu0 0.0
      %568 = vmatpush1.msra.mxu0 %v332
      %569 = vmatprep.subr.mxu0 0.0
      %570 = vmatpush1.msra.mxu0 %v333
      %571 = vmatprep.subr.mxu0 0.0
      %572 = vmatpush1.msra.mxu0 %v334
      %573 = vmatprep.subr.mxu0 0.0
      %574 = vmatpush1.msra.mxu0 %v335
      %575 = vmatprep.subr.mxu0 0.0
      %576 = vmatpush1.msra.mxu0 %v336
      %577 = vmatprep.subr.mxu0 0.0
      %578 = vmatpush1.msra.mxu0 %v337
      %579 = vmatprep.subr.mxu0 0.0
      %580 = vmatpush1.msra.mxu0 %v338
      %581 = vmatprep.subr.mxu0 0.0
      %582 = vmatpush1.msra.mxu0 %v339
      %583 = vmatprep.subr.mxu0 0.0
      %584 = vmatpush1.msra.mxu0 %v340
      %585 = vmatprep.subr.mxu0 0.0
      %586 = vmatpush1.msra.mxu0 %v341
      %587 = vmatprep.subr.mxu0 0.0
      %588 = vmatpush1.msra.mxu0 %v342
      %589 = vmatprep.subr.mxu0 0.0
      %590 = vmatpush1.msra.mxu0 %v343
      %591 = vmatprep.subr.mxu0 0.0
      %592 = vmatpush1.msra.mxu0 %v344
      %593 = vmatprep.subr.mxu0 0.0
      %594 = vmatpush1.msra.mxu0 %v345
      %595 = vmatprep.subr.mxu0 0.0
      %596 = vmatpush1.msra.mxu0 %v346
      %597 = vmatprep.subr.mxu0 0.0
      %598 = vmatpush1.msra.mxu0 %v347
      %599 = vmatprep.subr.mxu0 0.0
      %600 = vmatpush1.msra.mxu0 %v348
      %601 = vmatprep.subr.mxu0 0.0
      %602 = vmatpush1.msra.mxu0 %v349
      %603 = vmatprep.subr.mxu0 0.0
      %604 = vmatpush1.msra.mxu0 %v350
      %605 = vmatprep.subr.mxu0 0.0
      %606 = vmatpush1.msra.mxu0 %v351
      %607 = vmatprep.subr.mxu0 0.0
      %608 = vmatpush1.msra.mxu0 %v352
      %609 = vmatprep.subr.mxu0 0.0
      %610 = vmatpush1.msra.mxu0 %v353
      %611 = vmatprep.subr.mxu0 0.0
      %612 = vmatpush1.msra.mxu0 %v354
      %613 = vmatprep.subr.mxu0 0.0
      %614 = vmatpush1.msra.mxu0 %v355
      %615 = vmatprep.subr.mxu0 0.0
      %616 = vmatpush1.msra.mxu0 %v356
      %617 = vmatprep.subr.mxu0 0.0
      %618 = vmatpush1.msra.mxu0 %v357
      %619 = vmatprep.subr.mxu0 0.0
      %620 = vmatpush1.msra.mxu0 %v358
      %621 = vmatprep.subr.mxu0 0.0
      %622 = vmatpush1.msra.mxu0 %v359
      %623 = vmatprep.subr.mxu0 0.0
      %624 = vmatpush1.msra.mxu0 %v360
      %625 = vmatprep.mubr.f32.mxu0 %v226
      %626 = vmatmul.mubr.f32.gmra.mrb[0].mxu0 %v225
      %v627 = vpop.f32.mrb[0].mxu0
      %v628 = vadd.f32 %v534, %v627
      %v629 = vpop.f32.mrb[0].mxu0
      %630 = vmatprep.mubr.f32.mxu0 %v239
      %631 = vmatmul.mubr.f32.gmra.mrb[0].mxu0 %v238
      %v632 = vpop.f32.mrb[0].mxu0
      %v633 = vadd.f32 %v534, %v632
      %v634 = vpop.f32.mrb[0].mxu0
      %635 = vmatprep.mubr.f32.mxu0 %v252
      %636 = vmatmul.mubr.f32.gmra.mrb[0].mxu0 %v251
      %v637 = vpop.f32.mrb[0].mxu0
      %v638 = vadd.f32 %v534, %v637
      %v639 = vpop.f32.mrb[0].mxu0
      %640 = vmatprep.mubr.f32.mxu0 %v265
      %641 = vmatmul.mubr.f32.gmra.mrb[0].mxu0 %v264
      %v642 = vpop.f32.mrb[0].mxu0
      %v643 = vadd.f32 %v534, %v642
      %v644 = vpop.f32.mrb[0].mxu0
      %645 = vmatprep.mubr.f32.mxu0 %v278
      %646 = vmatmul.mubr.f32.gmra.mrb[0].mxu0 %v277
      %v647 = vpop.f32.mrb[0].mxu0
      %v648 = vadd.f32 %v534, %v647
      %v649 = vpop.f32.mrb[0].mxu0
      %650 = vmatprep.mubr.f32.mxu0 %v291
      %651 = vmatmul.mubr.f32.gmra.mrb[0].mxu0 %v290
      %v652 = vpop.f32.mrb[0].mxu0
      %v653 = vadd.f32 %v534, %v652
      %v654 = vpop.f32.mrb[0].mxu0
      %655 = vmatprep.mubr.f32.mxu0 %v304
      %656 = vmatmul.mubr.f32.gmra.mrb[0].mxu0 %v303
      %v657 = vpop.f32.mrb[0].mxu0
      %v658 = vadd.f32 %v534, %v657
      %v659 = vpop.f32.mrb[0].mxu0
      %660 = vmatprep.mubr.f32.mxu0 %v317
      %661 = vmatmul.mubr.f32.gmra.mrb[0].mxu0 %v316
      %v662 = vpop.f32.mrb[0].mxu0
      %v663 = vadd.f32 %v534, %v662
      %v664 = vpop.f32.mrb[0].mxu0
      %665 = vdwg.mxu0
      %666 = vmatprep.subr.mxu0 0.0
      %667 = vmatpush1.msra.mxu0 %v361
      %668 = vmatprep.subr.mxu0 0.0
      %669 = vmatpush1.msra.mxu0 %v362
      %670 = vmatprep.subr.mxu0 0.0
      %671 = vmatpush1.msra.mxu0 %v363
      %672 = vmatprep.subr.mxu0 0.0
      %673 = vmatpush1.msra.mxu0 %v364
      %674 = vmatprep.subr.mxu0 0.0
      %675 = vmatpush1.msra.mxu0 %v365
      %676 = vmatprep.subr.mxu0 0.0
      %677 = vmatpush1.msra.mxu0 %v366
      %678 = vmatprep.subr.mxu0 0.0
      %679 = vmatpush1.msra.mxu0 %v367
      %680 = vmatprep.subr.mxu0 0.0
      %681 = vmatpush1.msra.mxu0 %v368
      %682 = vmatprep.subr.mxu0 0.0
      %683 = vmatpush1.msra.mxu0 %v369
      %684 = vmatprep.subr.mxu0 0.0
      %685 = vmatpush1.msra.mxu0 %v370
      %686 = vmatprep.subr.mxu0 0.0
      %687 = vmatpush1.msra.mxu0 %v371
      %688 = vmatprep.subr.mxu0 0.0
      %689 = vmatpush1.msra.mxu0 %v372
      %690 = vmatprep.subr.mxu0 0.0
      %691 = vmatpush1.msra.mxu0 %v373
      %692 = vmatprep.subr.mxu0 0.0
      %693 = vmatpush1.msra.mxu0 %v374
      %694 = vmatprep.subr.mxu0 0.0
      %695 = vmatpush1.msra.mxu0 %v375
      %696 = vmatprep.subr.mxu0 0.0
      %697 = vmatpush1.msra.mxu0 %v376
      %698 = vmatprep.subr.mxu0 0.0
      %699 = vmatpush1.msra.mxu0 %v377
      %700 = vmatprep.subr.mxu0 0.0
      %701 = vmatpush1.msra.mxu0 %v378
      %702 = vmatprep.subr.mxu0 0.0
      %703 = vmatpush1.msra.mxu0 %v379
      %704 = vmatprep.subr.mxu0 0.0
      %705 = vmatpush1.msra.mxu0 %v380
      %706 = vmatprep.subr.mxu0 0.0
      %707 = vmatpush1.msra.mxu0 %v381
      %708 = vmatprep.subr.mxu0 0.0
      %709 = vmatpush1.msra.mxu0 %v382
      %710 = vmatprep.subr.mxu0 0.0
      %711 = vmatpush1.msra.mxu0 %v383
      %712 = vmatprep.subr.mxu0 0.0
      %713 = vmatpush1.msra.mxu0 %v384
      %714 = vmatprep.subr.mxu0 0.0
      %715 = vmatpush1.msra.mxu0 %v385
      %716 = vmatprep.subr.mxu0 0.0
      %717 = vmatpush1.msra.mxu0 %v386
      %718 = vmatprep.subr.mxu0 0.0
      %719 = vmatpush1.msra.mxu0 %v387
      %720 = vmatprep.subr.mxu0 0.0
      %721 = vmatpush1.msra.mxu0 %v388
      %722 = vmatprep.subr.mxu0 0.0
      %723 = vmatpush1.msra.mxu0 %v389
      %724 = vmatprep.subr.mxu0 0.0
      %725 = vmatpush1.msra.mxu0 %v390
      %726 = vmatprep.subr.mxu0 0.0
      %727 = vmatpush1.msra.mxu0 %v391
      %728 = vmatprep.subr.mxu0 0.0
      %729 = vmatpush1.msra.mxu0 %v392
      %730 = vmatprep.mubr.f32.mxu0 %v228
      %731 = vmatmul.mubr.f32.gmra.mrb[0].mxu0 %v227
      %v732 = vpop.f32.mrb[0].mxu0
      %v733 = vadd.f32 %v628, %v732
      %v734 = vpop.f32.mrb[0].mxu0
      %735 = vmatprep.mubr.f32.mxu0 %v241
      %736 = vmatmul.mubr.f32.gmra.mrb[0].mxu0 %v240
      %v737 = vpop.f32.mrb[0].mxu0
      %v738 = vadd.f32 %v633, %v737
      %v739 = vpop.f32.mrb[0].mxu0
      %740 = vmatprep.mubr.f32.mxu0 %v254
      %741 = vmatmul.mubr.f32.gmra.mrb[0].mxu0 %v253
      %v742 = vpop.f32.mrb[0].mxu0
      %v743 = vadd.f32 %v638, %v742
      %v744 = vpop.f32.mrb[0].mxu0
      %745 = vmatprep.mubr.f32.mxu0 %v267
      %746 = vmatmul.mubr.f32.gmra.mrb[0].mxu0 %v266
      %v747 = vpop.f32.mrb[0].mxu0
      %v748 = vadd.f32 %v643, %v747
      %v749 = vpop.f32.mrb[0].mxu0
      %750 = vmatprep.mubr.f32.mxu0 %v280
      %751 = vmatmul.mubr.f32.gmra.mrb[0].mxu0 %v279
      %v752 = vpop.f32.mrb[0].mxu0
      %v753 = vadd.f32 %v648, %v752
      %v754 = vpop.f32.mrb[0].mxu0
      %755 = vmatprep.mubr.f32.mxu0 %v293
      %756 = vmatmul.mubr.f32.gmra.mrb[0].mxu0 %v292
      %v757 = vpop.f32.mrb[0].mxu0
      %v758 = vadd.f32 %v653, %v757
      %v759 = vpop.f32.mrb[0].mxu0
      %760 = vmatprep.mubr.f32.mxu0 %v306
      %761 = vmatmul.mubr.f32.gmra.mrb[0].mxu0 %v305
      %v762 = vpop.f32.mrb[0].mxu0
      %v763 = vadd.f32 %v658, %v762
      %v764 = vpop.f32.mrb[0].mxu0
      %765 = vmatprep.mubr.f32.mxu0 %v319
      %766 = vmatmul.mubr.f32.gmra.mrb[0].mxu0 %v318
      %v767 = vpop.f32.mrb[0].mxu0
      %v768 = vadd.f32 %v663, %v767
      %v769 = vpop.f32.mrb[0].mxu0
      %770 = vdwg.mxu0
      %771 = vmatprep.subr.mxu0 0.0
      %772 = vmatpush1.msra.mxu0 %v393
      %773 = vmatprep.subr.mxu0 0.0
      %774 = vmatpush1.msra.mxu0 %v394
      %775 = vmatprep.subr.mxu0 0.0
      %776 = vmatpush1.msra.mxu0 %v395
      %777 = vmatprep.subr.mxu0 0.0
      %778 = vmatpush1.msra.mxu0 %v396
      %779 = vmatprep.subr.mxu0 0.0
      %780 = vmatpush1.msra.mxu0 %v397
      %781 = vmatprep.subr.mxu0 0.0
      %782 = vmatpush1.msra.mxu0 %v398
      %783 = vmatprep.subr.mxu0 0.0
      %784 = vmatpush1.msra.mxu0 %v399
      %785 = vmatprep.subr.mxu0 0.0
      %786 = vmatpush1.msra.mxu0 %v400
      %787 = vmatprep.subr.mxu0 0.0
      %788 = vmatpush1.msra.mxu0 %v401
      %789 = vmatprep.subr.mxu0 0.0
      %790 = vmatpush1.msra.mxu0 %v402
      %791 = vmatprep.subr.mxu0 0.0
      %792 = vmatpush1.msra.mxu0 %v403
      %793 = vmatprep.subr.mxu0 0.0
      %794 = vmatpush1.msra.mxu0 %v404
      %795 = vmatprep.subr.mxu0 0.0
      %796 = vmatpush1.msra.mxu0 %v405
      %797 = vmatprep.subr.mxu0 0.0
      %798 = vmatpush1.msra.mxu0 %v406
      %799 = vmatprep.subr.mxu0 0.0
      %800 = vmatpush1.msra.mxu0 %v407
      %801 = vmatprep.subr.mxu0 0.0
      %802 = vmatpush1.msra.mxu0 %v408
      %803 = vmatprep.subr.mxu0 0.0
      %804 = vmatpush1.msra.mxu0 %v409
      %805 = vmatprep.subr.mxu0 0.0
      %806 = vmatpush1.msra.mxu0 %v410
      %807 = vmatprep.subr.mxu0 0.0
      %808 = vmatpush1.msra.mxu0 %v411
      %809 = vmatprep.subr.mxu0 0.0
      %810 = vmatpush1.msra.mxu0 %v412
      %811 = vmatprep.subr.mxu0 0.0
      %812 = vmatpush1.msra.mxu0 %v413
      %813 = vmatprep.subr.mxu0 0.0
      %814 = vmatpush1.msra.mxu0 %v414
      %815 = vmatprep.subr.mxu0 0.0
      %816 = vmatpush1.msra.mxu0 %v415
      %817 = vmatprep.subr.mxu0 0.0
      %818 = vmatpush1.msra.mxu0 %v416
      %819 = vmatprep.subr.mxu0 0.0
      %820 = vmatpush1.msra.mxu0 %v417
      %821 = vmatprep.subr.mxu0 0.0
      %822 = vmatpush1.msra.mxu0 %v418
      %823 = vmatprep.subr.mxu0 0.0
      %824 = vmatpush1.msra.mxu0 %v419
      %825 = vmatprep.subr.mxu0 0.0
      %826 = vmatpush1.msra.mxu0 %v420
      %827 = vmatprep.subr.mxu0 0.0
      %828 = vmatpush1.msra.mxu0 %v421
      %829 = vmatprep.subr.mxu0 0.0
      %830 = vmatpush1.msra.mxu0 %v422
      %831 = vmatprep.subr.mxu0 0.0
      %832 = vmatpush1.msra.mxu0 %v423
      %833 = vmatprep.subr.mxu0 0.0
      %834 = vmatpush1.msra.mxu0 %v424
      %835 = vmatprep.mubr.f32.mxu0 %v230
      %836 = vmatmul.mubr.f32.gmra.mrb[0].mxu0 %v229
      %v837 = vpop.f32.mrb[0].mxu0
      %v838 = vadd.f32 %v733, %v837
      %v839 = vpop.f32.mrb[0].mxu0
      %840 = vmatprep.mubr.f32.mxu0 %v243
      %841 = vmatmul.mubr.f32.gmra.mrb[0].mxu0 %v242
      %v842 = vpop.f32.mrb[0].mxu0
      %v843 = vadd.f32 %v738, %v842
      %v844 = vpop.f32.mrb[0].mxu0
      %845 = vmatprep.mubr.f32.mxu0 %v256
      %846 = vmatmul.mubr.f32.gmra.mrb[0].mxu0 %v255
      %v847 = vpop.f32.mrb[0].mxu0
      %v848 = vadd.f32 %v743, %v847
      %v849 = vpop.f32.mrb[0].mxu0
      %850 = vmatprep.mubr.f32.mxu0 %v269
      %851 = vmatmul.mubr.f32.gmra.mrb[0].mxu0 %v268
      %v852 = vpop.f32.mrb[0].mxu0
      %v853 = vadd.f32 %v748, %v852
      %v854 = vpop.f32.mrb[0].mxu0
      %855 = vmatprep.mubr.f32.mxu0 %v282
      %856 = vmatmul.mubr.f32.gmra.mrb[0].mxu0 %v281
      %v857 = vpop.f32.mrb[0].mxu0
      %v858 = vadd.f32 %v753, %v857
      %v859 = vpop.f32.mrb[0].mxu0
      %860 = vmatprep.mubr.f32.mxu0 %v295
      %861 = vmatmul.mubr.f32.gmra.mrb[0].mxu0 %v294
      %v862 = vpop.f32.mrb[0].mxu0
      %v863 = vadd.f32 %v758, %v862
      %v864 = vpop.f32.mrb[0].mxu0
      %865 = vmatprep.mubr.f32.mxu0 %v308
      %866 = vmatmul.mubr.f32.gmra.mrb[0].mxu0 %v307
      %v867 = vpop.f32.mrb[0].mxu0
      %v868 = vadd.f32 %v763, %v867
      %v869 = vpop.f32.mrb[0].mxu0
      %870 = vmatprep.mubr.f32.mxu0 %v321
      %871 = vmatmul.mubr.f32.gmra.mrb[0].mxu0 %v320
      %v872 = vpop.f32.mrb[0].mxu0
      %v873 = vadd.f32 %v768, %v872
      %v874 = vpop.f32.mrb[0].mxu0
      %875 = vdwg.mxu0
      %876 = vmatprep.subr.mxu0 0.0
      %877 = vmatpush1.msra.mxu0 %v425
      %878 = vmatprep.subr.mxu0 0.0
      %879 = vmatpush1.msra.mxu0 %v426
      %880 = vmatprep.subr.mxu0 0.0
      %881 = vmatpush1.msra.mxu0 %v427
      %882 = vmatprep.subr.mxu0 0.0
      %883 = vmatpush1.msra.mxu0 %v428
      %884 = vmatprep.subr.mxu0 0.0
      %885 = vmatpush1.msra.mxu0 %v429
      %886 = vmatprep.subr.mxu0 0.0
      %887 = vmatpush1.msra.mxu0 %v430
      %888 = vmatprep.subr.mxu0 0.0
      %889 = vmatpush1.msra.mxu0 %v431
      %890 = vmatprep.subr.mxu0 0.0
      %891 = vmatpush1.msra.mxu0 %v432
      %892 = vmatprep.subr.mxu0 0.0
      %893 = vmatpush1.msra.mxu0 %v433
      %894 = vmatprep.subr.mxu0 0.0
      %895 = vmatpush1.msra.mxu0 %v434
      %896 = vmatprep.subr.mxu0 0.0
      %897 = vmatpush1.msra.mxu0 %v435
      %898 = vmatprep.subr.mxu0 0.0
      %899 = vmatpush1.msra.mxu0 %v436
      %900 = vmatprep.subr.mxu0 0.0
      %901 = vmatpush1.msra.mxu0 %v437
      %902 = vmatprep.subr.mxu0 0.0
      %903 = vmatpush1.msra.mxu0 %v438
      %904 = vmatprep.subr.mxu0 0.0
      %905 = vmatpush1.msra.mxu0 %v439
      %906 = vmatprep.subr.mxu0 0.0
      %907 = vmatpush1.msra.mxu0 %v440
      %908 = vmatprep.subr.mxu0 0.0
      %909 = vmatpush1.msra.mxu0 %v441
      %910 = vmatprep.subr.mxu0 0.0
      %911 = vmatpush1.msra.mxu0 %v442
      %912 = vmatprep.subr.mxu0 0.0
      %913 = vmatpush1.msra.mxu0 %v443
      %914 = vmatprep.subr.mxu0 0.0
      %915 = vmatpush1.msra.mxu0 %v444
      %916 = vmatprep.subr.mxu0 0.0
      %917 = vmatpush1.msra.mxu0 %v445
      %918 = vmatprep.subr.mxu0 0.0
      %919 = vmatpush1.msra.mxu0 %v446
      %920 = vmatprep.subr.mxu0 0.0
      %921 = vmatpush1.msra.mxu0 %v447
      %922 = vmatprep.subr.mxu0 0.0
      %923 = vmatpush1.msra.mxu0 %v448
      %924 = vmatprep.subr.mxu0 0.0
      %925 = vmatpush1.msra.mxu0 %v449
      %926 = vmatprep.subr.mxu0 0.0
      %927 = vmatpush1.msra.mxu0 %v450
      %928 = vmatprep.subr.mxu0 0.0
      %929 = vmatpush1.msra.mxu0 %v451
      %930 = vmatprep.subr.mxu0 0.0
      %931 = vmatpush1.msra.mxu0 %v452
      %932 = vmatprep.subr.mxu0 0.0
      %933 = vmatpush1.msra.mxu0 %v453
      %934 = vmatprep.subr.mxu0 0.0
      %935 = vmatpush1.msra.mxu0 %v454
      %936 = vmatprep.subr.mxu0 0.0
      %937 = vmatpush1.msra.mxu0 %v455
      %938 = vmatprep.subr.mxu0 0.0
      %939 = vmatpush1.msra.mxu0 %v456
      %940 = vmatprep.mubr.f32.mxu0 %v232
      %941 = vmatmul.mubr.f32.gmra.mrb[0].mxu0 %v231
      %v942 = vpop.f32.mrb[0].mxu0
      %v943 = vadd.f32 %v838, %v942
      %v944 = vpop.f32.mrb[0].mxu0
      %945 = vmatprep.mubr.f32.mxu0 %v245
      %946 = vmatmul.mubr.f32.gmra.mrb[0].mxu0 %v244
      %v947 = vpop.f32.mrb[0].mxu0
      %v948 = vadd.f32 %v843, %v947
      %v949 = vpop.f32.mrb[0].mxu0
      %950 = vmatprep.mubr.f32.mxu0 %v258
      %951 = vmatmul.mubr.f32.gmra.mrb[0].mxu0 %v257
      %v952 = vpop.f32.mrb[0].mxu0
      %v953 = vadd.f32 %v848, %v952
      %v954 = vpop.f32.mrb[0].mxu0
      %955 = vmatprep.mubr.f32.mxu0 %v271
      %956 = vmatmul.mubr.f32.gmra.mrb[0].mxu0 %v270
      %v957 = vpop.f32.mrb[0].mxu0
      %v958 = vadd.f32 %v853, %v957
      %v959 = vpop.f32.mrb[0].mxu0
      %960 = vmatprep.mubr.f32.mxu0 %v284
      %961 = vmatmul.mubr.f32.gmra.mrb[0].mxu0 %v283
      %v962 = vpop.f32.mrb[0].mxu0
      %v963 = vadd.f32 %v858, %v962
      %v964 = vpop.f32.mrb[0].mxu0
      %965 = vmatprep.mubr.f32.mxu0 %v297
      %966 = vmatmul.mubr.f32.gmra.mrb[0].mxu0 %v296
      %v967 = vpop.f32.mrb[0].mxu0
      %v968 = vadd.f32 %v863, %v967
      %v969 = vpop.f32.mrb[0].mxu0
      %970 = vmatprep.mubr.f32.mxu0 %v310
      %971 = vmatmul.mubr.f32.gmra.mrb[0].mxu0 %v309
      %v972 = vpop.f32.mrb[0].mxu0
      %v973 = vadd.f32 %v868, %v972
      %v974 = vpop.f32.mrb[0].mxu0
      %975 = vmatprep.mubr.f32.mxu0 %v323
      %976 = vmatmul.mubr.f32.gmra.mrb[0].mxu0 %v322
      %v977 = vpop.f32.mrb[0].mxu0
      %v978 = vadd.f32 %v873, %v977
      %v979 = vpop.f32.mrb[0].mxu0
      %980 = vdwg.mxu0
      %981 = vmatprep.subr.mxu0 0.0
      %982 = vmatpush1.msra.mxu0 %v457
      %983 = vmatprep.subr.mxu0 0.0
      %984 = vmatpush1.msra.mxu0 %v458
      %985 = vmatprep.subr.mxu0 0.0
      %986 = vmatpush1.msra.mxu0 %v459
      %987 = vmatprep.subr.mxu0 0.0
      %988 = vmatpush1.msra.mxu0 %v460
      %989 = vmatprep.subr.mxu0 0.0
      %990 = vmatpush1.msra.mxu0 %v461
      %991 = vmatprep.subr.mxu0 0.0
      %992 = vmatpush1.msra.mxu0 %v462
      %993 = vmatprep.subr.mxu0 0.0
      %994 = vmatpush1.msra.mxu0 %v463
      %995 = vmatprep.subr.mxu0 0.0
      %996 = vmatpush1.msra.mxu0 %v464
      %997 = vmatprep.subr.mxu0 0.0
      %998 = vmatpush1.msra.mxu0 %v465
      %999 = vmatprep.subr.mxu0 0.0
      %1000 = vmatpush1.msra.mxu0 %v466
      %1001 = vmatprep.subr.mxu0 0.0
      %1002 = vmatpush1.msra.mxu0 %v467
      %1003 = vmatprep.subr.mxu0 0.0
      %1004 = vmatpush1.msra.mxu0 %v468
      %1005 = vmatprep.subr.mxu0 0.0
      %1006 = vmatpush1.msra.mxu0 %v469
      %1007 = vmatprep.subr.mxu0 0.0
      %1008 = vmatpush1.msra.mxu0 %v470
      %1009 = vmatprep.subr.mxu0 0.0
      %1010 = vmatpush1.msra.mxu0 %v471
      %1011 = vmatprep.subr.mxu0 0.0
      %1012 = vmatpush1.msra.mxu0 %v472
      %1013 = vmatprep.subr.mxu0 0.0
      %1014 = vmatpush1.msra.mxu0 %v473
      %1015 = vmatprep.subr.mxu0 0.0
      %1016 = vmatpush1.msra.mxu0 %v474
      %1017 = vmatprep.subr.mxu0 0.0
      %1018 = vmatpush1.msra.mxu0 %v475
      %1019 = vmatprep.subr.mxu0 0.0
      %1020 = vmatpush1.msra.mxu0 %v476
      %1021 = vmatprep.subr.mxu0 0.0
      %1022 = vmatpush1.msra.mxu0 %v477
      %1023 = vmatprep.subr.mxu0 0.0
      %1024 = vmatpush1.msra.mxu0 %v478
      %1025 = vmatprep.subr.mxu0 0.0
      %1026 = vmatpush1.msra.mxu0 %v479
      %1027 = vmatprep.subr.mxu0 0.0
      %1028 = vmatpush1.msra.mxu0 %v480
      %1029 = vmatprep.subr.mxu0 0.0
      %1030 = vmatpush1.msra.mxu0 %v481
      %1031 = vmatprep.subr.mxu0 0.0
      %1032 = vmatpush1.msra.mxu0 %v482
      %1033 = vmatprep.subr.mxu0 0.0
      %1034 = vmatpush1.msra.mxu0 %v483
      %1035 = vmatprep.subr.mxu0 0.0
      %1036 = vmatpush1.msra.mxu0 %v484
      %1037 = vmatprep.subr.mxu0 0.0
      %1038 = vmatpush1.msra.mxu0 %v485
      %1039 = vmatprep.subr.mxu0 0.0
      %1040 = vmatpush1.msra.mxu0 %v486
      %1041 = vmatprep.subr.mxu0 0.0
      %1042 = vmatpush1.msra.mxu0 %v487
      %1043 = vmatprep.subr.mxu0 0.0
      %1044 = vmatpush1.msra.mxu0 %v488
      %1045 = vmatprep.mubr.f32.mxu0 %v234
      %1046 = vmatmul.mubr.f32.gmra.mrb[0].mxu0 %v233
      %v1047 = vpop.f32.mrb[0].mxu0
      %v1048 = vadd.f32 %v943, %v1047
      %v1049 = vpop.f32.mrb[0].mxu0
      %1050 = vmatprep.mubr.f32.mxu0 %v247
      %1051 = vmatmul.mubr.f32.gmra.mrb[0].mxu0 %v246
      %v1052 = vpop.f32.mrb[0].mxu0
      %v1053 = vadd.f32 %v948, %v1052
      %v1054 = vpop.f32.mrb[0].mxu0
      %1055 = vmatprep.mubr.f32.mxu0 %v260
      %1056 = vmatmul.mubr.f32.gmra.mrb[0].mxu0 %v259
      %v1057 = vpop.f32.mrb[0].mxu0
      %v1058 = vadd.f32 %v953, %v1057
      %v1059 = vpop.f32.mrb[0].mxu0
      %1060 = vmatprep.mubr.f32.mxu0 %v273
      %1061 = vmatmul.mubr.f32.gmra.mrb[0].mxu0 %v272
      %v1062 = vpop.f32.mrb[0].mxu0
      %v1063 = vadd.f32 %v958, %v1062
      %v1064 = vpop.f32.mrb[0].mxu0
      %1065 = vmatprep.mubr.f32.mxu0 %v286
      %1066 = vmatmul.mubr.f32.gmra.mrb[0].mxu0 %v285
      %v1067 = vpop.f32.mrb[0].mxu0
      %v1068 = vadd.f32 %v963, %v1067
      %v1069 = vpop.f32.mrb[0].mxu0
      %1070 = vmatprep.mubr.f32.mxu0 %v299
      %1071 = vmatmul.mubr.f32.gmra.mrb[0].mxu0 %v298
      %v1072 = vpop.f32.mrb[0].mxu0
      %v1073 = vadd.f32 %v968, %v1072
      %v1074 = vpop.f32.mrb[0].mxu0
      %1075 = vmatprep.mubr.f32.mxu0 %v312
      %1076 = vmatmul.mubr.f32.gmra.mrb[0].mxu0 %v311
      %v1077 = vpop.f32.mrb[0].mxu0
      %v1078 = vadd.f32 %v973, %v1077
      %v1079 = vpop.f32.mrb[0].mxu0
      %1080 = vmatprep.mubr.f32.mxu0 %v325
      %1081 = vmatmul.mubr.f32.gmra.mrb[0].mxu0 %v324
      %v1082 = vpop.f32.mrb[0].mxu0
      %v1083 = vadd.f32 %v978, %v1082
      %v1084 = vpop.f32.mrb[0].mxu0
      %1085 = vdwg.mxu0
      %1086 = vmatprep.subr.mxu0 0.0
      %1087 = vmatpush1.msra.mxu0 %v489
      %1088 = vmatprep.subr.mxu0 0.0
      %1089 = vmatpush1.msra.mxu0 %v490
      %1090 = vmatprep.subr.mxu0 0.0
      %1091 = vmatpush1.msra.mxu0 %v491
      %1092 = vmatprep.subr.mxu0 0.0
      %1093 = vmatpush1.msra.mxu0 %v492
      %1094 = vmatprep.subr.mxu0 0.0
      %1095 = vmatpush1.msra.mxu0 %v493
      %1096 = vmatprep.subr.mxu0 0.0
      %1097 = vmatpush1.msra.mxu0 %v494
      %1098 = vmatprep.subr.mxu0 0.0
      %1099 = vmatpush1.msra.mxu0 %v495
      %1100 = vmatprep.subr.mxu0 0.0
      %1101 = vmatpush1.msra.mxu0 %v496
      %1102 = vmatprep.subr.mxu0 0.0
      %1103 = vmatpush1.msra.mxu0 %v497
      %1104 = vmatprep.subr.mxu0 0.0
      %1105 = vmatpush1.msra.mxu0 %v498
      %1106 = vmatprep.subr.mxu0 0.0
      %1107 = vmatpush1.msra.mxu0 %v499
      %1108 = vmatprep.subr.mxu0 0.0
      %1109 = vmatpush1.msra.mxu0 %v500
      %1110 = vmatprep.subr.mxu0 0.0
      %1111 = vmatpush1.msra.mxu0 %v501
      %1112 = vmatprep.subr.mxu0 0.0
      %1113 = vmatpush1.msra.mxu0 %v502
      %1114 = vmatprep.subr.mxu0 0.0
      %1115 = vmatpush1.msra.mxu0 %v503
      %1116 = vmatprep.subr.mxu0 0.0
      %1117 = vmatpush1.msra.mxu0 %v504
      %1118 = vmatprep.subr.mxu0 0.0
      %1119 = vmatpush1.msra.mxu0 %v505
      %1120 = vmatprep.subr.mxu0 0.0
      %1121 = vmatpush1.msra.mxu0 %v506
      %1122 = vmatprep.subr.mxu0 0.0
      %1123 = vmatpush1.msra.mxu0 %v507
      %1124 = vmatprep.subr.mxu0 0.0
      %1125 = vmatpush1.msra.mxu0 %v508
      %1126 = vmatprep.subr.mxu0 0.0
      %1127 = vmatpush1.msra.mxu0 %v509
      %1128 = vmatprep.subr.mxu0 0.0
      %1129 = vmatpush1.msra.mxu0 %v510
      %1130 = vmatprep.subr.mxu0 0.0
      %1131 = vmatpush1.msra.mxu0 %v511
      %1132 = vmatprep.subr.mxu0 0.0
      %1133 = vmatpush1.msra.mxu0 %v512
      %1134 = vmatprep.subr.mxu0 0.0
      %1135 = vmatpush1.msra.mxu0 %v513
      %1136 = vmatprep.subr.mxu0 0.0
      %1137 = vmatpush1.msra.mxu0 %v514
      %1138 = vmatprep.subr.mxu0 0.0
      %1139 = vmatpush1.msra.mxu0 %v515
      %1140 = vmatprep.subr.mxu0 0.0
      %1141 = vmatpush1.msra.mxu0 %v516
      %1142 = vmatprep.subr.mxu0 0.0
      %1143 = vmatpush1.msra.mxu0 %v517
      %1144 = vmatprep.subr.mxu0 0.0
      %1145 = vmatpush1.msra.mxu0 %v518
      %1146 = vmatprep.subr.mxu0 0.0
      %1147 = vmatpush1.msra.mxu0 %v519
      %1148 = vmatprep.subr.mxu0 0.0
      %1149 = vmatpush1.msra.mxu0 %v520
      %1150 = vmatprep.mubr.f32.mxu0 %v236
      %1151 = vmatmul.mubr.f32.gmra.mrb[0].mxu0 %v235
      %v1152 = vpop.f32.mrb[0].mxu0
      %v1153 = vadd.f32 %v1048, %v1152
      %v1154 = vpop.f32.mrb[0].mxu0
      %1155 = vmatprep.mubr.f32.mxu0 %v249
      %1156 = vmatmul.mubr.f32.gmra.mrb[0].mxu0 %v248
      %v1157 = vpop.f32.mrb[0].mxu0
      %v1158 = vadd.f32 %v1053, %v1157
      %v1159 = vpop.f32.mrb[0].mxu0
      %1160 = vmatprep.mubr.f32.mxu0 %v262
      %1161 = vmatmul.mubr.f32.gmra.mrb[0].mxu0 %v261
      %v1162 = vpop.f32.mrb[0].mxu0
      %v1163 = vadd.f32 %v1058, %v1162
      %v1164 = vpop.f32.mrb[0].mxu0
      %1165 = vmatprep.mubr.f32.mxu0 %v275
      %1166 = vmatmul.mubr.f32.gmra.mrb[0].mxu0 %v274
      %v1167 = vpop.f32.mrb[0].mxu0
      %v1168 = vadd.f32 %v1063, %v1167
      %v1169 = vpop.f32.mrb[0].mxu0
      %1170 = vmatprep.mubr.f32.mxu0 %v288
      %1171 = vmatmul.mubr.f32.gmra.mrb[0].mxu0 %v287
      %v1172 = vpop.f32.mrb[0].mxu0
      %v1173 = vadd.f32 %v1068, %v1172
      %v1174 = vpop.f32.mrb[0].mxu0
      %1175 = vmatprep.mubr.f32.mxu0 %v301
      %1176 = vmatmul.mubr.f32.gmra.mrb[0].mxu0 %v300
      %v1177 = vpop.f32.mrb[0].mxu0
      %v1178 = vadd.f32 %v1073, %v1177
      %v1179 = vpop.f32.mrb[0].mxu0
      %1180 = vmatprep.mubr.f32.mxu0 %v314
      %1181 = vmatmul.mubr.f32.gmra.mrb[0].mxu0 %v313
      %v1182 = vpop.f32.mrb[0].mxu0
      %v1183 = vadd.f32 %v1078, %v1182
      %v1184 = vpop.f32.mrb[0].mxu0
      %1185 = vmatprep.mubr.f32.mxu0 %v327
      %1186 = vmatmul.mubr.f32.gmra.mrb[0].mxu0 %v326
      %v1187 = vpop.f32.mrb[0].mxu0
      %v1188 = vadd.f32 %v1083, %v1187
      %v1189 = vpop.f32.mrb[0].mxu0
      %1190 = vdwg.mxu0
      %1191 = vmatprep.subr.mxu0 0.0
      %1192 = vmatpush1.msra.mxu0 %v521
      %1193 = vmatprep.subr.mxu0 0.0
      %1194 = vmatpush1.msra.mxu0 %v522
      %1195 = vmatprep.subr.mxu0 0.0
      %1196 = vmatpush1.msra.mxu0 %v523
      %1197 = vmatprep.subr.mxu0 0.0
      %1198 = vmatpush1.msra.mxu0 %v524
      %1199 = vmatprep.subr.mxu0 0.0
      %1200 = vmatpush1.msra.mxu0 %v525
      %1201 = vmatprep.subr.mxu0 0.0
      %1202 = vmatpush1.msra.mxu0 %v526
      %1203 = vmatprep.subr.mxu0 0.0
      %1204 = vmatpush1.msra.mxu0 %v527
      %1205 = vmatprep.subr.mxu0 0.0
      %1206 = vmatpush1.msra.mxu0 %v528
      %1207 = vmatprep.subr.mxu0 0.0
      %1208 = vmatpush1.msra.mxu0 0.0
      %1209 = vmatprep.subr.mxu0 0.0
      %1210 = vmatpush1.msra.mxu0 0.0
      %1211 = vmatprep.subr.mxu0 0.0
      %1212 = vmatpush1.msra.mxu0 0.0
      %1213 = vmatprep.subr.mxu0 0.0
      %1214 = vmatpush1.msra.mxu0 0.0
      %1215 = vmatprep.subr.mxu0 0.0
      %1216 = vmatpush1.msra.mxu0 0.0
      %1217 = vmatprep.subr.mxu0 0.0
      %1218 = vmatpush1.msra.mxu0 0.0
      %1219 = vmatprep.subr.mxu0 0.0
      %1220 = vmatpush1.msra.mxu0 0.0
      %1221 = vmatprep.subr.mxu0 0.0
      %1222 = vmatpush1.msra.mxu0 0.0
      %1223 = vmatprep.subr.mxu0 0.0
      %1224 = vmatpush1.msra.mxu0 0.0
      %1225 = vmatprep.subr.mxu0 0.0
      %1226 = vmatpush1.msra.mxu0 0.0
      %1227 = vmatprep.subr.mxu0 0.0
      %1228 = vmatpush1.msra.mxu0 0.0
      %1229 = vmatprep.subr.mxu0 0.0
      %1230 = vmatpush1.msra.mxu0 0.0
      %1231 = vmatprep.subr.mxu0 0.0
      %1232 = vmatpush1.msra.mxu0 0.0
      %1233 = vmatprep.subr.mxu0 0.0
      %1234 = vmatpush1.msra.mxu0 0.0
      %1235 = vmatprep.subr.mxu0 0.0
      %1236 = vmatpush1.msra.mxu0 0.0
      %1237 = vmatprep.subr.mxu0 0.0
      %1238 = vmatpush1.msra.mxu0 0.0
      %1239 = vmatprep.subr.mxu0 0.0
      %1240 = vmatpush1.msra.mxu0 0.0
      %1241 = vmatprep.subr.mxu0 0.0
      %1242 = vmatpush1.msra.mxu0 0.0
      %1243 = vmatprep.subr.mxu0 0.0
      %1244 = vmatpush1.msra.mxu0 0.0
      %1245 = vmatprep.subr.mxu0 0.0
      %1246 = vmatpush1.msra.mxu0 0.0
      %1247 = vmatprep.subr.mxu0 0.0
      %1248 = vmatpush1.msra.mxu0 0.0
      %1249 = vmatprep.subr.mxu0 0.0
      %1250 = vmatpush1.msra.mxu0 0.0
      %1251 = vmatprep.subr.mxu0 0.0
      %1252 = vmatpush1.msra.mxu0 0.0
      %1253 = vmatprep.subr.mxu0 0.0
      %1254 = vmatpush1.msra.mxu0 0.0
      %1255 = vmatprep.mubr.f32.mxu0 0.0
      %1256 = vmatmul.mubr.f32.gmra.mrb[0].mxu0 %v538
      %v1257 = vpop.f32.mrb[0].mxu0
      %v1258 = vadd.f32 %v1153, %v1257
      %v1259 = vpop.f32.mrb[0].mxu0
      %1260 = vmatprep.mubr.f32.mxu0 0.0
      %1261 = vmatmul.mubr.f32.gmra.mrb[0].mxu0 %v541
      %v1262 = vpop.f32.mrb[0].mxu0
      %v1263 = vadd.f32 %v1158, %v1262
      %v1264 = vpop.f32.mrb[0].mxu0
      %1265 = vmatprep.mubr.f32.mxu0 0.0
      %1266 = vmatmul.mubr.f32.gmra.mrb[0].mxu0 %v544
      %v1267 = vpop.f32.mrb[0].mxu0
      %v1268 = vadd.f32 %v1163, %v1267
      %v1269 = vpop.f32.mrb[0].mxu0
      %1270 = vmatprep.mubr.f32.mxu0 0.0
      %1271 = vmatmul.mubr.f32.gmra.mrb[0].mxu0 %v547
      %v1272 = vpop.f32.mrb[0].mxu0
      %v1273 = vadd.f32 %v1168, %v1272
      %v1274 = vpop.f32.mrb[0].mxu0
      %1275 = vmatprep.mubr.f32.mxu0 0.0
      %1276 = vmatmul.mubr.f32.gmra.mrb[0].mxu0 %v550
      %v1277 = vpop.f32.mrb[0].mxu0
      %v1278 = vadd.f32 %v1173, %v1277
      %v1279 = vpop.f32.mrb[0].mxu0
      %1280 = vmatprep.mubr.f32.mxu0 0.0
      %1281 = vmatmul.mubr.f32.gmra.mrb[0].mxu0 %v553
      %v1282 = vpop.f32.mrb[0].mxu0
      %v1283 = vadd.f32 %v1178, %v1282
      %v1284 = vpop.f32.mrb[0].mxu0
      %1285 = vmatprep.mubr.f32.mxu0 0.0
      %1286 = vmatmul.mubr.f32.gmra.mrb[0].mxu0 %v556
      %v1287 = vpop.f32.mrb[0].mxu0
      %v1288 = vadd.f32 %v1183, %v1287
      %v1289 = vpop.f32.mrb[0].mxu0
      %1290 = vmatprep.mubr.f32.mxu0 0.0
      %1291 = vmatmul.mubr.f32.gmra.mrb[0].mxu0 %v559
      %v1292 = vpop.f32.mrb[0].mxu0
      %v1293 = vadd.f32 %v1188, %v1292
      %v1294 = vpop.f32.mrb[0].mxu0
      %1295 = vdwg.mxu0
      %v1296 = vmax.f32 %v1258, 0.0
      %v1297 = vmax.f32 %v1263, 0.0
      %v1298 = vmax.f32 %v1268, 0.0
      %v1299 = vmax.f32 %v1273, 0.0
      %v1300 = vmax.f32 %v1278, 0.0
      %v1301 = vmax.f32 %v1283, 0.0
      %v1302 = vmax.f32 %v1288, 0.0
      %v1303 = vmax.f32 %v1293, 0.0
      %v1304 = vadd.f32 %v1296, %v1297
      %v1305 = vadd.f32 %v1304, %v1298
      %v1306 = vadd.f32 %v1305, %v1299
      %v1307 = vadd.f32 %v1306, %v1300
      %v1308 = vadd.f32 %v1307, %v1301
      %v1309 = vadd.f32 %v1308, %v1302
      %v1310 = vadd.f32 %v1309, %v1303
      %1311 = vadd.xlane.f32.xlu0 %v1310
      %v1312 = vpop.xlane.xlu0 %1311
      %v1313 = vrot.slane %v1312, 4
      %v1314 = vadd.f32 %v1312, %v1313
      %v1315 = vrot.slane %v1314, 2
      %v1316 = vadd.f32 %v1314, %v1315
      %v1317 = vrot.slane %v1316, 1
      %v1318 = vadd.f32 %v1316, %v1317
      %s1319 = vtos %v1318
      %v1320 = vrcp.pop 8192.0
      %s1321 = vtos %v1320
      %s1322 = smul.f32 %s1319, %s1321
      %v1323 = vstv %s1322
      %v1324 = vsub.f32 %v1296, %v1323
      %v1325 = vsub.f32 %v1297, %v1323
      %v1326 = vsub.f32 %v1298, %v1323
      %v1327 = vsub.f32 %v1299, %v1323
      %v1328 = vsub.f32 %v1300, %v1323
      %v1329 = vsub.f32 %v1301, %v1323
      %v1330 = vsub.f32 %v1302, %v1323
      %v1331 = vsub.f32 %v1303, %v1323
      %v1332 = vmul.f32 %v1324, %v1324
      %v1333 = vmul.f32 %v1325, %v1325
      %v1334 = vmul.f32 %v1326, %v1326
      %v1335 = vmul.f32 %v1327, %v1327
      %v1336 = vmul.f32 %v1328, %v1328
      %v1337 = vmul.f32 %v1329, %v1329
      %v1338 = vmul.f32 %v1330, %v1330
      %v1339 = vmul.f32 %v1331, %v1331
      %v1340 = vadd.f32 %v1332, %v1333
      %v1341 = vadd.f32 %v1340, %v1334
      %v1342 = vadd.f32 %v1341, %v1335
      %v1343 = vadd.f32 %v1342, %v1336
      %v1344 = vadd.f32 %v1343, %v1337
      %v1345 = vadd.f32 %v1344, %v1338
      %v1346 = vadd.f32 %v1345, %v1339
      %1347 = vadd.xlane.f32.xlu0 %v1346
      %v1348 = vpop.xlane.xlu0 %1347
      %v1349 = vrot.slane %v1348, 4
      %v1350 = vadd.f32 %v1348, %v1349
      %v1351 = vrot.slane %v1350, 2
      %v1352 = vadd.f32 %v1350, %v1351
      %v1353 = vrot.slane %v1352, 1
      %v1354 = vadd.f32 %v1352, %v1353
      %s1355 = vtos %v1354
      %v1356 = vrcp.pop 8192.0
      %s1357 = vtos %v1356
      %s1358 = smul.f32 %s1355, %s1357
      %s1359 = sadd.f32 %s1358, 1e-05
      %v1360 = vstv %s1359
      %v1361 = vrsqrt.pop %v1360
      %s1362 = vtos %v1361
      %v1363 = vstv %s1362
      %v1364 = vmul.f32 %v1324, %v1363
      %v1365 = vmul.f32 %v1325, %v1363
      %v1366 = vmul.f32 %v1326, %v1363
      %v1367 = vmul.f32 %v1327, %v1363
      %v1368 = vmul.f32 %v1328, %v1363
      %v1369 = vmul.f32 %v1329, %v1363
      %v1370 = vmul.f32 %v1330, %v1363
      %v1371 = vmul.f32 %v1331, %v1363
      %v1372 = vld [vmem:[%s3] sm:$0x1]
      %v1374 = vlaneseq
      %v1375 = vshrl.u32 %v1374, 7
      %v1376 = vsub.s32 0, %v1375
      %v1377 = vrot.slane %v1372, %v1376
      %v1379 = vmul.f32 %v1364, %v1377
      %v1380 = vmul.f32 %v1365, %v1377
      %v1381 = vmul.f32 %v1366, %v1377
      %v1382 = vmul.f32 %v1367, %v1377
      %v1383 = vmul.f32 %v1368, %v1377
      %v1384 = vmul.f32 %v1369, %v1377
      %v1385 = vmul.f32 %v1370, %v1377
      %v1386 = vmul.f32 %v1371, %v1377
      %v1387 = vld [vmem:[%s4] sm:$0x1]
      %v1389 = vlaneseq
      %v1390 = vshrl.u32 %v1389, 7
      %v1391 = vsub.s32 0, %v1390
      %v1392 = vrot.slane %v1387, %v1391
      %v1394 = vadd.f32 %v1379, %v1392
      %v1395 = vadd.f32 %v1380, %v1392
      %v1396 = vadd.f32 %v1381, %v1392
      %v1397 = vadd.f32 %v1382, %v1392
      %v1398 = vadd.f32 %v1383, %v1392
      %v1399 = vadd.f32 %v1384, %v1392
      %v1400 = vadd.f32 %v1385, %v1392
      %v1401 = vadd.f32 %v1386, %v1392
      %1402 = vst [vmem:[%s224] sm:$0xff] %v1394
      %1403 = vst [vmem:[%s224 + $0x8] sm:$0xff] %v1395
      %1404 = vst [vmem:[%s224 + $0x10] sm:$0xff] %v1396
      %1405 = vst [vmem:[%s224 + $0x18] sm:$0xff] %v1397
      %1406 = vst [vmem:[%s224 + $0x20] sm:$0xff] %v1398
      %1407 = vst [vmem:[%s224 + $0x28] sm:$0xff] %v1399
      %1408 = vst [vmem:[%s224 + $0x30] sm:$0xff] %v1400
      %1409 = vst [vmem:[%s224 + $0x38] sm:$0xff] %v1401
      %p1410 = scmp.lt.s32.totalorder %s16, 1
      %s1411 = scalar_select %p1410, %s16, 1
      %s1412 = smul.addr %s1411, 8
      %s1413 = smul.addr %s1412, 8
      %s1414 = scalar_lea.vmem %s5, %s1413
      // Predicated region
      $region41: #{texture_finder_forward.14} parent=39 // pred_check
        %p1415 = pneg %p144
      $region42: #{texture_finder_forward.14} parent=39 // pred_check_branch
        %1417 = sbr.rel (%p1415) target = $region44
      $region43: #{texture_finder_forward.14} parent=39 // pred_region
        _
      $region44: #{texture_finder_forward.14} parent=39 // pred_fallthru
        _
    $region40: #{texture_finder_forward.14} parent=5 // pred_fallthru
      _
    %p1418 = scmp.le.s32.totalorder 2, %s11
    // Predicated region
    $region45: #{texture_finder_forward.14} parent=5 // pred_check
      %p1419 = pneg %p1418
    $region46: #{texture_finder_forward.14} parent=5 // pred_check_branch
      %1421 = sbr.rel (%p1419) target = $region48
    $region47: #{texture_finder_forward.14} parent=5 // pred_region
      %s1422 = ssub.s32 %s11, 2
      // Predicated region
      $region49: #{texture_finder_forward.14} parent=47 // pred_check
        %p1423 = pneg %p150
      $region50: #{texture_finder_forward.14} parent=47 // pred_check_branch
        %1425 = sbr.rel (%p1423) target = $region52
      $region51: #{texture_finder_forward.14} parent=47 // pred_region
        %p1426 = scmp.lt.s32.totalorder %s17, 1
        %s1427 = scalar_select %p1426, %s17, 1
        %s1428 = smul.addr %s1427, 8
        %s1429 = smul.addr %s1428, 8
        %s1430 = scalar_lea.vmem %s5, %s1429
      $region52: #{texture_finder_forward.14} parent=47 // pred_fallthru
        _
    $region48: #{texture_finder_forward.14} parent=5 // pred_fallthru
      _
  $region6: #{texture_finder_forward.14} parent=0 // loop_footer
    %s15 = sadd.s32 1, %s11
  $region7: #{texture_finder_forward.14} parent=0 // loop_footer_branch
    %10 = sbr.rel target = $region3
  $region8: #{texture_finder_forward.14} parent=0 // loop_exit
    _

// kernel: texture_finder_forward.15
$region0: #{texture_finder_forward.15}
  #allocation0 [shape = 'u32[]', space=smem, size = 0x4, offset = 0x4, fixed_abs, tag = 'smem constant byte address 0x4 - core index']
  #allocation1 [shape = 'u32[144,128]{1,0:T(1,128)}', space=vmem, size = 0x12000, scoped, tag = 'internal scratch']
  %s0 = inlined_call_operand.vmem [shape: f32[2,256,800], index: 0, kind: input, shape index: {}]
  %s1 = inlined_call_operand.vmem [shape: f32[800,4], index: 1, kind: input, shape index: {}]
  %s2 = inlined_call_operand.vmem [shape: f32[1,4], index: 2, kind: input, shape index: {}]
  %s3 = inlined_call_operand.vmem [shape: f32[2,256,4], index: 3, kind: output, shape index: {}]
  %s4 = sld [smem:[#allocation0]]
  $region45: #{texture_finder_forward.15} parent=0
    _
  %s6 = ssub.s32 1, %s4
  %s7 = scalar_select 0, %s6, %s4
  loop: start=0, step=1, limit=4
  $region2: #{texture_finder_forward.15} parent=0 // loop_pre_header
    _
  $region3: #{texture_finder_forward.15} parent=0 // loop_header
    %s9 = sphi 0, %s13
    %p10 = scmp.ge.s32.totalorder %s9, 4
    %s19 = sphi 0, %s21
    %s22 = sphi 0, %s19
    %s23 = sphi 0, %s22
    %s39 = sphi 0, %s23
    %s43 = sphi 0, %s43
    %s45 = sphi 0, %s43
    %s46 = sphi 0, %s45
    %s60 = sphi 0, %s46
    %s64 = sphi 0, %s64
    %s66 = sphi 0, %s64
    %s67 = sphi 0, %s66
    %s81 = sphi 0, %s67
    %s87 = sphi 0, %s89
    %s90 = sphi 0, %s87
    %s91 = sphi 0, %s90
    %s107 = sphi 0, %s91
  $region4: #{texture_finder_forward.15} parent=0 // loop_header_branch
    %12 = sbr.rel (%p10) target = $region8
  $region5: #{texture_finder_forward.15} parent=0 // loop_body
    %s14 = ssub.s32 %s9, 1
    %s15 = ssub.s32 %s9, 2
    %s16 = sadd.s32 %s9, 1
    %s17 = ssub.s32 %s9, %s16
    %p18 = scmp.eq.s32.totalorder %s17, 0
    %s20 = sadd.s32 %s19, 1
    %s21 = scalar_select %p18, %s19, %s20
    %p24 = pneg %p18
    %p25 = scmp.eq.s32.totalorder %s9, 1
    %p26 = por %p24, %p25
    %p27 = scmp.ne.s32.totalorder %s19, %s22
    %p28 = scmp.eq.s32.totalorder %s9, 0
    %p29 = por %p27, %p28
    %p30 = scmp.ne.s32.totalorder %s19, %s22
    %p31 = scmp.eq.s32.totalorder %s14, 1
    %p32 = por %p30, %p31
    %p33 = scmp.ne.s32.totalorder %s22, %s23
    %p34 = scmp.eq.s32.totalorder %s14, 0
    %p35 = por %p33, %p34
    %p36 = scmp.ne.s32.totalorder %s22, %s23
    %p37 = scmp.eq.s32.totalorder %s15, 1
    %p38 = por %p36, %p37
    %p40 = scmp.ne.s32.totalorder %s23, %s39
    %p41 = scmp.eq.s32.totalorder %s15, 0
    %p42 = por %p40, %p41
    %s44 = sadd.s32 %s43, 1
    %p47 = scmp.eq.s32.totalorder %s9, 1
    %p48 = scmp.ne.s32.totalorder %s43, %s45
    %p49 = scmp.eq.s32.totalorder %s9, 0
    %p50 = por %p48, %p49
    %p51 = scmp.ne.s32.totalorder %s43, %s45
    %p52 = scmp.eq.s32.totalorder %s14, 1
    %p53 = por %p51, %p52
    %p54 = scmp.ne.s32.totalorder %s45, %s46
    %p55 = scmp.eq.s32.totalorder %s14, 0
    %p56 = por %p54, %p55
    %p57 = scmp.ne.s32.totalorder %s45, %s46
    %p58 = scmp.eq.s32.totalorder %s15, 1
    %p59 = por %p57, %p58
    %p61 = scmp.ne.s32.totalorder %s46, %s60
    %p62 = scmp.eq.s32.totalorder %s15, 0
    %p63 = por %p61, %p62
    %s65 = sadd.s32 %s64, 1
    %p68 = scmp.eq.s32.totalorder %s9, 1
    %p69 = scmp.ne.s32.totalorder %s64, %s66
    %p70 = scmp.eq.s32.totalorder %s9, 0
    %p71 = por %p69, %p70
    %p72 = scmp.ne.s32.totalorder %s64, %s66
    %p73 = scmp.eq.s32.totalorder %s14, 1
    %p74 = por %p72, %p73
    %p75 = scmp.ne.s32.totalorder %s66, %s67
    %p76 = scmp.eq.s32.totalorder %s14, 0
    %p77 = por %p75, %p76
    %p78 = scmp.ne.s32.totalorder %s66, %s67
    %p79 = scmp.eq.s32.totalorder %s15, 1
    %p80 = por %p78, %p79
    %p82 = scmp.ne.s32.totalorder %s67, %s81
    %p83 = scmp.eq.s32.totalorder %s15, 0
    %p84 = por %p82, %p83
    %s85 = ssub.s32 %s9, %s16
    %p86 = scmp.eq.s32.totalorder %s85, 0
    %s88 = sadd.s32 %s87, 1
    %s89 = scalar_select %p86, %s87, %s88
    %p92 = pneg %p86
    %p93 = scmp.eq.s32.totalorder %s9, 1
    %p94 = por %p92, %p93
    %p95 = scmp.ne.s32.totalorder %s87, %s90
    %p96 = scmp.eq.s32.totalorder %s9, 0
    %p97 = por %p95, %p96
    %p98 = scmp.ne.s32.totalorder %s87, %s90
    %p99 = scmp.eq.s32.totalorder %s14, 1
    %p100 = por %p98, %p99
    %p101 = scmp.ne.s32.totalorder %s90, %s91
    %p102 = scmp.eq.s32.totalorder %s14, 0
    %p103 = por %p101, %p102
    %p104 = scmp.ne.s32.totalorder %s90, %s91
    %p105 = scmp.eq.s32.totalorder %s15, 1
    %p106 = por %p104, %p105
    %p108 = scmp.ne.s32.totalorder %s91, %s107
    %p109 = scmp.eq.s32.totalorder %s15, 0
    %p110 = por %p108, %p109
    %p111 = scmp.le.s32.totalorder 1, %s9
    %p112 = scmp.lt.s32.totalorder %s9, 3
    %p113 = pnand %p111, %p112
    %p114 = pneg %p113
    // Predicated region
    $region9: #{texture_finder_forward.15} parent=5 // pred_check
      _
    $region10: #{texture_finder_forward.15} parent=5 // pred_check_branch
      %116 = sbr.rel (%p113) target = $region12
    $region11: #{texture_finder_forward.15} parent=5 // pred_region
      %s117 = ssub.s32 %s9, 1
      // Predicated region
      $region13: #{texture_finder_forward.15} parent=11 // pred_check
        %p118 = pneg %p56
      $region14: #{texture_finder_forward.15} parent=11 // pred_check_branch
        %120 = sbr.rel (%p118) target = $region16
      $region15: #{texture_finder_forward.15} parent=11 // pred_region
        _
      $region16: #{texture_finder_forward.15} parent=11 // pred_fallthru
        _
      // Predicated region
      $region17: #{texture_finder_forward.15} parent=11 // pred_check
        %p121 = pneg %p77
      $region18: #{texture_finder_forward.15} parent=11 // pred_check_branch
        %123 = sbr.rel (%p121) target = $region20
      $region19: #{texture_finder_forward.15} parent=11 // pred_region
        _
      $region20: #{texture_finder_forward.15} parent=11 // pred_fallthru
        _
    $region12: #{texture_finder_forward.15} parent=5 // pred_fallthru
      _
    %p124 = scmp.lt.s32.totalorder %s9, 2
    // Predicated region
    $region21: #{texture_finder_forward.15} parent=5 // pred_check
      %p125 = pneg %p124
    $region22: #{texture_finder_forward.15} parent=5 // pred_check_branch
      %127 = sbr.rel (%p125) target = $region24
    $region23: #{texture_finder_forward.15} parent=5 // pred_region
      // Predicated region
      $region25: #{texture_finder_forward.15} parent=23 // pred_check
        %p128 = pneg %p29
      $region26: #{texture_finder_forward.15} parent=23 // pred_check_branch
        %130 = sbr.rel (%p128) target = $region28
      $region27: #{texture_finder_forward.15} parent=23 // pred_region
        %p131 = scmp.lt.s32.totalorder %s9, 1
        %s132 = scalar_select %p131, %s9, 1
        %s133 = smul.addr %s132, 224
        %s134 = smul.addr %s133, 8
        %s135 = scalar_lea.vmem %s0, %s134
      $region28: #{texture_finder_forward.15} parent=23 // pred_fallthru
        _
    $region24: #{texture_finder_forward.15} parent=5 // pred_fallthru
      _
    %p136 = scmp.le.s32.totalorder 1, %s9
    %p137 = scmp.lt.s32.totalorder %s9, 3
    %p138 = pnand %p136, %p137
    %p139 = pneg %p138
    // Predicated region
    $region29: #{texture_finder_forward.15} parent=5 // pred_check
      _
    $region30: #{texture_finder_forward.15} parent=5 // pred_check_branch
      %141 = sbr.rel (%p138) target = $region32
    $region31: #{texture_finder_forward.15} parent=5 // pred_region
      %s142 = ssub.s32 %s9, 1
      %p143 = scmp.lt.s32.totalorder %s14, 1
      %s144 = scalar_select %p143, %s14, 1
      %s145 = smul.addr %s144, 224
      %s146 = smul.addr %s145, 8
      %s147 = scalar_lea.vmem %s0, %s146
      %p148 = pneg %p35
      %p149 = pneg %p32
      %p150 = pneg %p56
      %p151 = pneg %p53
      %p152 = pneg %p77
      %p153 = pneg %p74
      %p154 = pneg %p103
      %p155 = pneg %p100
      %p156 = scmp.lt.s32.totalorder %s14, 1
      %s157 = scalar_select %p156, %s14, 1
      %s158 = smul.addr %s157, 32
      %s159 = smul.addr %s158, 8
      %s160 = scalar_lea.vmem %s3, %s159
      %p161 = scmp.lt.s32.totalorder %s14, 1
      %s162 = scalar_select %p161, %s14, 1
      %s163 = smul.addr %s162, 224
      %s164 = smul.addr %s163, 8
      %s165 = scalar_lea.vmem %s0, %s164
      %p166 = scmp.lt.s32.totalorder %s14, 1
      %s167 = scalar_select %p166, %s14, 1
      %s168 = smul.addr %s167, 32
      %s169 = smul.addr %s168, 8
      %s170 = scalar_lea.vmem %s3, %s169
      %v171 = vld [vmem:[%s165] sm:$0xff]
      %v172 = vld [vmem:[%s165 + $0x8] sm:$0xff]
      %v173 = vld [vmem:[%s165 + $0x10] sm:$0xff]
      %v174 = vld [vmem:[%s165 + $0x18] sm:$0xff]
      %v175 = vld [vmem:[%s165 + $0x20] sm:$0xff]
      %v176 = vld [vmem:[%s165 + $0x28] sm:$0xff]
      %v177 = vld [vmem:[%s165 + $0x30] sm:$0xff]
      %v178 = vld [vmem:[%s165 + $0x38] sm:$0xff]
      %v179 = vld [vmem:[%s165 + $0x40] sm:$0xff]
      %v180 = vld [vmem:[%s165 + $0x48] sm:$0xff]
      %v181 = vld [vmem:[%s165 + $0x50] sm:$0xff]
      %v182 = vld [vmem:[%s165 + $0x58] sm:$0xff]
      %v183 = vld [vmem:[%s165 + $0x60] sm:$0xff]
      %v184 = vld [vmem:[%s165 + $0x68] sm:$0xff]
      %v185 = vld [vmem:[%s165 + $0x70] sm:$0xff]
      %v186 = vld [vmem:[%s165 + $0x78] sm:$0xff]
      %v187 = vld [vmem:[%s165 + $0x80] sm:$0xff]
      %v188 = vld [vmem:[%s165 + $0x88] sm:$0xff]
      %v189 = vld [vmem:[%s165 + $0x90] sm:$0xff]
      %v190 = vld [vmem:[%s165 + $0x98] sm:$0xff]
      %v191 = vld [vmem:[%s165 + $0xa0] sm:$0xff]
      %v192 = vld [vmem:[%s165 + $0xa8] sm:$0xff]
      %v193 = vld [vmem:[%s165 + $0xb0] sm:$0xff]
      %v194 = vld [vmem:[%s165 + $0xb8] sm:$0xff]
      %v195 = vld [vmem:[%s165 + $0xc0] sm:$0xff]
      %v196 = vld [vmem:[%s165 + $0xc8] sm:$0xff]
      %v197 = vld [vmem:[%s165 + $0xd0] sm:$0xff]
      %v198 = vld [vmem:[%s165 + $0xd8] sm:$0xff]
      %v199 = vld [vmem:[%s165 + $0xe0] sm:$0xff]
      %v200 = vld [vmem:[%s165 + $0xe8] sm:$0xff]
      %v201 = vld [vmem:[%s165 + $0xf0] sm:$0xff]
      %v202 = vld [vmem:[%s165 + $0xf8] sm:$0xff]
      %v203 = vld [vmem:[%s165 + $0x100] sm:$0xff]
      %v204 = vld [vmem:[%s165 + $0x108] sm:$0xff]
      %v205 = vld [vmem:[%s165 + $0x110] sm:$0xff]
      %v206 = vld [vmem:[%s165 + $0x118] sm:$0xff]
      %v207 = vld [vmem:[%s165 + $0x120] sm:$0xff]
      %v208 = vld [vmem:[%s165 + $0x128] sm:$0xff]
      %v209 = vld [vmem:[%s165 + $0x130] sm:$0xff]
      %v210 = vld [vmem:[%s165 + $0x138] sm:$0xff]
      %v211 = vld [vmem:[%s165 + $0x140] sm:$0xff]
      %v212 = vld [vmem:[%s165 + $0x148] sm:$0xff]
      %v213 = vld [vmem:[%s165 + $0x150] sm:$0xff]
      %v214 = vld [vmem:[%s165 + $0x158] sm:$0xff]
      %v215 = vld [vmem:[%s165 + $0x160] sm:$0xff]
      %v216 = vld [vmem:[%s165 + $0x168] sm:$0xff]
      %v217 = vld [vmem:[%s165 + $0x170] sm:$0xff]
      %v218 = vld [vmem:[%s165 + $0x178] sm:$0xff]
      %v219 = vld [vmem:[%s165 + $0x180] sm:$0xff]
      %v220 = vld [vmem:[%s165 + $0x188] sm:$0xff]
      %v221 = vld [vmem:[%s165 + $0x190] sm:$0xff]
      %v222 = vld [vmem:[%s165 + $0x198] sm:$0xff]
      %v223 = vld [vmem:[%s165 + $0x1a0] sm:$0xff]
      %v224 = vld [vmem:[%s165 + $0x1a8] sm:$0xff]
      %v225 = vld [vmem:[%s165 + $0x1b0] sm:$0xff]
      %v226 = vld [vmem:[%s165 + $0x1b8] sm:$0xff]
      %v227 = vld [vmem:[%s165 + $0x1c0] sm:$0xff]
      %v228 = vld [vmem:[%s165 + $0x1c8] sm:$0xff]
      %v229 = vld [vmem:[%s165 + $0x1d0] sm:$0xff]
      %v230 = vld [vmem:[%s165 + $0x1d8] sm:$0xff]
      %v231 = vld [vmem:[%s165 + $0x1e0] sm:$0xff]
      %v232 = vld [vmem:[%s165 + $0x1e8] sm:$0xff]
      %v233 = vld [vmem:[%s165 + $0x1f0] sm:$0xff]
      %v234 = vld [vmem:[%s165 + $0x1f8] sm:$0xff]
      %v235 = vld [vmem:[%s165 + $0x200] sm:$0xff]
      %v236 = vld [vmem:[%s165 + $0x208] sm:$0xff]
      %v237 = vld [vmem:[%s165 + $0x210] sm:$0xff]
      %v238 = vld [vmem:[%s165 + $0x218] sm:$0xff]
      %v239 = vld [vmem:[%s165 + $0x220] sm:$0xff]
      %v240 = vld [vmem:[%s165 + $0x228] sm:$0xff]
      %v241 = vld [vmem:[%s165 + $0x230] sm:$0xff]
      %v242 = vld [vmem:[%s165 + $0x238] sm:$0xff]
      %v243 = vld [vmem:[%s165 + $0x240] sm:$0xff]
      %v244 = vld [vmem:[%s165 + $0x248] sm:$0xff]
      %v245 = vld [vmem:[%s165 + $0x250] sm:$0xff]
      %v246 = vld [vmem:[%s165 + $0x258] sm:$0xff]
      %v247 = vld [vmem:[%s165 + $0x260] sm:$0xff]
      %v248 = vld [vmem:[%s165 + $0x268] sm:$0xff]
      %v249 = vld [vmem:[%s165 + $0x270] sm:$0xff]
      %v250 = vld [vmem:[%s165 + $0x278] sm:$0xff]
      %v251 = vld [vmem:[%s165 + $0x280] sm:$0xff]
      %v252 = vld [vmem:[%s165 + $0x288] sm:$0xff]
      %v253 = vld [vmem:[%s165 + $0x290] sm:$0xff]
      %v254 = vld [vmem:[%s165 + $0x298] sm:$0xff]
      %v255 = vld [vmem:[%s165 + $0x2a0] sm:$0xff]
      %v256 = vld [vmem:[%s165 + $0x2a8] sm:$0xff]
      %v257 = vld [vmem:[%s165 + $0x2b0] sm:$0xff]
      %v258 = vld [vmem:[%s165 + $0x2b8] sm:$0xff]
      %v259 = vld [vmem:[%s165 + $0x2c0] sm:$0xff]
      %v260 = vld [vmem:[%s165 + $0x2c8] sm:$0xff]
      %v261 = vld [vmem:[%s165 + $0x2d0] sm:$0xff]
      %v262 = vld [vmem:[%s165 + $0x2d8] sm:$0xff]
      %v263 = vld [vmem:[%s165 + $0x2e0] sm:$0xff]
      %v264 = vld [vmem:[%s165 + $0x2e8] sm:$0xff]
      %v265 = vld [vmem:[%s165 + $0x2f0] sm:$0xff]
      %v266 = vld [vmem:[%s165 + $0x2f8] sm:$0xff]
      %v267 = vld [vmem:[%s165 + $0x300] sm:$0xff]
      %v268 = vld [vmem:[%s165 + $0x308] sm:$0xff]
      %v269 = vld [vmem:[%s165 + $0x310] sm:$0xff]
      %v270 = vld [vmem:[%s165 + $0x318] sm:$0xff]
      %v271 = vld [vmem:[%s165 + $0x320] sm:$0xff]
      %v272 = vld [vmem:[%s165 + $0x328] sm:$0xff]
      %v273 = vld [vmem:[%s165 + $0x330] sm:$0xff]
      %v274 = vld [vmem:[%s165 + $0x338] sm:$0xff]
      %v275 = vld [vmem:[%s165 + $0x340] sm:$0xff]
      %v276 = vld [vmem:[%s165 + $0x348] sm:$0xff]
      %v277 = vld [vmem:[%s165 + $0x350] sm:$0xff]
      %v278 = vld [vmem:[%s165 + $0x358] sm:$0xff]
      %v279 = vld [vmem:[%s165 + $0x360] sm:$0xff]
      %v280 = vld [vmem:[%s165 + $0x368] sm:$0xff]
      %v281 = vld [vmem:[%s165 + $0x370] sm:$0xff]
      %v282 = vld [vmem:[%s165 + $0x378] sm:$0xff]
      %v283 = vld [vmem:[%s165 + $0x380] sm:$0xff]
      %v284 = vld [vmem:[%s165 + $0x388] sm:$0xff]
      %v285 = vld [vmem:[%s165 + $0x390] sm:$0xff]
      %v286 = vld [vmem:[%s165 + $0x398] sm:$0xff]
      %v287 = vld [vmem:[%s165 + $0x3a0] sm:$0xff]
      %v288 = vld [vmem:[%s165 + $0x3a8] sm:$0xff]
      %v289 = vld [vmem:[%s165 + $0x3b0] sm:$0xff]
      %v290 = vld [vmem:[%s165 + $0x3b8] sm:$0xff]
      %v291 = vld [vmem:[%s165 + $0x3c0] sm:$0xff]
      %v292 = vld [vmem:[%s165 + $0x3c8] sm:$0xff]
      %v293 = vld [vmem:[%s165 + $0x3d0] sm:$0xff]
      %v294 = vld [vmem:[%s165 + $0x3d8] sm:$0xff]
      %v295 = vld [vmem:[%s165 + $0x3e0] sm:$0xff]
      %v296 = vld [vmem:[%s165 + $0x3e8] sm:$0xff]
      %v297 = vld [vmem:[%s165 + $0x3f0] sm:$0xff]
      %v298 = vld [vmem:[%s165 + $0x3f8] sm:$0xff]
      %v299 = vld [vmem:[%s165 + $0x400] sm:$0xff]
      %v300 = vld [vmem:[%s165 + $0x408] sm:$0xff]
      %v301 = vld [vmem:[%s165 + $0x410] sm:$0xff]
      %v302 = vld [vmem:[%s165 + $0x418] sm:$0xff]
      %v303 = vld [vmem:[%s165 + $0x420] sm:$0xff]
      %v304 = vld [vmem:[%s165 + $0x428] sm:$0xff]
      %v305 = vld [vmem:[%s165 + $0x430] sm:$0xff]
      %v306 = vld [vmem:[%s165 + $0x438] sm:$0xff]
      %v307 = vld [vmem:[%s165 + $0x440] sm:$0xff]
      %v308 = vld [vmem:[%s165 + $0x448] sm:$0xff]
      %v309 = vld [vmem:[%s165 + $0x450] sm:$0xff]
      %v310 = vld [vmem:[%s165 + $0x458] sm:$0xff]
      %v311 = vld [vmem:[%s165 + $0x460] sm:$0xff]
      %v312 = vld [vmem:[%s165 + $0x468] sm:$0xff]
      %v313 = vld [vmem:[%s165 + $0x470] sm:$0xff]
      %v314 = vld [vmem:[%s165 + $0x478] sm:$0xff]
      %v315 = vld [vmem:[%s165 + $0x480] sm:$0xff]
      %v316 = vld [vmem:[%s165 + $0x488] sm:$0xff]
      %v317 = vld [vmem:[%s165 + $0x490] sm:$0xff]
      %v318 = vld [vmem:[%s165 + $0x498] sm:$0xff]
      %v319 = vld [vmem:[%s165 + $0x4a0] sm:$0xff]
      %v320 = vld [vmem:[%s165 + $0x4a8] sm:$0xff]
      %v321 = vld [vmem:[%s165 + $0x4b0] sm:$0xff]
      %v322 = vld [vmem:[%s165 + $0x4b8] sm:$0xff]
      %v323 = vld [vmem:[%s165 + $0x4c0] sm:$0xff]
      %v324 = vld [vmem:[%s165 + $0x4c8] sm:$0xff]
      %v325 = vld [vmem:[%s165 + $0x4d0] sm:$0xff]
      %v326 = vld [vmem:[%s165 + $0x4d8] sm:$0xff]
      %v327 = vld [vmem:[%s165 + $0x4e0] sm:$0xff]
      %v328 = vld [vmem:[%s165 + $0x4e8] sm:$0xff]
      %v329 = vld [vmem:[%s165 + $0x4f0] sm:$0xff]
      %v330 = vld [vmem:[%s165 + $0x4f8] sm:$0xff]
      %v331 = vld [vmem:[%s165 + $0x500] sm:$0xff]
      %v332 = vld [vmem:[%s165 + $0x508] sm:$0xff]
      %v333 = vld [vmem:[%s165 + $0x510] sm:$0xff]
      %v334 = vld [vmem:[%s165 + $0x518] sm:$0xff]
      %v335 = vld [vmem:[%s165 + $0x520] sm:$0xff]
      %v336 = vld [vmem:[%s165 + $0x528] sm:$0xff]
      %v337 = vld [vmem:[%s165 + $0x530] sm:$0xff]
      %v338 = vld [vmem:[%s165 + $0x538] sm:$0xff]
      %v339 = vld [vmem:[%s165 + $0x540] sm:$0xff]
      %v340 = vld [vmem:[%s165 + $0x548] sm:$0xff]
      %v341 = vld [vmem:[%s165 + $0x550] sm:$0xff]
      %v342 = vld [vmem:[%s165 + $0x558] sm:$0xff]
      %v343 = vld [vmem:[%s165 + $0x560] sm:$0xff]
      %v344 = vld [vmem:[%s165 + $0x568] sm:$0xff]
      %v345 = vld [vmem:[%s165 + $0x570] sm:$0xff]
      %v346 = vld [vmem:[%s165 + $0x578] sm:$0xff]
      %v347 = vld [vmem:[%s165 + $0x580] sm:$0xff]
      %v348 = vld [vmem:[%s165 + $0x588] sm:$0xff]
      %v349 = vld [vmem:[%s165 + $0x590] sm:$0xff]
      %v350 = vld [vmem:[%s165 + $0x598] sm:$0xff]
      %v351 = vld [vmem:[%s165 + $0x5a0] sm:$0xff]
      %v352 = vld [vmem:[%s165 + $0x5a8] sm:$0xff]
      %v353 = vld [vmem:[%s165 + $0x5b0] sm:$0xff]
      %v354 = vld [vmem:[%s165 + $0x5b8] sm:$0xff]
      %v355 = vld [vmem:[%s165 + $0x5c0] sm:$0xff]
      %v356 = vld [vmem:[%s165 + $0x5c8] sm:$0xff]
      %v357 = vld [vmem:[%s165 + $0x5d0] sm:$0xff]
      %v358 = vld [vmem:[%s165 + $0x5d8] sm:$0xff]
      %v359 = vld [vmem:[%s165 + $0x5e0] sm:$0xff]
      %v360 = vld [vmem:[%s165 + $0x5e8] sm:$0xff]
      %v361 = vld [vmem:[%s165 + $0x5f0] sm:$0xff]
      %v362 = vld [vmem:[%s165 + $0x5f8] sm:$0xff]
      %v363 = vld [vmem:[%s165 + $0x600] sm:$0xff]
      %v364 = vld [vmem:[%s165 + $0x608] sm:$0xff]
      %v365 = vld [vmem:[%s165 + $0x610] sm:$0xff]
      %v366 = vld [vmem:[%s165 + $0x618] sm:$0xff]
      %v367 = vld [vmem:[%s165 + $0x620] sm:$0xff]
      %v368 = vld [vmem:[%s165 + $0x628] sm:$0xff]
      %v369 = vld [vmem:[%s165 + $0x630] sm:$0xff]
      %v370 = vld [vmem:[%s165 + $0x638] sm:$0xff]
      %v371 = vld [vmem:[%s165 + $0x640] sm:$0xff]
      %v372 = vld [vmem:[%s165 + $0x648] sm:$0xff]
      %v373 = vld [vmem:[%s165 + $0x650] sm:$0xff]
      %v374 = vld [vmem:[%s165 + $0x658] sm:$0xff]
      %v375 = vld [vmem:[%s165 + $0x660] sm:$0xff]
      %v376 = vld [vmem:[%s165 + $0x668] sm:$0xff]
      %v377 = vld [vmem:[%s165 + $0x670] sm:$0xff]
      %v378 = vld [vmem:[%s165 + $0x678] sm:$0xff]
      %v379 = vld [vmem:[%s165 + $0x680] sm:$0xff]
      %v380 = vld [vmem:[%s165 + $0x688] sm:$0xff]
      %v381 = vld [vmem:[%s165 + $0x690] sm:$0xff]
      %v382 = vld [vmem:[%s165 + $0x698] sm:$0xff]
      %v383 = vld [vmem:[%s165 + $0x6a0] sm:$0xff]
      %v384 = vld [vmem:[%s165 + $0x6a8] sm:$0xff]
      %v385 = vld [vmem:[%s165 + $0x6b0] sm:$0xff]
      %v386 = vld [vmem:[%s165 + $0x6b8] sm:$0xff]
      %v387 = vld [vmem:[%s165 + $0x6c0] sm:$0xff]
      %v388 = vld [vmem:[%s165 + $0x6c8] sm:$0xff]
      %v389 = vld [vmem:[%s165 + $0x6d0] sm:$0xff]
      %v390 = vld [vmem:[%s165 + $0x6d8] sm:$0xff]
      %v391 = vld [vmem:[%s165 + $0x6e0] sm:$0xff]
      %v392 = vld [vmem:[%s165 + $0x6e8] sm:$0xff]
      %v393 = vld [vmem:[%s165 + $0x6f0] sm:$0xff]
      %v394 = vld [vmem:[%s165 + $0x6f8] sm:$0xff]
      %v395 = vld [vmem:[%s1] sm:$0xff]
      %v396 = vld [vmem:[%s1 + $0x8] sm:$0xff]
      %v397 = vld [vmem:[%s1 + $0x10] sm:$0xff]
      %v398 = vld [vmem:[%s1 + $0x18] sm:$0xff]
      %v399 = vld [vmem:[%s1 + $0x20] sm:$0xff]
      %v400 = vld [vmem:[%s1 + $0x28] sm:$0xff]
      %v401 = vld [vmem:[%s1 + $0x30] sm:$0xff]
      %v402 = vld [vmem:[%s1 + $0x38] sm:$0xff]
      %v403 = vld [vmem:[%s1 + $0x40] sm:$0xff]
      %v404 = vld [vmem:[%s1 + $0x48] sm:$0xff]
      %v405 = vld [vmem:[%s1 + $0x50] sm:$0xff]
      %v406 = vld [vmem:[%s1 + $0x58] sm:$0xff]
      %v407 = vld [vmem:[%s1 + $0x60] sm:$0xff]
      %v408 = vld [vmem:[%s1 + $0x68] sm:$0xff]
      %v409 = vld [vmem:[%s1 + $0x70] sm:$0xff]
      %v410 = vld [vmem:[%s1 + $0x78] sm:$0xff]
      %v411 = vld [vmem:[%s1 + $0x80] sm:$0xff]
      %v412 = vld [vmem:[%s1 + $0x88] sm:$0xff]
      %v413 = vld [vmem:[%s1 + $0x90] sm:$0xff]
      %v414 = vld [vmem:[%s1 + $0x98] sm:$0xff]
      %v415 = vld [vmem:[%s1 + $0xa0] sm:$0xff]
      %v416 = vld [vmem:[%s1 + $0xa8] sm:$0xff]
      %v417 = vld [vmem:[%s1 + $0xb0] sm:$0xff]
      %v418 = vld [vmem:[%s1 + $0xb8] sm:$0xff]
      %v419 = vld [vmem:[%s1 + $0xc0] sm:$0xff]
      %v420 = vld [vmem:[%s1 + $0xc8] sm:$0xff]
      %v421 = vld [vmem:[%s1 + $0xd0] sm:$0xff]
      %v422 = vld [vmem:[%s1 + $0xd8] sm:$0xff]
      %v423 = vld [vmem:[%s1 + $0xe0] sm:$0xff]
      %v424 = vld [vmem:[%s1 + $0xe8] sm:$0xff]
      %v425 = vld [vmem:[%s1 + $0xf0] sm:$0xff]
      %v426 = vld [vmem:[%s1 + $0xf8] sm:$0xff]
      %v427 = vld [vmem:[%s1 + $0x100] sm:$0xff]
      %v428 = vld [vmem:[%s1 + $0x108] sm:$0xff]
      %v429 = vld [vmem:[%s1 + $0x110] sm:$0xff]
      %v430 = vld [vmem:[%s1 + $0x118] sm:$0xff]
      %v431 = vld [vmem:[%s1 + $0x120] sm:$0xff]
      %v432 = vld [vmem:[%s1 + $0x128] sm:$0xff]
      %v433 = vld [vmem:[%s1 + $0x130] sm:$0xff]
      %v434 = vld [vmem:[%s1 + $0x138] sm:$0xff]
      %v435 = vld [vmem:[%s1 + $0x140] sm:$0xff]
      %v436 = vld [vmem:[%s1 + $0x148] sm:$0xff]
      %v437 = vld [vmem:[%s1 + $0x150] sm:$0xff]
      %v438 = vld [vmem:[%s1 + $0x158] sm:$0xff]
      %v439 = vld [vmem:[%s1 + $0x160] sm:$0xff]
      %v440 = vld [vmem:[%s1 + $0x168] sm:$0xff]
      %v441 = vld [vmem:[%s1 + $0x170] sm:$0xff]
      %v442 = vld [vmem:[%s1 + $0x178] sm:$0xff]
      %v443 = vld [vmem:[%s1 + $0x180] sm:$0xff]
      %v444 = vld [vmem:[%s1 + $0x188] sm:$0xff]
      %v445 = vld [vmem:[%s1 + $0x190] sm:$0xff]
      %v446 = vld [vmem:[%s1 + $0x198] sm:$0xff]
      %v447 = vld [vmem:[%s1 + $0x1a0] sm:$0xff]
      %v448 = vld [vmem:[%s1 + $0x1a8] sm:$0xff]
      %v449 = vld [vmem:[%s1 + $0x1b0] sm:$0xff]
      %v450 = vld [vmem:[%s1 + $0x1b8] sm:$0xff]
      %v451 = vld [vmem:[%s1 + $0x1c0] sm:$0xff]
      %v452 = vld [vmem:[%s1 + $0x1c8] sm:$0xff]
      %v453 = vld [vmem:[%s1 + $0x1d0] sm:$0xff]
      %v454 = vld [vmem:[%s1 + $0x1d8] sm:$0xff]
      %v455 = vld [vmem:[%s1 + $0x1e0] sm:$0xff]
      %v456 = vld [vmem:[%s1 + $0x1e8] sm:$0xff]
      %v457 = vld [vmem:[%s1 + $0x1f0] sm:$0xff]
      %v458 = vld [vmem:[%s1 + $0x1f8] sm:$0xff]
      %v459 = vld [vmem:[%s1 + $0x200] sm:$0xff]
      %v460 = vld [vmem:[%s1 + $0x208] sm:$0xff]
      %v461 = vld [vmem:[%s1 + $0x210] sm:$0xff]
      %v462 = vld [vmem:[%s1 + $0x218] sm:$0xff]
      %v463 = vld [vmem:[%s1 + $0x220] sm:$0xff]
      %v464 = vld [vmem:[%s1 + $0x228] sm:$0xff]
      %v465 = vld [vmem:[%s1 + $0x230] sm:$0xff]
      %v466 = vld [vmem:[%s1 + $0x238] sm:$0xff]
      %v467 = vld [vmem:[%s1 + $0x240] sm:$0xff]
      %v468 = vld [vmem:[%s1 + $0x248] sm:$0xff]
      %v469 = vld [vmem:[%s1 + $0x250] sm:$0xff]
      %v470 = vld [vmem:[%s1 + $0x258] sm:$0xff]
      %v471 = vld [vmem:[%s1 + $0x260] sm:$0xff]
      %v472 = vld [vmem:[%s1 + $0x268] sm:$0xff]
      %v473 = vld [vmem:[%s1 + $0x270] sm:$0xff]
      %v474 = vld [vmem:[%s1 + $0x278] sm:$0xff]
      %v475 = vld [vmem:[%s1 + $0x280] sm:$0xff]
      %v476 = vld [vmem:[%s1 + $0x288] sm:$0xff]
      %v477 = vld [vmem:[%s1 + $0x290] sm:$0xff]
      %v478 = vld [vmem:[%s1 + $0x298] sm:$0xff]
      %v479 = vld [vmem:[%s1 + $0x2a0] sm:$0xff]
      %v480 = vld [vmem:[%s1 + $0x2a8] sm:$0xff]
      %v481 = vld [vmem:[%s1 + $0x2b0] sm:$0xff]
      %v482 = vld [vmem:[%s1 + $0x2b8] sm:$0xff]
      %v483 = vld [vmem:[%s1 + $0x2c0] sm:$0xff]
      %v484 = vld [vmem:[%s1 + $0x2c8] sm:$0xff]
      %v485 = vld [vmem:[%s1 + $0x2d0] sm:$0xff]
      %v486 = vld [vmem:[%s1 + $0x2d8] sm:$0xff]
      %v487 = vld [vmem:[%s1 + $0x2e0] sm:$0xff]
      %v488 = vld [vmem:[%s1 + $0x2e8] sm:$0xff]
      %v489 = vld [vmem:[%s1 + $0x2f0] sm:$0xff]
      %v490 = vld [vmem:[%s1 + $0x2f8] sm:$0xff]
      %v491 = vld [vmem:[%s1 + $0x300] sm:$0xff]
      %v492 = vld [vmem:[%s1 + $0x308] sm:$0xff]
      %v493 = vld [vmem:[%s1 + $0x310] sm:$0xff]
      %v494 = vld [vmem:[%s1 + $0x318] sm:$0xff]
      %v495 = vld [vmem:[%s2] sm:$0x1]
      %v497 = vlaneseq
      %v498 = vshrl.u32 %v497, 7
      %v499 = vsub.s32 0, %v498
      %v500 = vrot.slane %v495, %v499
      %vm502 = vcmask 261120
      %v504 = vsel %vm502, %v177, 0
      %v507 = vsel %vm502, %v184, 0
      %v510 = vsel %vm502, %v191, 0
      %v513 = vsel %vm502, %v198, 0
      %v516 = vsel %vm502, %v205, 0
      %v519 = vsel %vm502, %v212, 0
      %v522 = vsel %vm502, %v219, 0
      %v525 = vsel %vm502, %v226, 0
      %v528 = vsel %vm502, %v233, 0
      %v531 = vsel %vm502, %v240, 0
      %v534 = vsel %vm502, %v247, 0
      %v537 = vsel %vm502, %v254, 0
      %v540 = vsel %vm502, %v261, 0
      %v543 = vsel %vm502, %v268, 0
      %v546 = vsel %vm502, %v275, 0
      %v549 = vsel %vm502, %v282, 0
      %v552 = vsel %vm502, %v289, 0
      %v555 = vsel %vm502, %v296, 0
      %v558 = vsel %vm502, %v303, 0
      %v561 = vsel %vm502, %v310, 0
      %v564 = vsel %vm502, %v317, 0
      %v567 = vsel %vm502, %v324, 0
      %v570 = vsel %vm502, %v331, 0
      %v573 = vsel %vm502, %v338, 0
      %v576 = vsel %vm502, %v345, 0
      %v579 = vsel %vm502, %v352, 0
      %v582 = vsel %vm502, %v359, 0
      %v585 = vsel %vm502, %v366, 0
      %v588 = vsel %vm502, %v373, 0
      %v591 = vsel %vm502, %v380, 0
      %v594 = vsel %vm502, %v387, 0
      %v597 = vsel %vm502, %v394, 0
      %599 = vmatprep.subr.mxu0 0.0
      %600 = vmatpush1.msra.mxu0 %v395
      %601 = vmatprep.subr.mxu0 0.0
      %602 = vmatpush1.msra.mxu0 %v396
      %603 = vmatprep.subr.mxu0 0.0
      %604 = vmatpush1.msra.mxu0 %v397
      %605 = vmatprep.subr.mxu0 0.0
      %606 = vmatpush1.msra.mxu0 %v398
      %607 = vmatprep.subr.mxu0 0.0
      %608 = vmatpush1.msra.mxu0 %v399
      %609 = vmatprep.subr.mxu0 0.0
      %610 = vmatpush1.msra.mxu0 %v400
      %611 = vmatprep.subr.mxu0 0.0
      %612 = vmatpush1.msra.mxu0 %v401
      %613 = vmatprep.subr.mxu0 0.0
      %614 = vmatpush1.msra.mxu0 %v402
      %615 = vmatprep.subr.mxu0 0.0
      %616 = vmatpush1.msra.mxu0 %v403
      %617 = vmatprep.subr.mxu0 0.0
      %618 = vmatpush1.msra.mxu0 %v404
      %619 = vmatprep.subr.mxu0 0.0
      %620 = vmatpush1.msra.mxu0 %v405
      %621 = vmatprep.subr.mxu0 0.0
      %622 = vmatpush1.msra.mxu0 %v406
      %623 = vmatprep.subr.mxu0 0.0
      %624 = vmatpush1.msra.mxu0 %v407
      %625 = vmatprep.subr.mxu0 0.0
      %626 = vmatpush1.msra.mxu0 %v408
      %627 = vmatprep.subr.mxu0 0.0
      %628 = vmatpush1.msra.mxu0 %v409
      %629 = vmatprep.subr.mxu0 0.0
      %630 = vmatpush1.msra.mxu0 %v410
      %631 = vmatprep.subr.mxu0 0.0
      %632 = vmatpush1.msra.mxu0 %v411
      %633 = vmatprep.subr.mxu0 0.0
      %634 = vmatpush1.msra.mxu0 %v412
      %635 = vmatprep.subr.mxu0 0.0
      %636 = vmatpush1.msra.mxu0 %v413
      %637 = vmatprep.subr.mxu0 0.0
      %638 = vmatpush1.msra.mxu0 %v414
      %639 = vmatprep.subr.mxu0 0.0
      %640 = vmatpush1.msra.mxu0 %v415
      %641 = vmatprep.subr.mxu0 0.0
      %642 = vmatpush1.msra.mxu0 %v416
      %643 = vmatprep.subr.mxu0 0.0
      %644 = vmatpush1.msra.mxu0 %v417
      %645 = vmatprep.subr.mxu0 0.0
      %646 = vmatpush1.msra.mxu0 %v418
      %647 = vmatprep.subr.mxu0 0.0
      %648 = vmatpush1.msra.mxu0 %v419
      %649 = vmatprep.subr.mxu0 0.0
      %650 = vmatpush1.msra.mxu0 %v420
      %651 = vmatprep.subr.mxu0 0.0
      %652 = vmatpush1.msra.mxu0 %v421
      %653 = vmatprep.subr.mxu0 0.0
      %654 = vmatpush1.msra.mxu0 %v422
      %655 = vmatprep.subr.mxu0 0.0
      %656 = vmatpush1.msra.mxu0 %v423
      %657 = vmatprep.subr.mxu0 0.0
      %658 = vmatpush1.msra.mxu0 %v424
      %659 = vmatprep.subr.mxu0 0.0
      %660 = vmatpush1.msra.mxu0 %v425
      %661 = vmatprep.subr.mxu0 0.0
      %662 = vmatpush1.msra.mxu0 %v426
      %663 = vmatprep.mubr.f32.mxu0 %v172
      %664 = vmatmul.mubr.f32.gmra.mrb[0].mxu0 %v171
      %v665 = vpop.f32.mrb[0].mxu0
      %v666 = vadd.f32 %v500, %v665
      %v667 = vpop.f32.mrb[0].mxu0
      %668 = vmatprep.mubr.f32.mxu0 %v179
      %669 = vmatmul.mubr.f32.gmra.mrb[0].mxu0 %v178
      %v670 = vpop.f32.mrb[0].mxu0
      %v671 = vadd.f32 %v500, %v670
      %v672 = vpop.f32.mrb[0].mxu0
      %673 = vmatprep.mubr.f32.mxu0 %v186
      %674 = vmatmul.mubr.f32.gmra.mrb[0].mxu0 %v185
      %v675 = vpop.f32.mrb[0].mxu0
      %v676 = vadd.f32 %v500, %v675
      %v677 = vpop.f32.mrb[0].mxu0
      %678 = vmatprep.mubr.f32.mxu0 %v193
      %679 = vmatmul.mubr.f32.gmra.mrb[0].mxu0 %v192
      %v680 = vpop.f32.mrb[0].mxu0
      %v681 = vadd.f32 %v500, %v680
      %v682 = vpop.f32.mrb[0].mxu0
      %683 = vmatprep.mubr.f32.mxu0 %v200
      %684 = vmatmul.mubr.f32.gmra.mrb[0].mxu0 %v199
      %v685 = vpop.f32.mrb[0].mxu0
      %v686 = vadd.f32 %v500, %v685
      %v687 = vpop.f32.mrb[0].mxu0
      %688 = vmatprep.mubr.f32.mxu0 %v207
      %689 = vmatmul.mubr.f32.gmra.mrb[0].mxu0 %v206
      %v690 = vpop.f32.mrb[0].mxu0
      %v691 = vadd.f32 %v500, %v690
      %v692 = vpop.f32.mrb[0].mxu0
      %693 = vmatprep.mubr.f32.mxu0 %v214
      %694 = vmatmul.mubr.f32.gmra.mrb[0].mxu0 %v213
      %v695 = vpop.f32.mrb[0].mxu0
      %v696 = vadd.f32 %v500, %v695
      %v697 = vpop.f32.mrb[0].mxu0
      %698 = vmatprep.mubr.f32.mxu0 %v221
      %699 = vmatmul.mubr.f32.gmra.mrb[0].mxu0 %v220
      %v700 = vpop.f32.mrb[0].mxu0
      %v701 = vadd.f32 %v500, %v700
      %v702 = vpop.f32.mrb[0].mxu0
      %703 = vmatprep.mubr.f32.mxu0 %v228
      %704 = vmatmul.mubr.f32.gmra.mrb[0].mxu0 %v227
      %v705 = vpop.f32.mrb[0].mxu0
      %v706 = vadd.f32 %v500, %v705
      %v707 = vpop.f32.mrb[0].mxu0
      %708 = vmatprep.mubr.f32.mxu0 %v235
      %709 = vmatmul.mubr.f32.gmra.mrb[0].mxu0 %v234
      %v710 = vpop.f32.mrb[0].mxu0
      %v711 = vadd.f32 %v500, %v710
      %v712 = vpop.f32.mrb[0].mxu0
      %713 = vmatprep.mubr.f32.mxu0 %v242
      %714 = vmatmul.mubr.f32.gmra.mrb[0].mxu0 %v241
      %v715 = vpop.f32.mrb[0].mxu0
      %v716 = vadd.f32 %v500, %v715
      %v717 = vpop.f32.mrb[0].mxu0
      %718 = vmatprep.mubr.f32.mxu0 %v249
      %719 = vmatmul.mubr.f32.gmra.mrb[0].mxu0 %v248
      %v720 = vpop.f32.mrb[0].mxu0
      %v721 = vadd.f32 %v500, %v720
      %v722 = vpop.f32.mrb[0].mxu0
      %723 = vmatprep.mubr.f32.mxu0 %v256
      %724 = vmatmul.mubr.f32.gmra.mrb[0].mxu0 %v255
      %v725 = vpop.f32.mrb[0].mxu0
      %v726 = vadd.f32 %v500, %v725
      %v727 = vpop.f32.mrb[0].mxu0
      %728 = vmatprep.mubr.f32.mxu0 %v263
      %729 = vmatmul.mubr.f32.gmra.mrb[0].mxu0 %v262
      %v730 = vpop.f32.mrb[0].mxu0
      %v731 = vadd.f32 %v500, %v730
      %v732 = vpop.f32.mrb[0].mxu0
      %733 = vmatprep.mubr.f32.mxu0 %v270
      %734 = vmatmul.mubr.f32.gmra.mrb[0].mxu0 %v269
      %v735 = vpop.f32.mrb[0].mxu0
      %v736 = vadd.f32 %v500, %v735
      %v737 = vpop.f32.mrb[0].mxu0
      %738 = vmatprep.mubr.f32.mxu0 %v277
      %739 = vmatmul.mubr.f32.gmra.mrb[0].mxu0 %v276
      %v740 = vpop.f32.mrb[0].mxu0
      %v741 = vadd.f32 %v500, %v740
      %v742 = vpop.f32.mrb[0].mxu0
      %743 = vmatprep.mubr.f32.mxu0 %v284
      %744 = vmatmul.mubr.f32.gmra.mrb[0].mxu0 %v283
      %v745 = vpop.f32.mrb[0].mxu0
      %v746 = vadd.f32 %v500, %v745
      %v747 = vpop.f32.mrb[0].mxu0
      %748 = vmatprep.mubr.f32.mxu0 %v291
      %749 = vmatmul.mubr.f32.gmra.mrb[0].mxu0 %v290
      %v750 = vpop.f32.mrb[0].mxu0
      %v751 = vadd.f32 %v500, %v750
      %v752 = vpop.f32.mrb[0].mxu0
      %753 = vmatprep.mubr.f32.mxu0 %v298
      %754 = vmatmul.mubr.f32.gmra.mrb[0].mxu0 %v297
      %v755 = vpop.f32.mrb[0].mxu0
      %v756 = vadd.f32 %v500, %v755
      %v757 = vpop.f32.mrb[0].mxu0
      %758 = vmatprep.mubr.f32.mxu0 %v305
      %759 = vmatmul.mubr.f32.gmra.mrb[0].mxu0 %v304
      %v760 = vpop.f32.mrb[0].mxu0
      %v761 = vadd.f32 %v500, %v760
      %v762 = vpop.f32.mrb[0].mxu0
      %763 = vmatprep.mubr.f32.mxu0 %v312
      %764 = vmatmul.mubr.f32.gmra.mrb[0].mxu0 %v311
      %v765 = vpop.f32.mrb[0].mxu0
      %v766 = vadd.f32 %v500, %v765
      %v767 = vpop.f32.mrb[0].mxu0
      %768 = vmatprep.mubr.f32.mxu0 %v319
      %769 = vmatmul.mubr.f32.gmra.mrb[0].mxu0 %v318
      %v770 = vpop.f32.mrb[0].mxu0
      %v771 = vadd.f32 %v500, %v770
      %v772 = vpop.f32.mrb[0].mxu0
      %773 = vmatprep.mubr.f32.mxu0 %v326
      %774 = vmatmul.mubr.f32.gmra.mrb[0].mxu0 %v325
      %v775 = vpop.f32.mrb[0].mxu0
      %v776 = vadd.f32 %v500, %v775
      %v777 = vpop.f32.mrb[0].mxu0
      %778 = vmatprep.mubr.f32.mxu0 %v333
      %779 = vmatmul.mubr.f32.gmra.mrb[0].mxu0 %v332
      %v780 = vpop.f32.mrb[0].mxu0
      %v781 = vadd.f32 %v500, %v780
      %v782 = vpop.f32.mrb[0].mxu0
      %783 = vmatprep.mubr.f32.mxu0 %v340
      %784 = vmatmul.mubr.f32.gmra.mrb[0].mxu0 %v339
      %v785 = vpop.f32.mrb[0].mxu0
      %v786 = vadd.f32 %v500, %v785
      %v787 = vpop.f32.mrb[0].mxu0
      %788 = vmatprep.mubr.f32.mxu0 %v347
      %789 = vmatmul.mubr.f32.gmra.mrb[0].mxu0 %v346
      %v790 = vpop.f32.mrb[0].mxu0
      %v791 = vadd.f32 %v500, %v790
      %v792 = vpop.f32.mrb[0].mxu0
      %793 = vmatprep.mubr.f32.mxu0 %v354
      %794 = vmatmul.mubr.f32.gmra.mrb[0].mxu0 %v353
      %v795 = vpop.f32.mrb[0].mxu0
      %v796 = vadd.f32 %v500, %v795
      %v797 = vpop.f32.mrb[0].mxu0
      %798 = vmatprep.mubr.f32.mxu0 %v361
      %799 = vmatmul.mubr.f32.gmra.mrb[0].mxu0 %v360
      %v800 = vpop.f32.mrb[0].mxu0
      %v801 = vadd.f32 %v500, %v800
      %v802 = vpop.f32.mrb[0].mxu0
      %803 = vmatprep.mubr.f32.mxu0 %v368
      %804 = vmatmul.mubr.f32.gmra.mrb[0].mxu0 %v367
      %v805 = vpop.f32.mrb[0].mxu0
      %v806 = vadd.f32 %v500, %v805
      %v807 = vpop.f32.mrb[0].mxu0
      %808 = vmatprep.mubr.f32.mxu0 %v375
      %809 = vmatmul.mubr.f32.gmra.mrb[0].mxu0 %v374
      %v810 = vpop.f32.mrb[0].mxu0
      %v811 = vadd.f32 %v500, %v810
      %v812 = vpop.f32.mrb[0].mxu0
      %813 = vmatprep.mubr.f32.mxu0 %v382
      %814 = vmatmul.mubr.f32.gmra.mrb[0].mxu0 %v381
      %v815 = vpop.f32.mrb[0].mxu0
      %v816 = vadd.f32 %v500, %v815
      %v817 = vpop.f32.mrb[0].mxu0
      %818 = vmatprep.mubr.f32.mxu0 %v389
      %819 = vmatmul.mubr.f32.gmra.mrb[0].mxu0 %v388
      %v820 = vpop.f32.mrb[0].mxu0
      %v821 = vadd.f32 %v500, %v820
      %v822 = vpop.f32.mrb[0].mxu0
      %823 = vdwg.mxu0
      %824 = vmatprep.subr.mxu0 0.0
      %825 = vmatpush1.msra.mxu0 %v427
      %826 = vmatprep.subr.mxu0 0.0
      %827 = vmatpush1.msra.mxu0 %v428
      %828 = vmatprep.subr.mxu0 0.0
      %829 = vmatpush1.msra.mxu0 %v429
      %830 = vmatprep.subr.mxu0 0.0
      %831 = vmatpush1.msra.mxu0 %v430
      %832 = vmatprep.subr.mxu0 0.0
      %833 = vmatpush1.msra.mxu0 %v431
      %834 = vmatprep.subr.mxu0 0.0
      %835 = vmatpush1.msra.mxu0 %v432
      %836 = vmatprep.subr.mxu0 0.0
      %837 = vmatpush1.msra.mxu0 %v433
      %838 = vmatprep.subr.mxu0 0.0
      %839 = vmatpush1.msra.mxu0 %v434
      %840 = vmatprep.subr.mxu0 0.0
      %841 = vmatpush1.msra.mxu0 %v435
      %842 = vmatprep.subr.mxu0 0.0
      %843 = vmatpush1.msra.mxu0 %v436
      %844 = vmatprep.subr.mxu0 0.0
      %845 = vmatpush1.msra.mxu0 %v437
      %846 = vmatprep.subr.mxu0 0.0
      %847 = vmatpush1.msra.mxu0 %v438
      %848 = vmatprep.subr.mxu0 0.0
      %849 = vmatpush1.msra.mxu0 %v439
      %850 = vmatprep.subr.mxu0 0.0
      %851 = vmatpush1.msra.mxu0 %v440
      %852 = vmatprep.subr.mxu0 0.0
      %853 = vmatpush1.msra.mxu0 %v441
      %854 = vmatprep.subr.mxu0 0.0
      %855 = vmatpush1.msra.mxu0 %v442
      %856 = vmatprep.subr.mxu0 0.0
      %857 = vmatpush1.msra.mxu0 %v443
      %858 = vmatprep.subr.mxu0 0.0
      %859 = vmatpush1.msra.mxu0 %v444
      %860 = vmatprep.subr.mxu0 0.0
      %861 = vmatpush1.msra.mxu0 %v445
      %862 = vmatprep.subr.mxu0 0.0
      %863 = vmatpush1.msra.mxu0 %v446
      %864 = vmatprep.subr.mxu0 0.0
      %865 = vmatpush1.msra.mxu0 %v447
      %866 = vmatprep.subr.mxu0 0.0
      %867 = vmatpush1.msra.mxu0 %v448
      %868 = vmatprep.subr.mxu0 0.0
      %869 = vmatpush1.msra.mxu0 %v449
      %870 = vmatprep.subr.mxu0 0.0
      %871 = vmatpush1.msra.mxu0 %v450
      %872 = vmatprep.subr.mxu0 0.0
      %873 = vmatpush1.msra.mxu0 %v451
      %874 = vmatprep.subr.mxu0 0.0
      %875 = vmatpush1.msra.mxu0 %v452
      %876 = vmatprep.subr.mxu0 0.0
      %877 = vmatpush1.msra.mxu0 %v453
      %878 = vmatprep.subr.mxu0 0.0
      %879 = vmatpush1.msra.mxu0 %v454
      %880 = vmatprep.subr.mxu0 0.0
      %881 = vmatpush1.msra.mxu0 %v455
      %882 = vmatprep.subr.mxu0 0.0
      %883 = vmatpush1.msra.mxu0 %v456
      %884 = vmatprep.subr.mxu0 0.0
      %885 = vmatpush1.msra.mxu0 %v457
      %886 = vmatprep.subr.mxu0 0.0
      %887 = vmatpush1.msra.mxu0 %v458
      %888 = vmatprep.mubr.f32.mxu0 %v174
      %889 = vmatmul.mubr.f32.gmra.mrb[0].mxu0 %v173
      %v890 = vpop.f32.mrb[0].mxu0
      %v891 = vadd.f32 %v666, %v890
      %v892 = vpop.f32.mrb[0].mxu0
      %893 = vmatprep.mubr.f32.mxu0 %v181
      %894 = vmatmul.mubr.f32.gmra.mrb[0].mxu0 %v180
      %v895 = vpop.f32.mrb[0].mxu0
      %v896 = vadd.f32 %v671, %v895
      %v897 = vpop.f32.mrb[0].mxu0
      %898 = vmatprep.mubr.f32.mxu0 %v188
      %899 = vmatmul.mubr.f32.gmra.mrb[0].mxu0 %v187
      %v900 = vpop.f32.mrb[0].mxu0
      %v901 = vadd.f32 %v676, %v900
      %v902 = vpop.f32.mrb[0].mxu0
      %903 = vmatprep.mubr.f32.mxu0 %v195
      %904 = vmatmul.mubr.f32.gmra.mrb[0].mxu0 %v194
      %v905 = vpop.f32.mrb[0].mxu0
      %v906 = vadd.f32 %v681, %v905
      %v907 = vpop.f32.mrb[0].mxu0
      %908 = vmatprep.mubr.f32.mxu0 %v202
      %909 = vmatmul.mubr.f32.gmra.mrb[0].mxu0 %v201
      %v910 = vpop.f32.mrb[0].mxu0
      %v911 = vadd.f32 %v686, %v910
      %v912 = vpop.f32.mrb[0].mxu0
      %913 = vmatprep.mubr.f32.mxu0 %v209
      %914 = vmatmul.mubr.f32.gmra.mrb[0].mxu0 %v208
      %v915 = vpop.f32.mrb[0].mxu0
      %v916 = vadd.f32 %v691, %v915
      %v917 = vpop.f32.mrb[0].mxu0
      %918 = vmatprep.mubr.f32.mxu0 %v216
      %919 = vmatmul.mubr.f32.gmra.mrb[0].mxu0 %v215
      %v920 = vpop.f32.mrb[0].mxu0
      %v921 = vadd.f32 %v696, %v920
      %v922 = vpop.f32.mrb[0].mxu0
      %923 = vmatprep.mubr.f32.mxu0 %v223
      %924 = vmatmul.mubr.f32.gmra.mrb[0].mxu0 %v222
      %v925 = vpop.f32.mrb[0].mxu0
      %v926 = vadd.f32 %v701, %v925
      %v927 = vpop.f32.mrb[0].mxu0
      %928 = vmatprep.mubr.f32.mxu0 %v230
      %929 = vmatmul.mubr.f32.gmra.mrb[0].mxu0 %v229
      %v930 = vpop.f32.mrb[0].mxu0
      %v931 = vadd.f32 %v706, %v930
      %v932 = vpop.f32.mrb[0].mxu0
      %933 = vmatprep.mubr.f32.mxu0 %v237
      %934 = vmatmul.mubr.f32.gmra.mrb[0].mxu0 %v236
      %v935 = vpop.f32.mrb[0].mxu0
      %v936 = vadd.f32 %v711, %v935
      %v937 = vpop.f32.mrb[0].mxu0
      %938 = vmatprep.mubr.f32.mxu0 %v244
      %939 = vmatmul.mubr.f32.gmra.mrb[0].mxu0 %v243
      %v940 = vpop.f32.mrb[0].mxu0
      %v941 = vadd.f32 %v716, %v940
      %v942 = vpop.f32.mrb[0].mxu0
      %943 = vmatprep.mubr.f32.mxu0 %v251
      %944 = vmatmul.mubr.f32.gmra.mrb[0].mxu0 %v250
      %v945 = vpop.f32.mrb[0].mxu0
      %v946 = vadd.f32 %v721, %v945
      %v947 = vpop.f32.mrb[0].mxu0
      %948 = vmatprep.mubr.f32.mxu0 %v258
      %949 = vmatmul.mubr.f32.gmra.mrb[0].mxu0 %v257
      %v950 = vpop.f32.mrb[0].mxu0
      %v951 = vadd.f32 %v726, %v950
      %v952 = vpop.f32.mrb[0].mxu0
      %953 = vmatprep.mubr.f32.mxu0 %v265
      %954 = vmatmul.mubr.f32.gmra.mrb[0].mxu0 %v264
      %v955 = vpop.f32.mrb[0].mxu0
      %v956 = vadd.f32 %v731, %v955
      %v957 = vpop.f32.mrb[0].mxu0
      %958 = vmatprep.mubr.f32.mxu0 %v272
      %959 = vmatmul.mubr.f32.gmra.mrb[0].mxu0 %v271
      %v960 = vpop.f32.mrb[0].mxu0
      %v961 = vadd.f32 %v736, %v960
      %v962 = vpop.f32.mrb[0].mxu0
      %963 = vmatprep.mubr.f32.mxu0 %v279
      %964 = vmatmul.mubr.f32.gmra.mrb[0].mxu0 %v278
      %v965 = vpop.f32.mrb[0].mxu0
      %v966 = vadd.f32 %v741, %v965
      %v967 = vpop.f32.mrb[0].mxu0
      %968 = vmatprep.mubr.f32.mxu0 %v286
      %969 = vmatmul.mubr.f32.gmra.mrb[0].mxu0 %v285
      %v970 = vpop.f32.mrb[0].mxu0
      %v971 = vadd.f32 %v746, %v970
      %v972 = vpop.f32.mrb[0].mxu0
      %973 = vmatprep.mubr.f32.mxu0 %v293
      %974 = vmatmul.mubr.f32.gmra.mrb[0].mxu0 %v292
      %v975 = vpop.f32.mrb[0].mxu0
      %v976 = vadd.f32 %v751, %v975
      %v977 = vpop.f32.mrb[0].mxu0
      %978 = vmatprep.mubr.f32.mxu0 %v300
      %979 = vmatmul.mubr.f32.gmra.mrb[0].mxu0 %v299
      %v980 = vpop.f32.mrb[0].mxu0
      %v981 = vadd.f32 %v756, %v980
      %v982 = vpop.f32.mrb[0].mxu0
      %983 = vmatprep.mubr.f32.mxu0 %v307
      %984 = vmatmul.mubr.f32.gmra.mrb[0].mxu0 %v306
      %v985 = vpop.f32.mrb[0].mxu0
      %v986 = vadd.f32 %v761, %v985
      %v987 = vpop.f32.mrb[0].mxu0
      %988 = vmatprep.mubr.f32.mxu0 %v314
      %989 = vmatmul.mubr.f32.gmra.mrb[0].mxu0 %v313
      %v990 = vpop.f32.mrb[0].mxu0
      %v991 = vadd.f32 %v766, %v990
      %v992 = vpop.f32.mrb[0].mxu0
      %993 = vmatprep.mubr.f32.mxu0 %v321
      %994 = vmatmul.mubr.f32.gmra.mrb[0].mxu0 %v320
      %v995 = vpop.f32.mrb[0].mxu0
      %v996 = vadd.f32 %v771, %v995
      %v997 = vpop.f32.mrb[0].mxu0
      %998 = vmatprep.mubr.f32.mxu0 %v328
      %999 = vmatmul.mubr.f32.gmra.mrb[0].mxu0 %v327
      %v1000 = vpop.f32.mrb[0].mxu0
      %v1001 = vadd.f32 %v776, %v1000
      %v1002 = vpop.f32.mrb[0].mxu0
      %1003 = vmatprep.mubr.f32.mxu0 %v335
      %1004 = vmatmul.mubr.f32.gmra.mrb[0].mxu0 %v334
      %v1005 = vpop.f32.mrb[0].mxu0
      %v1006 = vadd.f32 %v781, %v1005
      %v1007 = vpop.f32.mrb[0].mxu0
      %1008 = vmatprep.mubr.f32.mxu0 %v342
      %1009 = vmatmul.mubr.f32.gmra.mrb[0].mxu0 %v341
      %v1010 = vpop.f32.mrb[0].mxu0
      %v1011 = vadd.f32 %v786, %v1010
      %v1012 = vpop.f32.mrb[0].mxu0
      %1013 = vmatprep.mubr.f32.mxu0 %v349
      %1014 = vmatmul.mubr.f32.gmra.mrb[0].mxu0 %v348
      %v1015 = vpop.f32.mrb[0].mxu0
      %v1016 = vadd.f32 %v791, %v1015
      %v1017 = vpop.f32.mrb[0].mxu0
      %1018 = vmatprep.mubr.f32.mxu0 %v356
      %1019 = vmatmul.mubr.f32.gmra.mrb[0].mxu0 %v355
      %v1020 = vpop.f32.mrb[0].mxu0
      %v1021 = vadd.f32 %v796, %v1020
      %v1022 = vpop.f32.mrb[0].mxu0
      %1023 = vmatprep.mubr.f32.mxu0 %v363
      %1024 = vmatmul.mubr.f32.gmra.mrb[0].mxu0 %v362
      %v1025 = vpop.f32.mrb[0].mxu0
      %v1026 = vadd.f32 %v801, %v1025
      %v1027 = vpop.f32.mrb[0].mxu0
      %1028 = vmatprep.mubr.f32.mxu0 %v370
      %1029 = vmatmul.mubr.f32.gmra.mrb[0].mxu0 %v369
      %v1030 = vpop.f32.mrb[0].mxu0
      %v1031 = vadd.f32 %v806, %v1030
      %v1032 = vpop.f32.mrb[0].mxu0
      %1033 = vmatprep.mubr.f32.mxu0 %v377
      %1034 = vmatmul.mubr.f32.gmra.mrb[0].mxu0 %v376
      %v1035 = vpop.f32.mrb[0].mxu0
      %v1036 = vadd.f32 %v811, %v1035
      %v1037 = vpop.f32.mrb[0].mxu0
      %1038 = vmatprep.mubr.f32.mxu0 %v384
      %1039 = vmatmul.mubr.f32.gmra.mrb[0].mxu0 %v383
      %v1040 = vpop.f32.mrb[0].mxu0
      %v1041 = vadd.f32 %v816, %v1040
      %v1042 = vpop.f32.mrb[0].mxu0
      %1043 = vmatprep.mubr.f32.mxu0 %v391
      %1044 = vmatmul.mubr.f32.gmra.mrb[0].mxu0 %v390
      %v1045 = vpop.f32.mrb[0].mxu0
      %v1046 = vadd.f32 %v821, %v1045
      %v1047 = vpop.f32.mrb[0].mxu0
      %1048 = vdwg.mxu0
      %1049 = vmatprep.subr.mxu0 0.0
      %1050 = vmatpush1.msra.mxu0 %v459
      %1051 = vmatprep.subr.mxu0 0.0
      %1052 = vmatpush1.msra.mxu0 %v460
      %1053 = vmatprep.subr.mxu0 0.0
      %1054 = vmatpush1.msra.mxu0 %v461
      %1055 = vmatprep.subr.mxu0 0.0
      %1056 = vmatpush1.msra.mxu0 %v462
      %1057 = vmatprep.subr.mxu0 0.0
      %1058 = vmatpush1.msra.mxu0 %v463
      %1059 = vmatprep.subr.mxu0 0.0
      %1060 = vmatpush1.msra.mxu0 %v464
      %1061 = vmatprep.subr.mxu0 0.0
      %1062 = vmatpush1.msra.mxu0 %v465
      %1063 = vmatprep.subr.mxu0 0.0
      %1064 = vmatpush1.msra.mxu0 %v466
      %1065 = vmatprep.subr.mxu0 0.0
      %1066 = vmatpush1.msra.mxu0 %v467
      %1067 = vmatprep.subr.mxu0 0.0
      %1068 = vmatpush1.msra.mxu0 %v468
      %1069 = vmatprep.subr.mxu0 0.0
      %1070 = vmatpush1.msra.mxu0 %v469
      %1071 = vmatprep.subr.mxu0 0.0
      %1072 = vmatpush1.msra.mxu0 %v470
      %1073 = vmatprep.subr.mxu0 0.0
      %1074 = vmatpush1.msra.mxu0 %v471
      %1075 = vmatprep.subr.mxu0 0.0
      %1076 = vmatpush1.msra.mxu0 %v472
      %1077 = vmatprep.subr.mxu0 0.0
      %1078 = vmatpush1.msra.mxu0 %v473
      %1079 = vmatprep.subr.mxu0 0.0
      %1080 = vmatpush1.msra.mxu0 %v474
      %1081 = vmatprep.subr.mxu0 0.0
      %1082 = vmatpush1.msra.mxu0 %v475
      %1083 = vmatprep.subr.mxu0 0.0
      %1084 = vmatpush1.msra.mxu0 %v476
      %1085 = vmatprep.subr.mxu0 0.0
      %1086 = vmatpush1.msra.mxu0 %v477
      %1087 = vmatprep.subr.mxu0 0.0
      %1088 = vmatpush1.msra.mxu0 %v478
      %1089 = vmatprep.subr.mxu0 0.0
      %1090 = vmatpush1.msra.mxu0 %v479
      %1091 = vmatprep.subr.mxu0 0.0
      %1092 = vmatpush1.msra.mxu0 %v480
      %1093 = vmatprep.subr.mxu0 0.0
      %1094 = vmatpush1.msra.mxu0 %v481
      %1095 = vmatprep.subr.mxu0 0.0
      %1096 = vmatpush1.msra.mxu0 %v482
      %1097 = vmatprep.subr.mxu0 0.0
      %1098 = vmatpush1.msra.mxu0 %v483
      %1099 = vmatprep.subr.mxu0 0.0
      %1100 = vmatpush1.msra.mxu0 %v484
      %1101 = vmatprep.subr.mxu0 0.0
      %1102 = vmatpush1.msra.mxu0 %v485
      %1103 = vmatprep.subr.mxu0 0.0
      %1104 = vmatpush1.msra.mxu0 %v486
      %1105 = vmatprep.subr.mxu0 0.0
      %1106 = vmatpush1.msra.mxu0 %v487
      %1107 = vmatprep.subr.mxu0 0.0
      %1108 = vmatpush1.msra.mxu0 %v488
      %1109 = vmatprep.subr.mxu0 0.0
      %1110 = vmatpush1.msra.mxu0 %v489
      %1111 = vmatprep.subr.mxu0 0.0
      %1112 = vmatpush1.msra.mxu0 %v490
      %1113 = vmatprep.mubr.f32.mxu0 %v176
      %1114 = vmatmul.mubr.f32.gmra.mrb[0].mxu0 %v175
      %v1115 = vpop.f32.mrb[0].mxu0
      %v1116 = vadd.f32 %v891, %v1115
      %v1117 = vpop.f32.mrb[0].mxu0
      %1118 = vmatprep.mubr.f32.mxu0 %v183
      %1119 = vmatmul.mubr.f32.gmra.mrb[0].mxu0 %v182
      %v1120 = vpop.f32.mrb[0].mxu0
      %v1121 = vadd.f32 %v896, %v1120
      %v1122 = vpop.f32.mrb[0].mxu0
      %1123 = vmatprep.mubr.f32.mxu0 %v190
      %1124 = vmatmul.mubr.f32.gmra.mrb[0].mxu0 %v189
      %v1125 = vpop.f32.mrb[0].mxu0
      %v1126 = vadd.f32 %v901, %v1125
      %v1127 = vpop.f32.mrb[0].mxu0
      %1128 = vmatprep.mubr.f32.mxu0 %v197
      %1129 = vmatmul.mubr.f32.gmra.mrb[0].mxu0 %v196
      %v1130 = vpop.f32.mrb[0].mxu0
      %v1131 = vadd.f32 %v906, %v1130
      %v1132 = vpop.f32.mrb[0].mxu0
      %1133 = vmatprep.mubr.f32.mxu0 %v204
      %1134 = vmatmul.mubr.f32.gmra.mrb[0].mxu0 %v203
      %v1135 = vpop.f32.mrb[0].mxu0
      %v1136 = vadd.f32 %v911, %v1135
      %v1137 = vpop.f32.mrb[0].mxu0
      %1138 = vmatprep.mubr.f32.mxu0 %v211
      %1139 = vmatmul.mubr.f32.gmra.mrb[0].mxu0 %v210
      %v1140 = vpop.f32.mrb[0].mxu0
      %v1141 = vadd.f32 %v916, %v1140
      %v1142 = vpop.f32.mrb[0].mxu0
      %1143 = vmatprep.mubr.f32.mxu0 %v218
      %1144 = vmatmul.mubr.f32.gmra.mrb[0].mxu0 %v217
      %v1145 = vpop.f32.mrb[0].mxu0
      %v1146 = vadd.f32 %v921, %v1145
      %v1147 = vpop.f32.mrb[0].mxu0
      %1148 = vmatprep.mubr.f32.mxu0 %v225
      %1149 = vmatmul.mubr.f32.gmra.mrb[0].mxu0 %v224
      %v1150 = vpop.f32.mrb[0].mxu0
      %v1151 = vadd.f32 %v926, %v1150
      %v1152 = vpop.f32.mrb[0].mxu0
      %1153 = vmatprep.mubr.f32.mxu0 %v232
      %1154 = vmatmul.mubr.f32.gmra.mrb[0].mxu0 %v231
      %v1155 = vpop.f32.mrb[0].mxu0
      %v1156 = vadd.f32 %v931, %v1155
      %v1157 = vpop.f32.mrb[0].mxu0
      %1158 = vmatprep.mubr.f32.mxu0 %v239
      %1159 = vmatmul.mubr.f32.gmra.mrb[0].mxu0 %v238
      %v1160 = vpop.f32.mrb[0].mxu0
      %v1161 = vadd.f32 %v936, %v1160
      %v1162 = vpop.f32.mrb[0].mxu0
      %1163 = vmatprep.mubr.f32.mxu0 %v246
      %1164 = vmatmul.mubr.f32.gmra.mrb[0].mxu0 %v245
      %v1165 = vpop.f32.mrb[0].mxu0
      %v1166 = vadd.f32 %v941, %v1165
      %v1167 = vpop.f32.mrb[0].mxu0
      %1168 = vmatprep.mubr.f32.mxu0 %v253
      %1169 = vmatmul.mubr.f32.gmra.mrb[0].mxu0 %v252
      %v1170 = vpop.f32.mrb[0].mxu0
      %v1171 = vadd.f32 %v946, %v1170
      %v1172 = vpop.f32.mrb[0].mxu0
      %1173 = vmatprep.mubr.f32.mxu0 %v260
      %1174 = vmatmul.mubr.f32.gmra.mrb[0].mxu0 %v259
      %v1175 = vpop.f32.mrb[0].mxu0
      %v1176 = vadd.f32 %v951, %v1175
      %v1177 = vpop.f32.mrb[0].mxu0
      %1178 = vmatprep.mubr.f32.mxu0 %v267
      %1179 = vmatmul.mubr.f32.gmra.mrb[0].mxu0 %v266
      %v1180 = vpop.f32.mrb[0].mxu0
      %v1181 = vadd.f32 %v956, %v1180
      %v1182 = vpop.f32.mrb[0].mxu0
      %1183 = vmatprep.mubr.f32.mxu0 %v274
      %1184 = vmatmul.mubr.f32.gmra.mrb[0].mxu0 %v273
      %v1185 = vpop.f32.mrb[0].mxu0
      %v1186 = vadd.f32 %v961, %v1185
      %v1187 = vpop.f32.mrb[0].mxu0
      %1188 = vmatprep.mubr.f32.mxu0 %v281
      %1189 = vmatmul.mubr.f32.gmra.mrb[0].mxu0 %v280
      %v1190 = vpop.f32.mrb[0].mxu0
      %v1191 = vadd.f32 %v966, %v1190
      %v1192 = vpop.f32.mrb[0].mxu0
      %1193 = vmatprep.mubr.f32.mxu0 %v288
      %1194 = vmatmul.mubr.f32.gmra.mrb[0].mxu0 %v287
      %v1195 = vpop.f32.mrb[0].mxu0
      %v1196 = vadd.f32 %v971, %v1195
      %v1197 = vpop.f32.mrb[0].mxu0
      %1198 = vmatprep.mubr.f32.mxu0 %v295
      %1199 = vmatmul.mubr.f32.gmra.mrb[0].mxu0 %v294
      %v1200 = vpop.f32.mrb[0].mxu0
      %v1201 = vadd.f32 %v976, %v1200
      %v1202 = vpop.f32.mrb[0].mxu0
      %1203 = vmatprep.mubr.f32.mxu0 %v302
      %1204 = vmatmul.mubr.f32.gmra.mrb[0].mxu0 %v301
      %v1205 = vpop.f32.mrb[0].mxu0
      %v1206 = vadd.f32 %v981, %v1205
      %v1207 = vpop.f32.mrb[0].mxu0
      %1208 = vmatprep.mubr.f32.mxu0 %v309
      %1209 = vmatmul.mubr.f32.gmra.mrb[0].mxu0 %v308
      %v1210 = vpop.f32.mrb[0].mxu0
      %v1211 = vadd.f32 %v986, %v1210
      %v1212 = vpop.f32.mrb[0].mxu0
      %1213 = vmatprep.mubr.f32.mxu0 %v316
      %1214 = vmatmul.mubr.f32.gmra.mrb[0].mxu0 %v315
      %v1215 = vpop.f32.mrb[0].mxu0
      %v1216 = vadd.f32 %v991, %v1215
      %v1217 = vpop.f32.mrb[0].mxu0
      %1218 = vmatprep.mubr.f32.mxu0 %v323
      %1219 = vmatmul.mubr.f32.gmra.mrb[0].mxu0 %v322
      %v1220 = vpop.f32.mrb[0].mxu0
      %v1221 = vadd.f32 %v996, %v1220
      %v1222 = vpop.f32.mrb[0].mxu0
      %1223 = vmatprep.mubr.f32.mxu0 %v330
      %1224 = vmatmul.mubr.f32.gmra.mrb[0].mxu0 %v329
      %v1225 = vpop.f32.mrb[0].mxu0
      %v1226 = vadd.f32 %v1001, %v1225
      %v1227 = vpop.f32.mrb[0].mxu0
      %1228 = vmatprep.mubr.f32.mxu0 %v337
      %1229 = vmatmul.mubr.f32.gmra.mrb[0].mxu0 %v336
      %v1230 = vpop.f32.mrb[0].mxu0
      %v1231 = vadd.f32 %v1006, %v1230
      %v1232 = vpop.f32.mrb[0].mxu0
      %1233 = vmatprep.mubr.f32.mxu0 %v344
      %1234 = vmatmul.mubr.f32.gmra.mrb[0].mxu0 %v343
      %v1235 = vpop.f32.mrb[0].mxu0
      %v1236 = vadd.f32 %v1011, %v1235
      %v1237 = vpop.f32.mrb[0].mxu0
      %1238 = vmatprep.mubr.f32.mxu0 %v351
      %1239 = vmatmul.mubr.f32.gmra.mrb[0].mxu0 %v350
      %v1240 = vpop.f32.mrb[0].mxu0
      %v1241 = vadd.f32 %v1016, %v1240
      %v1242 = vpop.f32.mrb[0].mxu0
      %1243 = vmatprep.mubr.f32.mxu0 %v358
      %1244 = vmatmul.mubr.f32.gmra.mrb[0].mxu0 %v357
      %v1245 = vpop.f32.mrb[0].mxu0
      %v1246 = vadd.f32 %v1021, %v1245
      %v1247 = vpop.f32.mrb[0].mxu0
      %1248 = vmatprep.mubr.f32.mxu0 %v365
      %1249 = vmatmul.mubr.f32.gmra.mrb[0].mxu0 %v364
      %v1250 = vpop.f32.mrb[0].mxu0
      %v1251 = vadd.f32 %v1026, %v1250
      %v1252 = vpop.f32.mrb[0].mxu0
      %1253 = vmatprep.mubr.f32.mxu0 %v372
      %1254 = vmatmul.mubr.f32.gmra.mrb[0].mxu0 %v371
      %v1255 = vpop.f32.mrb[0].mxu0
      %v1256 = vadd.f32 %v1031, %v1255
      %v1257 = vpop.f32.mrb[0].mxu0
      %1258 = vmatprep.mubr.f32.mxu0 %v379
      %1259 = vmatmul.mubr.f32.gmra.mrb[0].mxu0 %v378
      %v1260 = vpop.f32.mrb[0].mxu0
      %v1261 = vadd.f32 %v1036, %v1260
      %v1262 = vpop.f32.mrb[0].mxu0
      %1263 = vmatprep.mubr.f32.mxu0 %v386
      %1264 = vmatmul.mubr.f32.gmra.mrb[0].mxu0 %v385
      %v1265 = vpop.f32.mrb[0].mxu0
      %v1266 = vadd.f32 %v1041, %v1265
      %v1267 = vpop.f32.mrb[0].mxu0
      %1268 = vmatprep.mubr.f32.mxu0 %v393
      %1269 = vmatmul.mubr.f32.gmra.mrb[0].mxu0 %v392
      %v1270 = vpop.f32.mrb[0].mxu0
      %v1271 = vadd.f32 %v1046, %v1270
      %v1272 = vpop.f32.mrb[0].mxu0
      %1273 = vdwg.mxu0
      %1274 = vmatprep.subr.mxu0 0.0
      %1275 = vmatpush1.msra.mxu0 %v491
      %1276 = vmatprep.subr.mxu0 0.0
      %1277 = vmatpush1.msra.mxu0 %v492
      %1278 = vmatprep.subr.mxu0 0.0
      %1279 = vmatpush1.msra.mxu0 %v493
      %1280 = vmatprep.subr.mxu0 0.0
      %1281 = vmatpush1.msra.mxu0 %v494
      %1282 = vmatprep.subr.mxu0 0.0
      %1283 = vmatpush1.msra.mxu0 0.0
      %1284 = vmatprep.subr.mxu0 0.0
      %1285 = vmatpush1.msra.mxu0 0.0
      %1286 = vmatprep.subr.mxu0 0.0
      %1287 = vmatpush1.msra.mxu0 0.0
      %1288 = vmatprep.subr.mxu0 0.0
      %1289 = vmatpush1.msra.mxu0 0.0
      %1290 = vmatprep.subr.mxu0 0.0
      %1291 = vmatpush1.msra.mxu0 0.0
      %1292 = vmatprep.subr.mxu0 0.0
      %1293 = vmatpush1.msra.mxu0 0.0
      %1294 = vmatprep.subr.mxu0 0.0
      %1295 = vmatpush1.msra.mxu0 0.0
      %1296 = vmatprep.subr.mxu0 0.0
      %1297 = vmatpush1.msra.mxu0 0.0
      %1298 = vmatprep.subr.mxu0 0.0
      %1299 = vmatpush1.msra.mxu0 0.0
      %1300 = vmatprep.subr.mxu0 0.0
      %1301 = vmatpush1.msra.mxu0 0.0
      %1302 = vmatprep.subr.mxu0 0.0
      %1303 = vmatpush1.msra.mxu0 0.0
      %1304 = vmatprep.subr.mxu0 0.0
      %1305 = vmatpush1.msra.mxu0 0.0
      %1306 = vmatprep.subr.mxu0 0.0
      %1307 = vmatpush1.msra.mxu0 0.0
      %1308 = vmatprep.subr.mxu0 0.0
      %1309 = vmatpush1.msra.mxu0 0.0
      %1310 = vmatprep.subr.mxu0 0.0
      %1311 = vmatpush1.msra.mxu0 0.0
      %1312 = vmatprep.subr.mxu0 0.0
      %1313 = vmatpush1.msra.mxu0 0.0
      %1314 = vmatprep.subr.mxu0 0.0
      %1315 = vmatpush1.msra.mxu0 0.0
      %1316 = vmatprep.subr.mxu0 0.0
      %1317 = vmatpush1.msra.mxu0 0.0
      %1318 = vmatprep.subr.mxu0 0.0
      %1319 = vmatpush1.msra.mxu0 0.0
      %1320 = vmatprep.subr.mxu0 0.0
      %1321 = vmatpush1.msra.mxu0 0.0
      %1322 = vmatprep.subr.mxu0 0.0
      %1323 = vmatpush1.msra.mxu0 0.0
      %1324 = vmatprep.subr.mxu0 0.0
      %1325 = vmatpush1.msra.mxu0 0.0
      %1326 = vmatprep.subr.mxu0 0.0
      %1327 = vmatpush1.msra.mxu0 0.0
      %1328 = vmatprep.subr.mxu0 0.0
      %1329 = vmatpush1.msra.mxu0 0.0
      %1330 = vmatprep.subr.mxu0 0.0
      %1331 = vmatpush1.msra.mxu0 0.0
      %1332 = vmatprep.subr.mxu0 0.0
      %1333 = vmatpush1.msra.mxu0 0.0
      %1334 = vmatprep.subr.mxu0 0.0
      %1335 = vmatpush1.msra.mxu0 0.0
      %1336 = vmatprep.subr.mxu0 0.0
      %1337 = vmatpush1.msra.mxu0 0.0
      %1338 = vmatprep.mubr.f32.mxu0 0.0
      %1339 = vmatmul.mubr.f32.gmra.mrb[0].mxu0 %v504
      %v1340 = vpop.f32.mrb[0].mxu0
      %v1341 = vadd.f32 %v1116, %v1340
      %v1342 = vpop.f32.mrb[0].mxu0
      %1343 = vmatprep.mubr.f32.mxu0 0.0
      %1344 = vmatmul.mubr.f32.gmra.mrb[0].mxu0 %v507
      %v1345 = vpop.f32.mrb[0].mxu0
      %v1346 = vadd.f32 %v1121, %v1345
      %v1347 = vpop.f32.mrb[0].mxu0
      %1348 = vmatprep.mubr.f32.mxu0 0.0
      %1349 = vmatmul.mubr.f32.gmra.mrb[0].mxu0 %v510
      %v1350 = vpop.f32.mrb[0].mxu0
      %v1351 = vadd.f32 %v1126, %v1350
      %v1352 = vpop.f32.mrb[0].mxu0
      %1353 = vmatprep.mubr.f32.mxu0 0.0
      %1354 = vmatmul.mubr.f32.gmra.mrb[0].mxu0 %v513
      %v1355 = vpop.f32.mrb[0].mxu0
      %v1356 = vadd.f32 %v1131, %v1355
      %v1357 = vpop.f32.mrb[0].mxu0
      %1358 = vmatprep.mubr.f32.mxu0 0.0
      %1359 = vmatmul.mubr.f32.gmra.mrb[0].mxu0 %v516
      %v1360 = vpop.f32.mrb[0].mxu0
      %v1361 = vadd.f32 %v1136, %v1360
      %v1362 = vpop.f32.mrb[0].mxu0
      %1363 = vmatprep.mubr.f32.mxu0 0.0
      %1364 = vmatmul.mubr.f32.gmra.mrb[0].mxu0 %v519
      %v1365 = vpop.f32.mrb[0].mxu0
      %v1366 = vadd.f32 %v1141, %v1365
      %v1367 = vpop.f32.mrb[0].mxu0
      %1368 = vmatprep.mubr.f32.mxu0 0.0
      %1369 = vmatmul.mubr.f32.gmra.mrb[0].mxu0 %v522
      %v1370 = vpop.f32.mrb[0].mxu0
      %v1371 = vadd.f32 %v1146, %v1370
      %v1372 = vpop.f32.mrb[0].mxu0
      %1373 = vmatprep.mubr.f32.mxu0 0.0
      %1374 = vmatmul.mubr.f32.gmra.mrb[0].mxu0 %v525
      %v1375 = vpop.f32.mrb[0].mxu0
      %v1376 = vadd.f32 %v1151, %v1375
      %v1377 = vpop.f32.mrb[0].mxu0
      %1378 = vmatprep.mubr.f32.mxu0 0.0
      %1379 = vmatmul.mubr.f32.gmra.mrb[0].mxu0 %v528
      %v1380 = vpop.f32.mrb[0].mxu0
      %v1381 = vadd.f32 %v1156, %v1380
      %v1382 = vpop.f32.mrb[0].mxu0
      %1383 = vmatprep.mubr.f32.mxu0 0.0
      %1384 = vmatmul.mubr.f32.gmra.mrb[0].mxu0 %v531
      %v1385 = vpop.f32.mrb[0].mxu0
      %v1386 = vadd.f32 %v1161, %v1385
      %v1387 = vpop.f32.mrb[0].mxu0
      %1388 = vmatprep.mubr.f32.mxu0 0.0
      %1389 = vmatmul.mubr.f32.gmra.mrb[0].mxu0 %v534
      %v1390 = vpop.f32.mrb[0].mxu0
      %v1391 = vadd.f32 %v1166, %v1390
      %v1392 = vpop.f32.mrb[0].mxu0
      %1393 = vmatprep.mubr.f32.mxu0 0.0
      %1394 = vmatmul.mubr.f32.gmra.mrb[0].mxu0 %v537
      %v1395 = vpop.f32.mrb[0].mxu0
      %v1396 = vadd.f32 %v1171, %v1395
      %v1397 = vpop.f32.mrb[0].mxu0
      %1398 = vmatprep.mubr.f32.mxu0 0.0
      %1399 = vmatmul.mubr.f32.gmra.mrb[0].mxu0 %v540
      %v1400 = vpop.f32.mrb[0].mxu0
      %v1401 = vadd.f32 %v1176, %v1400
      %v1402 = vpop.f32.mrb[0].mxu0
      %1403 = vmatprep.mubr.f32.mxu0 0.0
      %1404 = vmatmul.mubr.f32.gmra.mrb[0].mxu0 %v543
      %v1405 = vpop.f32.mrb[0].mxu0
      %v1406 = vadd.f32 %v1181, %v1405
      %v1407 = vpop.f32.mrb[0].mxu0
      %1408 = vmatprep.mubr.f32.mxu0 0.0
      %1409 = vmatmul.mubr.f32.gmra.mrb[0].mxu0 %v546
      %v1410 = vpop.f32.mrb[0].mxu0
      %v1411 = vadd.f32 %v1186, %v1410
      %v1412 = vpop.f32.mrb[0].mxu0
      %1413 = vmatprep.mubr.f32.mxu0 0.0
      %1414 = vmatmul.mubr.f32.gmra.mrb[0].mxu0 %v549
      %v1415 = vpop.f32.mrb[0].mxu0
      %v1416 = vadd.f32 %v1191, %v1415
      %v1417 = vpop.f32.mrb[0].mxu0
      %1418 = vmatprep.mubr.f32.mxu0 0.0
      %1419 = vmatmul.mubr.f32.gmra.mrb[0].mxu0 %v552
      %v1420 = vpop.f32.mrb[0].mxu0
      %v1421 = vadd.f32 %v1196, %v1420
      %v1422 = vpop.f32.mrb[0].mxu0
      %1423 = vmatprep.mubr.f32.mxu0 0.0
      %1424 = vmatmul.mubr.f32.gmra.mrb[0].mxu0 %v555
      %v1425 = vpop.f32.mrb[0].mxu0
      %v1426 = vadd.f32 %v1201, %v1425
      %v1427 = vpop.f32.mrb[0].mxu0
      %1428 = vmatprep.mubr.f32.mxu0 0.0
      %1429 = vmatmul.mubr.f32.gmra.mrb[0].mxu0 %v558
      %v1430 = vpop.f32.mrb[0].mxu0
      %v1431 = vadd.f32 %v1206, %v1430
      %v1432 = vpop.f32.mrb[0].mxu0
      %1433 = vmatprep.mubr.f32.mxu0 0.0
      %1434 = vmatmul.mubr.f32.gmra.mrb[0].mxu0 %v561
      %v1435 = vpop.f32.mrb[0].mxu0
      %v1436 = vadd.f32 %v1211, %v1435
      %v1437 = vpop.f32.mrb[0].mxu0
      %1438 = vmatprep.mubr.f32.mxu0 0.0
      %1439 = vmatmul.mubr.f32.gmra.mrb[0].mxu0 %v564
      %v1440 = vpop.f32.mrb[0].mxu0
      %v1441 = vadd.f32 %v1216, %v1440
      %v1442 = vpop.f32.mrb[0].mxu0
      %1443 = vmatprep.mubr.f32.mxu0 0.0
      %1444 = vmatmul.mubr.f32.gmra.mrb[0].mxu0 %v567
      %v1445 = vpop.f32.mrb[0].mxu0
      %v1446 = vadd.f32 %v1221, %v1445
      %v1447 = vpop.f32.mrb[0].mxu0
      %1448 = vmatprep.mubr.f32.mxu0 0.0
      %1449 = vmatmul.mubr.f32.gmra.mrb[0].mxu0 %v570
      %v1450 = vpop.f32.mrb[0].mxu0
      %v1451 = vadd.f32 %v1226, %v1450
      %v1452 = vpop.f32.mrb[0].mxu0
      %1453 = vmatprep.mubr.f32.mxu0 0.0
      %1454 = vmatmul.mubr.f32.gmra.mrb[0].mxu0 %v573
      %v1455 = vpop.f32.mrb[0].mxu0
      %v1456 = vadd.f32 %v1231, %v1455
      %v1457 = vpop.f32.mrb[0].mxu0
      %1458 = vmatprep.mubr.f32.mxu0 0.0
      %1459 = vmatmul.mubr.f32.gmra.mrb[0].mxu0 %v576
      %v1460 = vpop.f32.mrb[0].mxu0
      %v1461 = vadd.f32 %v1236, %v1460
      %v1462 = vpop.f32.mrb[0].mxu0
      %1463 = vmatprep.mubr.f32.mxu0 0.0
      %1464 = vmatmul.mubr.f32.gmra.mrb[0].mxu0 %v579
      %v1465 = vpop.f32.mrb[0].mxu0
      %v1466 = vadd.f32 %v1241, %v1465
      %v1467 = vpop.f32.mrb[0].mxu0
      %1468 = vmatprep.mubr.f32.mxu0 0.0
      %1469 = vmatmul.mubr.f32.gmra.mrb[0].mxu0 %v582
      %v1470 = vpop.f32.mrb[0].mxu0
      %v1471 = vadd.f32 %v1246, %v1470
      %v1472 = vpop.f32.mrb[0].mxu0
      %1473 = vmatprep.mubr.f32.mxu0 0.0
      %1474 = vmatmul.mubr.f32.gmra.mrb[0].mxu0 %v585
      %v1475 = vpop.f32.mrb[0].mxu0
      %v1476 = vadd.f32 %v1251, %v1475
      %v1477 = vpop.f32.mrb[0].mxu0
      %1478 = vmatprep.mubr.f32.mxu0 0.0
      %1479 = vmatmul.mubr.f32.gmra.mrb[0].mxu0 %v588
      %v1480 = vpop.f32.mrb[0].mxu0
      %v1481 = vadd.f32 %v1256, %v1480
      %v1482 = vpop.f32.mrb[0].mxu0
      %1483 = vmatprep.mubr.f32.mxu0 0.0
      %1484 = vmatmul.mubr.f32.gmra.mrb[0].mxu0 %v591
      %v1485 = vpop.f32.mrb[0].mxu0
      %v1486 = vadd.f32 %v1261, %v1485
      %v1487 = vpop.f32.mrb[0].mxu0
      %1488 = vmatprep.mubr.f32.mxu0 0.0
      %1489 = vmatmul.mubr.f32.gmra.mrb[0].mxu0 %v594
      %v1490 = vpop.f32.mrb[0].mxu0
      %v1491 = vadd.f32 %v1266, %v1490
      %v1492 = vpop.f32.mrb[0].mxu0
      %1493 = vmatprep.mubr.f32.mxu0 0.0
      %1494 = vmatmul.mubr.f32.gmra.mrb[0].mxu0 %v597
      %v1495 = vpop.f32.mrb[0].mxu0
      %v1496 = vadd.f32 %v1271, %v1495
      %v1497 = vpop.f32.mrb[0].mxu0
      %1498 = vdwg.mxu0
      %v1499 = vxor.u32 %v1341, 2147483648
      %v1500 = vxor.u32 %v1346, 2147483648
      %v1501 = vxor.u32 %v1351, 2147483648
      %v1502 = vxor.u32 %v1356, 2147483648
      %v1503 = vxor.u32 %v1361, 2147483648
      %v1504 = vxor.u32 %v1366, 2147483648
      %v1505 = vxor.u32 %v1371, 2147483648
      %v1506 = vxor.u32 %v1376, 2147483648
      %v1507 = vxor.u32 %v1381, 2147483648
      %v1508 = vxor.u32 %v1386, 2147483648
      %v1509 = vxor.u32 %v1391, 2147483648
      %v1510 = vxor.u32 %v1396, 2147483648
      %v1511 = vxor.u32 %v1401, 2147483648
      %v1512 = vxor.u32 %v1406, 2147483648
      %v1513 = vxor.u32 %v1411, 2147483648
      %v1514 = vxor.u32 %v1416, 2147483648
      %v1515 = vxor.u32 %v1421, 2147483648
      %v1516 = vxor.u32 %v1426, 2147483648
      %v1517 = vxor.u32 %v1431, 2147483648
      %v1518 = vxor.u32 %v1436, 2147483648
      %v1519 = vxor.u32 %v1441, 2147483648
      %v1520 = vxor.u32 %v1446, 2147483648
      %v1521 = vxor.u32 %v1451, 2147483648
      %v1522 = vxor.u32 %v1456, 2147483648
      %v1523 = vxor.u32 %v1461, 2147483648
      %v1524 = vxor.u32 %v1466, 2147483648
      %v1525 = vxor.u32 %v1471, 2147483648
      %v1526 = vxor.u32 %v1476, 2147483648
      %v1527 = vxor.u32 %v1481, 2147483648
      %v1528 = vxor.u32 %v1486, 2147483648
      %v1529 = vxor.u32 %v1491, 2147483648
      %v1530 = vxor.u32 %v1496, 2147483648
      %v1531 = vmul.f32 %v1499, 1.442695
      %v1532 = vpow.pop %v1531
      %v1533 = vmul.f32 %v1500, 1.442695
      %v1534 = vpow.pop %v1533
      %v1535 = vmul.f32 %v1501, 1.442695
      %v1536 = vpow.pop %v1535
      %v1537 = vmul.f32 %v1502, 1.442695
      %v1538 = vpow.pop %v1537
      %v1539 = vmul.f32 %v1503, 1.442695
      %v1540 = vpow.pop %v1539
      %v1541 = vmul.f32 %v1504, 1.442695
      %v1542 = vpow.pop %v1541
      %v1543 = vmul.f32 %v1505, 1.442695
      %v1544 = vpow.pop %v1543
      %v1545 = vmul.f32 %v1506, 1.442695
      %v1546 = vpow.pop %v1545
      %v1547 = vmul.f32 %v1507, 1.442695
      %v1548 = vpow.pop %v1547
      %v1549 = vmul.f32 %v1508, 1.442695
      %v1550 = vpow.pop %v1549
      %v1551 = vmul.f32 %v1509, 1.442695
      %v1552 = vpow.pop %v1551
      %v1553 = vmul.f32 %v1510, 1.442695
      %v1554 = vpow.pop %v1553
      %v1555 = vmul.f32 %v1511, 1.442695
      %v1556 = vpow.pop %v1555
      %v1557 = vmul.f32 %v1512, 1.442695
      %v1558 = vpow.pop %v1557
      %v1559 = vmul.f32 %v1513, 1.442695
      %v1560 = vpow.pop %v1559
      %v1561 = vmul.f32 %v1514, 1.442695
      %v1562 = vpow.pop %v1561
      %v1563 = vmul.f32 %v1515, 1.442695
      %v1564 = vpow.pop %v1563
      %v1565 = vmul.f32 %v1516, 1.442695
      %v1566 = vpow.pop %v1565
      %v1567 = vmul.f32 %v1517, 1.442695
      %v1568 = vpow.pop %v1567
      %v1569 = vmul.f32 %v1518, 1.442695
      %v1570 = vpow.pop %v1569
      %v1571 = vmul.f32 %v1519, 1.442695
      %v1572 = vpow.pop %v1571
      %v1573 = vmul.f32 %v1520, 1.442695
      %v1574 = vpow.pop %v1573
      %v1575 = vmul.f32 %v1521, 1.442695
      %v1576 = vpow.pop %v1575
      %v1577 = vmul.f32 %v1522, 1.442695
      %v1578 = vpow.pop %v1577
      %v1579 = vmul.f32 %v1523, 1.442695
      %v1580 = vpow.pop %v1579
      %v1581 = vmul.f32 %v1524, 1.442695
      %v1582 = vpow.pop %v1581
      %v1583 = vmul.f32 %v1525, 1.442695
      %v1584 = vpow.pop %v1583
      %v1585 = vmul.f32 %v1526, 1.442695
      %v1586 = vpow.pop %v1585
      %v1587 = vmul.f32 %v1527, 1.442695
      %v1588 = vpow.pop %v1587
      %v1589 = vmul.f32 %v1528, 1.442695
      %v1590 = vpow.pop %v1589
      %v1591 = vmul.f32 %v1529, 1.442695
      %v1592 = vpow.pop %v1591
      %v1593 = vmul.f32 %v1530, 1.442695
      %v1594 = vpow.pop %v1593
      %v1595 = vadd.f32 %v1532, 1.0
      %v1596 = vadd.f32 %v1534, 1.0
      %v1597 = vadd.f32 %v1536, 1.0
      %v1598 = vadd.f32 %v1538, 1.0
      %v1599 = vadd.f32 %v1540, 1.0
      %v1600 = vadd.f32 %v1542, 1.0
      %v1601 = vadd.f32 %v1544, 1.0
      %v1602 = vadd.f32 %v1546, 1.0
      %v1603 = vadd.f32 %v1548, 1.0
      %v1604 = vadd.f32 %v1550, 1.0
      %v1605 = vadd.f32 %v1552, 1.0
      %v1606 = vadd.f32 %v1554, 1.0
      %v1607 = vadd.f32 %v1556, 1.0
      %v1608 = vadd.f32 %v1558, 1.0
      %v1609 = vadd.f32 %v1560, 1.0
      %v1610 = vadd.f32 %v1562, 1.0
      %v1611 = vadd.f32 %v1564, 1.0
      %v1612 = vadd.f32 %v1566, 1.0
      %v1613 = vadd.f32 %v1568, 1.0
      %v1614 = vadd.f32 %v1570, 1.0
      %v1615 = vadd.f32 %v1572, 1.0
      %v1616 = vadd.f32 %v1574, 1.0
      %v1617 = vadd.f32 %v1576, 1.0
      %v1618 = vadd.f32 %v1578, 1.0
      %v1619 = vadd.f32 %v1580, 1.0
      %v1620 = vadd.f32 %v1582, 1.0
      %v1621 = vadd.f32 %v1584, 1.0
      %v1622 = vadd.f32 %v1586, 1.0
      %v1623 = vadd.f32 %v1588, 1.0
      %v1624 = vadd.f32 %v1590, 1.0
      %v1625 = vadd.f32 %v1592, 1.0
      %v1626 = vadd.f32 %v1594, 1.0
      %v1627 = vrcp.pop %v1595
      %v1628 = vmul.f32 1.0, %v1627
      %v1629 = vrcp.pop %v1596
      %v1630 = vmul.f32 1.0, %v1629
      %v1631 = vrcp.pop %v1597
      %v1632 = vmul.f32 1.0, %v1631
      %v1633 = vrcp.pop %v1598
      %v1634 = vmul.f32 1.0, %v1633
      %v1635 = vrcp.pop %v1599
      %v1636 = vmul.f32 1.0, %v1635
      %v1637 = vrcp.pop %v1600
      %v1638 = vmul.f32 1.0, %v1637
      %v1639 = vrcp.pop %v1601
      %v1640 = vmul.f32 1.0, %v1639
      %v1641 = vrcp.pop %v1602
      %v1642 = vmul.f32 1.0, %v1641
      %v1643 = vrcp.pop %v1603
      %v1644 = vmul.f32 1.0, %v1643
      %v1645 = vrcp.pop %v1604
      %v1646 = vmul.f32 1.0, %v1645
      %v1647 = vrcp.pop %v1605
      %v1648 = vmul.f32 1.0, %v1647
      %v1649 = vrcp.pop %v1606
      %v1650 = vmul.f32 1.0, %v1649
      %v1651 = vrcp.pop %v1607
      %v1652 = vmul.f32 1.0, %v1651
      %v1653 = vrcp.pop %v1608
      %v1654 = vmul.f32 1.0, %v1653
      %v1655 = vrcp.pop %v1609
      %v1656 = vmul.f32 1.0, %v1655
      %v1657 = vrcp.pop %v1610
      %v1658 = vmul.f32 1.0, %v1657
      %v1659 = vrcp.pop %v1611
      %v1660 = vmul.f32 1.0, %v1659
      %v1661 = vrcp.pop %v1612
      %v1662 = vmul.f32 1.0, %v1661
      %v1663 = vrcp.pop %v1613
      %v1664 = vmul.f32 1.0, %v1663
      %v1665 = vrcp.pop %v1614
      %v1666 = vmul.f32 1.0, %v1665
      %v1667 = vrcp.pop %v1615
      %v1668 = vmul.f32 1.0, %v1667
      %v1669 = vrcp.pop %v1616
      %v1670 = vmul.f32 1.0, %v1669
      %v1671 = vrcp.pop %v1617
      %v1672 = vmul.f32 1.0, %v1671
      %v1673 = vrcp.pop %v1618
      %v1674 = vmul.f32 1.0, %v1673
      %v1675 = vrcp.pop %v1619
      %v1676 = vmul.f32 1.0, %v1675
      %v1677 = vrcp.pop %v1620
      %v1678 = vmul.f32 1.0, %v1677
      %v1679 = vrcp.pop %v1621
      %v1680 = vmul.f32 1.0, %v1679
      %v1681 = vrcp.pop %v1622
      %v1682 = vmul.f32 1.0, %v1681
      %v1683 = vrcp.pop %v1623
      %v1684 = vmul.f32 1.0, %v1683
      %v1685 = vrcp.pop %v1624
      %v1686 = vmul.f32 1.0, %v1685
      %v1687 = vrcp.pop %v1625
      %v1688 = vmul.f32 1.0, %v1687
      %v1689 = vrcp.pop %v1626
      %v1690 = vmul.f32 1.0, %v1689
      %vm1691 = vcmask 31744
      %1692 = vst.msk [vmem:[%s170] sm:$0xff] %vm1691, %v1628
      %1693 = vst.msk [vmem:[%s170 + $0x8] sm:$0xff] %vm1691, %v1630
      %1694 = vst.msk [vmem:[%s170 + $0x10] sm:$0xff] %vm1691, %v1632
      %1695 = vst.msk [vmem:[%s170 + $0x18] sm:$0xff] %vm1691, %v1634
      %1696 = vst.msk [vmem:[%s170 + $0x20] sm:$0xff] %vm1691, %v1636
      %1697 = vst.msk [vmem:[%s170 + $0x28] sm:$0xff] %vm1691, %v1638
      %1698 = vst.msk [vmem:[%s170 + $0x30] sm:$0xff] %vm1691, %v1640
      %1699 = vst.msk [vmem:[%s170 + $0x38] sm:$0xff] %vm1691, %v1642
      %1700 = vst.msk [vmem:[%s170 + $0x40] sm:$0xff] %vm1691, %v1644
      %1701 = vst.msk [vmem:[%s170 + $0x48] sm:$0xff] %vm1691, %v1646
      %1702 = vst.msk [vmem:[%s170 + $0x50] sm:$0xff] %vm1691, %v1648
      %1703 = vst.msk [vmem:[%s170 + $0x58] sm:$0xff] %vm1691, %v1650
      %1704 = vst.msk [vmem:[%s170 + $0x60] sm:$0xff] %vm1691, %v1652
      %1705 = vst.msk [vmem:[%s170 + $0x68] sm:$0xff] %vm1691, %v1654
      %1706 = vst.msk [vmem:[%s170 + $0x70] sm:$0xff] %vm1691, %v1656
      %1707 = vst.msk [vmem:[%s170 + $0x78] sm:$0xff] %vm1691, %v1658
      %1708 = vst.msk [vmem:[%s170 + $0x80] sm:$0xff] %vm1691, %v1660
      %1709 = vst.msk [vmem:[%s170 + $0x88] sm:$0xff] %vm1691, %v1662
      %1710 = vst.msk [vmem:[%s170 + $0x90] sm:$0xff] %vm1691, %v1664
      %1711 = vst.msk [vmem:[%s170 + $0x98] sm:$0xff] %vm1691, %v1666
      %1712 = vst.msk [vmem:[%s170 + $0xa0] sm:$0xff] %vm1691, %v1668
      %1713 = vst.msk [vmem:[%s170 + $0xa8] sm:$0xff] %vm1691, %v1670
      %1714 = vst.msk [vmem:[%s170 + $0xb0] sm:$0xff] %vm1691, %v1672
      %1715 = vst.msk [vmem:[%s170 + $0xb8] sm:$0xff] %vm1691, %v1674
      %1716 = vst.msk [vmem:[%s170 + $0xc0] sm:$0xff] %vm1691, %v1676
      %1717 = vst.msk [vmem:[%s170 + $0xc8] sm:$0xff] %vm1691, %v1678
      %1718 = vst.msk [vmem:[%s170 + $0xd0] sm:$0xff] %vm1691, %v1680
      %1719 = vst.msk [vmem:[%s170 + $0xd8] sm:$0xff] %vm1691, %v1682
      %1720 = vst.msk [vmem:[%s170 + $0xe0] sm:$0xff] %vm1691, %v1684
      %1721 = vst.msk [vmem:[%s170 + $0xe8] sm:$0xff] %vm1691, %v1686
      %1722 = vst.msk [vmem:[%s170 + $0xf0] sm:$0xff] %vm1691, %v1688
      %1723 = vst.msk [vmem:[%s170 + $0xf8] sm:$0xff] %vm1691, %v1690
      %p1724 = scmp.lt.s32.totalorder %s14, 1
      %s1725 = scalar_select %p1724, %s14, 1
      %s1726 = smul.addr %s1725, 32
      %s1727 = smul.addr %s1726, 8
      %s1728 = scalar_lea.vmem %s3, %s1727
      // Predicated region
      $region33: #{texture_finder_forward.15} parent=31 // pred_check
        %p1729 = pneg %p100
      $region34: #{texture_finder_forward.15} parent=31 // pred_check_branch
        %1731 = sbr.rel (%p1729) target = $region36
      $region35: #{texture_finder_forward.15} parent=31 // pred_region
        _
      $region36: #{texture_finder_forward.15} parent=31 // pred_fallthru
        _
    $region32: #{texture_finder_forward.15} parent=5 // pred_fallthru
      _
    %p1732 = scmp.le.s32.totalorder 2, %s9
    // Predicated region
    $region37: #{texture_finder_forward.15} parent=5 // pred_check
      %p1733 = pneg %p1732
    $region38: #{texture_finder_forward.15} parent=5 // pred_check_branch
      %1735 = sbr.rel (%p1733) target = $region40
    $region39: #{texture_finder_forward.15} parent=5 // pred_region
      %s1736 = ssub.s32 %s9, 2
      // Predicated region
      $region41: #{texture_finder_forward.15} parent=39 // pred_check
        %p1737 = pneg %p106
      $region42: #{texture_finder_forward.15} parent=39 // pred_check_branch
        %1739 = sbr.rel (%p1737) target = $region44
      $region43: #{texture_finder_forward.15} parent=39 // pred_region
        %p1740 = scmp.lt.s32.totalorder %s15, 1
        %s1741 = scalar_select %p1740, %s15, 1
        %s1742 = smul.addr %s1741, 32
        %s1743 = smul.addr %s1742, 8
        %s1744 = scalar_lea.vmem %s3, %s1743
      $region44: #{texture_finder_forward.15} parent=39 // pred_fallthru
        _
    $region40: #{texture_finder_forward.15} parent=5 // pred_fallthru
      _
  $region6: #{texture_finder_forward.15} parent=0 // loop_footer
    %s13 = sadd.s32 1, %s9
  $region7: #{texture_finder_forward.15} parent=0 // loop_footer_branch
    %8 = sbr.rel target = $region3
  $region8: #{texture_finder_forward.15} parent=0 // loop_exit
    _

</llo_original>
